<compile_context>
chip_gen: v7x
topology: tpu7x:2x2x1
jax: 0.10.0
libtpu: 0.0.40
codegen_flags: <defaults>
</compile_context>

<pallas_src>
import math

import jax
import jax.numpy as jnp
from jax.experimental import pallas as pl
from jax.experimental.pallas import tpu as pltpu

K = 5          # conv kernel size everywhere in RED_CNN
PAD = K - 1    # spatial shrink/grow per (t)conv
MM_DTYPE = jnp.bfloat16   # MXU operand dtype (banded weights + staged LHS)


# ---------------------------------------------------------------------------
# Parameter preparation (runs once, outside the kernel body)
# ---------------------------------------------------------------------------
def _spatial_plan(H, W):
    hs = [H - PAD * i for i in range(6)]    # hs[i]/ws[i]: spatial size after conv_i
    ws = [W - PAD * i for i in range(6)]
    return hs, ws


def _band_weights(kc, w_in, w_out, shift):
    """(5,5,Ci,Co) kernel -> flattened banded matmul weight (5*w_in*Ci, w_out*Co).

    Row index = dy*(w_in*Ci) + wi*Ci + ci ; column index = wo*Co + co ; entry is
    kc[dy, wi - wo + shift, ci, co] when 0 <= wi - wo + shift < 5, else 0.
    shift=0: VALID cross-correlation (nn.Conv2d), w_out = w_in - 4.
    shift=4: ConvTranspose2d(stride=1,pad=0) given the flipped kernel,
             w_out = w_in + 4 (W-direction zero padding folded into the band).
    """
    _, _, ci, co = kc.shape
    wi = jnp.arange(w_in)[:, None]
    wo = jnp.arange(w_out)[None, :]
    dx = wi - wo + shift                                    # (w_in, w_out)
    valid = (dx >= 0) & (dx < K)
    m = kc[:, jnp.clip(dx, 0, K - 1), :, :]                 # (5, w_in, w_out, Ci, Co)
    m = m * valid[None, :, :, None, None].astype(kc.dtype)
    m = jnp.transpose(m, (0, 1, 3, 2, 4))                   # (5, w_in, Ci, w_out, Co)
    return m.reshape(K * w_in * ci, w_out * co)


def prepare_params(p, H, W, mm_dtype=MM_DTYPE):
    """torch-layout params -> fused-kernel operands (banded bf16 weights, tiled biases)."""
    _, ws = _spatial_plan(H, W)
    wbs, bts = [], []
    # Encoder: nn.Conv2d weights (Co, Ci, 5, 5) -> conv-form (5, 5, Ci, Co).
    for i in range(1, 6):
        kc = jnp.transpose(p[f"conv{i}_w"], (2, 3, 1, 0))
        wbs.append(_band_weights(kc, ws[i - 1], ws[i], 0).astype(mm_dtype))
        bts.append(jnp.tile(p[f"conv{i}_b"], ws[i])[None, :].astype(jnp.float32))
    # Decoder: ConvTranspose2d(k=5,s=1,p=0) == VALID conv of the 4-padded input
    # with the spatially flipped, in/out-swapped kernel (torch layout Ci,Co,5,5).
    for i in range(1, 6):
        wt = p[f"tconv{i}_w"]
        kc = jnp.transpose(jnp.flip(wt, axis=(2, 3)), (2, 3, 0, 1))
        wbs.append(_band_weights(kc, ws[6 - i], ws[5 - i], PAD).astype(mm_dtype))
        bts.append(jnp.tile(p[f"tconv{i}_b"], ws[5 - i])[None, :].astype(jnp.float32))
    return dict(
        ws=wbs, bs=bts,
        fc1_w=p["fc1_w"].T,            # (1, nodes)
        fc1_b=p["fc1_b"][None, :],     # (1, nodes)
        fc2_w=p["fc2_w"],              # (1, nodes), used via a lane reduce
        fc2_b=p["fc2_b"][None, :],     # (1, 1)
    )


# ---------------------------------------------------------------------------
# Fused forward (single pallas_call)
# ---------------------------------------------------------------------------
def red_cnn_forward(x_nchw, params, *, batch_block=4, debug_feat=False,
                    mm_dtype=MM_DTYPE):
    """Fused Pallas forward.

    x_nchw: (N, 1, H, W) float32.
    Returns y (N, 1) = module output; with debug_feat=True also returns the
    final pre-pool activation feat (N, H, W) for per-pixel verification.
    """
    N, cin, H, W = x_nchw.shape
    assert cin == 1, "RED_CNN takes a single input channel"
    hs, ws = _spatial_plan(H, W)
    assert hs[5] >= 1 and ws[5] >= 1, "spatial size must be >= 21"
    C = params["conv1_w"].shape[0]

    B = min(batch_block, N)                 # images stacked along M per grid step
    G = -(-N // B)                          # grid steps
    Npad = G * B
    prep = prepare_params(params, H, W, mm_dtype)
    x = x_nchw[:, 0, :, :]                  # (N, H, W): Ci=1 packed layout
    if Npad != N:
        x = jnp.pad(x, ((0, Npad - N), (0, 0), (0, 0)))
    inv_hw = 1.0 / float(H * W)
    f32 = jnp.float32

    # Shared LHS staging buffer (max over layers of (B*Hout, 5*Win*Ci)).
    stage_rows = B * hs[0]
    stage_cols = K * max(ws[0], ws[1] * C)

    def kernel(x_ref, *refs):
        wr = refs[0:10]                   # banded weights, (5*Win*Ci, Wout*Co), bf16
        br = refs[10:20]                  # tiled biases,   (1, Wout*Co), f32
        fc1w, fc1b, fc2w, fc2b = refs[20:24]
        n_out = 2 if debug_feat else 1
        y_ref = refs[24]
        feat_ref = refs[25] if debug_feat else None
        (s1, s2, s3, s4, s5p, s6p, s7p, s8p, s9p, stage) = refs[24 + n_out:]

        # One-time zeroing of the decoder H-pad rows (scratch persists across
        # grid steps; pad rows are never overwritten afterwards).  NOTE: if the
        # batch axis is ever split per-core (CORE_PARALLEL on v7x), this init
        # must become per-core.
        @pl.when(pl.program_id(0) == 0)
        def _init_pad_rows():
            for buf in (s5p, s6p, s7p, s8p, s9p):
                buf[...] = jnp.zeros_like(buf)

        def win_scratch(src, rows_per_img, hout):
            return lambda b, d: src[b * rows_per_img + d:
                                    b * rows_per_img + d + hout, :]

        def band_layer(win_fn, li, hout, win_ci, res=None, relu=True):
            """5x5 (t)conv over B stacked images as ONE MXU matmul.

            LHS = (B*hout, 5*win_ci) staging (bf16), RHS = banded weight.
            Epilogue (bias, residual, ReLU) in f32.
            """
            for b in range(B):
                r0 = b * hout
                for d in range(K):
                    stage[r0:r0 + hout, d * win_ci:(d + 1) * win_ci] = (
                        win_fn(b, d).astype(mm_dtype))
            acc = jnp.dot(stage[0:B * hout, 0:K * win_ci], wr[li][...],
                          preferred_element_type=jnp.float32)
            acc = acc + br[li][...]
            if res is not None:
                acc = acc + res
            return jnp.maximum(acc, 0.0) if relu else acc

        def store_padded(dst, acc, hout):
            """Write per-image results into the centre rows of an H-padded buffer."""
            hp = hout + 2 * PAD
            for b in range(B):
                dst[b * hp + PAD:b * hp + PAD + hout, :] = (
                    acc[b * hout:(b + 1) * hout, :])

        # ------------------------------ encoder ------------------------------
        s1[...] = band_layer(lambda b, d: x_ref[b, d:d + hs[1], :], 0, hs[1], ws[0])
        s2[...] = band_layer(win_scratch(s1, hs[1], hs[2]), 1, hs[2], ws[1] * C)
        s3[...] = band_layer(win_scratch(s2, hs[2], hs[3]), 2, hs[3], ws[2] * C)
        s4[...] = band_layer(win_scratch(s3, hs[3], hs[4]), 3, hs[4], ws[3] * C)
        store_padded(s5p, band_layer(win_scratch(s4, hs[4], hs[5]), 4, hs[5],
                                     ws[4] * C), hs[5])
        # ------------------------------ decoder ------------------------------
        store_padded(s6p, band_layer(win_scratch(s5p, hs[5] + 2 * PAD, hs[4]), 5,
                                     hs[4], ws[5] * C, res=s4[...]), hs[4])
        store_padded(s7p, band_layer(win_scratch(s6p, hs[4] + 2 * PAD, hs[3]), 6,
                                     hs[3], ws[4] * C), hs[3])
        store_padded(s8p, band_layer(win_scratch(s7p, hs[3] + 2 * PAD, hs[2]), 7,
                                     hs[2], ws[3] * C, res=s2[...]), hs[2])
        store_padded(s9p, band_layer(win_scratch(s8p, hs[2] + 2 * PAD, hs[1]), 8,
                                     hs[1], ws[2] * C), hs[1])
        # tconv5 output, pre-residual / pre-ReLU, stacked (B*H, W)
        acc = band_layer(win_scratch(s9p, hs[1] + 2 * PAD, hs[0]), 9, hs[0],
                         ws[1] * C, relu=False)

        # --- per-image epilogue: +residual_1, ReLU, avgpool -> fc head --------
        for b in range(B):
            img = jnp.maximum(acc[b * H:(b + 1) * H, :] + x_ref[b, :, :], 0.0)
            if debug_feat:
                feat_ref[b:b + 1, :, :] = img[None, :, :]
            pooled = jnp.sum(img) * inv_hw                                # scalar
            hvec = jnp.maximum(pooled * fc1w[...] + fc1b[...], 0.0)       # (1, nodes)
            yv = jnp.sum(hvec * fc2w[...], axis=1, keepdims=True) + fc2b[...]
            y_ref[:, b:b + 1, :] = (4.0 / (1.0 + jnp.exp(-yv)))[None, :, :]

    # ---------------------------- call assembly ------------------------------
    in_specs = [pl.BlockSpec((B, H, W), lambda g: (g, 0, 0))]
    inputs = [x]
    for wm in prep["ws"]:
        in_specs.append(pl.BlockSpec(wm.shape, lambda g: (0, 0)))
        inputs.append(wm)
    for bt in prep["bs"]:
        in_specs.append(pl.BlockSpec(bt.shape, lambda g: (0, 0)))
        inputs.append(bt)
    for name in ("fc1_w", "fc1_b", "fc2_w", "fc2_b"):
        in_specs.append(pl.BlockSpec(prep[name].shape, lambda g: (0, 0)))
        inputs.append(prep[name])

    out_shape = [jax.ShapeDtypeStruct((G, B, 1), jnp.float32)]
    out_specs = [pl.BlockSpec((1, B, 1), lambda g: (g, 0, 0))]
    if debug_feat:
        out_shape.append(jax.ShapeDtypeStruct((Npad, H, W), jnp.float32))
        out_specs.append(pl.BlockSpec((B, H, W), lambda g: (g, 0, 0)))

    scratch_defs = [
        ((B * hs[1], ws[1] * C), f32),               # conv1 out
        ((B * hs[2], ws[2] * C), f32),               # conv2 out (residual_2)
        ((B * hs[3], ws[3] * C), f32),               # conv3 out
        ((B * hs[4], ws[4] * C), f32),               # conv4 out (residual_3)
        ((B * (hs[5] + 2 * PAD), ws[5] * C), f32),   # conv5 out, H-padded
        ((B * (hs[4] + 2 * PAD), ws[4] * C), f32),   # tconv1 out, H-padded
        ((B * (hs[3] + 2 * PAD), ws[3] * C), f32),   # tconv2 out, H-padded
        ((B * (hs[2] + 2 * PAD), ws[2] * C), f32),   # tconv3 out, H-padded
        ((B * (hs[1] + 2 * PAD), ws[1] * C), f32),   # tconv4 out, H-padded
        ((stage_rows, stage_cols), mm_dtype),        # shared LHS staging
    ]
    scratch_shapes = [pltpu.VMEM(s, d) for s, d in scratch_defs]

    # VMEM budget check (review): ins/outs double-buffered + scratch, must fit
    # comfortably under v7x's 64 MiB (default scoped limit 32 MiB).
    def _nbytes(shape, dtype):
        return math.prod(shape) * jnp.dtype(dtype).itemsize
    in_block_bytes = _nbytes((B, H, W), f32) + sum(
        _nbytes(a.shape, a.dtype) for a in inputs[1:])
    out_block_bytes = _nbytes((1, B, 1), f32) + (
        _nbytes((B, H, W), f32) if debug_feat else 0)
    scratch_bytes = sum(_nbytes(s, d) for s, d in scratch_defs)
    vmem_bytes = 2 * (in_block_bytes + out_block_bytes) + scratch_bytes
    assert vmem_bytes < 48 * 1024 * 1024, f"VMEM estimate too large: {vmem_bytes}"

    outs = pl.pallas_call(
        kernel,
        out_shape=tuple(out_shape),
        grid=(G,),
        in_specs=in_specs,
        out_specs=tuple(out_specs),
        scratch_shapes=scratch_shapes,
        compiler_params=pltpu.CompilerParams(
            # TODO(synk): pltpu.CORE_PARALLEL on v7x would split the batch axis
            # across both TensorCores but needs a per-core pad-row init.
            dimension_semantics=("parallel",)),
    )(*inputs)

    y = outs[0].reshape(Npad, 1)[:N]
    if debug_feat:
        return y, outs[1][:N]
    return y


# ---------------------------------------------------------------------------
# Deterministic synthetic parameters (torch layouts, shapes from __init__)
# ---------------------------------------------------------------------------
def init_params(key, out_ch=8, nodes=16):
    ks = iter(jax.random.split(key, 32))
    p = {}

    def conv_w(co, ci):     # nn.Conv2d weight (Co, Ci, 5, 5)
        return 0.08 * jax.random.normal(next(ks), (co, ci, K, K), jnp.float32)

    def tconv_w(ci, co):    # nn.ConvTranspose2d weight (Ci, Co, 5, 5)
        return 0.08 * jax.random.normal(next(ks), (ci, co, K, K), jnp.float32)

    def bias(c):
        return 0.01 * jax.random.normal(next(ks), (c,), jnp.float32)

    for i, (co, ci) in enumerate([(out_ch, 1)] + [(out_ch, out_ch)] * 4, 1):
        p[f"conv{i}_w"], p[f"conv{i}_b"] = conv_w(co, ci), bias(co)
    for i, (ci, co) in enumerate([(out_ch, out_ch)] * 4 + [(out_ch, 1)], 1):
        p[f"tconv{i}_w"], p[f"tconv{i}_b"] = tconv_w(ci, co), bias(co)
    p["fc1_w"] = 0.5 * jax.random.normal(next(ks), (nodes, 1), jnp.float32)   # Linear (out, in)
    p["fc1_b"] = 0.01 * jax.random.normal(next(ks), (nodes,), jnp.float32)
    p["fc2_w"] = 0.5 * jax.random.normal(next(ks), (1, nodes), jnp.float32)
    p["fc2_b"] = 0.01 * jax.random.normal(next(ks), (1,), jnp.float32)
    return p


# ---------------------------------------------------------------------------
# Pure-JAX reference (mirrors the torch forward line by line).
# cast_dtype=bf16 reproduces the kernel's MXU operand rounding (f32 accumulate
# of bf16 operands) so only f32 accumulation-order differences remain.
# ---------------------------------------------------------------------------
def ref_forward(x_nchw, p, cast_dtype=None):
    relu = jax.nn.relu

    def cast(v):
        if cast_dtype is None:
            return v
        return v.astype(cast_dtype).astype(jnp.float32)

    x = jnp.transpose(x_nchw, (0, 2, 3, 1))                   # NHWC

    def conv(v, w_oihw, b):
        w = jnp.transpose(w_oihw, (2, 3, 1, 0))               # -> HWIO
        y = jax.lax.conv_general_dilated(
            cast(v), cast(w), (1, 1), "VALID",
            dimension_numbers=("NHWC", "HWIO", "NHWC"),
            precision=jax.lax.Precision.HIGHEST)
        return y + b.reshape(1, 1, 1, -1)

    def tconv(v, w_iohw, b):
        vp = jnp.pad(v, ((0, 0), (PAD, PAD), (PAD, PAD), (0, 0)))
        w = jnp.transpose(jnp.flip(w_iohw, axis=(2, 3)), (2, 3, 0, 1))
        y = jax.lax.conv_general_dilated(
            cast(vp), cast(w), (1, 1), "VALID",
            dimension_numbers=("NHWC", "HWIO", "NHWC"),
            precision=jax.lax.Precision.HIGHEST)
        return y + b.reshape(1, 1, 1, -1)

    r1 = x
    out = relu(conv(x, p["conv1_w"], p["conv1_b"]))
    out = relu(conv(out, p["conv2_w"], p["conv2_b"]))
    r2 = out
    out = relu(conv(out, p["conv3_w"], p["conv3_b"]))
    out = relu(conv(out, p["conv4_w"], p["conv4_b"]))
    r3 = out
    out = relu(conv(out, p["conv5_w"], p["conv5_b"]))
    out = tconv(out, p["tconv1_w"], p["tconv1_b"])
    out = out + r3
    out = tconv(relu(out), p["tconv2_w"], p["tconv2_b"])
    out = tconv(relu(out), p["tconv3_w"], p["tconv3_b"])
    out = out + r2
    out = tconv(relu(out), p["tconv4_w"], p["tconv4_b"])
    out = tconv(relu(out), p["tconv5_w"], p["tconv5_b"])
    out = out + r1
    out = relu(out)
    feat = out[..., 0]                                        # (N, H, W), C == 1
    pooled = jnp.mean(out, axis=(1, 2))                       # adaptive avgpool + flatten
    h = relu(jnp.dot(pooled, p["fc1_w"].T, precision="highest") + p["fc1_b"])
    y = jnp.dot(h, p["fc2_w"].T, precision="highest") + p["fc2_b"]
    return jax.nn.sigmoid(y) * 4.0, feat


if __name__ == "__main__":
    key = jax.random.PRNGKey(0)
    kx, kp = jax.random.split(key)

    # Small shapes: batch=2, 1 input channel, 28x28 spatial (the five VALID 5x5
    # convs need >= 21), out_ch=8, nodes=16.
    N, H, W = 2, 28, 28
    x = jax.random.normal(kx, (N, 1, H, W), jnp.float32)
    params = init_params(kp, out_ch=8, nodes=16)

    # Debug run: per-pixel feature map exposed for verification.
    y_dbg, feat = jax.jit(
        lambda a, p: red_cnn_forward(a, p, debug_feat=True))(x, params)
    y_dbg, feat = jax.block_until_ready((y_dbg, feat))
    assert y_dbg.shape == (N, 1)

    # Tight structural check against the bf16-operand-matched reference: both
    # sides do f32 accumulation of identically bf16-rounded operands, so only
    # accumulation-order noise remains.  A banding / window off-by-one would
    # produce O(1) errors and fail this immediately.
    y_m, feat_m = ref_forward(x, params, cast_dtype=jnp.bfloat16)
    assert jnp.allclose(feat, feat_m, rtol=5e-3, atol=5e-3), \
        float(jnp.max(jnp.abs(feat - feat_m)))
    assert jnp.allclose(y_dbg, y_m, rtol=2e-3, atol=2e-3), (y_dbg, y_m)

    # Loose end-to-end check against the full-f32 reference (difference is the
    # deliberate bf16 MXU operand rounding, review item 4).
    y_ref, feat_ref = ref_forward(x, params)
    assert jnp.allclose(feat, feat_ref, rtol=8e-2, atol=8e-2), \
        float(jnp.max(jnp.abs(feat - feat_ref)))
    assert jnp.allclose(y_dbg, y_ref, rtol=3e-2, atol=3e-2), (y_dbg, y_ref)

    # Production run: feature-map output gated off (lean store path).
    y = jax.jit(red_cnn_forward)(x, params)
    y = jax.block_until_ready(y)
    assert y.shape == (N, 1)
    assert jnp.allclose(y, y_dbg, rtol=1e-5, atol=1e-5)
    print("KERNEL_OK")
</pallas_src>

<mosaic_0001>
module attributes {stable_mosaic.version = 11 : i64} {
  func.func @kernel(%arg0: i32, %arg1: memref<2x28x28xf32, #tpu.memory_space<vmem>>, %arg2: memref<140x192xbf16, #tpu.memory_space<vmem>>, %arg3: memref<960x160xbf16, #tpu.memory_space<vmem>>, %arg4: memref<800x128xbf16, #tpu.memory_space<vmem>>, %arg5: memref<640x96xbf16, #tpu.memory_space<vmem>>, %arg6: memref<480x64xbf16, #tpu.memory_space<vmem>>, %arg7: memref<320x96xbf16, #tpu.memory_space<vmem>>, %arg8: memref<480x128xbf16, #tpu.memory_space<vmem>>, %arg9: memref<640x160xbf16, #tpu.memory_space<vmem>>, %arg10: memref<800x192xbf16, #tpu.memory_space<vmem>>, %arg11: memref<960x28xbf16, #tpu.memory_space<vmem>>, %arg12: memref<1x192xf32, #tpu.memory_space<vmem>>, %arg13: memref<1x160xf32, #tpu.memory_space<vmem>>, %arg14: memref<1x128xf32, #tpu.memory_space<vmem>>, %arg15: memref<1x96xf32, #tpu.memory_space<vmem>>, %arg16: memref<1x64xf32, #tpu.memory_space<vmem>>, %arg17: memref<1x96xf32, #tpu.memory_space<vmem>>, %arg18: memref<1x128xf32, #tpu.memory_space<vmem>>, %arg19: memref<1x160xf32, #tpu.memory_space<vmem>>, %arg20: memref<1x192xf32, #tpu.memory_space<vmem>>, %arg21: memref<1x28xf32, #tpu.memory_space<vmem>>, %arg22: memref<1x16xf32, #tpu.memory_space<vmem>>, %arg23: memref<1x16xf32, #tpu.memory_space<vmem>>, %arg24: memref<1x16xf32, #tpu.memory_space<vmem>>, %arg25: memref<1x1xf32, #tpu.memory_space<vmem>>, %arg26: memref<1x2x1xf32, #tpu.memory_space<vmem>>, %arg27: memref<2x28x28xf32, #tpu.memory_space<vmem>>, %arg28: memref<48x192xf32, #tpu.memory_space<vmem>>, %arg29: memref<40x160xf32, #tpu.memory_space<vmem>>, %arg30: memref<32x128xf32, #tpu.memory_space<vmem>>, %arg31: memref<24x96xf32, #tpu.memory_space<vmem>>, %arg32: memref<32x64xf32, #tpu.memory_space<vmem>>, %arg33: memref<40x96xf32, #tpu.memory_space<vmem>>, %arg34: memref<48x128xf32, #tpu.memory_space<vmem>>, %arg35: memref<56x160xf32, #tpu.memory_space<vmem>>, %arg36: memref<64x192xf32, #tpu.memory_space<vmem>>, %arg37: memref<56x960xbf16, #tpu.memory_space<vmem>>) attributes {dimension_semantics = [#tpu.dimension_semantics<parallel>], iteration_bounds = array<i64: 1>, scalar_prefetch = 0 : i64, scratch_operands = 10 : i64, tpu.core_type = #tpu.core_type<tc>, window_params = [{transform_indices = @transform_0, window_bounds = array<i64: 2, 28, 28>}, {pipeline_mode = #tpu.pipeline_mode<synchronous>, transform_indices = @transform_1, window_bounds = array<i64: 140, 192>}, {pipeline_mode = #tpu.pipeline_mode<synchronous>, transform_indices = @transform_2, window_bounds = array<i64: 960, 160>}, {pipeline_mode = #tpu.pipeline_mode<synchronous>, transform_indices = @transform_3, window_bounds = array<i64: 800, 128>}, {pipeline_mode = #tpu.pipeline_mode<synchronous>, transform_indices = @transform_4, window_bounds = array<i64: 640, 96>}, {pipeline_mode = #tpu.pipeline_mode<synchronous>, transform_indices = @transform_5, window_bounds = array<i64: 480, 64>}, {pipeline_mode = #tpu.pipeline_mode<synchronous>, transform_indices = @transform_6, window_bounds = array<i64: 320, 96>}, {pipeline_mode = #tpu.pipeline_mode<synchronous>, transform_indices = @transform_7, window_bounds = array<i64: 480, 128>}, {pipeline_mode = #tpu.pipeline_mode<synchronous>, transform_indices = @transform_8, window_bounds = array<i64: 640, 160>}, {pipeline_mode = #tpu.pipeline_mode<synchronous>, transform_indices = @transform_9, window_bounds = array<i64: 800, 192>}, {pipeline_mode = #tpu.pipeline_mode<synchronous>, transform_indices = @transform_10, window_bounds = array<i64: 960, 28>}, {pipeline_mode = #tpu.pipeline_mode<synchronous>, transform_indices = @transform_11, window_bounds = array<i64: 1, 192>}, {pipeline_mode = #tpu.pipeline_mode<synchronous>, transform_indices = @transform_12, window_bounds = array<i64: 1, 160>}, {pipeline_mode = #tpu.pipeline_mode<synchronous>, transform_indices = @transform_13, window_bounds = array<i64: 1, 128>}, {pipeline_mode = #tpu.pipeline_mode<synchronous>, transform_indices = @transform_14, window_bounds = array<i64: 1, 96>}, {pipeline_mode = #tpu.pipeline_mode<synchronous>, transform_indices = @transform_15, window_bounds = array<i64: 1, 64>}, {pipeline_mode = #tpu.pipeline_mode<synchronous>, transform_indices = @transform_16, window_bounds = array<i64: 1, 96>}, {pipeline_mode = #tpu.pipeline_mode<synchronous>, transform_indices = @transform_17, window_bounds = array<i64: 1, 128>}, {pipeline_mode = #tpu.pipeline_mode<synchronous>, transform_indices = @transform_18, window_bounds = array<i64: 1, 160>}, {pipeline_mode = #tpu.pipeline_mode<synchronous>, transform_indices = @transform_19, window_bounds = array<i64: 1, 192>}, {pipeline_mode = #tpu.pipeline_mode<synchronous>, transform_indices = @transform_20, window_bounds = array<i64: 1, 28>}, {pipeline_mode = #tpu.pipeline_mode<synchronous>, transform_indices = @transform_21, window_bounds = array<i64: 1, 16>}, {pipeline_mode = #tpu.pipeline_mode<synchronous>, transform_indices = @transform_22, window_bounds = array<i64: 1, 16>}, {pipeline_mode = #tpu.pipeline_mode<synchronous>, transform_indices = @transform_23, window_bounds = array<i64: 1, 16>}, {pipeline_mode = #tpu.pipeline_mode<synchronous>, transform_indices = @transform_24, window_bounds = array<i64: 1, 1>}, {transform_indices = @transform_25, window_bounds = array<i64: 1, 2, 1>}, {transform_indices = @transform_26, window_bounds = array<i64: 2, 28, 28>}]} {
    %c0_i32 = arith.constant 0 : i32
    %0 = arith.cmpi eq, %arg0, %c0_i32 : i32
    %1 = arith.extui %0 : i1 to i32
    %c0_i32_0 = arith.constant 0 : i32
    %2 = arith.cmpi ne, %1, %c0_i32_0 : i32
    scf.if %2 {
      %cst_523 = arith.constant 0.000000e+00 : f32
      %489 = vector.broadcast %cst_523 : f32 to vector<32x64xf32>
      %c0_524 = arith.constant 0 : index
      %c0_525 = arith.constant 0 : index
      %490 = vector.load %arg32[%c0_524, %c0_525] : memref<32x64xf32, #tpu.memory_space<vmem>>, vector<32x64xf32>
      tpu.vector_store %arg32[%c0_524, %c0_525], %489 {strides = array<i32>} : memref<32x64xf32, #tpu.memory_space<vmem>>, vector<32x64xf32>,
      %cst_526 = arith.constant 0.000000e+00 : f32
      %491 = vector.broadcast %cst_526 : f32 to vector<40x96xf32>
      %c0_527 = arith.constant 0 : index
      %c0_528 = arith.constant 0 : index
      %492 = vector.load %arg33[%c0_527, %c0_528] : memref<40x96xf32, #tpu.memory_space<vmem>>, vector<40x96xf32>
      tpu.vector_store %arg33[%c0_527, %c0_528], %491 {strides = array<i32>} : memref<40x96xf32, #tpu.memory_space<vmem>>, vector<40x96xf32>,
      %cst_529 = arith.constant 0.000000e+00 : f32
      %493 = vector.broadcast %cst_529 : f32 to vector<48x128xf32>
      %c0_530 = arith.constant 0 : index
      %c0_531 = arith.constant 0 : index
      %494 = vector.load %arg34[%c0_530, %c0_531] : memref<48x128xf32, #tpu.memory_space<vmem>>, vector<48x128xf32>
      tpu.vector_store %arg34[%c0_530, %c0_531], %493 {strides = array<i32>} : memref<48x128xf32, #tpu.memory_space<vmem>>, vector<48x128xf32>,
      %cst_532 = arith.constant 0.000000e+00 : f32
      %495 = vector.broadcast %cst_532 : f32 to vector<56x160xf32>
      %c0_533 = arith.constant 0 : index
      %c0_534 = arith.constant 0 : index
      %496 = vector.load %arg35[%c0_533, %c0_534] : memref<56x160xf32, #tpu.memory_space<vmem>>, vector<56x160xf32>
      tpu.vector_store %arg35[%c0_533, %c0_534], %495 {strides = array<i32>} : memref<56x160xf32, #tpu.memory_space<vmem>>, vector<56x160xf32>,
      %cst_535 = arith.constant 0.000000e+00 : f32
      %497 = vector.broadcast %cst_535 : f32 to vector<64x192xf32>
      %c0_536 = arith.constant 0 : index
      %c0_537 = arith.constant 0 : index
      %498 = vector.load %arg36[%c0_536, %c0_537] : memref<64x192xf32, #tpu.memory_space<vmem>>, vector<64x192xf32>
      tpu.vector_store %arg36[%c0_536, %c0_537], %497 {strides = array<i32>} : memref<64x192xf32, #tpu.memory_space<vmem>>, vector<64x192xf32>,
    } else {
    }
    %c0 = arith.constant 0 : index
    %c0_1 = arith.constant 0 : index
    %c0_2 = arith.constant 0 : index
    %3 = vector.load %arg1[%c0, %c0_1, %c0_2] : memref<2x28x28xf32, #tpu.memory_space<vmem>>, vector<1x24x28xf32>
    %4 = vector.shape_cast %3 : vector<1x24x28xf32> to vector<24x28xf32>
    %5 = arith.truncf %4 : vector<24x28xf32> to vector<24x28xbf16>
    %c0_3 = arith.constant 0 : index
    %c0_4 = arith.constant 0 : index
    %6 = vector.load %arg37[%c0_3, %c0_4] : memref<56x960xbf16, #tpu.memory_space<vmem>>, vector<24x28xbf16>
    tpu.vector_store %arg37[%c0_3, %c0_4], %5 {strides = array<i32>} : memref<56x960xbf16, #tpu.memory_space<vmem>>, vector<24x28xbf16>,
    %c0_5 = arith.constant 0 : index
    %c1 = arith.constant 1 : index
    %c0_6 = arith.constant 0 : index
    %7 = vector.load %arg1[%c0_5, %c1, %c0_6] : memref<2x28x28xf32, #tpu.memory_space<vmem>>, vector<1x24x28xf32>
    %8 = vector.shape_cast %7 : vector<1x24x28xf32> to vector<24x28xf32>
    %9 = arith.truncf %8 : vector<24x28xf32> to vector<24x28xbf16>
    %c0_7 = arith.constant 0 : index
    %c28 = arith.constant 28 : index
    %10 = vector.load %arg37[%c0_7, %c28] : memref<56x960xbf16, #tpu.memory_space<vmem>>, vector<24x28xbf16>
    tpu.vector_store %arg37[%c0_7, %c28], %9 {strides = array<i32>} : memref<56x960xbf16, #tpu.memory_space<vmem>>, vector<24x28xbf16>,
    %c0_8 = arith.constant 0 : index
    %c2 = arith.constant 2 : index
    %c0_9 = arith.constant 0 : index
    %11 = vector.load %arg1[%c0_8, %c2, %c0_9] : memref<2x28x28xf32, #tpu.memory_space<vmem>>, vector<1x24x28xf32>
    %12 = vector.shape_cast %11 : vector<1x24x28xf32> to vector<24x28xf32>
    %13 = arith.truncf %12 : vector<24x28xf32> to vector<24x28xbf16>
    %c0_10 = arith.constant 0 : index
    %c56 = arith.constant 56 : index
    %14 = vector.load %arg37[%c0_10, %c56] : memref<56x960xbf16, #tpu.memory_space<vmem>>, vector<24x28xbf16>
    tpu.vector_store %arg37[%c0_10, %c56], %13 {strides = array<i32>} : memref<56x960xbf16, #tpu.memory_space<vmem>>, vector<24x28xbf16>,
    %c0_11 = arith.constant 0 : index
    %c3 = arith.constant 3 : index
    %c0_12 = arith.constant 0 : index
    %15 = vector.load %arg1[%c0_11, %c3, %c0_12] : memref<2x28x28xf32, #tpu.memory_space<vmem>>, vector<1x24x28xf32>
    %16 = vector.shape_cast %15 : vector<1x24x28xf32> to vector<24x28xf32>
    %17 = arith.truncf %16 : vector<24x28xf32> to vector<24x28xbf16>
    %c0_13 = arith.constant 0 : index
    %c84 = arith.constant 84 : index
    %18 = vector.load %arg37[%c0_13, %c84] : memref<56x960xbf16, #tpu.memory_space<vmem>>, vector<24x28xbf16>
    tpu.vector_store %arg37[%c0_13, %c84], %17 {strides = array<i32>} : memref<56x960xbf16, #tpu.memory_space<vmem>>, vector<24x28xbf16>,
    %c0_14 = arith.constant 0 : index
    %c4 = arith.constant 4 : index
    %c0_15 = arith.constant 0 : index
    %19 = vector.load %arg1[%c0_14, %c4, %c0_15] : memref<2x28x28xf32, #tpu.memory_space<vmem>>, vector<1x24x28xf32>
    %20 = vector.shape_cast %19 : vector<1x24x28xf32> to vector<24x28xf32>
    %21 = arith.truncf %20 : vector<24x28xf32> to vector<24x28xbf16>
    %c0_16 = arith.constant 0 : index
    %c112 = arith.constant 112 : index
    %22 = vector.load %arg37[%c0_16, %c112] : memref<56x960xbf16, #tpu.memory_space<vmem>>, vector<24x28xbf16>
    tpu.vector_store %arg37[%c0_16, %c112], %21 {strides = array<i32>} : memref<56x960xbf16, #tpu.memory_space<vmem>>, vector<24x28xbf16>,
    %c1_17 = arith.constant 1 : index
    %c0_18 = arith.constant 0 : index
    %c0_19 = arith.constant 0 : index
    %23 = vector.load %arg1[%c1_17, %c0_18, %c0_19] : memref<2x28x28xf32, #tpu.memory_space<vmem>>, vector<1x24x28xf32>
    %24 = vector.shape_cast %23 : vector<1x24x28xf32> to vector<24x28xf32>
    %25 = arith.truncf %24 : vector<24x28xf32> to vector<24x28xbf16>
    %c24 = arith.constant 24 : index
    %c0_20 = arith.constant 0 : index
    %26 = vector.load %arg37[%c24, %c0_20] : memref<56x960xbf16, #tpu.memory_space<vmem>>, vector<24x28xbf16>
    tpu.vector_store %arg37[%c24, %c0_20], %25 {strides = array<i32>} : memref<56x960xbf16, #tpu.memory_space<vmem>>, vector<24x28xbf16>,
    %c1_21 = arith.constant 1 : index
    %c1_22 = arith.constant 1 : index
    %c0_23 = arith.constant 0 : index
    %27 = vector.load %arg1[%c1_21, %c1_22, %c0_23] : memref<2x28x28xf32, #tpu.memory_space<vmem>>, vector<1x24x28xf32>
    %28 = vector.shape_cast %27 : vector<1x24x28xf32> to vector<24x28xf32>
    %29 = arith.truncf %28 : vector<24x28xf32> to vector<24x28xbf16>
    %c24_24 = arith.constant 24 : index
    %c28_25 = arith.constant 28 : index
    %30 = vector.load %arg37[%c24_24, %c28_25] : memref<56x960xbf16, #tpu.memory_space<vmem>>, vector<24x28xbf16>
    tpu.vector_store %arg37[%c24_24, %c28_25], %29 {strides = array<i32>} : memref<56x960xbf16, #tpu.memory_space<vmem>>, vector<24x28xbf16>,
    %c1_26 = arith.constant 1 : index
    %c2_27 = arith.constant 2 : index
    %c0_28 = arith.constant 0 : index
    %31 = vector.load %arg1[%c1_26, %c2_27, %c0_28] : memref<2x28x28xf32, #tpu.memory_space<vmem>>, vector<1x24x28xf32>
    %32 = vector.shape_cast %31 : vector<1x24x28xf32> to vector<24x28xf32>
    %33 = arith.truncf %32 : vector<24x28xf32> to vector<24x28xbf16>
    %c24_29 = arith.constant 24 : index
    %c56_30 = arith.constant 56 : index
    %34 = vector.load %arg37[%c24_29, %c56_30] : memref<56x960xbf16, #tpu.memory_space<vmem>>, vector<24x28xbf16>
    tpu.vector_store %arg37[%c24_29, %c56_30], %33 {strides = array<i32>} : memref<56x960xbf16, #tpu.memory_space<vmem>>, vector<24x28xbf16>,
    %c1_31 = arith.constant 1 : index
    %c3_32 = arith.constant 3 : index
    %c0_33 = arith.constant 0 : index
    %35 = vector.load %arg1[%c1_31, %c3_32, %c0_33] : memref<2x28x28xf32, #tpu.memory_space<vmem>>, vector<1x24x28xf32>
    %36 = vector.shape_cast %35 : vector<1x24x28xf32> to vector<24x28xf32>
    %37 = arith.truncf %36 : vector<24x28xf32> to vector<24x28xbf16>
    %c24_34 = arith.constant 24 : index
    %c84_35 = arith.constant 84 : index
    %38 = vector.load %arg37[%c24_34, %c84_35] : memref<56x960xbf16, #tpu.memory_space<vmem>>, vector<24x28xbf16>
    tpu.vector_store %arg37[%c24_34, %c84_35], %37 {strides = array<i32>} : memref<56x960xbf16, #tpu.memory_space<vmem>>, vector<24x28xbf16>,
    %c1_36 = arith.constant 1 : index
    %c4_37 = arith.constant 4 : index
    %c0_38 = arith.constant 0 : index
    %39 = vector.load %arg1[%c1_36, %c4_37, %c0_38] : memref<2x28x28xf32, #tpu.memory_space<vmem>>, vector<1x24x28xf32>
    %40 = vector.shape_cast %39 : vector<1x24x28xf32> to vector<24x28xf32>
    %41 = arith.truncf %40 : vector<24x28xf32> to vector<24x28xbf16>
    %c24_39 = arith.constant 24 : index
    %c112_40 = arith.constant 112 : index
    %42 = vector.load %arg37[%c24_39, %c112_40] : memref<56x960xbf16, #tpu.memory_space<vmem>>, vector<24x28xbf16>
    tpu.vector_store %arg37[%c24_39, %c112_40], %41 {strides = array<i32>} : memref<56x960xbf16, #tpu.memory_space<vmem>>, vector<24x28xbf16>,
    %c0_41 = arith.constant 0 : index
    %c0_42 = arith.constant 0 : index
    %43 = vector.load %arg37[%c0_41, %c0_42] : memref<56x960xbf16, #tpu.memory_space<vmem>>, vector<48x140xbf16>
    %c0_43 = arith.constant 0 : index
    %c0_44 = arith.constant 0 : index
    %44 = vector.load %arg2[%c0_43, %c0_44] : memref<140x192xbf16, #tpu.memory_space<vmem>>, vector<140x192xbf16>
    %cst = arith.constant dense<0.000000e+00> : vector<48x192xf32>
    %45 = tpu.matmul %43, %44, %cst {dimension_numbers = #tpu.dot_dimension_numbers<[1], [0], [0], [1], [0, 0, 1, 1], [], []>} : vector<48x140xbf16>, vector<140x192xbf16>, vector<48x192xf32> -> vector<48x192xf32>
    %c0_45 = arith.constant 0 : index
    %c0_46 = arith.constant 0 : index
    %46 = vector.load %arg12[%c0_45, %c0_46] : memref<1x192xf32, #tpu.memory_space<vmem>>, vector<1x192xf32>
    %47 = vector.broadcast %46 : vector<1x192xf32> to vector<48x192xf32>
    %48 = arith.addf %45, %47 : vector<48x192xf32>
    %cst_47 = arith.constant 0.000000e+00 : f32
    %49 = vector.broadcast %cst_47 : f32 to vector<48x192xf32>
    %50 = arith.maximumf %48, %49 : vector<48x192xf32>
    %c0_48 = arith.constant 0 : index
    %c0_49 = arith.constant 0 : index
    %51 = vector.load %arg28[%c0_48, %c0_49] : memref<48x192xf32, #tpu.memory_space<vmem>>, vector<48x192xf32>
    tpu.vector_store %arg28[%c0_48, %c0_49], %50 {strides = array<i32>} : memref<48x192xf32, #tpu.memory_space<vmem>>, vector<48x192xf32>,
    %c0_50 = arith.constant 0 : index
    %c0_51 = arith.constant 0 : index
    %52 = vector.load %arg28[%c0_50, %c0_51] : memref<48x192xf32, #tpu.memory_space<vmem>>, vector<20x192xf32>
    %53 = arith.truncf %52 : vector<20x192xf32> to vector<20x192xbf16>
    %c0_52 = arith.constant 0 : index
    %c0_53 = arith.constant 0 : index
    %54 = vector.load %arg37[%c0_52, %c0_53] : memref<56x960xbf16, #tpu.memory_space<vmem>>, vector<20x192xbf16>
    tpu.vector_store %arg37[%c0_52, %c0_53], %53 {strides = array<i32>} : memref<56x960xbf16, #tpu.memory_space<vmem>>, vector<20x192xbf16>,
    %c1_54 = arith.constant 1 : index
    %c0_55 = arith.constant 0 : index
    %55 = vector.load %arg28[%c1_54, %c0_55] : memref<48x192xf32, #tpu.memory_space<vmem>>, vector<20x192xf32>
    %56 = arith.truncf %55 : vector<20x192xf32> to vector<20x192xbf16>
    %c0_56 = arith.constant 0 : index
    %c192 = arith.constant 192 : index
    %57 = vector.load %arg37[%c0_56, %c192] : memref<56x960xbf16, #tpu.memory_space<vmem>>, vector<20x192xbf16>
    tpu.vector_store %arg37[%c0_56, %c192], %56 {strides = array<i32>} : memref<56x960xbf16, #tpu.memory_space<vmem>>, vector<20x192xbf16>,
    %c2_57 = arith.constant 2 : index
    %c0_58 = arith.constant 0 : index
    %58 = vector.load %arg28[%c2_57, %c0_58] : memref<48x192xf32, #tpu.memory_space<vmem>>, vector<20x192xf32>
    %59 = arith.truncf %58 : vector<20x192xf32> to vector<20x192xbf16>
    %c0_59 = arith.constant 0 : index
    %c384 = arith.constant 384 : index
    %60 = vector.load %arg37[%c0_59, %c384] : memref<56x960xbf16, #tpu.memory_space<vmem>>, vector<20x192xbf16>
    tpu.vector_store %arg37[%c0_59, %c384], %59 {strides = array<i32>} : memref<56x960xbf16, #tpu.memory_space<vmem>>, vector<20x192xbf16>,
    %c3_60 = arith.constant 3 : index
    %c0_61 = arith.constant 0 : index
    %61 = vector.load %arg28[%c3_60, %c0_61] : memref<48x192xf32, #tpu.memory_space<vmem>>, vector<20x192xf32>
    %62 = arith.truncf %61 : vector<20x192xf32> to vector<20x192xbf16>
    %c0_62 = arith.constant 0 : index
    %c576 = arith.constant 576 : index
    %63 = vector.load %arg37[%c0_62, %c576] : memref<56x960xbf16, #tpu.memory_space<vmem>>, vector<20x192xbf16>
    tpu.vector_store %arg37[%c0_62, %c576], %62 {strides = array<i32>} : memref<56x960xbf16, #tpu.memory_space<vmem>>, vector<20x192xbf16>,
    %c4_63 = arith.constant 4 : index
    %c0_64 = arith.constant 0 : index
    %64 = vector.load %arg28[%c4_63, %c0_64] : memref<48x192xf32, #tpu.memory_space<vmem>>, vector<20x192xf32>
    %65 = arith.truncf %64 : vector<20x192xf32> to vector<20x192xbf16>
    %c0_65 = arith.constant 0 : index
    %c768 = arith.constant 768 : index
    %66 = vector.load %arg37[%c0_65, %c768] : memref<56x960xbf16, #tpu.memory_space<vmem>>, vector<20x192xbf16>
    tpu.vector_store %arg37[%c0_65, %c768], %65 {strides = array<i32>} : memref<56x960xbf16, #tpu.memory_space<vmem>>, vector<20x192xbf16>,
    %c24_66 = arith.constant 24 : index
    %c0_67 = arith.constant 0 : index
    %67 = vector.load %arg28[%c24_66, %c0_67] : memref<48x192xf32, #tpu.memory_space<vmem>>, vector<20x192xf32>
    %68 = arith.truncf %67 : vector<20x192xf32> to vector<20x192xbf16>
    %c20 = arith.constant 20 : index
    %c0_68 = arith.constant 0 : index
    %69 = vector.load %arg37[%c20, %c0_68] : memref<56x960xbf16, #tpu.memory_space<vmem>>, vector<20x192xbf16>
    tpu.vector_store %arg37[%c20, %c0_68], %68 {strides = array<i32>} : memref<56x960xbf16, #tpu.memory_space<vmem>>, vector<20x192xbf16>,
    %c25 = arith.constant 25 : index
    %c0_69 = arith.constant 0 : index
    %70 = vector.load %arg28[%c25, %c0_69] : memref<48x192xf32, #tpu.memory_space<vmem>>, vector<20x192xf32>
    %71 = arith.truncf %70 : vector<20x192xf32> to vector<20x192xbf16>
    %c20_70 = arith.constant 20 : index
    %c192_71 = arith.constant 192 : index
    %72 = vector.load %arg37[%c20_70, %c192_71] : memref<56x960xbf16, #tpu.memory_space<vmem>>, vector<20x192xbf16>
    tpu.vector_store %arg37[%c20_70, %c192_71], %71 {strides = array<i32>} : memref<56x960xbf16, #tpu.memory_space<vmem>>, vector<20x192xbf16>,
    %c26 = arith.constant 26 : index
    %c0_72 = arith.constant 0 : index
    %73 = vector.load %arg28[%c26, %c0_72] : memref<48x192xf32, #tpu.memory_space<vmem>>, vector<20x192xf32>
    %74 = arith.truncf %73 : vector<20x192xf32> to vector<20x192xbf16>
    %c20_73 = arith.constant 20 : index
    %c384_74 = arith.constant 384 : index
    %75 = vector.load %arg37[%c20_73, %c384_74] : memref<56x960xbf16, #tpu.memory_space<vmem>>, vector<20x192xbf16>
    tpu.vector_store %arg37[%c20_73, %c384_74], %74 {strides = array<i32>} : memref<56x960xbf16, #tpu.memory_space<vmem>>, vector<20x192xbf16>,
    %c27 = arith.constant 27 : index
    %c0_75 = arith.constant 0 : index
    %76 = vector.load %arg28[%c27, %c0_75] : memref<48x192xf32, #tpu.memory_space<vmem>>, vector<20x192xf32>
    %77 = arith.truncf %76 : vector<20x192xf32> to vector<20x192xbf16>
    %c20_76 = arith.constant 20 : index
    %c576_77 = arith.constant 576 : index
    %78 = vector.load %arg37[%c20_76, %c576_77] : memref<56x960xbf16, #tpu.memory_space<vmem>>, vector<20x192xbf16>
    tpu.vector_store %arg37[%c20_76, %c576_77], %77 {strides = array<i32>} : memref<56x960xbf16, #tpu.memory_space<vmem>>, vector<20x192xbf16>,
    %c28_78 = arith.constant 28 : index
    %c0_79 = arith.constant 0 : index
    %79 = vector.load %arg28[%c28_78, %c0_79] : memref<48x192xf32, #tpu.memory_space<vmem>>, vector<20x192xf32>
    %80 = arith.truncf %79 : vector<20x192xf32> to vector<20x192xbf16>
    %c20_80 = arith.constant 20 : index
    %c768_81 = arith.constant 768 : index
    %81 = vector.load %arg37[%c20_80, %c768_81] : memref<56x960xbf16, #tpu.memory_space<vmem>>, vector<20x192xbf16>
    tpu.vector_store %arg37[%c20_80, %c768_81], %80 {strides = array<i32>} : memref<56x960xbf16, #tpu.memory_space<vmem>>, vector<20x192xbf16>,
    %c0_82 = arith.constant 0 : index
    %c0_83 = arith.constant 0 : index
    %82 = vector.load %arg37[%c0_82, %c0_83] : memref<56x960xbf16, #tpu.memory_space<vmem>>, vector<40x960xbf16>
    %c0_84 = arith.constant 0 : index
    %c0_85 = arith.constant 0 : index
    %83 = vector.load %arg3[%c0_84, %c0_85] : memref<960x160xbf16, #tpu.memory_space<vmem>>, vector<960x160xbf16>
    %cst_86 = arith.constant dense<0.000000e+00> : vector<40x160xf32>
    %84 = tpu.matmul %82, %83, %cst_86 {dimension_numbers = #tpu.dot_dimension_numbers<[1], [0], [0], [1], [0, 0, 1, 1], [], []>} : vector<40x960xbf16>, vector<960x160xbf16>, vector<40x160xf32> -> vector<40x160xf32>
    %c0_87 = arith.constant 0 : index
    %c0_88 = arith.constant 0 : index
    %85 = vector.load %arg13[%c0_87, %c0_88] : memref<1x160xf32, #tpu.memory_space<vmem>>, vector<1x160xf32>
    %86 = vector.broadcast %85 : vector<1x160xf32> to vector<40x160xf32>
    %87 = arith.addf %84, %86 : vector<40x160xf32>
    %cst_89 = arith.constant 0.000000e+00 : f32
    %88 = vector.broadcast %cst_89 : f32 to vector<40x160xf32>
    %89 = arith.maximumf %87, %88 : vector<40x160xf32>
    %c0_90 = arith.constant 0 : index
    %c0_91 = arith.constant 0 : index
    %90 = vector.load %arg29[%c0_90, %c0_91] : memref<40x160xf32, #tpu.memory_space<vmem>>, vector<40x160xf32>
    tpu.vector_store %arg29[%c0_90, %c0_91], %89 {strides = array<i32>} : memref<40x160xf32, #tpu.memory_space<vmem>>, vector<40x160xf32>,
    %c0_92 = arith.constant 0 : index
    %c0_93 = arith.constant 0 : index
    %91 = vector.load %arg29[%c0_92, %c0_93] : memref<40x160xf32, #tpu.memory_space<vmem>>, vector<16x160xf32>
    %92 = arith.truncf %91 : vector<16x160xf32> to vector<16x160xbf16>
    %c0_94 = arith.constant 0 : index
    %c0_95 = arith.constant 0 : index
    %93 = vector.load %arg37[%c0_94, %c0_95] : memref<56x960xbf16, #tpu.memory_space<vmem>>, vector<16x160xbf16>
    tpu.vector_store %arg37[%c0_94, %c0_95], %92 {strides = array<i32>} : memref<56x960xbf16, #tpu.memory_space<vmem>>, vector<16x160xbf16>,
    %c1_96 = arith.constant 1 : index
    %c0_97 = arith.constant 0 : index
    %94 = vector.load %arg29[%c1_96, %c0_97] : memref<40x160xf32, #tpu.memory_space<vmem>>, vector<16x160xf32>
    %95 = arith.truncf %94 : vector<16x160xf32> to vector<16x160xbf16>
    %c0_98 = arith.constant 0 : index
    %c160 = arith.constant 160 : index
    %96 = vector.load %arg37[%c0_98, %c160] : memref<56x960xbf16, #tpu.memory_space<vmem>>, vector<16x160xbf16>
    tpu.vector_store %arg37[%c0_98, %c160], %95 {strides = array<i32>} : memref<56x960xbf16, #tpu.memory_space<vmem>>, vector<16x160xbf16>,
    %c2_99 = arith.constant 2 : index
    %c0_100 = arith.constant 0 : index
    %97 = vector.load %arg29[%c2_99, %c0_100] : memref<40x160xf32, #tpu.memory_space<vmem>>, vector<16x160xf32>
    %98 = arith.truncf %97 : vector<16x160xf32> to vector<16x160xbf16>
    %c0_101 = arith.constant 0 : index
    %c320 = arith.constant 320 : index
    %99 = vector.load %arg37[%c0_101, %c320] : memref<56x960xbf16, #tpu.memory_space<vmem>>, vector<16x160xbf16>
    tpu.vector_store %arg37[%c0_101, %c320], %98 {strides = array<i32>} : memref<56x960xbf16, #tpu.memory_space<vmem>>, vector<16x160xbf16>,
    %c3_102 = arith.constant 3 : index
    %c0_103 = arith.constant 0 : index
    %100 = vector.load %arg29[%c3_102, %c0_103] : memref<40x160xf32, #tpu.memory_space<vmem>>, vector<16x160xf32>
    %101 = arith.truncf %100 : vector<16x160xf32> to vector<16x160xbf16>
    %c0_104 = arith.constant 0 : index
    %c480 = arith.constant 480 : index
    %102 = vector.load %arg37[%c0_104, %c480] : memref<56x960xbf16, #tpu.memory_space<vmem>>, vector<16x160xbf16>
    tpu.vector_store %arg37[%c0_104, %c480], %101 {strides = array<i32>} : memref<56x960xbf16, #tpu.memory_space<vmem>>, vector<16x160xbf16>,
    %c4_105 = arith.constant 4 : index
    %c0_106 = arith.constant 0 : index
    %103 = vector.load %arg29[%c4_105, %c0_106] : memref<40x160xf32, #tpu.memory_space<vmem>>, vector<16x160xf32>
    %104 = arith.truncf %103 : vector<16x160xf32> to vector<16x160xbf16>
    %c0_107 = arith.constant 0 : index
    %c640 = arith.constant 640 : index
    %105 = vector.load %arg37[%c0_107, %c640] : memref<56x960xbf16, #tpu.memory_space<vmem>>, vector<16x160xbf16>
    tpu.vector_store %arg37[%c0_107, %c640], %104 {strides = array<i32>} : memref<56x960xbf16, #tpu.memory_space<vmem>>, vector<16x160xbf16>,
    %c20_108 = arith.constant 20 : index
    %c0_109 = arith.constant 0 : index
    %106 = vector.load %arg29[%c20_108, %c0_109] : memref<40x160xf32, #tpu.memory_space<vmem>>, vector<16x160xf32>
    %107 = arith.truncf %106 : vector<16x160xf32> to vector<16x160xbf16>
    %c16 = arith.constant 16 : index
    %c0_110 = arith.constant 0 : index
    %108 = vector.load %arg37[%c16, %c0_110] : memref<56x960xbf16, #tpu.memory_space<vmem>>, vector<16x160xbf16>
    tpu.vector_store %arg37[%c16, %c0_110], %107 {strides = array<i32>} : memref<56x960xbf16, #tpu.memory_space<vmem>>, vector<16x160xbf16>,
    %c21 = arith.constant 21 : index
    %c0_111 = arith.constant 0 : index
    %109 = vector.load %arg29[%c21, %c0_111] : memref<40x160xf32, #tpu.memory_space<vmem>>, vector<16x160xf32>
    %110 = arith.truncf %109 : vector<16x160xf32> to vector<16x160xbf16>
    %c16_112 = arith.constant 16 : index
    %c160_113 = arith.constant 160 : index
    %111 = vector.load %arg37[%c16_112, %c160_113] : memref<56x960xbf16, #tpu.memory_space<vmem>>, vector<16x160xbf16>
    tpu.vector_store %arg37[%c16_112, %c160_113], %110 {strides = array<i32>} : memref<56x960xbf16, #tpu.memory_space<vmem>>, vector<16x160xbf16>,
    %c22 = arith.constant 22 : index
    %c0_114 = arith.constant 0 : index
    %112 = vector.load %arg29[%c22, %c0_114] : memref<40x160xf32, #tpu.memory_space<vmem>>, vector<16x160xf32>
    %113 = arith.truncf %112 : vector<16x160xf32> to vector<16x160xbf16>
    %c16_115 = arith.constant 16 : index
    %c320_116 = arith.constant 320 : index
    %114 = vector.load %arg37[%c16_115, %c320_116] : memref<56x960xbf16, #tpu.memory_space<vmem>>, vector<16x160xbf16>
    tpu.vector_store %arg37[%c16_115, %c320_116], %113 {strides = array<i32>} : memref<56x960xbf16, #tpu.memory_space<vmem>>, vector<16x160xbf16>,
    %c23 = arith.constant 23 : index
    %c0_117 = arith.constant 0 : index
    %115 = vector.load %arg29[%c23, %c0_117] : memref<40x160xf32, #tpu.memory_space<vmem>>, vector<16x160xf32>
    %116 = arith.truncf %115 : vector<16x160xf32> to vector<16x160xbf16>
    %c16_118 = arith.constant 16 : index
    %c480_119 = arith.constant 480 : index
    %117 = vector.load %arg37[%c16_118, %c480_119] : memref<56x960xbf16, #tpu.memory_space<vmem>>, vector<16x160xbf16>
    tpu.vector_store %arg37[%c16_118, %c480_119], %116 {strides = array<i32>} : memref<56x960xbf16, #tpu.memory_space<vmem>>, vector<16x160xbf16>,
    %c24_120 = arith.constant 24 : index
    %c0_121 = arith.constant 0 : index
    %118 = vector.load %arg29[%c24_120, %c0_121] : memref<40x160xf32, #tpu.memory_space<vmem>>, vector<16x160xf32>
    %119 = arith.truncf %118 : vector<16x160xf32> to vector<16x160xbf16>
    %c16_122 = arith.constant 16 : index
    %c640_123 = arith.constant 640 : index
    %120 = vector.load %arg37[%c16_122, %c640_123] : memref<56x960xbf16, #tpu.memory_space<vmem>>, vector<16x160xbf16>
    tpu.vector_store %arg37[%c16_122, %c640_123], %119 {strides = array<i32>} : memref<56x960xbf16, #tpu.memory_space<vmem>>, vector<16x160xbf16>,
    %c0_124 = arith.constant 0 : index
    %c0_125 = arith.constant 0 : index
    %121 = vector.load %arg37[%c0_124, %c0_125] : memref<56x960xbf16, #tpu.memory_space<vmem>>, vector<32x800xbf16>
    %c0_126 = arith.constant 0 : index
    %c0_127 = arith.constant 0 : index
    %122 = vector.load %arg4[%c0_126, %c0_127] : memref<800x128xbf16, #tpu.memory_space<vmem>>, vector<800x128xbf16>
    %cst_128 = arith.constant dense<0.000000e+00> : vector<32x128xf32>
    %123 = tpu.matmul %121, %122, %cst_128 {dimension_numbers = #tpu.dot_dimension_numbers<[1], [0], [0], [1], [0, 0, 1, 1], [], []>} : vector<32x800xbf16>, vector<800x128xbf16>, vector<32x128xf32> -> vector<32x128xf32>
    %c0_129 = arith.constant 0 : index
    %c0_130 = arith.constant 0 : index
    %124 = vector.load %arg14[%c0_129, %c0_130] : memref<1x128xf32, #tpu.memory_space<vmem>>, vector<1x128xf32>
    %125 = vector.broadcast %124 : vector<1x128xf32> to vector<32x128xf32>
    %126 = arith.addf %123, %125 : vector<32x128xf32>
    %cst_131 = arith.constant 0.000000e+00 : f32
    %127 = vector.broadcast %cst_131 : f32 to vector<32x128xf32>
    %128 = arith.maximumf %126, %127 : vector<32x128xf32>
    %c0_132 = arith.constant 0 : index
    %c0_133 = arith.constant 0 : index
    %129 = vector.load %arg30[%c0_132, %c0_133] : memref<32x128xf32, #tpu.memory_space<vmem>>, vector<32x128xf32>
    tpu.vector_store %arg30[%c0_132, %c0_133], %128 {strides = array<i32>} : memref<32x128xf32, #tpu.memory_space<vmem>>, vector<32x128xf32>,
    %c0_134 = arith.constant 0 : index
    %c0_135 = arith.constant 0 : index
    %130 = vector.load %arg30[%c0_134, %c0_135] : memref<32x128xf32, #tpu.memory_space<vmem>>, vector<12x128xf32>
    %131 = arith.truncf %130 : vector<12x128xf32> to vector<12x128xbf16>
    %c0_136 = arith.constant 0 : index
    %c0_137 = arith.constant 0 : index
    %132 = vector.load %arg37[%c0_136, %c0_137] : memref<56x960xbf16, #tpu.memory_space<vmem>>, vector<12x128xbf16>
    tpu.vector_store %arg37[%c0_136, %c0_137], %131 {strides = array<i32>} : memref<56x960xbf16, #tpu.memory_space<vmem>>, vector<12x128xbf16>,
    %c1_138 = arith.constant 1 : index
    %c0_139 = arith.constant 0 : index
    %133 = vector.load %arg30[%c1_138, %c0_139] : memref<32x128xf32, #tpu.memory_space<vmem>>, vector<12x128xf32>
    %134 = arith.truncf %133 : vector<12x128xf32> to vector<12x128xbf16>
    %c0_140 = arith.constant 0 : index
    %c128 = arith.constant 128 : index
    %135 = vector.load %arg37[%c0_140, %c128] : memref<56x960xbf16, #tpu.memory_space<vmem>>, vector<12x128xbf16>
    tpu.vector_store %arg37[%c0_140, %c128], %134 {strides = array<i32>} : memref<56x960xbf16, #tpu.memory_space<vmem>>, vector<12x128xbf16>,
    %c2_141 = arith.constant 2 : index
    %c0_142 = arith.constant 0 : index
    %136 = vector.load %arg30[%c2_141, %c0_142] : memref<32x128xf32, #tpu.memory_space<vmem>>, vector<12x128xf32>
    %137 = arith.truncf %136 : vector<12x128xf32> to vector<12x128xbf16>
    %c0_143 = arith.constant 0 : index
    %c256 = arith.constant 256 : index
    %138 = vector.load %arg37[%c0_143, %c256] : memref<56x960xbf16, #tpu.memory_space<vmem>>, vector<12x128xbf16>
    tpu.vector_store %arg37[%c0_143, %c256], %137 {strides = array<i32>} : memref<56x960xbf16, #tpu.memory_space<vmem>>, vector<12x128xbf16>,
    %c3_144 = arith.constant 3 : index
    %c0_145 = arith.constant 0 : index
    %139 = vector.load %arg30[%c3_144, %c0_145] : memref<32x128xf32, #tpu.memory_space<vmem>>, vector<12x128xf32>
    %140 = arith.truncf %139 : vector<12x128xf32> to vector<12x128xbf16>
    %c0_146 = arith.constant 0 : index
    %c384_147 = arith.constant 384 : index
    %141 = vector.load %arg37[%c0_146, %c384_147] : memref<56x960xbf16, #tpu.memory_space<vmem>>, vector<12x128xbf16>
    tpu.vector_store %arg37[%c0_146, %c384_147], %140 {strides = array<i32>} : memref<56x960xbf16, #tpu.memory_space<vmem>>, vector<12x128xbf16>,
    %c4_148 = arith.constant 4 : index
    %c0_149 = arith.constant 0 : index
    %142 = vector.load %arg30[%c4_148, %c0_149] : memref<32x128xf32, #tpu.memory_space<vmem>>, vector<12x128xf32>
    %143 = arith.truncf %142 : vector<12x128xf32> to vector<12x128xbf16>
    %c0_150 = arith.constant 0 : index
    %c512 = arith.constant 512 : index
    %144 = vector.load %arg37[%c0_150, %c512] : memref<56x960xbf16, #tpu.memory_space<vmem>>, vector<12x128xbf16>
    tpu.vector_store %arg37[%c0_150, %c512], %143 {strides = array<i32>} : memref<56x960xbf16, #tpu.memory_space<vmem>>, vector<12x128xbf16>,
    %c16_151 = arith.constant 16 : index
    %c0_152 = arith.constant 0 : index
    %145 = vector.load %arg30[%c16_151, %c0_152] : memref<32x128xf32, #tpu.memory_space<vmem>>, vector<12x128xf32>
    %146 = arith.truncf %145 : vector<12x128xf32> to vector<12x128xbf16>
    %c12 = arith.constant 12 : index
    %c0_153 = arith.constant 0 : index
    %147 = vector.load %arg37[%c12, %c0_153] : memref<56x960xbf16, #tpu.memory_space<vmem>>, vector<12x128xbf16>
    tpu.vector_store %arg37[%c12, %c0_153], %146 {strides = array<i32>} : memref<56x960xbf16, #tpu.memory_space<vmem>>, vector<12x128xbf16>,
    %c17 = arith.constant 17 : index
    %c0_154 = arith.constant 0 : index
    %148 = vector.load %arg30[%c17, %c0_154] : memref<32x128xf32, #tpu.memory_space<vmem>>, vector<12x128xf32>
    %149 = arith.truncf %148 : vector<12x128xf32> to vector<12x128xbf16>
    %c12_155 = arith.constant 12 : index
    %c128_156 = arith.constant 128 : index
    %150 = vector.load %arg37[%c12_155, %c128_156] : memref<56x960xbf16, #tpu.memory_space<vmem>>, vector<12x128xbf16>
    tpu.vector_store %arg37[%c12_155, %c128_156], %149 {strides = array<i32>} : memref<56x960xbf16, #tpu.memory_space<vmem>>, vector<12x128xbf16>,
    %c18 = arith.constant 18 : index
    %c0_157 = arith.constant 0 : index
    %151 = vector.load %arg30[%c18, %c0_157] : memref<32x128xf32, #tpu.memory_space<vmem>>, vector<12x128xf32>
    %152 = arith.truncf %151 : vector<12x128xf32> to vector<12x128xbf16>
    %c12_158 = arith.constant 12 : index
    %c256_159 = arith.constant 256 : index
    %153 = vector.load %arg37[%c12_158, %c256_159] : memref<56x960xbf16, #tpu.memory_space<vmem>>, vector<12x128xbf16>
    tpu.vector_store %arg37[%c12_158, %c256_159], %152 {strides = array<i32>} : memref<56x960xbf16, #tpu.memory_space<vmem>>, vector<12x128xbf16>,
    %c19 = arith.constant 19 : index
    %c0_160 = arith.constant 0 : index
    %154 = vector.load %arg30[%c19, %c0_160] : memref<32x128xf32, #tpu.memory_space<vmem>>, vector<12x128xf32>
    %155 = arith.truncf %154 : vector<12x128xf32> to vector<12x128xbf16>
    %c12_161 = arith.constant 12 : index
    %c384_162 = arith.constant 384 : index
    %156 = vector.load %arg37[%c12_161, %c384_162] : memref<56x960xbf16, #tpu.memory_space<vmem>>, vector<12x128xbf16>
    tpu.vector_store %arg37[%c12_161, %c384_162], %155 {strides = array<i32>} : memref<56x960xbf16, #tpu.memory_space<vmem>>, vector<12x128xbf16>,
    %c20_163 = arith.constant 20 : index
    %c0_164 = arith.constant 0 : index
    %157 = vector.load %arg30[%c20_163, %c0_164] : memref<32x128xf32, #tpu.memory_space<vmem>>, vector<12x128xf32>
    %158 = arith.truncf %157 : vector<12x128xf32> to vector<12x128xbf16>
    %c12_165 = arith.constant 12 : index
    %c512_166 = arith.constant 512 : index
    %159 = vector.load %arg37[%c12_165, %c512_166] : memref<56x960xbf16, #tpu.memory_space<vmem>>, vector<12x128xbf16>
    tpu.vector_store %arg37[%c12_165, %c512_166], %158 {strides = array<i32>} : memref<56x960xbf16, #tpu.memory_space<vmem>>, vector<12x128xbf16>,
    %c0_167 = arith.constant 0 : index
    %c0_168 = arith.constant 0 : index
    %160 = vector.load %arg37[%c0_167, %c0_168] : memref<56x960xbf16, #tpu.memory_space<vmem>>, vector<24x640xbf16>
    %c0_169 = arith.constant 0 : index
    %c0_170 = arith.constant 0 : index
    %161 = vector.load %arg5[%c0_169, %c0_170] : memref<640x96xbf16, #tpu.memory_space<vmem>>, vector<640x96xbf16>
    %cst_171 = arith.constant dense<0.000000e+00> : vector<24x96xf32>
    %162 = tpu.matmul %160, %161, %cst_171 {dimension_numbers = #tpu.dot_dimension_numbers<[1], [0], [0], [1], [0, 0, 1, 1], [], []>} : vector<24x640xbf16>, vector<640x96xbf16>, vector<24x96xf32> -> vector<24x96xf32>
    %c0_172 = arith.constant 0 : index
    %c0_173 = arith.constant 0 : index
    %163 = vector.load %arg15[%c0_172, %c0_173] : memref<1x96xf32, #tpu.memory_space<vmem>>, vector<1x96xf32>
    %164 = vector.broadcast %163 : vector<1x96xf32> to vector<24x96xf32>
    %165 = arith.addf %162, %164 : vector<24x96xf32>
    %cst_174 = arith.constant 0.000000e+00 : f32
    %166 = vector.broadcast %cst_174 : f32 to vector<24x96xf32>
    %167 = arith.maximumf %165, %166 : vector<24x96xf32>
    %c0_175 = arith.constant 0 : index
    %c0_176 = arith.constant 0 : index
    %168 = vector.load %arg31[%c0_175, %c0_176] : memref<24x96xf32, #tpu.memory_space<vmem>>, vector<24x96xf32>
    tpu.vector_store %arg31[%c0_175, %c0_176], %167 {strides = array<i32>} : memref<24x96xf32, #tpu.memory_space<vmem>>, vector<24x96xf32>,
    %c0_177 = arith.constant 0 : index
    %c0_178 = arith.constant 0 : index
    %169 = vector.load %arg31[%c0_177, %c0_178] : memref<24x96xf32, #tpu.memory_space<vmem>>, vector<8x96xf32>
    %170 = arith.truncf %169 : vector<8x96xf32> to vector<8x96xbf16>
    %c0_179 = arith.constant 0 : index
    %c0_180 = arith.constant 0 : index
    %171 = vector.load %arg37[%c0_179, %c0_180] : memref<56x960xbf16, #tpu.memory_space<vmem>>, vector<8x96xbf16>
    tpu.vector_store %arg37[%c0_179, %c0_180], %170 {strides = array<i32>} : memref<56x960xbf16, #tpu.memory_space<vmem>>, vector<8x96xbf16>,
    %c1_181 = arith.constant 1 : index
    %c0_182 = arith.constant 0 : index
    %172 = vector.load %arg31[%c1_181, %c0_182] : memref<24x96xf32, #tpu.memory_space<vmem>>, vector<8x96xf32>
    %173 = arith.truncf %172 : vector<8x96xf32> to vector<8x96xbf16>
    %c0_183 = arith.constant 0 : index
    %c96 = arith.constant 96 : index
    %174 = vector.load %arg37[%c0_183, %c96] : memref<56x960xbf16, #tpu.memory_space<vmem>>, vector<8x96xbf16>
    tpu.vector_store %arg37[%c0_183, %c96], %173 {strides = array<i32>} : memref<56x960xbf16, #tpu.memory_space<vmem>>, vector<8x96xbf16>,
    %c2_184 = arith.constant 2 : index
    %c0_185 = arith.constant 0 : index
    %175 = vector.load %arg31[%c2_184, %c0_185] : memref<24x96xf32, #tpu.memory_space<vmem>>, vector<8x96xf32>
    %176 = arith.truncf %175 : vector<8x96xf32> to vector<8x96xbf16>
    %c0_186 = arith.constant 0 : index
    %c192_187 = arith.constant 192 : index
    %177 = vector.load %arg37[%c0_186, %c192_187] : memref<56x960xbf16, #tpu.memory_space<vmem>>, vector<8x96xbf16>
    tpu.vector_store %arg37[%c0_186, %c192_187], %176 {strides = array<i32>} : memref<56x960xbf16, #tpu.memory_space<vmem>>, vector<8x96xbf16>,
    %c3_188 = arith.constant 3 : index
    %c0_189 = arith.constant 0 : index
    %178 = vector.load %arg31[%c3_188, %c0_189] : memref<24x96xf32, #tpu.memory_space<vmem>>, vector<8x96xf32>
    %179 = arith.truncf %178 : vector<8x96xf32> to vector<8x96xbf16>
    %c0_190 = arith.constant 0 : index
    %c288 = arith.constant 288 : index
    %180 = vector.load %arg37[%c0_190, %c288] : memref<56x960xbf16, #tpu.memory_space<vmem>>, vector<8x96xbf16>
    tpu.vector_store %arg37[%c0_190, %c288], %179 {strides = array<i32>} : memref<56x960xbf16, #tpu.memory_space<vmem>>, vector<8x96xbf16>,
    %c4_191 = arith.constant 4 : index
    %c0_192 = arith.constant 0 : index
    %181 = vector.load %arg31[%c4_191, %c0_192] : memref<24x96xf32, #tpu.memory_space<vmem>>, vector<8x96xf32>
    %182 = arith.truncf %181 : vector<8x96xf32> to vector<8x96xbf16>
    %c0_193 = arith.constant 0 : index
    %c384_194 = arith.constant 384 : index
    %183 = vector.load %arg37[%c0_193, %c384_194] : memref<56x960xbf16, #tpu.memory_space<vmem>>, vector<8x96xbf16>
    tpu.vector_store %arg37[%c0_193, %c384_194], %182 {strides = array<i32>} : memref<56x960xbf16, #tpu.memory_space<vmem>>, vector<8x96xbf16>,
    %c12_195 = arith.constant 12 : index
    %c0_196 = arith.constant 0 : index
    %184 = vector.load %arg31[%c12_195, %c0_196] : memref<24x96xf32, #tpu.memory_space<vmem>>, vector<8x96xf32>
    %185 = arith.truncf %184 : vector<8x96xf32> to vector<8x96xbf16>
    %c8 = arith.constant 8 : index
    %c0_197 = arith.constant 0 : index
    %186 = vector.load %arg37[%c8, %c0_197] : memref<56x960xbf16, #tpu.memory_space<vmem>>, vector<8x96xbf16>
    tpu.vector_store %arg37[%c8, %c0_197], %185 {strides = array<i32>} : memref<56x960xbf16, #tpu.memory_space<vmem>>, vector<8x96xbf16>,
    %c13 = arith.constant 13 : index
    %c0_198 = arith.constant 0 : index
    %187 = vector.load %arg31[%c13, %c0_198] : memref<24x96xf32, #tpu.memory_space<vmem>>, vector<8x96xf32>
    %188 = arith.truncf %187 : vector<8x96xf32> to vector<8x96xbf16>
    %c8_199 = arith.constant 8 : index
    %c96_200 = arith.constant 96 : index
    %189 = vector.load %arg37[%c8_199, %c96_200] : memref<56x960xbf16, #tpu.memory_space<vmem>>, vector<8x96xbf16>
    tpu.vector_store %arg37[%c8_199, %c96_200], %188 {strides = array<i32>} : memref<56x960xbf16, #tpu.memory_space<vmem>>, vector<8x96xbf16>,
    %c14 = arith.constant 14 : index
    %c0_201 = arith.constant 0 : index
    %190 = vector.load %arg31[%c14, %c0_201] : memref<24x96xf32, #tpu.memory_space<vmem>>, vector<8x96xf32>
    %191 = arith.truncf %190 : vector<8x96xf32> to vector<8x96xbf16>
    %c8_202 = arith.constant 8 : index
    %c192_203 = arith.constant 192 : index
    %192 = vector.load %arg37[%c8_202, %c192_203] : memref<56x960xbf16, #tpu.memory_space<vmem>>, vector<8x96xbf16>
    tpu.vector_store %arg37[%c8_202, %c192_203], %191 {strides = array<i32>} : memref<56x960xbf16, #tpu.memory_space<vmem>>, vector<8x96xbf16>,
    %c15 = arith.constant 15 : index
    %c0_204 = arith.constant 0 : index
    %193 = vector.load %arg31[%c15, %c0_204] : memref<24x96xf32, #tpu.memory_space<vmem>>, vector<8x96xf32>
    %194 = arith.truncf %193 : vector<8x96xf32> to vector<8x96xbf16>
    %c8_205 = arith.constant 8 : index
    %c288_206 = arith.constant 288 : index
    %195 = vector.load %arg37[%c8_205, %c288_206] : memref<56x960xbf16, #tpu.memory_space<vmem>>, vector<8x96xbf16>
    tpu.vector_store %arg37[%c8_205, %c288_206], %194 {strides = array<i32>} : memref<56x960xbf16, #tpu.memory_space<vmem>>, vector<8x96xbf16>,
    %c16_207 = arith.constant 16 : index
    %c0_208 = arith.constant 0 : index
    %196 = vector.load %arg31[%c16_207, %c0_208] : memref<24x96xf32, #tpu.memory_space<vmem>>, vector<8x96xf32>
    %197 = arith.truncf %196 : vector<8x96xf32> to vector<8x96xbf16>
    %c8_209 = arith.constant 8 : index
    %c384_210 = arith.constant 384 : index
    %198 = vector.load %arg37[%c8_209, %c384_210] : memref<56x960xbf16, #tpu.memory_space<vmem>>, vector<8x96xbf16>
    tpu.vector_store %arg37[%c8_209, %c384_210], %197 {strides = array<i32>} : memref<56x960xbf16, #tpu.memory_space<vmem>>, vector<8x96xbf16>,
    %c0_211 = arith.constant 0 : index
    %c0_212 = arith.constant 0 : index
    %199 = vector.load %arg37[%c0_211, %c0_212] : memref<56x960xbf16, #tpu.memory_space<vmem>>, vector<16x480xbf16>
    %c0_213 = arith.constant 0 : index
    %c0_214 = arith.constant 0 : index
    %200 = vector.load %arg6[%c0_213, %c0_214] : memref<480x64xbf16, #tpu.memory_space<vmem>>, vector<480x64xbf16>
    %cst_215 = arith.constant dense<0.000000e+00> : vector<16x64xf32>
    %201 = tpu.matmul %199, %200, %cst_215 {dimension_numbers = #tpu.dot_dimension_numbers<[1], [0], [0], [1], [0, 0, 1, 1], [], []>} : vector<16x480xbf16>, vector<480x64xbf16>, vector<16x64xf32> -> vector<16x64xf32>
    %c0_216 = arith.constant 0 : index
    %c0_217 = arith.constant 0 : index
    %202 = vector.load %arg16[%c0_216, %c0_217] : memref<1x64xf32, #tpu.memory_space<vmem>>, vector<1x64xf32>
    %203 = vector.broadcast %202 : vector<1x64xf32> to vector<16x64xf32>
    %204 = arith.addf %201, %203 : vector<16x64xf32>
    %cst_218 = arith.constant 0.000000e+00 : f32
    %205 = vector.broadcast %cst_218 : f32 to vector<16x64xf32>
    %206 = arith.maximumf %204, %205 : vector<16x64xf32>
    %207 = vector.extract_strided_slice %206 {offsets = [0, 0], sizes = [8, 64], strides = [1, 1]} : vector<16x64xf32> to vector<8x64xf32>
    %c4_219 = arith.constant 4 : index
    %c0_220 = arith.constant 0 : index
    %208 = vector.load %arg32[%c4_219, %c0_220] : memref<32x64xf32, #tpu.memory_space<vmem>>, vector<8x64xf32>
    tpu.vector_store %arg32[%c4_219, %c0_220], %207 {strides = array<i32>} : memref<32x64xf32, #tpu.memory_space<vmem>>, vector<8x64xf32>,
    %209 = vector.extract_strided_slice %206 {offsets = [8, 0], sizes = [8, 64], strides = [1, 1]} : vector<16x64xf32> to vector<8x64xf32>
    %c20_221 = arith.constant 20 : index
    %c0_222 = arith.constant 0 : index
    %210 = vector.load %arg32[%c20_221, %c0_222] : memref<32x64xf32, #tpu.memory_space<vmem>>, vector<8x64xf32>
    tpu.vector_store %arg32[%c20_221, %c0_222], %209 {strides = array<i32>} : memref<32x64xf32, #tpu.memory_space<vmem>>, vector<8x64xf32>,
    %c0_223 = arith.constant 0 : index
    %c0_224 = arith.constant 0 : index
    %211 = vector.load %arg31[%c0_223, %c0_224] : memref<24x96xf32, #tpu.memory_space<vmem>>, vector<24x96xf32>
    %c0_225 = arith.constant 0 : index
    %c0_226 = arith.constant 0 : index
    %212 = vector.load %arg32[%c0_225, %c0_226] : memref<32x64xf32, #tpu.memory_space<vmem>>, vector<12x64xf32>
    %213 = arith.truncf %212 : vector<12x64xf32> to vector<12x64xbf16>
    %c0_227 = arith.constant 0 : index
    %c0_228 = arith.constant 0 : index
    %214 = vector.load %arg37[%c0_227, %c0_228] : memref<56x960xbf16, #tpu.memory_space<vmem>>, vector<12x64xbf16>
    tpu.vector_store %arg37[%c0_227, %c0_228], %213 {strides = array<i32>} : memref<56x960xbf16, #tpu.memory_space<vmem>>, vector<12x64xbf16>,
    %c1_229 = arith.constant 1 : index
    %c0_230 = arith.constant 0 : index
    %215 = vector.load %arg32[%c1_229, %c0_230] : memref<32x64xf32, #tpu.memory_space<vmem>>, vector<12x64xf32>
    %216 = arith.truncf %215 : vector<12x64xf32> to vector<12x64xbf16>
    %c0_231 = arith.constant 0 : index
    %c64 = arith.constant 64 : index
    %217 = vector.load %arg37[%c0_231, %c64] : memref<56x960xbf16, #tpu.memory_space<vmem>>, vector<12x64xbf16>
    tpu.vector_store %arg37[%c0_231, %c64], %216 {strides = array<i32>} : memref<56x960xbf16, #tpu.memory_space<vmem>>, vector<12x64xbf16>,
    %c2_232 = arith.constant 2 : index
    %c0_233 = arith.constant 0 : index
    %218 = vector.load %arg32[%c2_232, %c0_233] : memref<32x64xf32, #tpu.memory_space<vmem>>, vector<12x64xf32>
    %219 = arith.truncf %218 : vector<12x64xf32> to vector<12x64xbf16>
    %c0_234 = arith.constant 0 : index
    %c128_235 = arith.constant 128 : index
    %220 = vector.load %arg37[%c0_234, %c128_235] : memref<56x960xbf16, #tpu.memory_space<vmem>>, vector<12x64xbf16>
    tpu.vector_store %arg37[%c0_234, %c128_235], %219 {strides = array<i32>} : memref<56x960xbf16, #tpu.memory_space<vmem>>, vector<12x64xbf16>,
    %c3_236 = arith.constant 3 : index
    %c0_237 = arith.constant 0 : index
    %221 = vector.load %arg32[%c3_236, %c0_237] : memref<32x64xf32, #tpu.memory_space<vmem>>, vector<12x64xf32>
    %222 = arith.truncf %221 : vector<12x64xf32> to vector<12x64xbf16>
    %c0_238 = arith.constant 0 : index
    %c192_239 = arith.constant 192 : index
    %223 = vector.load %arg37[%c0_238, %c192_239] : memref<56x960xbf16, #tpu.memory_space<vmem>>, vector<12x64xbf16>
    tpu.vector_store %arg37[%c0_238, %c192_239], %222 {strides = array<i32>} : memref<56x960xbf16, #tpu.memory_space<vmem>>, vector<12x64xbf16>,
    %c4_240 = arith.constant 4 : index
    %c0_241 = arith.constant 0 : index
    %224 = vector.load %arg32[%c4_240, %c0_241] : memref<32x64xf32, #tpu.memory_space<vmem>>, vector<12x64xf32>
    %225 = arith.truncf %224 : vector<12x64xf32> to vector<12x64xbf16>
    %c0_242 = arith.constant 0 : index
    %c256_243 = arith.constant 256 : index
    %226 = vector.load %arg37[%c0_242, %c256_243] : memref<56x960xbf16, #tpu.memory_space<vmem>>, vector<12x64xbf16>
    tpu.vector_store %arg37[%c0_242, %c256_243], %225 {strides = array<i32>} : memref<56x960xbf16, #tpu.memory_space<vmem>>, vector<12x64xbf16>,
    %c16_244 = arith.constant 16 : index
    %c0_245 = arith.constant 0 : index
    %227 = vector.load %arg32[%c16_244, %c0_245] : memref<32x64xf32, #tpu.memory_space<vmem>>, vector<12x64xf32>
    %228 = arith.truncf %227 : vector<12x64xf32> to vector<12x64xbf16>
    %c12_246 = arith.constant 12 : index
    %c0_247 = arith.constant 0 : index
    %229 = vector.load %arg37[%c12_246, %c0_247] : memref<56x960xbf16, #tpu.memory_space<vmem>>, vector<12x64xbf16>
    tpu.vector_store %arg37[%c12_246, %c0_247], %228 {strides = array<i32>} : memref<56x960xbf16, #tpu.memory_space<vmem>>, vector<12x64xbf16>,
    %c17_248 = arith.constant 17 : index
    %c0_249 = arith.constant 0 : index
    %230 = vector.load %arg32[%c17_248, %c0_249] : memref<32x64xf32, #tpu.memory_space<vmem>>, vector<12x64xf32>
    %231 = arith.truncf %230 : vector<12x64xf32> to vector<12x64xbf16>
    %c12_250 = arith.constant 12 : index
    %c64_251 = arith.constant 64 : index
    %232 = vector.load %arg37[%c12_250, %c64_251] : memref<56x960xbf16, #tpu.memory_space<vmem>>, vector<12x64xbf16>
    tpu.vector_store %arg37[%c12_250, %c64_251], %231 {strides = array<i32>} : memref<56x960xbf16, #tpu.memory_space<vmem>>, vector<12x64xbf16>,
    %c18_252 = arith.constant 18 : index
    %c0_253 = arith.constant 0 : index
    %233 = vector.load %arg32[%c18_252, %c0_253] : memref<32x64xf32, #tpu.memory_space<vmem>>, vector<12x64xf32>
    %234 = arith.truncf %233 : vector<12x64xf32> to vector<12x64xbf16>
    %c12_254 = arith.constant 12 : index
    %c128_255 = arith.constant 128 : index
    %235 = vector.load %arg37[%c12_254, %c128_255] : memref<56x960xbf16, #tpu.memory_space<vmem>>, vector<12x64xbf16>
    tpu.vector_store %arg37[%c12_254, %c128_255], %234 {strides = array<i32>} : memref<56x960xbf16, #tpu.memory_space<vmem>>, vector<12x64xbf16>,
    %c19_256 = arith.constant 19 : index
    %c0_257 = arith.constant 0 : index
    %236 = vector.load %arg32[%c19_256, %c0_257] : memref<32x64xf32, #tpu.memory_space<vmem>>, vector<12x64xf32>
    %237 = arith.truncf %236 : vector<12x64xf32> to vector<12x64xbf16>
    %c12_258 = arith.constant 12 : index
    %c192_259 = arith.constant 192 : index
    %238 = vector.load %arg37[%c12_258, %c192_259] : memref<56x960xbf16, #tpu.memory_space<vmem>>, vector<12x64xbf16>
    tpu.vector_store %arg37[%c12_258, %c192_259], %237 {strides = array<i32>} : memref<56x960xbf16, #tpu.memory_space<vmem>>, vector<12x64xbf16>,
    %c20_260 = arith.constant 20 : index
    %c0_261 = arith.constant 0 : index
    %239 = vector.load %arg32[%c20_260, %c0_261] : memref<32x64xf32, #tpu.memory_space<vmem>>, vector<12x64xf32>
    %240 = arith.truncf %239 : vector<12x64xf32> to vector<12x64xbf16>
    %c12_262 = arith.constant 12 : index
    %c256_263 = arith.constant 256 : index
    %241 = vector.load %arg37[%c12_262, %c256_263] : memref<56x960xbf16, #tpu.memory_space<vmem>>, vector<12x64xbf16>
    tpu.vector_store %arg37[%c12_262, %c256_263], %240 {strides = array<i32>} : memref<56x960xbf16, #tpu.memory_space<vmem>>, vector<12x64xbf16>,
    %c0_264 = arith.constant 0 : index
    %c0_265 = arith.constant 0 : index
    %242 = vector.load %arg37[%c0_264, %c0_265] : memref<56x960xbf16, #tpu.memory_space<vmem>>, vector<24x320xbf16>
    %c0_266 = arith.constant 0 : index
    %c0_267 = arith.constant 0 : index
    %243 = vector.load %arg7[%c0_266, %c0_267] : memref<320x96xbf16, #tpu.memory_space<vmem>>, vector<320x96xbf16>
    %cst_268 = arith.constant dense<0.000000e+00> : vector<24x96xf32>
    %244 = tpu.matmul %242, %243, %cst_268 {dimension_numbers = #tpu.dot_dimension_numbers<[1], [0], [0], [1], [0, 0, 1, 1], [], []>} : vector<24x320xbf16>, vector<320x96xbf16>, vector<24x96xf32> -> vector<24x96xf32>
    %c0_269 = arith.constant 0 : index
    %c0_270 = arith.constant 0 : index
    %245 = vector.load %arg17[%c0_269, %c0_270] : memref<1x96xf32, #tpu.memory_space<vmem>>, vector<1x96xf32>
    %246 = vector.broadcast %245 : vector<1x96xf32> to vector<24x96xf32>
    %247 = arith.addf %244, %246 : vector<24x96xf32>
    %248 = arith.addf %247, %211 : vector<24x96xf32>
    %cst_271 = arith.constant 0.000000e+00 : f32
    %249 = vector.broadcast %cst_271 : f32 to vector<24x96xf32>
    %250 = arith.maximumf %248, %249 : vector<24x96xf32>
    %251 = vector.extract_strided_slice %250 {offsets = [0, 0], sizes = [12, 96], strides = [1, 1]} : vector<24x96xf32> to vector<12x96xf32>
    %c4_272 = arith.constant 4 : index
    %c0_273 = arith.constant 0 : index
    %252 = vector.load %arg33[%c4_272, %c0_273] : memref<40x96xf32, #tpu.memory_space<vmem>>, vector<12x96xf32>
    tpu.vector_store %arg33[%c4_272, %c0_273], %251 {strides = array<i32>} : memref<40x96xf32, #tpu.memory_space<vmem>>, vector<12x96xf32>,
    %253 = vector.extract_strided_slice %250 {offsets = [12, 0], sizes = [12, 96], strides = [1, 1]} : vector<24x96xf32> to vector<12x96xf32>
    %c24_274 = arith.constant 24 : index
    %c0_275 = arith.constant 0 : index
    %254 = vector.load %arg33[%c24_274, %c0_275] : memref<40x96xf32, #tpu.memory_space<vmem>>, vector<12x96xf32>
    tpu.vector_store %arg33[%c24_274, %c0_275], %253 {strides = array<i32>} : memref<40x96xf32, #tpu.memory_space<vmem>>, vector<12x96xf32>,
    %c0_276 = arith.constant 0 : index
    %c0_277 = arith.constant 0 : index
    %255 = vector.load %arg33[%c0_276, %c0_277] : memref<40x96xf32, #tpu.memory_space<vmem>>, vector<16x96xf32>
    %256 = arith.truncf %255 : vector<16x96xf32> to vector<16x96xbf16>
    %c0_278 = arith.constant 0 : index
    %c0_279 = arith.constant 0 : index
    %257 = vector.load %arg37[%c0_278, %c0_279] : memref<56x960xbf16, #tpu.memory_space<vmem>>, vector<16x96xbf16>
    tpu.vector_store %arg37[%c0_278, %c0_279], %256 {strides = array<i32>} : memref<56x960xbf16, #tpu.memory_space<vmem>>, vector<16x96xbf16>,
    %c1_280 = arith.constant 1 : index
    %c0_281 = arith.constant 0 : index
    %258 = vector.load %arg33[%c1_280, %c0_281] : memref<40x96xf32, #tpu.memory_space<vmem>>, vector<16x96xf32>
    %259 = arith.truncf %258 : vector<16x96xf32> to vector<16x96xbf16>
    %c0_282 = arith.constant 0 : index
    %c96_283 = arith.constant 96 : index
    %260 = vector.load %arg37[%c0_282, %c96_283] : memref<56x960xbf16, #tpu.memory_space<vmem>>, vector<16x96xbf16>
    tpu.vector_store %arg37[%c0_282, %c96_283], %259 {strides = array<i32>} : memref<56x960xbf16, #tpu.memory_space<vmem>>, vector<16x96xbf16>,
    %c2_284 = arith.constant 2 : index
    %c0_285 = arith.constant 0 : index
    %261 = vector.load %arg33[%c2_284, %c0_285] : memref<40x96xf32, #tpu.memory_space<vmem>>, vector<16x96xf32>
    %262 = arith.truncf %261 : vector<16x96xf32> to vector<16x96xbf16>
    %c0_286 = arith.constant 0 : index
    %c192_287 = arith.constant 192 : index
    %263 = vector.load %arg37[%c0_286, %c192_287] : memref<56x960xbf16, #tpu.memory_space<vmem>>, vector<16x96xbf16>
    tpu.vector_store %arg37[%c0_286, %c192_287], %262 {strides = array<i32>} : memref<56x960xbf16, #tpu.memory_space<vmem>>, vector<16x96xbf16>,
    %c3_288 = arith.constant 3 : index
    %c0_289 = arith.constant 0 : index
    %264 = vector.load %arg33[%c3_288, %c0_289] : memref<40x96xf32, #tpu.memory_space<vmem>>, vector<16x96xf32>
    %265 = arith.truncf %264 : vector<16x96xf32> to vector<16x96xbf16>
    %c0_290 = arith.constant 0 : index
    %c288_291 = arith.constant 288 : index
    %266 = vector.load %arg37[%c0_290, %c288_291] : memref<56x960xbf16, #tpu.memory_space<vmem>>, vector<16x96xbf16>
    tpu.vector_store %arg37[%c0_290, %c288_291], %265 {strides = array<i32>} : memref<56x960xbf16, #tpu.memory_space<vmem>>, vector<16x96xbf16>,
    %c4_292 = arith.constant 4 : index
    %c0_293 = arith.constant 0 : index
    %267 = vector.load %arg33[%c4_292, %c0_293] : memref<40x96xf32, #tpu.memory_space<vmem>>, vector<16x96xf32>
    %268 = arith.truncf %267 : vector<16x96xf32> to vector<16x96xbf16>
    %c0_294 = arith.constant 0 : index
    %c384_295 = arith.constant 384 : index
    %269 = vector.load %arg37[%c0_294, %c384_295] : memref<56x960xbf16, #tpu.memory_space<vmem>>, vector<16x96xbf16>
    tpu.vector_store %arg37[%c0_294, %c384_295], %268 {strides = array<i32>} : memref<56x960xbf16, #tpu.memory_space<vmem>>, vector<16x96xbf16>,
    %c20_296 = arith.constant 20 : index
    %c0_297 = arith.constant 0 : index
    %270 = vector.load %arg33[%c20_296, %c0_297] : memref<40x96xf32, #tpu.memory_space<vmem>>, vector<16x96xf32>
    %271 = arith.truncf %270 : vector<16x96xf32> to vector<16x96xbf16>
    %c16_298 = arith.constant 16 : index
    %c0_299 = arith.constant 0 : index
    %272 = vector.load %arg37[%c16_298, %c0_299] : memref<56x960xbf16, #tpu.memory_space<vmem>>, vector<16x96xbf16>
    tpu.vector_store %arg37[%c16_298, %c0_299], %271 {strides = array<i32>} : memref<56x960xbf16, #tpu.memory_space<vmem>>, vector<16x96xbf16>,
    %c21_300 = arith.constant 21 : index
    %c0_301 = arith.constant 0 : index
    %273 = vector.load %arg33[%c21_300, %c0_301] : memref<40x96xf32, #tpu.memory_space<vmem>>, vector<16x96xf32>
    %274 = arith.truncf %273 : vector<16x96xf32> to vector<16x96xbf16>
    %c16_302 = arith.constant 16 : index
    %c96_303 = arith.constant 96 : index
    %275 = vector.load %arg37[%c16_302, %c96_303] : memref<56x960xbf16, #tpu.memory_space<vmem>>, vector<16x96xbf16>
    tpu.vector_store %arg37[%c16_302, %c96_303], %274 {strides = array<i32>} : memref<56x960xbf16, #tpu.memory_space<vmem>>, vector<16x96xbf16>,
    %c22_304 = arith.constant 22 : index
    %c0_305 = arith.constant 0 : index
    %276 = vector.load %arg33[%c22_304, %c0_305] : memref<40x96xf32, #tpu.memory_space<vmem>>, vector<16x96xf32>
    %277 = arith.truncf %276 : vector<16x96xf32> to vector<16x96xbf16>
    %c16_306 = arith.constant 16 : index
    %c192_307 = arith.constant 192 : index
    %278 = vector.load %arg37[%c16_306, %c192_307] : memref<56x960xbf16, #tpu.memory_space<vmem>>, vector<16x96xbf16>
    tpu.vector_store %arg37[%c16_306, %c192_307], %277 {strides = array<i32>} : memref<56x960xbf16, #tpu.memory_space<vmem>>, vector<16x96xbf16>,
    %c23_308 = arith.constant 23 : index
    %c0_309 = arith.constant 0 : index
    %279 = vector.load %arg33[%c23_308, %c0_309] : memref<40x96xf32, #tpu.memory_space<vmem>>, vector<16x96xf32>
    %280 = arith.truncf %279 : vector<16x96xf32> to vector<16x96xbf16>
    %c16_310 = arith.constant 16 : index
    %c288_311 = arith.constant 288 : index
    %281 = vector.load %arg37[%c16_310, %c288_311] : memref<56x960xbf16, #tpu.memory_space<vmem>>, vector<16x96xbf16>
    tpu.vector_store %arg37[%c16_310, %c288_311], %280 {strides = array<i32>} : memref<56x960xbf16, #tpu.memory_space<vmem>>, vector<16x96xbf16>,
    %c24_312 = arith.constant 24 : index
    %c0_313 = arith.constant 0 : index
    %282 = vector.load %arg33[%c24_312, %c0_313] : memref<40x96xf32, #tpu.memory_space<vmem>>, vector<16x96xf32>
    %283 = arith.truncf %282 : vector<16x96xf32> to vector<16x96xbf16>
    %c16_314 = arith.constant 16 : index
    %c384_315 = arith.constant 384 : index
    %284 = vector.load %arg37[%c16_314, %c384_315] : memref<56x960xbf16, #tpu.memory_space<vmem>>, vector<16x96xbf16>
    tpu.vector_store %arg37[%c16_314, %c384_315], %283 {strides = array<i32>} : memref<56x960xbf16, #tpu.memory_space<vmem>>, vector<16x96xbf16>,
    %c0_316 = arith.constant 0 : index
    %c0_317 = arith.constant 0 : index
    %285 = vector.load %arg37[%c0_316, %c0_317] : memref<56x960xbf16, #tpu.memory_space<vmem>>, vector<32x480xbf16>
    %c0_318 = arith.constant 0 : index
    %c0_319 = arith.constant 0 : index
    %286 = vector.load %arg8[%c0_318, %c0_319] : memref<480x128xbf16, #tpu.memory_space<vmem>>, vector<480x128xbf16>
    %cst_320 = arith.constant dense<0.000000e+00> : vector<32x128xf32>
    %287 = tpu.matmul %285, %286, %cst_320 {dimension_numbers = #tpu.dot_dimension_numbers<[1], [0], [0], [1], [0, 0, 1, 1], [], []>} : vector<32x480xbf16>, vector<480x128xbf16>, vector<32x128xf32> -> vector<32x128xf32>
    %c0_321 = arith.constant 0 : index
    %c0_322 = arith.constant 0 : index
    %288 = vector.load %arg18[%c0_321, %c0_322] : memref<1x128xf32, #tpu.memory_space<vmem>>, vector<1x128xf32>
    %289 = vector.broadcast %288 : vector<1x128xf32> to vector<32x128xf32>
    %290 = arith.addf %287, %289 : vector<32x128xf32>
    %cst_323 = arith.constant 0.000000e+00 : f32
    %291 = vector.broadcast %cst_323 : f32 to vector<32x128xf32>
    %292 = arith.maximumf %290, %291 : vector<32x128xf32>
    %293 = vector.extract_strided_slice %292 {offsets = [0, 0], sizes = [16, 128], strides = [1, 1]} : vector<32x128xf32> to vector<16x128xf32>
    %c4_324 = arith.constant 4 : index
    %c0_325 = arith.constant 0 : index
    %294 = vector.load %arg34[%c4_324, %c0_325] : memref<48x128xf32, #tpu.memory_space<vmem>>, vector<16x128xf32>
    tpu.vector_store %arg34[%c4_324, %c0_325], %293 {strides = array<i32>} : memref<48x128xf32, #tpu.memory_space<vmem>>, vector<16x128xf32>,
    %295 = vector.extract_strided_slice %292 {offsets = [16, 0], sizes = [16, 128], strides = [1, 1]} : vector<32x128xf32> to vector<16x128xf32>
    %c28_326 = arith.constant 28 : index
    %c0_327 = arith.constant 0 : index
    %296 = vector.load %arg34[%c28_326, %c0_327] : memref<48x128xf32, #tpu.memory_space<vmem>>, vector<16x128xf32>
    tpu.vector_store %arg34[%c28_326, %c0_327], %295 {strides = array<i32>} : memref<48x128xf32, #tpu.memory_space<vmem>>, vector<16x128xf32>,
    %c0_328 = arith.constant 0 : index
    %c0_329 = arith.constant 0 : index
    %297 = vector.load %arg29[%c0_328, %c0_329] : memref<40x160xf32, #tpu.memory_space<vmem>>, vector<40x160xf32>
    %c0_330 = arith.constant 0 : index
    %c0_331 = arith.constant 0 : index
    %298 = vector.load %arg34[%c0_330, %c0_331] : memref<48x128xf32, #tpu.memory_space<vmem>>, vector<20x128xf32>
    %299 = arith.truncf %298 : vector<20x128xf32> to vector<20x128xbf16>
    %c0_332 = arith.constant 0 : index
    %c0_333 = arith.constant 0 : index
    %300 = vector.load %arg37[%c0_332, %c0_333] : memref<56x960xbf16, #tpu.memory_space<vmem>>, vector<20x128xbf16>
    tpu.vector_store %arg37[%c0_332, %c0_333], %299 {strides = array<i32>} : memref<56x960xbf16, #tpu.memory_space<vmem>>, vector<20x128xbf16>,
    %c1_334 = arith.constant 1 : index
    %c0_335 = arith.constant 0 : index
    %301 = vector.load %arg34[%c1_334, %c0_335] : memref<48x128xf32, #tpu.memory_space<vmem>>, vector<20x128xf32>
    %302 = arith.truncf %301 : vector<20x128xf32> to vector<20x128xbf16>
    %c0_336 = arith.constant 0 : index
    %c128_337 = arith.constant 128 : index
    %303 = vector.load %arg37[%c0_336, %c128_337] : memref<56x960xbf16, #tpu.memory_space<vmem>>, vector<20x128xbf16>
    tpu.vector_store %arg37[%c0_336, %c128_337], %302 {strides = array<i32>} : memref<56x960xbf16, #tpu.memory_space<vmem>>, vector<20x128xbf16>,
    %c2_338 = arith.constant 2 : index
    %c0_339 = arith.constant 0 : index
    %304 = vector.load %arg34[%c2_338, %c0_339] : memref<48x128xf32, #tpu.memory_space<vmem>>, vector<20x128xf32>
    %305 = arith.truncf %304 : vector<20x128xf32> to vector<20x128xbf16>
    %c0_340 = arith.constant 0 : index
    %c256_341 = arith.constant 256 : index
    %306 = vector.load %arg37[%c0_340, %c256_341] : memref<56x960xbf16, #tpu.memory_space<vmem>>, vector<20x128xbf16>
    tpu.vector_store %arg37[%c0_340, %c256_341], %305 {strides = array<i32>} : memref<56x960xbf16, #tpu.memory_space<vmem>>, vector<20x128xbf16>,
    %c3_342 = arith.constant 3 : index
    %c0_343 = arith.constant 0 : index
    %307 = vector.load %arg34[%c3_342, %c0_343] : memref<48x128xf32, #tpu.memory_space<vmem>>, vector<20x128xf32>
    %308 = arith.truncf %307 : vector<20x128xf32> to vector<20x128xbf16>
    %c0_344 = arith.constant 0 : index
    %c384_345 = arith.constant 384 : index
    %309 = vector.load %arg37[%c0_344, %c384_345] : memref<56x960xbf16, #tpu.memory_space<vmem>>, vector<20x128xbf16>
    tpu.vector_store %arg37[%c0_344, %c384_345], %308 {strides = array<i32>} : memref<56x960xbf16, #tpu.memory_space<vmem>>, vector<20x128xbf16>,
    %c4_346 = arith.constant 4 : index
    %c0_347 = arith.constant 0 : index
    %310 = vector.load %arg34[%c4_346, %c0_347] : memref<48x128xf32, #tpu.memory_space<vmem>>, vector<20x128xf32>
    %311 = arith.truncf %310 : vector<20x128xf32> to vector<20x128xbf16>
    %c0_348 = arith.constant 0 : index
    %c512_349 = arith.constant 512 : index
    %312 = vector.load %arg37[%c0_348, %c512_349] : memref<56x960xbf16, #tpu.memory_space<vmem>>, vector<20x128xbf16>
    tpu.vector_store %arg37[%c0_348, %c512_349], %311 {strides = array<i32>} : memref<56x960xbf16, #tpu.memory_space<vmem>>, vector<20x128xbf16>,
    %c24_350 = arith.constant 24 : index
    %c0_351 = arith.constant 0 : index
    %313 = vector.load %arg34[%c24_350, %c0_351] : memref<48x128xf32, #tpu.memory_space<vmem>>, vector<20x128xf32>
    %314 = arith.truncf %313 : vector<20x128xf32> to vector<20x128xbf16>
    %c20_352 = arith.constant 20 : index
    %c0_353 = arith.constant 0 : index
    %315 = vector.load %arg37[%c20_352, %c0_353] : memref<56x960xbf16, #tpu.memory_space<vmem>>, vector<20x128xbf16>
    tpu.vector_store %arg37[%c20_352, %c0_353], %314 {strides = array<i32>} : memref<56x960xbf16, #tpu.memory_space<vmem>>, vector<20x128xbf16>,
    %c25_354 = arith.constant 25 : index
    %c0_355 = arith.constant 0 : index
    %316 = vector.load %arg34[%c25_354, %c0_355] : memref<48x128xf32, #tpu.memory_space<vmem>>, vector<20x128xf32>
    %317 = arith.truncf %316 : vector<20x128xf32> to vector<20x128xbf16>
    %c20_356 = arith.constant 20 : index
    %c128_357 = arith.constant 128 : index
    %318 = vector.load %arg37[%c20_356, %c128_357] : memref<56x960xbf16, #tpu.memory_space<vmem>>, vector<20x128xbf16>
    tpu.vector_store %arg37[%c20_356, %c128_357], %317 {strides = array<i32>} : memref<56x960xbf16, #tpu.memory_space<vmem>>, vector<20x128xbf16>,
    %c26_358 = arith.constant 26 : index
    %c0_359 = arith.constant 0 : index
    %319 = vector.load %arg34[%c26_358, %c0_359] : memref<48x128xf32, #tpu.memory_space<vmem>>, vector<20x128xf32>
    %320 = arith.truncf %319 : vector<20x128xf32> to vector<20x128xbf16>
    %c20_360 = arith.constant 20 : index
    %c256_361 = arith.constant 256 : index
    %321 = vector.load %arg37[%c20_360, %c256_361] : memref<56x960xbf16, #tpu.memory_space<vmem>>, vector<20x128xbf16>
    tpu.vector_store %arg37[%c20_360, %c256_361], %320 {strides = array<i32>} : memref<56x960xbf16, #tpu.memory_space<vmem>>, vector<20x128xbf16>,
    %c27_362 = arith.constant 27 : index
    %c0_363 = arith.constant 0 : index
    %322 = vector.load %arg34[%c27_362, %c0_363] : memref<48x128xf32, #tpu.memory_space<vmem>>, vector<20x128xf32>
    %323 = arith.truncf %322 : vector<20x128xf32> to vector<20x128xbf16>
    %c20_364 = arith.constant 20 : index
    %c384_365 = arith.constant 384 : index
    %324 = vector.load %arg37[%c20_364, %c384_365] : memref<56x960xbf16, #tpu.memory_space<vmem>>, vector<20x128xbf16>
    tpu.vector_store %arg37[%c20_364, %c384_365], %323 {strides = array<i32>} : memref<56x960xbf16, #tpu.memory_space<vmem>>, vector<20x128xbf16>,
    %c28_366 = arith.constant 28 : index
    %c0_367 = arith.constant 0 : index
    %325 = vector.load %arg34[%c28_366, %c0_367] : memref<48x128xf32, #tpu.memory_space<vmem>>, vector<20x128xf32>
    %326 = arith.truncf %325 : vector<20x128xf32> to vector<20x128xbf16>
    %c20_368 = arith.constant 20 : index
    %c512_369 = arith.constant 512 : index
    %327 = vector.load %arg37[%c20_368, %c512_369] : memref<56x960xbf16, #tpu.memory_space<vmem>>, vector<20x128xbf16>
    tpu.vector_store %arg37[%c20_368, %c512_369], %326 {strides = array<i32>} : memref<56x960xbf16, #tpu.memory_space<vmem>>, vector<20x128xbf16>,
    %c0_370 = arith.constant 0 : index
    %c0_371 = arith.constant 0 : index
    %328 = vector.load %arg37[%c0_370, %c0_371] : memref<56x960xbf16, #tpu.memory_space<vmem>>, vector<40x640xbf16>
    %c0_372 = arith.constant 0 : index
    %c0_373 = arith.constant 0 : index
    %329 = vector.load %arg9[%c0_372, %c0_373] : memref<640x160xbf16, #tpu.memory_space<vmem>>, vector<640x160xbf16>
    %cst_374 = arith.constant dense<0.000000e+00> : vector<40x160xf32>
    %330 = tpu.matmul %328, %329, %cst_374 {dimension_numbers = #tpu.dot_dimension_numbers<[1], [0], [0], [1], [0, 0, 1, 1], [], []>} : vector<40x640xbf16>, vector<640x160xbf16>, vector<40x160xf32> -> vector<40x160xf32>
    %c0_375 = arith.constant 0 : index
    %c0_376 = arith.constant 0 : index
    %331 = vector.load %arg19[%c0_375, %c0_376] : memref<1x160xf32, #tpu.memory_space<vmem>>, vector<1x160xf32>
    %332 = vector.broadcast %331 : vector<1x160xf32> to vector<40x160xf32>
    %333 = arith.addf %330, %332 : vector<40x160xf32>
    %334 = arith.addf %333, %297 : vector<40x160xf32>
    %cst_377 = arith.constant 0.000000e+00 : f32
    %335 = vector.broadcast %cst_377 : f32 to vector<40x160xf32>
    %336 = arith.maximumf %334, %335 : vector<40x160xf32>
    %337 = vector.extract_strided_slice %336 {offsets = [0, 0], sizes = [20, 160], strides = [1, 1]} : vector<40x160xf32> to vector<20x160xf32>
    %c4_378 = arith.constant 4 : index
    %c0_379 = arith.constant 0 : index
    %338 = vector.load %arg35[%c4_378, %c0_379] : memref<56x160xf32, #tpu.memory_space<vmem>>, vector<20x160xf32>
    tpu.vector_store %arg35[%c4_378, %c0_379], %337 {strides = array<i32>} : memref<56x160xf32, #tpu.memory_space<vmem>>, vector<20x160xf32>,
    %339 = vector.extract_strided_slice %336 {offsets = [20, 0], sizes = [20, 160], strides = [1, 1]} : vector<40x160xf32> to vector<20x160xf32>
    %c32 = arith.constant 32 : index
    %c0_380 = arith.constant 0 : index
    %340 = vector.load %arg35[%c32, %c0_380] : memref<56x160xf32, #tpu.memory_space<vmem>>, vector<20x160xf32>
    tpu.vector_store %arg35[%c32, %c0_380], %339 {strides = array<i32>} : memref<56x160xf32, #tpu.memory_space<vmem>>, vector<20x160xf32>,
    %c0_381 = arith.constant 0 : index
    %c0_382 = arith.constant 0 : index
    %341 = vector.load %arg35[%c0_381, %c0_382] : memref<56x160xf32, #tpu.memory_space<vmem>>, vector<24x160xf32>
    %342 = arith.truncf %341 : vector<24x160xf32> to vector<24x160xbf16>
    %c0_383 = arith.constant 0 : index
    %c0_384 = arith.constant 0 : index
    %343 = vector.load %arg37[%c0_383, %c0_384] : memref<56x960xbf16, #tpu.memory_space<vmem>>, vector<24x160xbf16>
    tpu.vector_store %arg37[%c0_383, %c0_384], %342 {strides = array<i32>} : memref<56x960xbf16, #tpu.memory_space<vmem>>, vector<24x160xbf16>,
    %c1_385 = arith.constant 1 : index
    %c0_386 = arith.constant 0 : index
    %344 = vector.load %arg35[%c1_385, %c0_386] : memref<56x160xf32, #tpu.memory_space<vmem>>, vector<24x160xf32>
    %345 = arith.truncf %344 : vector<24x160xf32> to vector<24x160xbf16>
    %c0_387 = arith.constant 0 : index
    %c160_388 = arith.constant 160 : index
    %346 = vector.load %arg37[%c0_387, %c160_388] : memref<56x960xbf16, #tpu.memory_space<vmem>>, vector<24x160xbf16>
    tpu.vector_store %arg37[%c0_387, %c160_388], %345 {strides = array<i32>} : memref<56x960xbf16, #tpu.memory_space<vmem>>, vector<24x160xbf16>,
    %c2_389 = arith.constant 2 : index
    %c0_390 = arith.constant 0 : index
    %347 = vector.load %arg35[%c2_389, %c0_390] : memref<56x160xf32, #tpu.memory_space<vmem>>, vector<24x160xf32>
    %348 = arith.truncf %347 : vector<24x160xf32> to vector<24x160xbf16>
    %c0_391 = arith.constant 0 : index
    %c320_392 = arith.constant 320 : index
    %349 = vector.load %arg37[%c0_391, %c320_392] : memref<56x960xbf16, #tpu.memory_space<vmem>>, vector<24x160xbf16>
    tpu.vector_store %arg37[%c0_391, %c320_392], %348 {strides = array<i32>} : memref<56x960xbf16, #tpu.memory_space<vmem>>, vector<24x160xbf16>,
    %c3_393 = arith.constant 3 : index
    %c0_394 = arith.constant 0 : index
    %350 = vector.load %arg35[%c3_393, %c0_394] : memref<56x160xf32, #tpu.memory_space<vmem>>, vector<24x160xf32>
    %351 = arith.truncf %350 : vector<24x160xf32> to vector<24x160xbf16>
    %c0_395 = arith.constant 0 : index
    %c480_396 = arith.constant 480 : index
    %352 = vector.load %arg37[%c0_395, %c480_396] : memref<56x960xbf16, #tpu.memory_space<vmem>>, vector<24x160xbf16>
    tpu.vector_store %arg37[%c0_395, %c480_396], %351 {strides = array<i32>} : memref<56x960xbf16, #tpu.memory_space<vmem>>, vector<24x160xbf16>,
    %c4_397 = arith.constant 4 : index
    %c0_398 = arith.constant 0 : index
    %353 = vector.load %arg35[%c4_397, %c0_398] : memref<56x160xf32, #tpu.memory_space<vmem>>, vector<24x160xf32>
    %354 = arith.truncf %353 : vector<24x160xf32> to vector<24x160xbf16>
    %c0_399 = arith.constant 0 : index
    %c640_400 = arith.constant 640 : index
    %355 = vector.load %arg37[%c0_399, %c640_400] : memref<56x960xbf16, #tpu.memory_space<vmem>>, vector<24x160xbf16>
    tpu.vector_store %arg37[%c0_399, %c640_400], %354 {strides = array<i32>} : memref<56x960xbf16, #tpu.memory_space<vmem>>, vector<24x160xbf16>,
    %c28_401 = arith.constant 28 : index
    %c0_402 = arith.constant 0 : index
    %356 = vector.load %arg35[%c28_401, %c0_402] : memref<56x160xf32, #tpu.memory_space<vmem>>, vector<24x160xf32>
    %357 = arith.truncf %356 : vector<24x160xf32> to vector<24x160xbf16>
    %c24_403 = arith.constant 24 : index
    %c0_404 = arith.constant 0 : index
    %358 = vector.load %arg37[%c24_403, %c0_404] : memref<56x960xbf16, #tpu.memory_space<vmem>>, vector<24x160xbf16>
    tpu.vector_store %arg37[%c24_403, %c0_404], %357 {strides = array<i32>} : memref<56x960xbf16, #tpu.memory_space<vmem>>, vector<24x160xbf16>,
    %c29 = arith.constant 29 : index
    %c0_405 = arith.constant 0 : index
    %359 = vector.load %arg35[%c29, %c0_405] : memref<56x160xf32, #tpu.memory_space<vmem>>, vector<24x160xf32>
    %360 = arith.truncf %359 : vector<24x160xf32> to vector<24x160xbf16>
    %c24_406 = arith.constant 24 : index
    %c160_407 = arith.constant 160 : index
    %361 = vector.load %arg37[%c24_406, %c160_407] : memref<56x960xbf16, #tpu.memory_space<vmem>>, vector<24x160xbf16>
    tpu.vector_store %arg37[%c24_406, %c160_407], %360 {strides = array<i32>} : memref<56x960xbf16, #tpu.memory_space<vmem>>, vector<24x160xbf16>,
    %c30 = arith.constant 30 : index
    %c0_408 = arith.constant 0 : index
    %362 = vector.load %arg35[%c30, %c0_408] : memref<56x160xf32, #tpu.memory_space<vmem>>, vector<24x160xf32>
    %363 = arith.truncf %362 : vector<24x160xf32> to vector<24x160xbf16>
    %c24_409 = arith.constant 24 : index
    %c320_410 = arith.constant 320 : index
    %364 = vector.load %arg37[%c24_409, %c320_410] : memref<56x960xbf16, #tpu.memory_space<vmem>>, vector<24x160xbf16>
    tpu.vector_store %arg37[%c24_409, %c320_410], %363 {strides = array<i32>} : memref<56x960xbf16, #tpu.memory_space<vmem>>, vector<24x160xbf16>,
    %c31 = arith.constant 31 : index
    %c0_411 = arith.constant 0 : index
    %365 = vector.load %arg35[%c31, %c0_411] : memref<56x160xf32, #tpu.memory_space<vmem>>, vector<24x160xf32>
    %366 = arith.truncf %365 : vector<24x160xf32> to vector<24x160xbf16>
    %c24_412 = arith.constant 24 : index
    %c480_413 = arith.constant 480 : index
    %367 = vector.load %arg37[%c24_412, %c480_413] : memref<56x960xbf16, #tpu.memory_space<vmem>>, vector<24x160xbf16>
    tpu.vector_store %arg37[%c24_412, %c480_413], %366 {strides = array<i32>} : memref<56x960xbf16, #tpu.memory_space<vmem>>, vector<24x160xbf16>,
    %c32_414 = arith.constant 32 : index
    %c0_415 = arith.constant 0 : index
    %368 = vector.load %arg35[%c32_414, %c0_415] : memref<56x160xf32, #tpu.memory_space<vmem>>, vector<24x160xf32>
    %369 = arith.truncf %368 : vector<24x160xf32> to vector<24x160xbf16>
    %c24_416 = arith.constant 24 : index
    %c640_417 = arith.constant 640 : index
    %370 = vector.load %arg37[%c24_416, %c640_417] : memref<56x960xbf16, #tpu.memory_space<vmem>>, vector<24x160xbf16>
    tpu.vector_store %arg37[%c24_416, %c640_417], %369 {strides = array<i32>} : memref<56x960xbf16, #tpu.memory_space<vmem>>, vector<24x160xbf16>,
    %c0_418 = arith.constant 0 : index
    %c0_419 = arith.constant 0 : index
    %371 = vector.load %arg37[%c0_418, %c0_419] : memref<56x960xbf16, #tpu.memory_space<vmem>>, vector<48x800xbf16>
    %c0_420 = arith.constant 0 : index
    %c0_421 = arith.constant 0 : index
    %372 = vector.load %arg10[%c0_420, %c0_421] : memref<800x192xbf16, #tpu.memory_space<vmem>>, vector<800x192xbf16>
    %cst_422 = arith.constant dense<0.000000e+00> : vector<48x192xf32>
    %373 = tpu.matmul %371, %372, %cst_422 {dimension_numbers = #tpu.dot_dimension_numbers<[1], [0], [0], [1], [0, 0, 1, 1], [], []>} : vector<48x800xbf16>, vector<800x192xbf16>, vector<48x192xf32> -> vector<48x192xf32>
    %c0_423 = arith.constant 0 : index
    %c0_424 = arith.constant 0 : index
    %374 = vector.load %arg20[%c0_423, %c0_424] : memref<1x192xf32, #tpu.memory_space<vmem>>, vector<1x192xf32>
    %375 = vector.broadcast %374 : vector<1x192xf32> to vector<48x192xf32>
    %376 = arith.addf %373, %375 : vector<48x192xf32>
    %cst_425 = arith.constant 0.000000e+00 : f32
    %377 = vector.broadcast %cst_425 : f32 to vector<48x192xf32>
    %378 = arith.maximumf %376, %377 : vector<48x192xf32>
    %379 = vector.extract_strided_slice %378 {offsets = [0, 0], sizes = [24, 192], strides = [1, 1]} : vector<48x192xf32> to vector<24x192xf32>
    %c4_426 = arith.constant 4 : index
    %c0_427 = arith.constant 0 : index
    %380 = vector.load %arg36[%c4_426, %c0_427] : memref<64x192xf32, #tpu.memory_space<vmem>>, vector<24x192xf32>
    tpu.vector_store %arg36[%c4_426, %c0_427], %379 {strides = array<i32>} : memref<64x192xf32, #tpu.memory_space<vmem>>, vector<24x192xf32>,
    %381 = vector.extract_strided_slice %378 {offsets = [24, 0], sizes = [24, 192], strides = [1, 1]} : vector<48x192xf32> to vector<24x192xf32>
    %c36 = arith.constant 36 : index
    %c0_428 = arith.constant 0 : index
    %382 = vector.load %arg36[%c36, %c0_428] : memref<64x192xf32, #tpu.memory_space<vmem>>, vector<24x192xf32>
    tpu.vector_store %arg36[%c36, %c0_428], %381 {strides = array<i32>} : memref<64x192xf32, #tpu.memory_space<vmem>>, vector<24x192xf32>,
    %c0_429 = arith.constant 0 : index
    %c0_430 = arith.constant 0 : index
    %383 = vector.load %arg36[%c0_429, %c0_430] : memref<64x192xf32, #tpu.memory_space<vmem>>, vector<28x192xf32>
    %384 = arith.truncf %383 : vector<28x192xf32> to vector<28x192xbf16>
    %c0_431 = arith.constant 0 : index
    %c0_432 = arith.constant 0 : index
    %385 = vector.load %arg37[%c0_431, %c0_432] : memref<56x960xbf16, #tpu.memory_space<vmem>>, vector<28x192xbf16>
    tpu.vector_store %arg37[%c0_431, %c0_432], %384 {strides = array<i32>} : memref<56x960xbf16, #tpu.memory_space<vmem>>, vector<28x192xbf16>,
    %c1_433 = arith.constant 1 : index
    %c0_434 = arith.constant 0 : index
    %386 = vector.load %arg36[%c1_433, %c0_434] : memref<64x192xf32, #tpu.memory_space<vmem>>, vector<28x192xf32>
    %387 = arith.truncf %386 : vector<28x192xf32> to vector<28x192xbf16>
    %c0_435 = arith.constant 0 : index
    %c192_436 = arith.constant 192 : index
    %388 = vector.load %arg37[%c0_435, %c192_436] : memref<56x960xbf16, #tpu.memory_space<vmem>>, vector<28x192xbf16>
    tpu.vector_store %arg37[%c0_435, %c192_436], %387 {strides = array<i32>} : memref<56x960xbf16, #tpu.memory_space<vmem>>, vector<28x192xbf16>,
    %c2_437 = arith.constant 2 : index
    %c0_438 = arith.constant 0 : index
    %389 = vector.load %arg36[%c2_437, %c0_438] : memref<64x192xf32, #tpu.memory_space<vmem>>, vector<28x192xf32>
    %390 = arith.truncf %389 : vector<28x192xf32> to vector<28x192xbf16>
    %c0_439 = arith.constant 0 : index
    %c384_440 = arith.constant 384 : index
    %391 = vector.load %arg37[%c0_439, %c384_440] : memref<56x960xbf16, #tpu.memory_space<vmem>>, vector<28x192xbf16>
    tpu.vector_store %arg37[%c0_439, %c384_440], %390 {strides = array<i32>} : memref<56x960xbf16, #tpu.memory_space<vmem>>, vector<28x192xbf16>,
    %c3_441 = arith.constant 3 : index
    %c0_442 = arith.constant 0 : index
    %392 = vector.load %arg36[%c3_441, %c0_442] : memref<64x192xf32, #tpu.memory_space<vmem>>, vector<28x192xf32>
    %393 = arith.truncf %392 : vector<28x192xf32> to vector<28x192xbf16>
    %c0_443 = arith.constant 0 : index
    %c576_444 = arith.constant 576 : index
    %394 = vector.load %arg37[%c0_443, %c576_444] : memref<56x960xbf16, #tpu.memory_space<vmem>>, vector<28x192xbf16>
    tpu.vector_store %arg37[%c0_443, %c576_444], %393 {strides = array<i32>} : memref<56x960xbf16, #tpu.memory_space<vmem>>, vector<28x192xbf16>,
    %c4_445 = arith.constant 4 : index
    %c0_446 = arith.constant 0 : index
    %395 = vector.load %arg36[%c4_445, %c0_446] : memref<64x192xf32, #tpu.memory_space<vmem>>, vector<28x192xf32>
    %396 = arith.truncf %395 : vector<28x192xf32> to vector<28x192xbf16>
    %c0_447 = arith.constant 0 : index
    %c768_448 = arith.constant 768 : index
    %397 = vector.load %arg37[%c0_447, %c768_448] : memref<56x960xbf16, #tpu.memory_space<vmem>>, vector<28x192xbf16>
    tpu.vector_store %arg37[%c0_447, %c768_448], %396 {strides = array<i32>} : memref<56x960xbf16, #tpu.memory_space<vmem>>, vector<28x192xbf16>,
    %c32_449 = arith.constant 32 : index
    %c0_450 = arith.constant 0 : index
    %398 = vector.load %arg36[%c32_449, %c0_450] : memref<64x192xf32, #tpu.memory_space<vmem>>, vector<28x192xf32>
    %399 = arith.truncf %398 : vector<28x192xf32> to vector<28x192xbf16>
    %c28_451 = arith.constant 28 : index
    %c0_452 = arith.constant 0 : index
    %400 = vector.load %arg37[%c28_451, %c0_452] : memref<56x960xbf16, #tpu.memory_space<vmem>>, vector<28x192xbf16>
    tpu.vector_store %arg37[%c28_451, %c0_452], %399 {strides = array<i32>} : memref<56x960xbf16, #tpu.memory_space<vmem>>, vector<28x192xbf16>,
    %c33 = arith.constant 33 : index
    %c0_453 = arith.constant 0 : index
    %401 = vector.load %arg36[%c33, %c0_453] : memref<64x192xf32, #tpu.memory_space<vmem>>, vector<28x192xf32>
    %402 = arith.truncf %401 : vector<28x192xf32> to vector<28x192xbf16>
    %c28_454 = arith.constant 28 : index
    %c192_455 = arith.constant 192 : index
    %403 = vector.load %arg37[%c28_454, %c192_455] : memref<56x960xbf16, #tpu.memory_space<vmem>>, vector<28x192xbf16>
    tpu.vector_store %arg37[%c28_454, %c192_455], %402 {strides = array<i32>} : memref<56x960xbf16, #tpu.memory_space<vmem>>, vector<28x192xbf16>,
    %c34 = arith.constant 34 : index
    %c0_456 = arith.constant 0 : index
    %404 = vector.load %arg36[%c34, %c0_456] : memref<64x192xf32, #tpu.memory_space<vmem>>, vector<28x192xf32>
    %405 = arith.truncf %404 : vector<28x192xf32> to vector<28x192xbf16>
    %c28_457 = arith.constant 28 : index
    %c384_458 = arith.constant 384 : index
    %406 = vector.load %arg37[%c28_457, %c384_458] : memref<56x960xbf16, #tpu.memory_space<vmem>>, vector<28x192xbf16>
    tpu.vector_store %arg37[%c28_457, %c384_458], %405 {strides = array<i32>} : memref<56x960xbf16, #tpu.memory_space<vmem>>, vector<28x192xbf16>,
    %c35 = arith.constant 35 : index
    %c0_459 = arith.constant 0 : index
    %407 = vector.load %arg36[%c35, %c0_459] : memref<64x192xf32, #tpu.memory_space<vmem>>, vector<28x192xf32>
    %408 = arith.truncf %407 : vector<28x192xf32> to vector<28x192xbf16>
    %c28_460 = arith.constant 28 : index
    %c576_461 = arith.constant 576 : index
    %409 = vector.load %arg37[%c28_460, %c576_461] : memref<56x960xbf16, #tpu.memory_space<vmem>>, vector<28x192xbf16>
    tpu.vector_store %arg37[%c28_460, %c576_461], %408 {strides = array<i32>} : memref<56x960xbf16, #tpu.memory_space<vmem>>, vector<28x192xbf16>,
    %c36_462 = arith.constant 36 : index
    %c0_463 = arith.constant 0 : index
    %410 = vector.load %arg36[%c36_462, %c0_463] : memref<64x192xf32, #tpu.memory_space<vmem>>, vector<28x192xf32>
    %411 = arith.truncf %410 : vector<28x192xf32> to vector<28x192xbf16>
    %c28_464 = arith.constant 28 : index
    %c768_465 = arith.constant 768 : index
    %412 = vector.load %arg37[%c28_464, %c768_465] : memref<56x960xbf16, #tpu.memory_space<vmem>>, vector<28x192xbf16>
    tpu.vector_store %arg37[%c28_464, %c768_465], %411 {strides = array<i32>} : memref<56x960xbf16, #tpu.memory_space<vmem>>, vector<28x192xbf16>,
    %c0_466 = arith.constant 0 : index
    %c0_467 = arith.constant 0 : index
    %413 = vector.load %arg37[%c0_466, %c0_467] : memref<56x960xbf16, #tpu.memory_space<vmem>>, vector<56x960xbf16>
    %c0_468 = arith.constant 0 : index
    %c0_469 = arith.constant 0 : index
    %414 = vector.load %arg11[%c0_468, %c0_469] : memref<960x28xbf16, #tpu.memory_space<vmem>>, vector<960x28xbf16>
    %cst_470 = arith.constant dense<0.000000e+00> : vector<56x28xf32>
    %415 = tpu.matmul %413, %414, %cst_470 {dimension_numbers = #tpu.dot_dimension_numbers<[1], [0], [0], [1], [0, 0, 1, 1], [], []>} : vector<56x960xbf16>, vector<960x28xbf16>, vector<56x28xf32> -> vector<56x28xf32>
    %c0_471 = arith.constant 0 : index
    %c0_472 = arith.constant 0 : index
    %416 = vector.load %arg21[%c0_471, %c0_472] : memref<1x28xf32, #tpu.memory_space<vmem>>, vector<1x28xf32>
    %417 = vector.broadcast %416 : vector<1x28xf32> to vector<56x28xf32>
    %418 = arith.addf %415, %417 : vector<56x28xf32>
    %419 = vector.extract_strided_slice %418 {offsets = [0, 0], sizes = [28, 28], strides = [1, 1]} : vector<56x28xf32> to vector<28x28xf32>
    %c0_473 = arith.constant 0 : index
    %c0_474 = arith.constant 0 : index
    %c0_475 = arith.constant 0 : index
    %420 = vector.load %arg1[%c0_473, %c0_474, %c0_475] : memref<2x28x28xf32, #tpu.memory_space<vmem>>, vector<1x28x28xf32>
    %421 = vector.shape_cast %420 : vector<1x28x28xf32> to vector<28x28xf32>
    %422 = arith.addf %419, %421 : vector<28x28xf32>
    %cst_476 = arith.constant 0.000000e+00 : f32
    %423 = vector.broadcast %cst_476 : f32 to vector<28x28xf32>
    %424 = arith.maximumf %422, %423 : vector<28x28xf32>
    %425 = vector.shape_cast %424 : vector<28x28xf32> to vector<1x28x28xf32>
    %c0_477 = arith.constant 0 : index
    %c0_478 = arith.constant 0 : index
    %c0_479 = arith.constant 0 : index
    %426 = vector.load %arg27[%c0_477, %c0_478, %c0_479] : memref<2x28x28xf32, #tpu.memory_space<vmem>>, vector<1x28x28xf32>
    tpu.vector_store %arg27[%c0_477, %c0_478, %c0_479], %425 {strides = array<i32>} : memref<2x28x28xf32, #tpu.memory_space<vmem>>, vector<1x28x28xf32>,
    %427 = vector.shape_cast %424 : vector<28x28xf32> to vector<1x28x28xf32>
    %cst_480 = arith.constant dense<0.000000e+00> : vector<1xf32>
    %428 = vector.multi_reduction <add>, %427, %cst_480 [1, 2] : vector<1x28x28xf32> to vector<1xf32>
    %429 = vector.shape_cast %428 : vector<1xf32> to vector<1x1x1xf32>
    %430 = vector.extract %429[0, 0, 0] : f32 from vector<1x1x1xf32>
    %cst_481 = arith.constant 0.00127551018 : f32
    %431 = arith.mulf %430, %cst_481 : f32
    %c0_482 = arith.constant 0 : index
    %c0_483 = arith.constant 0 : index
    %432 = vector.load %arg22[%c0_482, %c0_483] : memref<1x16xf32, #tpu.memory_space<vmem>>, vector<1x16xf32>
    %433 = vector.broadcast %431 : f32 to vector<1x16xf32>
    %434 = arith.mulf %433, %432 : vector<1x16xf32>
    %c0_484 = arith.constant 0 : index
    %c0_485 = arith.constant 0 : index
    %435 = vector.load %arg23[%c0_484, %c0_485] : memref<1x16xf32, #tpu.memory_space<vmem>>, vector<1x16xf32>
    %436 = arith.addf %434, %435 : vector<1x16xf32>
    %cst_486 = arith.constant 0.000000e+00 : f32
    %437 = vector.broadcast %cst_486 : f32 to vector<1x16xf32>
    %438 = arith.maximumf %436, %437 : vector<1x16xf32>
    %c0_487 = arith.constant 0 : index
    %c0_488 = arith.constant 0 : index
    %439 = vector.load %arg24[%c0_487, %c0_488] : memref<1x16xf32, #tpu.memory_space<vmem>>, vector<1x16xf32>
    %440 = arith.mulf %438, %439 : vector<1x16xf32>
    %cst_489 = arith.constant dense<0.000000e+00> : vector<1xf32>
    %441 = vector.multi_reduction <add>, %440, %cst_489 [1] : vector<1x16xf32> to vector<1xf32>
    %442 = vector.shape_cast %441 : vector<1xf32> to vector<1x1xf32>
    %c0_490 = arith.constant 0 : index
    %c0_491 = arith.constant 0 : index
    %443 = vector.load %arg25[%c0_490, %c0_491] : memref<1x1xf32, #tpu.memory_space<vmem>>, vector<1x1xf32>
    %444 = arith.addf %442, %443 : vector<1x1xf32>
    %cst_492 = arith.constant 0.000000e+00 : f32
    %445 = vector.broadcast %cst_492 : f32 to vector<1x1xf32>
    %446 = arith.subf %445, %444 : vector<1x1xf32>
    %447 = math.exp %446 : vector<1x1xf32>
    %cst_493 = arith.constant 1.000000e+00 : f32
    %448 = vector.broadcast %cst_493 : f32 to vector<1x1xf32>
    %449 = arith.addf %448, %447 : vector<1x1xf32>
    %cst_494 = arith.constant 4.000000e+00 : f32
    %450 = vector.broadcast %cst_494 : f32 to vector<1x1xf32>
    %451 = arith.divf %450, %449 : vector<1x1xf32>
    %452 = vector.shape_cast %451 : vector<1x1xf32> to vector<1x1x1xf32>
    %c0_495 = arith.constant 0 : index
    %c0_496 = arith.constant 0 : index
    %c0_497 = arith.constant 0 : index
    %453 = vector.load %arg26[%c0_495, %c0_496, %c0_497] : memref<1x2x1xf32, #tpu.memory_space<vmem>>, vector<1x1x1xf32>
    tpu.vector_store %arg26[%c0_495, %c0_496, %c0_497], %452 {strides = array<i32>} : memref<1x2x1xf32, #tpu.memory_space<vmem>>, vector<1x1x1xf32>,
    %454 = vector.extract_strided_slice %418 {offsets = [28, 0], sizes = [28, 28], strides = [1, 1]} : vector<56x28xf32> to vector<28x28xf32>
    %c1_498 = arith.constant 1 : index
    %c0_499 = arith.constant 0 : index
    %c0_500 = arith.constant 0 : index
    %455 = vector.load %arg1[%c1_498, %c0_499, %c0_500] : memref<2x28x28xf32, #tpu.memory_space<vmem>>, vector<1x28x28xf32>
    %456 = vector.shape_cast %455 : vector<1x28x28xf32> to vector<28x28xf32>
    %457 = arith.addf %454, %456 : vector<28x28xf32>
    %cst_501 = arith.constant 0.000000e+00 : f32
    %458 = vector.broadcast %cst_501 : f32 to vector<28x28xf32>
    %459 = arith.maximumf %457, %458 : vector<28x28xf32>
    %460 = vector.shape_cast %459 : vector<28x28xf32> to vector<1x28x28xf32>
    %c1_502 = arith.constant 1 : index
    %c0_503 = arith.constant 0 : index
    %c0_504 = arith.constant 0 : index
    %461 = vector.load %arg27[%c1_502, %c0_503, %c0_504] : memref<2x28x28xf32, #tpu.memory_space<vmem>>, vector<1x28x28xf32>
    tpu.vector_store %arg27[%c1_502, %c0_503, %c0_504], %460 {strides = array<i32>} : memref<2x28x28xf32, #tpu.memory_space<vmem>>, vector<1x28x28xf32>,
    %462 = vector.shape_cast %459 : vector<28x28xf32> to vector<1x28x28xf32>
    %cst_505 = arith.constant dense<0.000000e+00> : vector<1xf32>
    %463 = vector.multi_reduction <add>, %462, %cst_505 [1, 2] : vector<1x28x28xf32> to vector<1xf32>
    %464 = vector.shape_cast %463 : vector<1xf32> to vector<1x1x1xf32>
    %465 = vector.extract %464[0, 0, 0] : f32 from vector<1x1x1xf32>
    %cst_506 = arith.constant 0.00127551018 : f32
    %466 = arith.mulf %465, %cst_506 : f32
    %c0_507 = arith.constant 0 : index
    %c0_508 = arith.constant 0 : index
    %467 = vector.load %arg22[%c0_507, %c0_508] : memref<1x16xf32, #tpu.memory_space<vmem>>, vector<1x16xf32>
    %468 = vector.broadcast %466 : f32 to vector<1x16xf32>
    %469 = arith.mulf %468, %467 : vector<1x16xf32>
    %c0_509 = arith.constant 0 : index
    %c0_510 = arith.constant 0 : index
    %470 = vector.load %arg23[%c0_509, %c0_510] : memref<1x16xf32, #tpu.memory_space<vmem>>, vector<1x16xf32>
    %471 = arith.addf %469, %470 : vector<1x16xf32>
    %cst_511 = arith.constant 0.000000e+00 : f32
    %472 = vector.broadcast %cst_511 : f32 to vector<1x16xf32>
    %473 = arith.maximumf %471, %472 : vector<1x16xf32>
    %c0_512 = arith.constant 0 : index
    %c0_513 = arith.constant 0 : index
    %474 = vector.load %arg24[%c0_512, %c0_513] : memref<1x16xf32, #tpu.memory_space<vmem>>, vector<1x16xf32>
    %475 = arith.mulf %473, %474 : vector<1x16xf32>
    %cst_514 = arith.constant dense<0.000000e+00> : vector<1xf32>
    %476 = vector.multi_reduction <add>, %475, %cst_514 [1] : vector<1x16xf32> to vector<1xf32>
    %477 = vector.shape_cast %476 : vector<1xf32> to vector<1x1xf32>
    %c0_515 = arith.constant 0 : index
    %c0_516 = arith.constant 0 : index
    %478 = vector.load %arg25[%c0_515, %c0_516] : memref<1x1xf32, #tpu.memory_space<vmem>>, vector<1x1xf32>
    %479 = arith.addf %477, %478 : vector<1x1xf32>
    %cst_517 = arith.constant 0.000000e+00 : f32
    %480 = vector.broadcast %cst_517 : f32 to vector<1x1xf32>
    %481 = arith.subf %480, %479 : vector<1x1xf32>
    %482 = math.exp %481 : vector<1x1xf32>
    %cst_518 = arith.constant 1.000000e+00 : f32
    %483 = vector.broadcast %cst_518 : f32 to vector<1x1xf32>
    %484 = arith.addf %483, %482 : vector<1x1xf32>
    %cst_519 = arith.constant 4.000000e+00 : f32
    %485 = vector.broadcast %cst_519 : f32 to vector<1x1xf32>
    %486 = arith.divf %485, %484 : vector<1x1xf32>
    %487 = vector.shape_cast %486 : vector<1x1xf32> to vector<1x1x1xf32>
    %c0_520 = arith.constant 0 : index
    %c1_521 = arith.constant 1 : index
    %c0_522 = arith.constant 0 : index
    %488 = vector.load %arg26[%c0_520, %c1_521, %c0_522] : memref<1x2x1xf32, #tpu.memory_space<vmem>>, vector<1x1x1xf32>
    tpu.vector_store %arg26[%c0_520, %c1_521, %c0_522], %487 {strides = array<i32>} : memref<1x2x1xf32, #tpu.memory_space<vmem>>, vector<1x1x1xf32>,
    return
  }
  func.func @transform_0(%arg0: i32) -> (i32, i32, i32) {
    %c0_i32 = arith.constant 0 : i32
    %c0_i32_0 = arith.constant 0 : i32
    %c0_i32_1 = arith.constant 0 : i32
    return %arg0, %c0_i32, %c0_i32_0 : i32, i32, i32
  }
  func.func @transform_1(%arg0: i32) -> (i32, i32) {
    %c0_i32 = arith.constant 0 : i32
    %c0_i32_0 = arith.constant 0 : i32
    %c0_i32_1 = arith.constant 0 : i32
    return %c0_i32, %c0_i32_0 : i32, i32
  }
  func.func @transform_2(%arg0: i32) -> (i32, i32) {
    %c0_i32 = arith.constant 0 : i32
    %c0_i32_0 = arith.constant 0 : i32
    %c0_i32_1 = arith.constant 0 : i32
    return %c0_i32, %c0_i32_0 : i32, i32
  }
  func.func @transform_3(%arg0: i32) -> (i32, i32) {
    %c0_i32 = arith.constant 0 : i32
    %c0_i32_0 = arith.constant 0 : i32
    %c0_i32_1 = arith.constant 0 : i32
    return %c0_i32, %c0_i32_0 : i32, i32
  }
  func.func @transform_4(%arg0: i32) -> (i32, i32) {
    %c0_i32 = arith.constant 0 : i32
    %c0_i32_0 = arith.constant 0 : i32
    %c0_i32_1 = arith.constant 0 : i32
    return %c0_i32, %c0_i32_0 : i32, i32
  }
  func.func @transform_5(%arg0: i32) -> (i32, i32) {
    %c0_i32 = arith.constant 0 : i32
    %c0_i32_0 = arith.constant 0 : i32
    %c0_i32_1 = arith.constant 0 : i32
    return %c0_i32, %c0_i32_0 : i32, i32
  }
  func.func @transform_6(%arg0: i32) -> (i32, i32) {
    %c0_i32 = arith.constant 0 : i32
    %c0_i32_0 = arith.constant 0 : i32
    %c0_i32_1 = arith.constant 0 : i32
    return %c0_i32, %c0_i32_0 : i32, i32
  }
  func.func @transform_7(%arg0: i32) -> (i32, i32) {
    %c0_i32 = arith.constant 0 : i32
    %c0_i32_0 = arith.constant 0 : i32
    %c0_i32_1 = arith.constant 0 : i32
    return %c0_i32, %c0_i32_0 : i32, i32
  }
  func.func @transform_8(%arg0: i32) -> (i32, i32) {
    %c0_i32 = arith.constant 0 : i32
    %c0_i32_0 = arith.constant 0 : i32
    %c0_i32_1 = arith.constant 0 : i32
    return %c0_i32, %c0_i32_0 : i32, i32
  }
  func.func @transform_9(%arg0: i32) -> (i32, i32) {
    %c0_i32 = arith.constant 0 : i32
    %c0_i32_0 = arith.constant 0 : i32
    %c0_i32_1 = arith.constant 0 : i32
    return %c0_i32, %c0_i32_0 : i32, i32
  }
  func.func @transform_10(%arg0: i32) -> (i32, i32) {
    %c0_i32 = arith.constant 0 : i32
    %c0_i32_0 = arith.constant 0 : i32
    %c0_i32_1 = arith.constant 0 : i32
    return %c0_i32, %c0_i32_0 : i32, i32
  }
  func.func @transform_11(%arg0: i32) -> (i32, i32) {
    %c0_i32 = arith.constant 0 : i32
    %c0_i32_0 = arith.constant 0 : i32
    %c0_i32_1 = arith.constant 0 : i32
    return %c0_i32, %c0_i32_0 : i32, i32
  }
  func.func @transform_12(%arg0: i32) -> (i32, i32) {
    %c0_i32 = arith.constant 0 : i32
    %c0_i32_0 = arith.constant 0 : i32
    %c0_i32_1 = arith.constant 0 : i32
    return %c0_i32, %c0_i32_0 : i32, i32
  }
  func.func @transform_13(%arg0: i32) -> (i32, i32) {
    %c0_i32 = arith.constant 0 : i32
    %c0_i32_0 = arith.constant 0 : i32
    %c0_i32_1 = arith.constant 0 : i32
    return %c0_i32, %c0_i32_0 : i32, i32
  }
  func.func @transform_14(%arg0: i32) -> (i32, i32) {
    %c0_i32 = arith.constant 0 : i32
    %c0_i32_0 = arith.constant 0 : i32
    %c0_i32_1 = arith.constant 0 : i32
    return %c0_i32, %c0_i32_0 : i32, i32
  }
  func.func @transform_15(%arg0: i32) -> (i32, i32) {
    %c0_i32 = arith.constant 0 : i32
    %c0_i32_0 = arith.constant 0 : i32
    %c0_i32_1 = arith.constant 0 : i32
    return %c0_i32, %c0_i32_0 : i32, i32
  }
  func.func @transform_16(%arg0: i32) -> (i32, i32) {
    %c0_i32 = arith.constant 0 : i32
    %c0_i32_0 = arith.constant 0 : i32
    %c0_i32_1 = arith.constant 0 : i32
    return %c0_i32, %c0_i32_0 : i32, i32
  }
  func.func @transform_17(%arg0: i32) -> (i32, i32) {
    %c0_i32 = arith.constant 0 : i32
    %c0_i32_0 = arith.constant 0 : i32
    %c0_i32_1 = arith.constant 0 : i32
    return %c0_i32, %c0_i32_0 : i32, i32
  }
  func.func @transform_18(%arg0: i32) -> (i32, i32) {
    %c0_i32 = arith.constant 0 : i32
    %c0_i32_0 = arith.constant 0 : i32
    %c0_i32_1 = arith.constant 0 : i32
    return %c0_i32, %c0_i32_0 : i32, i32
  }
  func.func @transform_19(%arg0: i32) -> (i32, i32) {
    %c0_i32 = arith.constant 0 : i32
    %c0_i32_0 = arith.constant 0 : i32
    %c0_i32_1 = arith.constant 0 : i32
    return %c0_i32, %c0_i32_0 : i32, i32
  }
  func.func @transform_20(%arg0: i32) -> (i32, i32) {
    %c0_i32 = arith.constant 0 : i32
    %c0_i32_0 = arith.constant 0 : i32
    %c0_i32_1 = arith.constant 0 : i32
    return %c0_i32, %c0_i32_0 : i32, i32
  }
  func.func @transform_21(%arg0: i32) -> (i32, i32) {
    %c0_i32 = arith.constant 0 : i32
    %c0_i32_0 = arith.constant 0 : i32
    %c0_i32_1 = arith.constant 0 : i32
    return %c0_i32, %c0_i32_0 : i32, i32
  }
  func.func @transform_22(%arg0: i32) -> (i32, i32) {
    %c0_i32 = arith.constant 0 : i32
    %c0_i32_0 = arith.constant 0 : i32
    %c0_i32_1 = arith.constant 0 : i32
    return %c0_i32, %c0_i32_0 : i32, i32
  }
  func.func @transform_23(%arg0: i32) -> (i32, i32) {
    %c0_i32 = arith.constant 0 : i32
    %c0_i32_0 = arith.constant 0 : i32
    %c0_i32_1 = arith.constant 0 : i32
    return %c0_i32, %c0_i32_0 : i32, i32
  }
  func.func @transform_24(%arg0: i32) -> (i32, i32) {
    %c0_i32 = arith.constant 0 : i32
    %c0_i32_0 = arith.constant 0 : i32
    %c0_i32_1 = arith.constant 0 : i32
    return %c0_i32, %c0_i32_0 : i32, i32
  }
  func.func @transform_25(%arg0: i32) -> (i32, i32, i32) {
    %c0_i32 = arith.constant 0 : i32
    %c0_i32_0 = arith.constant 0 : i32
    %c0_i32_1 = arith.constant 0 : i32
    return %arg0, %c0_i32, %c0_i32_0 : i32, i32, i32
  }
  func.func @transform_26(%arg0: i32) -> (i32, i32, i32) {
    %c0_i32 = arith.constant 0 : i32
    %c0_i32_0 = arith.constant 0 : i32
    %c0_i32_1 = arith.constant 0 : i32
    return %arg0, %c0_i32, %c0_i32_0 : i32, i32, i32
  }
}

</mosaic_0001>

<llo_original>
// kernel: tile.53
$region0: #{tile.53}
  #allocation0 [shape = 's32[1]{0}', space=sflag, size = 0x4, scoped, tag = 'scoped memory for tile.53']
  %s0 = inlined_call_operand.vmem [shape: f32[8], index: 0, kind: input, shape index: {}]
  %s1 = inlined_call_operand.vmem [shape: f32[24,8], index: 1, kind: output, shape index: {}]
  // Predicated region
  $region2: #{tile.53} parent=0 // pred_check
    _
  $region3: #{tile.53} parent=0 // pred_check_branch
    %3 = sbr.rel (0) target = $region5
  $region4: #{tile.53} parent=0 // pred_region
    _
  $region5: #{tile.53} parent=0 // pred_fallthru
    _
  %v4 = vld [vmem:[%s0] ss:$0 sm:$0xff]
  %5 = vst [vmem:[%s1] sm:$0xff] %v4
  %s6 = scalar_lea.vmem %s1, 8
  %7 = vst [vmem:[%s6] sm:$0xff] %v4
  %s8 = scalar_lea.vmem %s1, 16
  %9 = vst [vmem:[%s8] sm:$0xff] %v4

// kernel: tile.54
$region0: #{tile.54}
  %s0 = inlined_call_operand.vmem [shape: f32[24,8], index: 0, kind: input, shape index: {}]
  %s1 = inlined_call_operand.vmem [shape: f32[1,192], index: 1, kind: output, shape index: {}]
  $region1: #{tile.54} parent=0
    #allocation0 [shape = 'u8[8192]{0}', space=vmem, size = 0x2000, scoped, tag = 'scoped mem for output reshape']
    %s2 = smov 3
    %v3 = vld [vmem:[%s0] ss:$16 sm:%s2]
    %vm4 = vcmask 64512
    %5 = vst.msk [vmem:[#allocation0] ss:$8 sm:$0x3] %vm4, %v3
    %s6 = scalar_lea.vmem %s0, 15
    %v7 = vld [vmem:[%s6] sm:$0x1]
    %8 = vrot.lane.b32.xlu0 %v7, 120
    %v9 = vpop.permute.xlu0 %8
    %vm10 = vcmask 1048512
    %11 = vst.msk [vmem:[#allocation0] sm:$0x1] %vm10, %v9
    %s12 = scalar_lea.vmem %s0, 14
    %v13 = vld [vmem:[%s12] sm:$0x1]
    %14 = vrot.lane.b32.xlu0 %v13, 112
    %v15 = vpop.permute.xlu0 %14
    %vm16 = vcmask 982912
    %17 = vst.msk [vmem:[#allocation0] sm:$0x1] %vm16, %v15
    %s18 = scalar_lea.vmem %s0, 13
    %v19 = vld [vmem:[%s18] sm:$0x1]
    %20 = vrot.lane.b32.xlu0 %v19, 104
    %v21 = vpop.permute.xlu0 %20
    %vm22 = vcmask 917312
    %23 = vst.msk [vmem:[#allocation0] sm:$0x1] %vm22, %v21
    %s24 = scalar_lea.vmem %s0, 12
    %v25 = vld [vmem:[%s24] sm:$0x1]
    %26 = vrot.lane.b32.xlu0 %v25, 96
    %v27 = vpop.permute.xlu0 %26
    %vm28 = vcmask 851712
    %29 = vst.msk [vmem:[#allocation0] sm:$0x1] %vm28, %v27
    %s30 = scalar_lea.vmem %s0, 11
    %v31 = vld [vmem:[%s30] sm:$0x1]
    %32 = vrot.lane.b32.xlu0 %v31, 88
    %v33 = vpop.permute.xlu0 %32
    %vm34 = vcmask 786112
    %35 = vst.msk [vmem:[#allocation0] sm:$0x1] %vm34, %v33
    %s36 = scalar_lea.vmem %s0, 10
    %v37 = vld [vmem:[%s36] sm:$0x1]
    %38 = vrot.lane.b32.xlu0 %v37, 80
    %v39 = vpop.permute.xlu0 %38
    %vm40 = vcmask 720512
    %41 = vst.msk [vmem:[#allocation0] sm:$0x1] %vm40, %v39
    %s42 = scalar_lea.vmem %s0, 9
    %v43 = vld [vmem:[%s42] sm:$0x1]
    %44 = vrot.lane.b32.xlu0 %v43, 72
    %v45 = vpop.permute.xlu0 %44
    %vm46 = vcmask 654912
    %47 = vst.msk [vmem:[#allocation0] sm:$0x1] %vm46, %v45
    %s48 = scalar_lea.vmem %s0, 8
    %v49 = vld [vmem:[%s48] sm:$0x1]
    %50 = vrot.lane.b32.xlu0 %v49, 64
    %v51 = vpop.permute.xlu0 %50
    %vm52 = vcmask 589312
    %53 = vst.msk [vmem:[#allocation0] sm:$0x1] %vm52, %v51
    %s54 = scalar_lea.vmem %s0, 7
    %s55 = smov 3
    %v56 = vld [vmem:[%s54] ss:$16 sm:%s55]
    %57 = vrot.lane.b32.xlu0 %v56, 56
    %v58 = vpop.permute.xlu0 %57
    %vm59 = vcmask 523712
    %60 = vst.msk [vmem:[#allocation0] ss:$8 sm:$0x3] %vm59, %v58
    %s61 = scalar_lea.vmem %s0, 6
    %s62 = smov 3
    %v63 = vld [vmem:[%s61] ss:$16 sm:%s62]
    %64 = vrot.lane.b32.xlu0 %v63, 48
    %v65 = vpop.permute.xlu0 %64
    %vm66 = vcmask 458112
    %67 = vst.msk [vmem:[#allocation0] ss:$8 sm:$0x3] %vm66, %v65
    %s68 = scalar_lea.vmem %s0, 5
    %s69 = smov 3
    %v70 = vld [vmem:[%s68] ss:$16 sm:%s69]
    %71 = vrot.lane.b32.xlu0 %v70, 40
    %v72 = vpop.permute.xlu0 %71
    %vm73 = vcmask 392512
    %74 = vst.msk [vmem:[#allocation0] ss:$8 sm:$0x3] %vm73, %v72
    %s75 = scalar_lea.vmem %s0, 4
    %s76 = smov 3
    %v77 = vld [vmem:[%s75] ss:$16 sm:%s76]
    %78 = vrot.lane.b32.xlu0 %v77, 32
    %v79 = vpop.permute.xlu0 %78
    %vm80 = vcmask 326912
    %81 = vst.msk [vmem:[#allocation0] ss:$8 sm:$0x3] %vm80, %v79
    %s82 = scalar_lea.vmem %s0, 3
    %s83 = smov 3
    %v84 = vld [vmem:[%s82] ss:$16 sm:%s83]
    %85 = vrot.lane.b32.xlu0 %v84, 24
    %v86 = vpop.permute.xlu0 %85
    %vm87 = vcmask 261312
    %88 = vst.msk [vmem:[#allocation0] ss:$8 sm:$0x3] %vm87, %v86
    %s89 = scalar_lea.vmem %s0, 2
    %s90 = smov 3
    %v91 = vld [vmem:[%s89] ss:$16 sm:%s90]
    %92 = vrot.lane.b32.xlu0 %v91, 16
    %v93 = vpop.permute.xlu0 %92
    %vm94 = vcmask 195712
    %95 = vst.msk [vmem:[#allocation0] ss:$8 sm:$0x3] %vm94, %v93
    %s96 = scalar_lea.vmem %s0, 1
    %s97 = smov 3
    %v98 = vld [vmem:[%s96] ss:$16 sm:%s97]
    %99 = vrot.lane.b32.xlu0 %v98, 8
    %v100 = vpop.permute.xlu0 %99
    %vm101 = vcmask 130112
    %102 = vst.msk [vmem:[#allocation0] ss:$8 sm:$0x3] %vm101, %v100
    %s104 = sshllo.u32 0, 1
    %v106 = vld [vmem:[#allocation0] sm:%s104]
    %s107 = sshllo.u32 0, 1
    %108 = vst [vmem:[%s1] sm:%s107] %v106
    %s109 = scalar_lea.vmem [#allocation0], 8
    %v110 = vld [vmem:[%s109] sm:%s104]
    %s111 = sshllo.u32 0, 1
    %s112 = scalar_lea.vmem %s1, 1
    %113 = vst [vmem:[%s112] sm:%s111] %v110

// kernel: tile.58
$region0: #{tile.58}
  #allocation0 [shape = 's32[1]{0}', space=sflag, size = 0x4, scoped, tag = 'scoped memory for tile.58']
  %s0 = inlined_call_operand.vmem [shape: f32[8], index: 0, kind: input, shape index: {}]
  %s1 = inlined_call_operand.vmem [shape: f32[20,8], index: 1, kind: output, shape index: {}]
  // Predicated region
  $region2: #{tile.58} parent=0 // pred_check
    _
  $region3: #{tile.58} parent=0 // pred_check_branch
    %3 = sbr.rel (0) target = $region5
  $region4: #{tile.58} parent=0 // pred_region
    _
  $region5: #{tile.58} parent=0 // pred_fallthru
    _
  %v4 = vld [vmem:[%s0] ss:$0 sm:$0xff]
  %5 = vst [vmem:[%s1] sm:$0xff] %v4
  %s6 = scalar_lea.vmem %s1, 8
  %7 = vst [vmem:[%s6] sm:$0xff] %v4
  %s8 = scalar_lea.vmem %s1, 16
  %9 = vst [vmem:[%s8] sm:$0xff] %v4

// kernel: tile.59
$region0: #{tile.59}
  %s0 = inlined_call_operand.vmem [shape: f32[20,8], index: 0, kind: input, shape index: {}]
  %s1 = inlined_call_operand.vmem [shape: f32[1,160], index: 1, kind: output, shape index: {}]
  $region1: #{tile.59} parent=0
    #allocation0 [shape = 'u8[8192]{0}', space=vmem, size = 0x2000, scoped, tag = 'scoped mem for output reshape']
    %s2 = smov 3
    %v3 = vld [vmem:[%s0] ss:$16 sm:%s2]
    %vm4 = vcmask 64512
    %5 = vst.msk [vmem:[#allocation0] ss:$8 sm:$0x3] %vm4, %v3
    %s6 = scalar_lea.vmem %s0, 15
    %v7 = vld [vmem:[%s6] sm:$0x1]
    %8 = vrot.lane.b32.xlu0 %v7, 120
    %v9 = vpop.permute.xlu0 %8
    %vm10 = vcmask 1048512
    %11 = vst.msk [vmem:[#allocation0] sm:$0x1] %vm10, %v9
    %s12 = scalar_lea.vmem %s0, 14
    %v13 = vld [vmem:[%s12] sm:$0x1]
    %14 = vrot.lane.b32.xlu0 %v13, 112
    %v15 = vpop.permute.xlu0 %14
    %vm16 = vcmask 982912
    %17 = vst.msk [vmem:[#allocation0] sm:$0x1] %vm16, %v15
    %s18 = scalar_lea.vmem %s0, 13
    %v19 = vld [vmem:[%s18] sm:$0x1]
    %20 = vrot.lane.b32.xlu0 %v19, 104
    %v21 = vpop.permute.xlu0 %20
    %vm22 = vcmask 917312
    %23 = vst.msk [vmem:[#allocation0] sm:$0x1] %vm22, %v21
    %s24 = scalar_lea.vmem %s0, 12
    %v25 = vld [vmem:[%s24] sm:$0x1]
    %26 = vrot.lane.b32.xlu0 %v25, 96
    %v27 = vpop.permute.xlu0 %26
    %vm28 = vcmask 851712
    %29 = vst.msk [vmem:[#allocation0] sm:$0x1] %vm28, %v27
    %s30 = scalar_lea.vmem %s0, 11
    %v31 = vld [vmem:[%s30] sm:$0x1]
    %32 = vrot.lane.b32.xlu0 %v31, 88
    %v33 = vpop.permute.xlu0 %32
    %vm34 = vcmask 786112
    %35 = vst.msk [vmem:[#allocation0] sm:$0x1] %vm34, %v33
    %s36 = scalar_lea.vmem %s0, 10
    %v37 = vld [vmem:[%s36] sm:$0x1]
    %38 = vrot.lane.b32.xlu0 %v37, 80
    %v39 = vpop.permute.xlu0 %38
    %vm40 = vcmask 720512
    %41 = vst.msk [vmem:[#allocation0] sm:$0x1] %vm40, %v39
    %s42 = scalar_lea.vmem %s0, 9
    %v43 = vld [vmem:[%s42] sm:$0x1]
    %44 = vrot.lane.b32.xlu0 %v43, 72
    %v45 = vpop.permute.xlu0 %44
    %vm46 = vcmask 654912
    %47 = vst.msk [vmem:[#allocation0] sm:$0x1] %vm46, %v45
    %s48 = scalar_lea.vmem %s0, 8
    %v49 = vld [vmem:[%s48] sm:$0x1]
    %50 = vrot.lane.b32.xlu0 %v49, 64
    %v51 = vpop.permute.xlu0 %50
    %vm52 = vcmask 589312
    %53 = vst.msk [vmem:[#allocation0] sm:$0x1] %vm52, %v51
    %s54 = scalar_lea.vmem %s0, 7
    %v55 = vld [vmem:[%s54] sm:$0x1]
    %56 = vrot.lane.b32.xlu0 %v55, 56
    %v57 = vpop.permute.xlu0 %56
    %vm58 = vcmask 523712
    %59 = vst.msk [vmem:[#allocation0] sm:$0x1] %vm58, %v57
    %s60 = scalar_lea.vmem %s0, 6
    %v61 = vld [vmem:[%s60] sm:$0x1]
    %62 = vrot.lane.b32.xlu0 %v61, 48
    %v63 = vpop.permute.xlu0 %62
    %vm64 = vcmask 458112
    %65 = vst.msk [vmem:[#allocation0] sm:$0x1] %vm64, %v63
    %s66 = scalar_lea.vmem %s0, 5
    %v67 = vld [vmem:[%s66] sm:$0x1]
    %68 = vrot.lane.b32.xlu0 %v67, 40
    %v69 = vpop.permute.xlu0 %68
    %vm70 = vcmask 392512
    %71 = vst.msk [vmem:[#allocation0] sm:$0x1] %vm70, %v69
    %s72 = scalar_lea.vmem %s0, 4
    %v73 = vld [vmem:[%s72] sm:$0x1]
    %74 = vrot.lane.b32.xlu0 %v73, 32
    %v75 = vpop.permute.xlu0 %74
    %vm76 = vcmask 326912
    %77 = vst.msk [vmem:[#allocation0] sm:$0x1] %vm76, %v75
    %s78 = scalar_lea.vmem %s0, 3
    %s79 = smov 3
    %v80 = vld [vmem:[%s78] ss:$16 sm:%s79]
    %81 = vrot.lane.b32.xlu0 %v80, 24
    %v82 = vpop.permute.xlu0 %81
    %vm83 = vcmask 261312
    %84 = vst.msk [vmem:[#allocation0] ss:$8 sm:$0x3] %vm83, %v82
    %s85 = scalar_lea.vmem %s0, 2
    %s86 = smov 3
    %v87 = vld [vmem:[%s85] ss:$16 sm:%s86]
    %88 = vrot.lane.b32.xlu0 %v87, 16
    %v89 = vpop.permute.xlu0 %88
    %vm90 = vcmask 195712
    %91 = vst.msk [vmem:[#allocation0] ss:$8 sm:$0x3] %vm90, %v89
    %s92 = scalar_lea.vmem %s0, 1
    %s93 = smov 3
    %v94 = vld [vmem:[%s92] ss:$16 sm:%s93]
    %95 = vrot.lane.b32.xlu0 %v94, 8
    %v96 = vpop.permute.xlu0 %95
    %vm97 = vcmask 130112
    %98 = vst.msk [vmem:[#allocation0] ss:$8 sm:$0x3] %vm97, %v96
    %s100 = sshllo.u32 0, 1
    %v102 = vld [vmem:[#allocation0] sm:%s100]
    %s103 = sshllo.u32 0, 1
    %104 = vst [vmem:[%s1] sm:%s103] %v102
    %s105 = scalar_lea.vmem [#allocation0], 8
    %v106 = vld [vmem:[%s105] sm:%s100]
    %s107 = sshllo.u32 0, 1
    %s108 = scalar_lea.vmem %s1, 1
    %109 = vst [vmem:[%s108] sm:%s107] %v106

// kernel: tile.63
$region0: #{tile.63}
  #allocation0 [shape = 's32[1]{0}', space=sflag, size = 0x4, scoped, tag = 'scoped memory for tile.63']
  %s0 = inlined_call_operand.vmem [shape: f32[8], index: 0, kind: input, shape index: {}]
  %s1 = inlined_call_operand.vmem [shape: f32[16,8], index: 1, kind: output, shape index: {}]
  // Predicated region
  $region2: #{tile.63} parent=0 // pred_check
    _
  $region3: #{tile.63} parent=0 // pred_check_branch
    %3 = sbr.rel (0) target = $region5
  $region4: #{tile.63} parent=0 // pred_region
    _
  $region5: #{tile.63} parent=0 // pred_fallthru
    _
  %v4 = vld [vmem:[%s0] ss:$0 sm:$0xff]
  %5 = vst [vmem:[%s1] sm:$0xff] %v4
  %s6 = scalar_lea.vmem %s1, 8
  %7 = vst [vmem:[%s6] sm:$0xff] %v4

// kernel: tile.64
$region0: #{tile.64}
  %s0 = inlined_call_operand.vmem [shape: f32[16,8], index: 0, kind: input, shape index: {}]
  %s1 = inlined_call_operand.vmem [shape: f32[1,128], index: 1, kind: output, shape index: {}]
  $region1: #{tile.64} parent=0
    #allocation0 [shape = 'u8[4096]{0}', space=vmem, size = 0x1000, scoped, tag = 'scoped mem for output reshape']
    %v2 = vld [vmem:[%s0] sm:$0x1]
    %vm3 = vcmask 64512
    %4 = vst.msk [vmem:[#allocation0] sm:$0x1] %vm3, %v2
    %s5 = scalar_lea.vmem %s0, 15
    %v6 = vld [vmem:[%s5] sm:$0x1]
    %7 = vrot.lane.b32.xlu0 %v6, 120
    %v8 = vpop.permute.xlu0 %7
    %vm9 = vcmask 1048512
    %10 = vst.msk [vmem:[#allocation0] sm:$0x1] %vm9, %v8
    %s11 = scalar_lea.vmem %s0, 14
    %v12 = vld [vmem:[%s11] sm:$0x1]
    %13 = vrot.lane.b32.xlu0 %v12, 112
    %v14 = vpop.permute.xlu0 %13
    %vm15 = vcmask 982912
    %16 = vst.msk [vmem:[#allocation0] sm:$0x1] %vm15, %v14
    %s17 = scalar_lea.vmem %s0, 13
    %v18 = vld [vmem:[%s17] sm:$0x1]
    %19 = vrot.lane.b32.xlu0 %v18, 104
    %v20 = vpop.permute.xlu0 %19
    %vm21 = vcmask 917312
    %22 = vst.msk [vmem:[#allocation0] sm:$0x1] %vm21, %v20
    %s23 = scalar_lea.vmem %s0, 12
    %v24 = vld [vmem:[%s23] sm:$0x1]
    %25 = vrot.lane.b32.xlu0 %v24, 96
    %v26 = vpop.permute.xlu0 %25
    %vm27 = vcmask 851712
    %28 = vst.msk [vmem:[#allocation0] sm:$0x1] %vm27, %v26
    %s29 = scalar_lea.vmem %s0, 11
    %v30 = vld [vmem:[%s29] sm:$0x1]
    %31 = vrot.lane.b32.xlu0 %v30, 88
    %v32 = vpop.permute.xlu0 %31
    %vm33 = vcmask 786112
    %34 = vst.msk [vmem:[#allocation0] sm:$0x1] %vm33, %v32
    %s35 = scalar_lea.vmem %s0, 10
    %v36 = vld [vmem:[%s35] sm:$0x1]
    %37 = vrot.lane.b32.xlu0 %v36, 80
    %v38 = vpop.permute.xlu0 %37
    %vm39 = vcmask 720512
    %40 = vst.msk [vmem:[#allocation0] sm:$0x1] %vm39, %v38
    %s41 = scalar_lea.vmem %s0, 9
    %v42 = vld [vmem:[%s41] sm:$0x1]
    %43 = vrot.lane.b32.xlu0 %v42, 72
    %v44 = vpop.permute.xlu0 %43
    %vm45 = vcmask 654912
    %46 = vst.msk [vmem:[#allocation0] sm:$0x1] %vm45, %v44
    %s47 = scalar_lea.vmem %s0, 8
    %v48 = vld [vmem:[%s47] sm:$0x1]
    %49 = vrot.lane.b32.xlu0 %v48, 64
    %v50 = vpop.permute.xlu0 %49
    %vm51 = vcmask 589312
    %52 = vst.msk [vmem:[#allocation0] sm:$0x1] %vm51, %v50
    %s53 = scalar_lea.vmem %s0, 7
    %v54 = vld [vmem:[%s53] sm:$0x1]
    %55 = vrot.lane.b32.xlu0 %v54, 56
    %v56 = vpop.permute.xlu0 %55
    %vm57 = vcmask 523712
    %58 = vst.msk [vmem:[#allocation0] sm:$0x1] %vm57, %v56
    %s59 = scalar_lea.vmem %s0, 6
    %v60 = vld [vmem:[%s59] sm:$0x1]
    %61 = vrot.lane.b32.xlu0 %v60, 48
    %v62 = vpop.permute.xlu0 %61
    %vm63 = vcmask 458112
    %64 = vst.msk [vmem:[#allocation0] sm:$0x1] %vm63, %v62
    %s65 = scalar_lea.vmem %s0, 5
    %v66 = vld [vmem:[%s65] sm:$0x1]
    %67 = vrot.lane.b32.xlu0 %v66, 40
    %v68 = vpop.permute.xlu0 %67
    %vm69 = vcmask 392512
    %70 = vst.msk [vmem:[#allocation0] sm:$0x1] %vm69, %v68
    %s71 = scalar_lea.vmem %s0, 4
    %v72 = vld [vmem:[%s71] sm:$0x1]
    %73 = vrot.lane.b32.xlu0 %v72, 32
    %v74 = vpop.permute.xlu0 %73
    %vm75 = vcmask 326912
    %76 = vst.msk [vmem:[#allocation0] sm:$0x1] %vm75, %v74
    %s77 = scalar_lea.vmem %s0, 3
    %v78 = vld [vmem:[%s77] sm:$0x1]
    %79 = vrot.lane.b32.xlu0 %v78, 24
    %v80 = vpop.permute.xlu0 %79
    %vm81 = vcmask 261312
    %82 = vst.msk [vmem:[#allocation0] sm:$0x1] %vm81, %v80
    %s83 = scalar_lea.vmem %s0, 2
    %v84 = vld [vmem:[%s83] sm:$0x1]
    %85 = vrot.lane.b32.xlu0 %v84, 16
    %v86 = vpop.permute.xlu0 %85
    %vm87 = vcmask 195712
    %88 = vst.msk [vmem:[#allocation0] sm:$0x1] %vm87, %v86
    %s89 = scalar_lea.vmem %s0, 1
    %v90 = vld [vmem:[%s89] sm:$0x1]
    %91 = vrot.lane.b32.xlu0 %v90, 8
    %v92 = vpop.permute.xlu0 %91
    %vm93 = vcmask 130112
    %94 = vst.msk [vmem:[#allocation0] sm:$0x1] %vm93, %v92
    %s96 = sshllo.u32 0, 1
    %v98 = vld [vmem:[#allocation0] sm:%s96]
    %s99 = sshllo.u32 0, 1
    %100 = vst [vmem:[%s1] sm:%s99] %v98

// kernel: tile.68
$region0: #{tile.68}
  #allocation0 [shape = 's32[1]{0}', space=sflag, size = 0x4, scoped, tag = 'scoped memory for tile.68']
  %s0 = inlined_call_operand.vmem [shape: f32[8], index: 0, kind: input, shape index: {}]
  %s1 = inlined_call_operand.vmem [shape: f32[12,8], index: 1, kind: output, shape index: {}]
  // Predicated region
  $region2: #{tile.68} parent=0 // pred_check
    _
  $region3: #{tile.68} parent=0 // pred_check_branch
    %3 = sbr.rel (0) target = $region5
  $region4: #{tile.68} parent=0 // pred_region
    _
  $region5: #{tile.68} parent=0 // pred_fallthru
    _
  %v4 = vld [vmem:[%s0] ss:$0 sm:$0xff]
  %5 = vst [vmem:[%s1] sm:$0xff] %v4
  %s6 = scalar_lea.vmem %s1, 8
  %7 = vst [vmem:[%s6] sm:$0xff] %v4

// kernel: tile.69
$region0: #{tile.69}
  %s0 = inlined_call_operand.vmem [shape: f32[12,8], index: 0, kind: input, shape index: {}]
  %s1 = inlined_call_operand.vmem [shape: f32[1,96], index: 1, kind: output, shape index: {}]
  $region1: #{tile.69} parent=0
    #allocation0 [shape = 'u8[4096]{0}', space=vmem, size = 0x1000, scoped, tag = 'scoped mem for output reshape']
    %v2 = vld [vmem:[%s0] sm:$0x1]
    %vm3 = vcmask 64512
    %4 = vst.msk [vmem:[#allocation0] sm:$0x1] %vm3, %v2
    %s5 = scalar_lea.vmem %s0, 11
    %v6 = vld [vmem:[%s5] sm:$0x1]
    %7 = vrot.lane.b32.xlu0 %v6, 88
    %v8 = vpop.permute.xlu0 %7
    %vm9 = vcmask 786112
    %10 = vst.msk [vmem:[#allocation0] sm:$0x1] %vm9, %v8
    %s11 = scalar_lea.vmem %s0, 10
    %v12 = vld [vmem:[%s11] sm:$0x1]
    %13 = vrot.lane.b32.xlu0 %v12, 80
    %v14 = vpop.permute.xlu0 %13
    %vm15 = vcmask 720512
    %16 = vst.msk [vmem:[#allocation0] sm:$0x1] %vm15, %v14
    %s17 = scalar_lea.vmem %s0, 9
    %v18 = vld [vmem:[%s17] sm:$0x1]
    %19 = vrot.lane.b32.xlu0 %v18, 72
    %v20 = vpop.permute.xlu0 %19
    %vm21 = vcmask 654912
    %22 = vst.msk [vmem:[#allocation0] sm:$0x1] %vm21, %v20
    %s23 = scalar_lea.vmem %s0, 8
    %v24 = vld [vmem:[%s23] sm:$0x1]
    %25 = vrot.lane.b32.xlu0 %v24, 64
    %v26 = vpop.permute.xlu0 %25
    %vm27 = vcmask 589312
    %28 = vst.msk [vmem:[#allocation0] sm:$0x1] %vm27, %v26
    %s29 = scalar_lea.vmem %s0, 7
    %v30 = vld [vmem:[%s29] sm:$0x1]
    %31 = vrot.lane.b32.xlu0 %v30, 56
    %v32 = vpop.permute.xlu0 %31
    %vm33 = vcmask 523712
    %34 = vst.msk [vmem:[#allocation0] sm:$0x1] %vm33, %v32
    %s35 = scalar_lea.vmem %s0, 6
    %v36 = vld [vmem:[%s35] sm:$0x1]
    %37 = vrot.lane.b32.xlu0 %v36, 48
    %v38 = vpop.permute.xlu0 %37
    %vm39 = vcmask 458112
    %40 = vst.msk [vmem:[#allocation0] sm:$0x1] %vm39, %v38
    %s41 = scalar_lea.vmem %s0, 5
    %v42 = vld [vmem:[%s41] sm:$0x1]
    %43 = vrot.lane.b32.xlu0 %v42, 40
    %v44 = vpop.permute.xlu0 %43
    %vm45 = vcmask 392512
    %46 = vst.msk [vmem:[#allocation0] sm:$0x1] %vm45, %v44
    %s47 = scalar_lea.vmem %s0, 4
    %v48 = vld [vmem:[%s47] sm:$0x1]
    %49 = vrot.lane.b32.xlu0 %v48, 32
    %v50 = vpop.permute.xlu0 %49
    %vm51 = vcmask 326912
    %52 = vst.msk [vmem:[#allocation0] sm:$0x1] %vm51, %v50
    %s53 = scalar_lea.vmem %s0, 3
    %v54 = vld [vmem:[%s53] sm:$0x1]
    %55 = vrot.lane.b32.xlu0 %v54, 24
    %v56 = vpop.permute.xlu0 %55
    %vm57 = vcmask 261312
    %58 = vst.msk [vmem:[#allocation0] sm:$0x1] %vm57, %v56
    %s59 = scalar_lea.vmem %s0, 2
    %v60 = vld [vmem:[%s59] sm:$0x1]
    %61 = vrot.lane.b32.xlu0 %v60, 16
    %v62 = vpop.permute.xlu0 %61
    %vm63 = vcmask 195712
    %64 = vst.msk [vmem:[#allocation0] sm:$0x1] %vm63, %v62
    %s65 = scalar_lea.vmem %s0, 1
    %v66 = vld [vmem:[%s65] sm:$0x1]
    %67 = vrot.lane.b32.xlu0 %v66, 8
    %v68 = vpop.permute.xlu0 %67
    %vm69 = vcmask 130112
    %70 = vst.msk [vmem:[#allocation0] sm:$0x1] %vm69, %v68
    %s72 = sshllo.u32 0, 1
    %v74 = vld [vmem:[#allocation0] sm:%s72]
    %s75 = sshllo.u32 0, 1
    %76 = vst [vmem:[%s1] sm:%s75] %v74

// kernel: tile.73
$region0: #{tile.73}
  #allocation0 [shape = 's32[1]{0}', space=sflag, size = 0x4, scoped, tag = 'scoped memory for tile.73']
  %s0 = inlined_call_operand.vmem [shape: f32[8], index: 0, kind: input, shape index: {}]
  %s1 = inlined_call_operand.vmem [shape: f32[8,8], index: 1, kind: output, shape index: {}]
  // Predicated region
  $region2: #{tile.73} parent=0 // pred_check
    _
  $region3: #{tile.73} parent=0 // pred_check_branch
    %3 = sbr.rel (0) target = $region5
  $region4: #{tile.73} parent=0 // pred_region
    _
  $region5: #{tile.73} parent=0 // pred_fallthru
    _
  %v4 = vld [vmem:[%s0] ss:$0 sm:$0xff]
  %5 = vst [vmem:[%s1] sm:$0xff] %v4

// kernel: tile.74
$region0: #{tile.74}
  %s0 = inlined_call_operand.vmem [shape: f32[8,8], index: 0, kind: input, shape index: {}]
  %s1 = inlined_call_operand.vmem [shape: f32[1,64], index: 1, kind: output, shape index: {}]
  $region1: #{tile.74} parent=0
    #allocation0 [shape = 'u8[4096]{0}', space=vmem, size = 0x1000, scoped, tag = 'scoped mem for output reshape']
    %v2 = vld [vmem:[%s0] sm:$0x1]
    %vm3 = vcmask 64512
    %4 = vst.msk [vmem:[#allocation0] sm:$0x1] %vm3, %v2
    %s5 = scalar_lea.vmem %s0, 7
    %v6 = vld [vmem:[%s5] sm:$0x1]
    %7 = vrot.lane.b32.xlu0 %v6, 56
    %v8 = vpop.permute.xlu0 %7
    %vm9 = vcmask 523712
    %10 = vst.msk [vmem:[#allocation0] sm:$0x1] %vm9, %v8
    %s11 = scalar_lea.vmem %s0, 6
    %v12 = vld [vmem:[%s11] sm:$0x1]
    %13 = vrot.lane.b32.xlu0 %v12, 48
    %v14 = vpop.permute.xlu0 %13
    %vm15 = vcmask 458112
    %16 = vst.msk [vmem:[#allocation0] sm:$0x1] %vm15, %v14
    %s17 = scalar_lea.vmem %s0, 5
    %v18 = vld [vmem:[%s17] sm:$0x1]
    %19 = vrot.lane.b32.xlu0 %v18, 40
    %v20 = vpop.permute.xlu0 %19
    %vm21 = vcmask 392512
    %22 = vst.msk [vmem:[#allocation0] sm:$0x1] %vm21, %v20
    %s23 = scalar_lea.vmem %s0, 4
    %v24 = vld [vmem:[%s23] sm:$0x1]
    %25 = vrot.lane.b32.xlu0 %v24, 32
    %v26 = vpop.permute.xlu0 %25
    %vm27 = vcmask 326912
    %28 = vst.msk [vmem:[#allocation0] sm:$0x1] %vm27, %v26
    %s29 = scalar_lea.vmem %s0, 3
    %v30 = vld [vmem:[%s29] sm:$0x1]
    %31 = vrot.lane.b32.xlu0 %v30, 24
    %v32 = vpop.permute.xlu0 %31
    %vm33 = vcmask 261312
    %34 = vst.msk [vmem:[#allocation0] sm:$0x1] %vm33, %v32
    %s35 = scalar_lea.vmem %s0, 2
    %v36 = vld [vmem:[%s35] sm:$0x1]
    %37 = vrot.lane.b32.xlu0 %v36, 16
    %v38 = vpop.permute.xlu0 %37
    %vm39 = vcmask 195712
    %40 = vst.msk [vmem:[#allocation0] sm:$0x1] %vm39, %v38
    %s41 = scalar_lea.vmem %s0, 1
    %v42 = vld [vmem:[%s41] sm:$0x1]
    %43 = vrot.lane.b32.xlu0 %v42, 8
    %v44 = vpop.permute.xlu0 %43
    %vm45 = vcmask 130112
    %46 = vst.msk [vmem:[#allocation0] sm:$0x1] %vm45, %v44
    %s48 = sshllo.u32 0, 1
    %v50 = vld [vmem:[#allocation0] sm:%s48]
    %s51 = sshllo.u32 0, 1
    %52 = vst [vmem:[%s1] sm:%s51] %v50

// kernel: _lambda_.1
$region0: #{_lambda_.1}
  #allocation0 [shape = 'u32[]', space=smem, size = 0x4, offset = 0x4, fixed_abs, tag = 'smem constant byte address 0x4 - core index']
  #allocation1 [shape = 'u32[144,128]{1,0:T(1,128)}', space=vmem, size = 0x12000, scoped, tag = 'internal scratch']
  #allocation2 [shape = 'f32[48,192]{1,0:T(8,128)}', space=vmem, size = 0xc000, scoped, tag = 'scratch operand']
  #allocation3 [shape = 'f32[40,160]{1,0:T(8,128)}', space=vmem, size = 0xa000, scoped, tag = 'scratch operand']
  #allocation4 [shape = 'f32[32,128]{1,0:T(8,128)}', space=vmem, size = 0x4000, scoped, tag = 'scratch operand']
  #allocation5 [shape = 'f32[24,96]{1,0:T(8,128)}', space=vmem, size = 0x3000, scoped, tag = 'scratch operand']
  #allocation6 [shape = 'f32[32,64]{1,0:T(8,128)}', space=vmem, size = 0x4000, scoped, tag = 'scratch operand']
  #allocation7 [shape = 'f32[40,96]{1,0:T(8,128)}', space=vmem, size = 0x5000, scoped, tag = 'scratch operand']
  #allocation8 [shape = 'f32[48,128]{1,0:T(8,128)}', space=vmem, size = 0x6000, scoped, tag = 'scratch operand']
  #allocation9 [shape = 'f32[56,160]{1,0:T(8,128)}', space=vmem, size = 0xe000, scoped, tag = 'scratch operand']
  #allocation10 [shape = 'f32[64,192]{1,0:T(8,128)}', space=vmem, size = 0x10000, scoped, tag = 'scratch operand']
  #allocation11 [shape = 'bf16[56,960]{1,0:T(8,128)(2,1)}', space=vmem, size = 0x1c000, scoped, tag = 'scratch operand']
  #allocation12 [shape = 'f32[1,1]{1,0:T(1,128)S(1)}', space=vmem, size = 0x200, scoped, tag = 'scoped memory for _lambda_.1']
  %s0 = inlined_call_operand.vmem [shape: f32[2,28,28], index: 0, kind: input, shape index: {}]
  %s1 = inlined_call_operand.vmem [shape: bf16[140,192], index: 1, kind: input, shape index: {}]
  %s2 = inlined_call_operand.vmem [shape: bf16[960,160], index: 2, kind: input, shape index: {}]
  %s3 = inlined_call_operand.vmem [shape: bf16[800,128], index: 3, kind: input, shape index: {}]
  %s4 = inlined_call_operand.vmem [shape: bf16[640,96], index: 4, kind: input, shape index: {}]
  %s5 = inlined_call_operand.vmem [shape: bf16[480,64], index: 5, kind: input, shape index: {}]
  %s6 = inlined_call_operand.vmem [shape: bf16[320,96], index: 6, kind: input, shape index: {}]
  %s7 = inlined_call_operand.vmem [shape: bf16[480,128], index: 7, kind: input, shape index: {}]
  %s8 = inlined_call_operand.vmem [shape: bf16[640,160], index: 8, kind: input, shape index: {}]
  %s9 = inlined_call_operand.vmem [shape: bf16[800,192], index: 9, kind: input, shape index: {}]
  %s10 = inlined_call_operand.vmem [shape: bf16[960,28], index: 10, kind: input, shape index: {}]
  %s11 = inlined_call_operand.vmem [shape: f32[1,192], index: 11, kind: input, shape index: {}]
  %s12 = inlined_call_operand.vmem [shape: f32[1,160], index: 12, kind: input, shape index: {}]
  %s13 = inlined_call_operand.vmem [shape: f32[1,128], index: 13, kind: input, shape index: {}]
  %s14 = inlined_call_operand.vmem [shape: f32[1,96], index: 14, kind: input, shape index: {}]
  %s15 = inlined_call_operand.vmem [shape: f32[1,64], index: 15, kind: input, shape index: {}]
  %s16 = inlined_call_operand.vmem [shape: f32[1,96], index: 16, kind: input, shape index: {}]
  %s17 = inlined_call_operand.vmem [shape: f32[1,128], index: 17, kind: input, shape index: {}]
  %s18 = inlined_call_operand.vmem [shape: f32[1,160], index: 18, kind: input, shape index: {}]
  %s19 = inlined_call_operand.vmem [shape: f32[1,192], index: 19, kind: input, shape index: {}]
  %s20 = inlined_call_operand.vmem [shape: f32[1,28], index: 20, kind: input, shape index: {}]
  %s21 = inlined_call_operand.vmem [shape: f32[1,16], index: 21, kind: input, shape index: {}]
  %s22 = inlined_call_operand.vmem [shape: f32[1,16], index: 22, kind: input, shape index: {}]
  %s23 = inlined_call_operand.vmem [shape: f32[1,16], index: 23, kind: input, shape index: {}]
  %s24 = inlined_call_operand.<no memory space> [shape: f32[1,1], index: 24, kind: input, shape index: {}]
  %s25 = inlined_call_operand.vmem [shape: f32[1,2,1], index: 25, kind: output, shape index: {0}]
  %s26 = inlined_call_operand.vmem [shape: f32[2,28,28], index: 26, kind: output, shape index: {1}]
  %27 = xla_tuple %s25, %s26
  %s28 = sld [smem:[#allocation0]]
  $region122: #{_lambda_.1} parent=0
    _
  %s30 = ssub.s32 1, %s28
  %s31 = scalar_select 0, %s30, %s28
  %v32 = vstv %s24
  %33 = vst [vmem:[#allocation12] sm:$0x1] %v32
  // Predicated region
  $region2: #{_lambda_.1} parent=0 // pred_check
    _
  $region3: #{_lambda_.1} parent=0 // pred_check_branch
    %35 = sbr.rel (0) target = $region5
  $region4: #{_lambda_.1} parent=0 // pred_region
    _
  $region5: #{_lambda_.1} parent=0 // pred_fallthru
    _
  // Predicated region
  $region6: #{_lambda_.1} parent=0 // pred_check
    _
  $region7: #{_lambda_.1} parent=0 // pred_check_branch
    %37 = sbr.rel (0) target = $region9
  $region8: #{_lambda_.1} parent=0 // pred_region
    _
  $region9: #{_lambda_.1} parent=0 // pred_fallthru
    _
  // Predicated region
  $region10: #{_lambda_.1} parent=0 // pred_check
    _
  $region11: #{_lambda_.1} parent=0 // pred_check_branch
    %39 = sbr.rel (0) target = $region13
  $region12: #{_lambda_.1} parent=0 // pred_region
    _
  $region13: #{_lambda_.1} parent=0 // pred_fallthru
    _
  // Predicated region
  $region14: #{_lambda_.1} parent=0 // pred_check
    _
  $region15: #{_lambda_.1} parent=0 // pred_check_branch
    %41 = sbr.rel (0) target = $region17
  $region16: #{_lambda_.1} parent=0 // pred_region
    _
  $region17: #{_lambda_.1} parent=0 // pred_fallthru
    _
  // Predicated region
  $region18: #{_lambda_.1} parent=0 // pred_check
    _
  $region19: #{_lambda_.1} parent=0 // pred_check_branch
    %43 = sbr.rel (0) target = $region21
  $region20: #{_lambda_.1} parent=0 // pred_region
    _
  $region21: #{_lambda_.1} parent=0 // pred_fallthru
    _
  // Predicated region
  $region22: #{_lambda_.1} parent=0 // pred_check
    _
  $region23: #{_lambda_.1} parent=0 // pred_check_branch
    %45 = sbr.rel (0) target = $region25
  $region24: #{_lambda_.1} parent=0 // pred_region
    _
  $region25: #{_lambda_.1} parent=0 // pred_fallthru
    _
  // Predicated region
  $region26: #{_lambda_.1} parent=0 // pred_check
    _
  $region27: #{_lambda_.1} parent=0 // pred_check_branch
    %47 = sbr.rel (0) target = $region29
  $region28: #{_lambda_.1} parent=0 // pred_region
    _
  $region29: #{_lambda_.1} parent=0 // pred_fallthru
    _
  // Predicated region
  $region30: #{_lambda_.1} parent=0 // pred_check
    _
  $region31: #{_lambda_.1} parent=0 // pred_check_branch
    %49 = sbr.rel (0) target = $region33
  $region32: #{_lambda_.1} parent=0 // pred_region
    _
  $region33: #{_lambda_.1} parent=0 // pred_fallthru
    _
  // Predicated region
  $region34: #{_lambda_.1} parent=0 // pred_check
    _
  $region35: #{_lambda_.1} parent=0 // pred_check_branch
    %51 = sbr.rel (0) target = $region37
  $region36: #{_lambda_.1} parent=0 // pred_region
    _
  $region37: #{_lambda_.1} parent=0 // pred_fallthru
    _
  // Predicated region
  $region38: #{_lambda_.1} parent=0 // pred_check
    _
  $region39: #{_lambda_.1} parent=0 // pred_check_branch
    %53 = sbr.rel (0) target = $region41
  $region40: #{_lambda_.1} parent=0 // pred_region
    _
  $region41: #{_lambda_.1} parent=0 // pred_fallthru
    _
  // Predicated region
  $region42: #{_lambda_.1} parent=0 // pred_check
    _
  $region43: #{_lambda_.1} parent=0 // pred_check_branch
    %55 = sbr.rel (0) target = $region45
  $region44: #{_lambda_.1} parent=0 // pred_region
    _
  $region45: #{_lambda_.1} parent=0 // pred_fallthru
    _
  // Predicated region
  $region46: #{_lambda_.1} parent=0 // pred_check
    _
  $region47: #{_lambda_.1} parent=0 // pred_check_branch
    %57 = sbr.rel (0) target = $region49
  $region48: #{_lambda_.1} parent=0 // pred_region
    _
  $region49: #{_lambda_.1} parent=0 // pred_fallthru
    _
  // Predicated region
  $region50: #{_lambda_.1} parent=0 // pred_check
    _
  $region51: #{_lambda_.1} parent=0 // pred_check_branch
    %59 = sbr.rel (0) target = $region53
  $region52: #{_lambda_.1} parent=0 // pred_region
    _
  $region53: #{_lambda_.1} parent=0 // pred_fallthru
    _
  // Predicated region
  $region54: #{_lambda_.1} parent=0 // pred_check
    _
  $region55: #{_lambda_.1} parent=0 // pred_check_branch
    %61 = sbr.rel (0) target = $region57
  $region56: #{_lambda_.1} parent=0 // pred_region
    _
  $region57: #{_lambda_.1} parent=0 // pred_fallthru
    _
  // Predicated region
  $region58: #{_lambda_.1} parent=0 // pred_check
    _
  $region59: #{_lambda_.1} parent=0 // pred_check_branch
    %63 = sbr.rel (0) target = $region61
  $region60: #{_lambda_.1} parent=0 // pred_region
    _
  $region61: #{_lambda_.1} parent=0 // pred_fallthru
    _
  // Predicated region
  $region62: #{_lambda_.1} parent=0 // pred_check
    _
  $region63: #{_lambda_.1} parent=0 // pred_check_branch
    %65 = sbr.rel (0) target = $region65
  $region64: #{_lambda_.1} parent=0 // pred_region
    _
  $region65: #{_lambda_.1} parent=0 // pred_fallthru
    _
  // Predicated region
  $region66: #{_lambda_.1} parent=0 // pred_check
    _
  $region67: #{_lambda_.1} parent=0 // pred_check_branch
    %67 = sbr.rel (0) target = $region69
  $region68: #{_lambda_.1} parent=0 // pred_region
    _
  $region69: #{_lambda_.1} parent=0 // pred_fallthru
    _
  // Predicated region
  $region70: #{_lambda_.1} parent=0 // pred_check
    _
  $region71: #{_lambda_.1} parent=0 // pred_check_branch
    %69 = sbr.rel (0) target = $region73
  $region72: #{_lambda_.1} parent=0 // pred_region
    _
  $region73: #{_lambda_.1} parent=0 // pred_fallthru
    _
  // Predicated region
  $region74: #{_lambda_.1} parent=0 // pred_check
    _
  $region75: #{_lambda_.1} parent=0 // pred_check_branch
    %71 = sbr.rel (0) target = $region77
  $region76: #{_lambda_.1} parent=0 // pred_region
    _
  $region77: #{_lambda_.1} parent=0 // pred_fallthru
    _
  // Predicated region
  $region78: #{_lambda_.1} parent=0 // pred_check
    _
  $region79: #{_lambda_.1} parent=0 // pred_check_branch
    %73 = sbr.rel (0) target = $region81
  $region80: #{_lambda_.1} parent=0 // pred_region
    _
  $region81: #{_lambda_.1} parent=0 // pred_fallthru
    _
  // Predicated region
  $region82: #{_lambda_.1} parent=0 // pred_check
    _
  $region83: #{_lambda_.1} parent=0 // pred_check_branch
    %75 = sbr.rel (0) target = $region85
  $region84: #{_lambda_.1} parent=0 // pred_region
    _
  $region85: #{_lambda_.1} parent=0 // pred_fallthru
    _
  // Predicated region
  $region86: #{_lambda_.1} parent=0 // pred_check
    _
  $region87: #{_lambda_.1} parent=0 // pred_check_branch
    %77 = sbr.rel (0) target = $region89
  $region88: #{_lambda_.1} parent=0 // pred_region
    _
  $region89: #{_lambda_.1} parent=0 // pred_fallthru
    _
  // Predicated region
  $region90: #{_lambda_.1} parent=0 // pred_check
    _
  $region91: #{_lambda_.1} parent=0 // pred_check_branch
    %79 = sbr.rel (0) target = $region93
  $region92: #{_lambda_.1} parent=0 // pred_region
    _
  $region93: #{_lambda_.1} parent=0 // pred_fallthru
    _
  // Predicated region
  $region94: #{_lambda_.1} parent=0 // pred_check
    _
  $region95: #{_lambda_.1} parent=0 // pred_check_branch
    %81 = sbr.rel (0) target = $region97
  $region96: #{_lambda_.1} parent=0 // pred_region
    _
  $region97: #{_lambda_.1} parent=0 // pred_fallthru
    _
  // Predicated region
  $region98: #{_lambda_.1} parent=0 // pred_check
    _
  $region99: #{_lambda_.1} parent=0 // pred_check_branch
    %83 = sbr.rel (0) target = $region101
  $region100: #{_lambda_.1} parent=0 // pred_region
    _
  $region101: #{_lambda_.1} parent=0 // pred_fallthru
    _
  %p85 = scmp.eq.s32.totalorder 0, 0
  // Predicated region
  $region102: #{_lambda_.1} parent=0 // pred_check
    %p86 = pneg %p85
  $region103: #{_lambda_.1} parent=0 // pred_check_branch
    %88 = sbr.rel (%p86) target = $region105
  $region104: #{_lambda_.1} parent=0 // pred_region
    %vm89 = vcmask 523264
    %90 = vst.msk [vmem:[#allocation6] sm:$0xff] %vm89, 0.0
    %91 = vst.msk [vmem:[#allocation6 + $0x8] sm:$0xff] %vm89, 0.0
    %92 = vst.msk [vmem:[#allocation6 + $0x10] sm:$0xff] %vm89, 0.0
    %93 = vst.msk [vmem:[#allocation6 + $0x18] sm:$0xff] %vm89, 0.0
    %vm94 = vcmask 785408
    %95 = vst.msk [vmem:[#allocation7] sm:$0xff] %vm94, 0.0
    %96 = vst.msk [vmem:[#allocation7 + $0x8] sm:$0xff] %vm94, 0.0
    %97 = vst.msk [vmem:[#allocation7 + $0x10] sm:$0xff] %vm94, 0.0
    %98 = vst.msk [vmem:[#allocation7 + $0x18] sm:$0xff] %vm94, 0.0
    %99 = vst.msk [vmem:[#allocation7 + $0x20] sm:$0xff] %vm94, 0.0
    %100 = vst [vmem:[#allocation8] sm:$0xff] 0.0
    %101 = vst [vmem:[#allocation8 + $0x8] sm:$0xff] 0.0
    %102 = vst [vmem:[#allocation8 + $0x10] sm:$0xff] 0.0
    %103 = vst [vmem:[#allocation8 + $0x18] sm:$0xff] 0.0
    %104 = vst [vmem:[#allocation8 + $0x20] sm:$0xff] 0.0
    %105 = vst [vmem:[#allocation8 + $0x28] sm:$0xff] 0.0
    %106 = vst [vmem:[#allocation9] sm:$0xff] 0.0
    %vm107 = vcmask 261120
    %108 = vst.msk [vmem:[#allocation9 + $0x8] sm:$0xff] %vm107, 0.0
    %109 = vst [vmem:[#allocation9 + $0x10] sm:$0xff] 0.0
    %110 = vst.msk [vmem:[#allocation9 + $0x18] sm:$0xff] %vm107, 0.0
    %111 = vst [vmem:[#allocation9 + $0x20] sm:$0xff] 0.0
    %112 = vst.msk [vmem:[#allocation9 + $0x28] sm:$0xff] %vm107, 0.0
    %113 = vst [vmem:[#allocation9 + $0x30] sm:$0xff] 0.0
    %114 = vst.msk [vmem:[#allocation9 + $0x38] sm:$0xff] %vm107, 0.0
    %115 = vst [vmem:[#allocation9 + $0x40] sm:$0xff] 0.0
    %116 = vst.msk [vmem:[#allocation9 + $0x48] sm:$0xff] %vm107, 0.0
    %117 = vst [vmem:[#allocation9 + $0x50] sm:$0xff] 0.0
    %118 = vst.msk [vmem:[#allocation9 + $0x58] sm:$0xff] %vm107, 0.0
    %119 = vst [vmem:[#allocation9 + $0x60] sm:$0xff] 0.0
    %120 = vst.msk [vmem:[#allocation9 + $0x68] sm:$0xff] %vm107, 0.0
    %121 = vst [vmem:[#allocation10] sm:$0xff] 0.0
    %122 = vst.msk [vmem:[#allocation10 + $0x8] sm:$0xff] %vm89, 0.0
    %123 = vst [vmem:[#allocation10 + $0x10] sm:$0xff] 0.0
    %124 = vst.msk [vmem:[#allocation10 + $0x18] sm:$0xff] %vm89, 0.0
    %125 = vst [vmem:[#allocation10 + $0x20] sm:$0xff] 0.0
    %126 = vst.msk [vmem:[#allocation10 + $0x28] sm:$0xff] %vm89, 0.0
    %127 = vst [vmem:[#allocation10 + $0x30] sm:$0xff] 0.0
    %128 = vst.msk [vmem:[#allocation10 + $0x38] sm:$0xff] %vm89, 0.0
    %129 = vst [vmem:[#allocation10 + $0x40] sm:$0xff] 0.0
    %130 = vst.msk [vmem:[#allocation10 + $0x48] sm:$0xff] %vm89, 0.0
    %131 = vst [vmem:[#allocation10 + $0x50] sm:$0xff] 0.0
    %132 = vst.msk [vmem:[#allocation10 + $0x58] sm:$0xff] %vm89, 0.0
    %133 = vst [vmem:[#allocation10 + $0x60] sm:$0xff] 0.0
    %134 = vst.msk [vmem:[#allocation10 + $0x68] sm:$0xff] %vm89, 0.0
    %135 = vst [vmem:[#allocation10 + $0x70] sm:$0xff] 0.0
    %136 = vst.msk [vmem:[#allocation10 + $0x78] sm:$0xff] %vm89, 0.0
  $region105: #{_lambda_.1} parent=0 // pred_fallthru
    _
  %v137 = vld [vmem:[%s0] sm:$0xff]
  %v138 = vld [vmem:[%s0 + $0x8] sm:$0xff]
  %v139 = vld [vmem:[%s0 + $0x10] sm:$0xff]
  %v140 = vpack.c.bf16 %v138, %v137
  %v141 = vpack.c.bf16 %v139, %v139
  %v144 = vunpack.c.l.b16 %v140
  %v145 = vunpack.c.h.b16 %v140
  %v146 = vunpack.c.l.b16 %v141
  %v147 = vpack.c.b16 %v144, %v144
  %v148 = vpack.c.b16 %v145, %v145
  %v149 = vpack.c.b16 %v146, %v146
  %vm153 = vcmask 224256
  %154 = vst.msk [vmem:[#allocation11] sm:$0xf] %vm153, %v147
  %155 = vst.msk [vmem:[#allocation11 + $0x20] sm:$0xf] %vm153, %v148
  %156 = vst.msk [vmem:[#allocation11 + $0x40] sm:$0xf] %vm153, %v149
  %v157 = vld [vmem:[%s0 + $0x1] sm:$0xff]
  %v158 = vld [vmem:[%s0 + $0x9] sm:$0xff]
  %v159 = vld [vmem:[%s0 + $0x11] sm:$0xff]
  %v160 = vpack.c.bf16 %v158, %v157
  %v161 = vpack.c.bf16 %v159, %v159
  %v164 = vunpack.c.l.b16 %v160
  %v165 = vunpack.c.h.b16 %v160
  %v166 = vunpack.c.l.b16 %v161
  %v167 = vpack.c.b16 %v164, %v164
  %v168 = vpack.c.b16 %v165, %v165
  %v169 = vpack.c.b16 %v166, %v166
  %170 = vrot.lane.b32.xlu0 %v167, 28
  %v171 = vpop.permute.xlu0 %170
  %172 = vrot.lane.b32.xlu0 %v168, 28
  %v173 = vpop.permute.xlu0 %172
  %174 = vrot.lane.b32.xlu0 %v169, 28
  %v175 = vpop.permute.xlu0 %174
  %vm179 = vcmask 453856
  %180 = vst.msk [vmem:[#allocation11] sm:$0xf] %vm179, %v171
  %181 = vst.msk [vmem:[#allocation11 + $0x20] sm:$0xf] %vm179, %v173
  %182 = vst.msk [vmem:[#allocation11 + $0x40] sm:$0xf] %vm179, %v175
  %v183 = vld [vmem:[%s0 + $0x2] sm:$0xff]
  %v184 = vld [vmem:[%s0 + $0xa] sm:$0xff]
  %v185 = vld [vmem:[%s0 + $0x12] sm:$0xff]
  %v186 = vpack.c.bf16 %v184, %v183
  %v187 = vpack.c.bf16 %v185, %v185
  %v190 = vunpack.c.l.b16 %v186
  %v191 = vunpack.c.h.b16 %v186
  %v192 = vunpack.c.l.b16 %v187
  %v193 = vpack.c.b16 %v190, %v190
  %v194 = vpack.c.b16 %v191, %v191
  %v195 = vpack.c.b16 %v192, %v192
  %196 = vrot.lane.b32.xlu0 %v193, 56
  %v197 = vpop.permute.xlu0 %196
  %198 = vrot.lane.b32.xlu0 %v194, 56
  %v199 = vpop.permute.xlu0 %198
  %200 = vrot.lane.b32.xlu0 %v195, 56
  %v201 = vpop.permute.xlu0 %200
  %vm205 = vcmask 683456
  %206 = vst.msk [vmem:[#allocation11] sm:$0xf] %vm205, %v197
  %207 = vst.msk [vmem:[#allocation11 + $0x20] sm:$0xf] %vm205, %v199
  %208 = vst.msk [vmem:[#allocation11 + $0x40] sm:$0xf] %vm205, %v201
  %v209 = vld [vmem:[%s0 + $0x3] sm:$0xff]
  %v210 = vld [vmem:[%s0 + $0xb] sm:$0xff]
  %v211 = vld [vmem:[%s0 + $0x13] sm:$0xff]
  %v212 = vpack.c.bf16 %v210, %v209
  %v213 = vpack.c.bf16 %v211, %v211
  %v216 = vunpack.c.l.b16 %v212
  %v217 = vunpack.c.h.b16 %v212
  %v218 = vunpack.c.l.b16 %v213
  %v219 = vpack.c.b16 %v216, %v216
  %v220 = vpack.c.b16 %v217, %v217
  %v221 = vpack.c.b16 %v218, %v218
  %222 = vrot.lane.b32.xlu0 %v219, 84
  %v223 = vpop.permute.xlu0 %222
  %224 = vrot.lane.b32.xlu0 %v220, 84
  %v225 = vpop.permute.xlu0 %224
  %226 = vrot.lane.b32.xlu0 %v221, 84
  %v227 = vpop.permute.xlu0 %226
  %vm231 = vcmask 913056
  %232 = vst.msk [vmem:[#allocation11] sm:$0xf] %vm231, %v223
  %233 = vst.msk [vmem:[#allocation11 + $0x20] sm:$0xf] %vm231, %v225
  %234 = vst.msk [vmem:[#allocation11 + $0x40] sm:$0xf] %vm231, %v227
  %v235 = vld [vmem:[%s0 + $0x4] sm:$0xff]
  %v236 = vld [vmem:[%s0 + $0xc] sm:$0xff]
  %v237 = vld [vmem:[%s0 + $0x14] sm:$0xff]
  %v238 = vpack.c.bf16 %v236, %v235
  %v239 = vpack.c.bf16 %v237, %v237
  %v242 = vunpack.c.l.b16 %v238
  %v243 = vunpack.c.h.b16 %v238
  %v244 = vunpack.c.l.b16 %v239
  %v245 = vpack.c.b16 %v242, %v242
  %v246 = vpack.c.b16 %v243, %v243
  %v247 = vpack.c.b16 %v244, %v244
  %248 = vrot.lane.b32.xlu0 %v245, 112
  %v249 = vpop.permute.xlu0 %248
  %250 = vrot.lane.b32.xlu0 %v246, 112
  %v251 = vpop.permute.xlu0 %250
  %252 = vrot.lane.b32.xlu0 %v247, 112
  %v253 = vpop.permute.xlu0 %252
  %v254 = vrot.slane %v249, 4
  %v255 = vrot.slane %v251, 4
  %v256 = vrot.slane %v253, 4
  %vm257 = vcmask 916480
  %v258 = vsel %vm257, %v254, %v249
  %v259 = vsel %vm257, %v255, %v251
  %v260 = vsel %vm257, %v256, %v253
  %vm264 = vcmask 1044352
  %vm265 = vcmask 97284
  %vm266 = vmor %vm265, %vm264
  %267 = vst.msk [vmem:[#allocation11] sm:$0xff] %vm266, %v258
  %268 = vst.msk [vmem:[#allocation11 + $0x20] sm:$0xff] %vm266, %v259
  %269 = vst.msk [vmem:[#allocation11 + $0x40] sm:$0xff] %vm266, %v260
  %s270 = scalar_lea.vmem %s0, 32
  %v271 = vld [vmem:[%s270] sm:$0xff]
  %v272 = vld [vmem:[%s270 + $0x8] sm:$0xff]
  %v273 = vld [vmem:[%s270 + $0x10] sm:$0xff]
  %v274 = vpack.c.bf16 %v272, %v271
  %v275 = vpack.c.bf16 %v273, %v273
  %v278 = vunpack.c.l.b16 %v274
  %v279 = vunpack.c.h.b16 %v274
  %v280 = vunpack.c.l.b16 %v275
  %v281 = vpack.c.b16 %v278, %v278
  %v282 = vpack.c.b16 %v279, %v279
  %v283 = vpack.c.b16 %v280, %v280
  %287 = vst.msk [vmem:[#allocation11 + $0x60] sm:$0xf] %vm153, %v281
  %288 = vst.msk [vmem:[#allocation11 + $0x80] sm:$0xf] %vm153, %v282
  %289 = vst.msk [vmem:[#allocation11 + $0xa0] sm:$0xf] %vm153, %v283
  %v290 = vld [vmem:[%s270 + $0x1] sm:$0xff]
  %v291 = vld [vmem:[%s270 + $0x9] sm:$0xff]
  %v292 = vld [vmem:[%s270 + $0x11] sm:$0xff]
  %v293 = vpack.c.bf16 %v291, %v290
  %v294 = vpack.c.bf16 %v292, %v292
  %v297 = vunpack.c.l.b16 %v293
  %v298 = vunpack.c.h.b16 %v293
  %v299 = vunpack.c.l.b16 %v294
  %v300 = vpack.c.b16 %v297, %v297
  %v301 = vpack.c.b16 %v298, %v298
  %v302 = vpack.c.b16 %v299, %v299
  %303 = vrot.lane.b32.xlu0 %v300, 28
  %v304 = vpop.permute.xlu0 %303
  %305 = vrot.lane.b32.xlu0 %v301, 28
  %v306 = vpop.permute.xlu0 %305
  %307 = vrot.lane.b32.xlu0 %v302, 28
  %v308 = vpop.permute.xlu0 %307
  %312 = vst.msk [vmem:[#allocation11 + $0x60] sm:$0xf] %vm179, %v304
  %313 = vst.msk [vmem:[#allocation11 + $0x80] sm:$0xf] %vm179, %v306
  %314 = vst.msk [vmem:[#allocation11 + $0xa0] sm:$0xf] %vm179, %v308
  %v315 = vld [vmem:[%s270 + $0x2] sm:$0xff]
  %v316 = vld [vmem:[%s270 + $0xa] sm:$0xff]
  %v317 = vld [vmem:[%s270 + $0x12] sm:$0xff]
  %v318 = vpack.c.bf16 %v316, %v315
  %v319 = vpack.c.bf16 %v317, %v317
  %v322 = vunpack.c.l.b16 %v318
  %v323 = vunpack.c.h.b16 %v318
  %v324 = vunpack.c.l.b16 %v319
  %v325 = vpack.c.b16 %v322, %v322
  %v326 = vpack.c.b16 %v323, %v323
  %v327 = vpack.c.b16 %v324, %v324
  %328 = vrot.lane.b32.xlu0 %v325, 56
  %v329 = vpop.permute.xlu0 %328
  %330 = vrot.lane.b32.xlu0 %v326, 56
  %v331 = vpop.permute.xlu0 %330
  %332 = vrot.lane.b32.xlu0 %v327, 56
  %v333 = vpop.permute.xlu0 %332
  %337 = vst.msk [vmem:[#allocation11 + $0x60] sm:$0xf] %vm205, %v329
  %338 = vst.msk [vmem:[#allocation11 + $0x80] sm:$0xf] %vm205, %v331
  %339 = vst.msk [vmem:[#allocation11 + $0xa0] sm:$0xf] %vm205, %v333
  %v340 = vld [vmem:[%s270 + $0x3] sm:$0xff]
  %v341 = vld [vmem:[%s270 + $0xb] sm:$0xff]
  %v342 = vld [vmem:[%s270 + $0x13] sm:$0xff]
  %v343 = vpack.c.bf16 %v341, %v340
  %v344 = vpack.c.bf16 %v342, %v342
  %v347 = vunpack.c.l.b16 %v343
  %v348 = vunpack.c.h.b16 %v343
  %v349 = vunpack.c.l.b16 %v344
  %v350 = vpack.c.b16 %v347, %v347
  %v351 = vpack.c.b16 %v348, %v348
  %v352 = vpack.c.b16 %v349, %v349
  %353 = vrot.lane.b32.xlu0 %v350, 84
  %v354 = vpop.permute.xlu0 %353
  %355 = vrot.lane.b32.xlu0 %v351, 84
  %v356 = vpop.permute.xlu0 %355
  %357 = vrot.lane.b32.xlu0 %v352, 84
  %v358 = vpop.permute.xlu0 %357
  %362 = vst.msk [vmem:[#allocation11 + $0x60] sm:$0xf] %vm231, %v354
  %363 = vst.msk [vmem:[#allocation11 + $0x80] sm:$0xf] %vm231, %v356
  %364 = vst.msk [vmem:[#allocation11 + $0xa0] sm:$0xf] %vm231, %v358
  %v365 = vld [vmem:[%s270 + $0x4] sm:$0xff]
  %v366 = vld [vmem:[%s270 + $0xc] sm:$0xff]
  %v367 = vld [vmem:[%s270 + $0x14] sm:$0xff]
  %v368 = vpack.c.bf16 %v366, %v365
  %v369 = vpack.c.bf16 %v367, %v367
  %v372 = vunpack.c.l.b16 %v368
  %v373 = vunpack.c.h.b16 %v368
  %v374 = vunpack.c.l.b16 %v369
  %v375 = vpack.c.b16 %v372, %v372
  %v376 = vpack.c.b16 %v373, %v373
  %v377 = vpack.c.b16 %v374, %v374
  %378 = vrot.lane.b32.xlu0 %v375, 112
  %v379 = vpop.permute.xlu0 %378
  %380 = vrot.lane.b32.xlu0 %v376, 112
  %v381 = vpop.permute.xlu0 %380
  %382 = vrot.lane.b32.xlu0 %v377, 112
  %v383 = vpop.permute.xlu0 %382
  %v384 = vrot.slane %v379, 4
  %v385 = vrot.slane %v381, 4
  %v386 = vrot.slane %v383, 4
  %v387 = vsel %vm257, %v384, %v379
  %v388 = vsel %vm257, %v385, %v381
  %v389 = vsel %vm257, %v386, %v383
  %393 = vst.msk [vmem:[#allocation11 + $0x60] sm:$0xff] %vm266, %v387
  %394 = vst.msk [vmem:[#allocation11 + $0x80] sm:$0xff] %vm266, %v388
  %395 = vst.msk [vmem:[#allocation11 + $0xa0] sm:$0xff] %vm266, %v389
  %v396 = vld [vmem:[#allocation11] sm:$0xff]
  %v397 = vld [vmem:[#allocation11 + $0x20] sm:$0xff]
  %v398 = vld [vmem:[#allocation11 + $0x40] sm:$0xff]
  %v399 = vld [vmem:[#allocation11 + $0x60] sm:$0xff]
  %v400 = vld [vmem:[#allocation11 + $0x80] sm:$0xff]
  %v401 = vld [vmem:[#allocation11 + $0xa0] sm:$0xff]
  %v402 = vld [vmem:[%s1] sm:$0xff]
  %v403 = vld [vmem:[%s1 + $0x8] sm:$0xff]
  %v404 = vld [vmem:[%s1 + $0x10] sm:$0xff]
  %v405 = vld [vmem:[%s1 + $0x18] sm:$0xff]
  %v406 = vld [vmem:[%s1 + $0x20] sm:$0xff]
  %v407 = vld [vmem:[%s1 + $0x28] sm:$0xff]
  %v408 = vld [vmem:[%s1 + $0x30] sm:$0xff]
  %v409 = vld [vmem:[%s1 + $0x38] sm:$0xff]
  %v410 = vld [vmem:[%s1 + $0x40] sm:$0xff]
  %v411 = vld [vmem:[%s1 + $0x48] sm:$0xff]
  %v412 = vld [vmem:[%s1 + $0x50] sm:$0xff]
  %v413 = vld [vmem:[%s1 + $0x58] sm:$0xff]
  %v414 = vld [vmem:[%s1 + $0x60] sm:$0xff]
  %v415 = vld [vmem:[%s1 + $0x68] sm:$0xff]
  %v416 = vld [vmem:[%s1 + $0x70] sm:$0xff]
  %v417 = vld [vmem:[%s1 + $0x78] sm:$0xff]
  %v418 = vld [vmem:[%s1 + $0x80] sm:$0xff]
  %v419 = vld [vmem:[%s1 + $0x88] sm:$0x33]
  %v420 = vld [vmem:[%s11] sm:$0x3]
  %v422 = vlaneseq
  %v423 = vshrl.u32 %v422, 7
  %v424 = vsub.s32 0, %v423
  %v425 = vrot.slane %v420, %v424
  %v426 = vlaneseq
  %v427 = vshrl.u32 %v426, 7
  %v428 = vsub.s32 1, %v427
  %v429 = vrot.slane %v420, %v428
  %v438 = vunpack.c.l.b16 %v396
  %v439 = vunpack.c.h.b16 %v396
  %v440 = vunpack.c.l.b16 %v397
  %v441 = vunpack.c.h.b16 %v397
  %v442 = vunpack.c.l.b16 %v398
  %v443 = vunpack.c.h.b16 %v398
  %v444 = vunpack.c.l.b16 %v399
  %v445 = vunpack.c.h.b16 %v399
  %v446 = vunpack.c.l.b16 %v400
  %v447 = vunpack.c.h.b16 %v400
  %v448 = vunpack.c.l.b16 %v401
  %v449 = vunpack.c.h.b16 %v401
  %v450 = vpack.c.b16 %v440, %v438
  %v451 = vpack.c.b16 %v441, %v439
  %v452 = vpack.c.b16 %v444, %v442
  %v453 = vpack.c.b16 %v445, %v443
  %v454 = vpack.c.b16 %v448, %v446
  %v455 = vpack.c.b16 %v449, %v447
  %v477 = vunpack.c.l.b16 %v402
  %v478 = vunpack.c.h.b16 %v402
  %v479 = vunpack.c.l.b16 %v403
  %v480 = vunpack.c.h.b16 %v403
  %v481 = vunpack.c.l.b16 %v404
  %v482 = vunpack.c.h.b16 %v404
  %v483 = vunpack.c.l.b16 %v405
  %v484 = vunpack.c.h.b16 %v405
  %v485 = vunpack.c.l.b16 %v406
  %v486 = vunpack.c.h.b16 %v406
  %v487 = vunpack.c.l.b16 %v407
  %v488 = vunpack.c.h.b16 %v407
  %v489 = vunpack.c.l.b16 %v408
  %v490 = vunpack.c.h.b16 %v408
  %v491 = vunpack.c.l.b16 %v409
  %v492 = vunpack.c.h.b16 %v409
  %v493 = vunpack.c.l.b16 %v410
  %v494 = vunpack.c.h.b16 %v410
  %v495 = vunpack.c.l.b16 %v411
  %v496 = vunpack.c.h.b16 %v411
  %v497 = vunpack.c.l.b16 %v412
  %v498 = vunpack.c.h.b16 %v412
  %v499 = vunpack.c.l.b16 %v413
  %v500 = vunpack.c.h.b16 %v413
  %v501 = vunpack.c.l.b16 %v414
  %v502 = vunpack.c.h.b16 %v414
  %v503 = vunpack.c.l.b16 %v415
  %v504 = vunpack.c.h.b16 %v415
  %v505 = vunpack.c.l.b16 %v416
  %v506 = vunpack.c.h.b16 %v416
  %v507 = vunpack.c.l.b16 %v417
  %v508 = vunpack.c.h.b16 %v417
  %v509 = vunpack.c.l.b16 %v418
  %v510 = vunpack.c.h.b16 %v418
  %v511 = vunpack.c.l.b16 %v419
  %v512 = vunpack.c.h.b16 %v419
  %v513 = vpack.c.b16 %v479, %v477
  %v514 = vpack.c.b16 %v480, %v478
  %v515 = vpack.c.b16 %v483, %v481
  %v516 = vpack.c.b16 %v484, %v482
  %v517 = vpack.c.b16 %v487, %v485
  %v518 = vpack.c.b16 %v488, %v486
  %v519 = vpack.c.b16 %v491, %v489
  %v520 = vpack.c.b16 %v492, %v490
  %v521 = vpack.c.b16 %v495, %v493
  %v522 = vpack.c.b16 %v496, %v494
  %v523 = vpack.c.b16 %v499, %v497
  %v524 = vpack.c.b16 %v500, %v498
  %v525 = vpack.c.b16 %v503, %v501
  %v526 = vpack.c.b16 %v504, %v502
  %v527 = vpack.c.b16 %v507, %v505
  %v528 = vpack.c.b16 %v508, %v506
  %v529 = vpack.c.b16 %v511, %v509
  %v530 = vpack.c.b16 %v512, %v510
  %vm547 = vcmask 97280
  %v549 = vsel %vm547, %v451, 0
  %v552 = vsel %vm547, %v453, 0
  %v555 = vsel %vm547, %v455, 0
  %vm557 = vcmask 1045504
  %v559 = vsel %vm557, %v529, 0
  %v562 = vsel %vm557, %v530, 0
  %564 = vmatprep.subr.bf16.mxu0 %v514
  %565 = vmatpush1.bf16.msra.mxu0 %v513
  %566 = vmatprep.subr.bf16.mxu0 %v516
  %567 = vmatpush1.bf16.msra.mxu0 %v515
  %568 = vmatprep.subr.bf16.mxu0 %v518
  %569 = vmatpush1.bf16.msra.mxu0 %v517
  %570 = vmatprep.subr.bf16.mxu0 %v520
  %571 = vmatpush1.bf16.msra.mxu0 %v519
  %572 = vmatprep.subr.bf16.mxu0 %v522
  %573 = vmatpush1.bf16.msra.mxu0 %v521
  %574 = vmatprep.subr.bf16.mxu0 %v524
  %575 = vmatpush1.bf16.msra.mxu0 %v523
  %576 = vmatprep.subr.bf16.mxu0 %v526
  %577 = vmatpush1.bf16.msra.mxu0 %v525
  %578 = vmatprep.subr.bf16.mxu0 %v528
  %579 = vmatpush1.bf16.msra.mxu0 %v527
  %580 = vmatprep.subr.bf16.mxu0 %v562
  %581 = vmatpush1.bf16.msra.mxu0 %v559
  %582 = vmatprep.subr.bf16.mxu0 0
  %583 = vmatpush1.bf16.msra.mxu0 0
  %584 = vmatprep.subr.bf16.mxu0 0
  %585 = vmatpush1.bf16.msra.mxu0 0
  %586 = vmatprep.subr.bf16.mxu0 0
  %587 = vmatpush1.bf16.msra.mxu0 0
  %588 = vmatprep.subr.bf16.mxu0 0
  %589 = vmatpush1.bf16.msra.mxu0 0
  %590 = vmatprep.subr.bf16.mxu0 0
  %591 = vmatpush1.bf16.msra.mxu0 0
  %592 = vmatprep.subr.bf16.mxu0 0
  %593 = vmatpush1.bf16.msra.mxu0 0
  %594 = vmatprep.subr.bf16.mxu0 0
  %595 = vmatpush1.bf16.msra.mxu0 0
  %596 = vmatprep.mubr.bf16.mxu0 %v549
  %597 = vmatmul.mubr.bf16.gmra.mrb[0].mxu0 %v450
  %v598 = vpop.f32.mrb[0].mxu0
  %v599 = vadd.f32 %v425, %v598
  %v600 = vpop.f32.mrb[0].mxu0
  %v601 = vadd.f32 %v429, %v600
  %v602 = vpop.f32.mrb[0].mxu0
  %v603 = vadd.f32 %v425, %v602
  %v604 = vpop.f32.mrb[0].mxu0
  %v605 = vadd.f32 %v429, %v604
  %606 = vmatprep.mubr.bf16.mxu0 %v552
  %607 = vmatmul.mubr.bf16.gmra.mrb[0].mxu0 %v452
  %v608 = vpop.f32.mrb[0].mxu0
  %v609 = vadd.f32 %v425, %v608
  %v610 = vpop.f32.mrb[0].mxu0
  %v611 = vadd.f32 %v429, %v610
  %v612 = vpop.f32.mrb[0].mxu0
  %v613 = vadd.f32 %v425, %v612
  %v614 = vpop.f32.mrb[0].mxu0
  %v615 = vadd.f32 %v429, %v614
  %616 = vmatprep.mubr.bf16.mxu0 %v555
  %617 = vmatmul.mubr.bf16.gmra.mrb[0].mxu0 %v454
  %v618 = vpop.f32.mrb[0].mxu0
  %v619 = vadd.f32 %v425, %v618
  %v620 = vpop.f32.mrb[0].mxu0
  %v621 = vadd.f32 %v429, %v620
  %v622 = vpop.f32.mrb[0].mxu0
  %v623 = vadd.f32 %v425, %v622
  %v624 = vpop.f32.mrb[0].mxu0
  %v625 = vadd.f32 %v429, %v624
  %626 = vdwg.mxu0
  %v627 = vmax.f32 %v599, 0.0
  %v628 = vmax.f32 %v601, 0.0
  %v629 = vmax.f32 %v603, 0.0
  %v630 = vmax.f32 %v605, 0.0
  %v631 = vmax.f32 %v609, 0.0
  %v632 = vmax.f32 %v611, 0.0
  %v633 = vmax.f32 %v613, 0.0
  %v634 = vmax.f32 %v615, 0.0
  %v635 = vmax.f32 %v619, 0.0
  %v636 = vmax.f32 %v621, 0.0
  %v637 = vmax.f32 %v623, 0.0
  %v638 = vmax.f32 %v625, 0.0
  %639 = vst [vmem:[#allocation2] sm:$0xff] %v627
  %vm640 = vcmask 523264
  %641 = vst.msk [vmem:[#allocation2 + $0x8] sm:$0xff] %vm640, %v628
  %642 = vst [vmem:[#allocation2 + $0x10] sm:$0xff] %v629
  %643 = vst.msk [vmem:[#allocation2 + $0x18] sm:$0xff] %vm640, %v630
  %644 = vst [vmem:[#allocation2 + $0x20] sm:$0xff] %v631
  %645 = vst.msk [vmem:[#allocation2 + $0x28] sm:$0xff] %vm640, %v632
  %646 = vst [vmem:[#allocation2 + $0x30] sm:$0xff] %v633
  %647 = vst.msk [vmem:[#allocation2 + $0x38] sm:$0xff] %vm640, %v634
  %648 = vst [vmem:[#allocation2 + $0x40] sm:$0xff] %v635
  %649 = vst.msk [vmem:[#allocation2 + $0x48] sm:$0xff] %vm640, %v636
  %650 = vst [vmem:[#allocation2 + $0x50] sm:$0xff] %v637
  %651 = vst.msk [vmem:[#allocation2 + $0x58] sm:$0xff] %vm640, %v638
  %v652 = vld [vmem:[#allocation2] sm:$0xff]
  %v653 = vld [vmem:[#allocation2 + $0x8] sm:$0xff]
  %v654 = vld [vmem:[#allocation2 + $0x10] sm:$0xff]
  %v655 = vld [vmem:[#allocation2 + $0x18] sm:$0xff]
  %v656 = vld [vmem:[#allocation2 + $0x20] sm:$0xf]
  %v657 = vld [vmem:[#allocation2 + $0x28] sm:$0xf]
  %v658 = vpack.c.bf16 %v654, %v652
  %v659 = vpack.c.bf16 %v655, %v653
  %v660 = vpack.c.bf16 %v656, %v656
  %v661 = vpack.c.bf16 %v657, %v657
  %v666 = vunpack.c.l.b16 %v658
  %v667 = vunpack.c.l.b16 %v659
  %v668 = vunpack.c.h.b16 %v658
  %v669 = vunpack.c.h.b16 %v659
  %v670 = vunpack.c.l.b16 %v660
  %v671 = vunpack.c.l.b16 %v661
  %v672 = vpack.c.b16 %v667, %v666
  %v673 = vpack.c.b16 %v669, %v668
  %v674 = vpack.c.b16 %v671, %v670
  %vm678 = vcmask 1043456
  %vm679 = vcmask 523268
  %vm680 = vmor %vm679, %vm678
  %681 = vst.msk [vmem:[#allocation11] sm:$0xff] %vm680, %v672
  %682 = vst.msk [vmem:[#allocation11 + $0x20] sm:$0xff] %vm680, %v673
  %vm683 = vcmask 1041408
  %vm684 = vcmask 521220
  %vm685 = vmor %vm684, %vm683
  %686 = vst.msk [vmem:[#allocation11 + $0x40] sm:$0x33] %vm685, %v674
  %v687 = vld [vmem:[#allocation2] sm:$0xfe]
  %v688 = vld [vmem:[#allocation2 + $0x8] sm:$0xfe]
  %v689 = vld [vmem:[#allocation2 + $0x10] sm:$0xff]
  %v690 = vld [vmem:[#allocation2 + $0x18] sm:$0xff]
  %v691 = vld [vmem:[#allocation2 + $0x20] sm:$0x1f]
  %v692 = vld [vmem:[#allocation2 + $0x28] sm:$0x1f]
  %v693 = vpack.c.bf16 %v689, %v687
  %v694 = vpack.c.bf16 %v690, %v688
  %v695 = vpack.c.bf16 %v691, %v691
  %v696 = vpack.c.bf16 %v692, %v692
  %v701 = vunpack.c.l.b16 %v693
  %v702 = vunpack.c.l.b16 %v694
  %v703 = vunpack.c.h.b16 %v693
  %v704 = vunpack.c.h.b16 %v694
  %v705 = vunpack.c.l.b16 %v695
  %v706 = vunpack.c.l.b16 %v696
  %v707 = vpack.c.b16 %v702, %v701
  %v708 = vpack.c.b16 %v704, %v703
  %v709 = vpack.c.b16 %v706, %v705
  %vm710 = vsmask.f32 3328
  %vm711 = vsmask.f32 7440
  %vm712 = vmor %vm710, %vm711
  %v714 = vshrl.u32 %v707, 16
  %v716 = vrot.slane %v714, 4
  %v717 = vshll.u32 %v707, 16
  %v719 = vrot.slane %v717, 5
  %v720 = vor.u32 %v716, %v719
  %v721 = vrot.slane %v720, 4
  %v723 = vshll.u32 %v708, 16
  %v725 = vrot.slane %v723, 5
  %v726 = vsel %vm712, %v721, %v725
  %v727 = vshrl.u32 %v708, 16
  %v729 = vrot.slane %v727, 4
  %v730 = vor.u32 %v729, %v725
  %v731 = vrot.slane %v730, 4
  %v733 = vshll.u32 %v709, 16
  %v735 = vrot.slane %v733, 5
  %v736 = vsel %vm712, %v731, %v735
  %v737 = vshrl.u32 %v709, 16
  %v739 = vrot.slane %v737, 4
  %v740 = vor.u32 %v739, %v735
  %v741 = vrot.slane %v740, 4
  %742 = vrot.lane.b32.xlu0 %v726, 64
  %v743 = vpop.permute.xlu0 %742
  %744 = vrot.lane.b32.xlu0 %v736, 64
  %v745 = vpop.permute.xlu0 %744
  %746 = vrot.lane.b32.xlu0 %v741, 64
  %v747 = vpop.permute.xlu0 %746
  %v748 = vrot.slane %v743, 4
  %v749 = vrot.slane %v745, 4
  %v750 = vrot.slane %v747, 4
  %vm751 = vcmask 523264
  %v752 = vsel %vm751, %v748, %v743
  %v753 = vsel %vm751, %v749, %v745
  %v754 = vsel %vm751, %v750, %v747
  %vm758 = vcmask 1043968
  %vm759 = vcmask 1047556
  %vm760 = vmor %vm759, %vm758
  %761 = vst.msk [vmem:[#allocation11 + $0x4] sm:$0xff] %vm760, %v752
  %762 = vst.msk [vmem:[#allocation11 + $0x24] sm:$0xff] %vm760, %v753
  %vm763 = vcmask 1041920
  %vm764 = vcmask 1045508
  %vm765 = vmor %vm764, %vm763
  %766 = vst.msk [vmem:[#allocation11 + $0x44] sm:$0x33] %vm765, %v754
  %v767 = vld [vmem:[#allocation2] sm:$0xfc]
  %v768 = vld [vmem:[#allocation2 + $0x8] sm:$0xfc]
  %v769 = vld [vmem:[#allocation2 + $0x10] sm:$0xff]
  %v770 = vld [vmem:[#allocation2 + $0x18] sm:$0xff]
  %v771 = vld [vmem:[#allocation2 + $0x20] sm:$0x3f]
  %v772 = vld [vmem:[#allocation2 + $0x28] sm:$0x3f]
  %v773 = vpack.c.bf16 %v769, %v767
  %v774 = vpack.c.bf16 %v770, %v768
  %v775 = vpack.c.bf16 %v771, %v771
  %v776 = vpack.c.bf16 %v772, %v772
  %v781 = vunpack.c.l.b16 %v773
  %v782 = vunpack.c.l.b16 %v774
  %v783 = vunpack.c.h.b16 %v773
  %v784 = vunpack.c.h.b16 %v774
  %v785 = vunpack.c.l.b16 %v775
  %v786 = vunpack.c.l.b16 %v776
  %v787 = vpack.c.b16 %v782, %v781
  %v788 = vpack.c.b16 %v784, %v783
  %v789 = vpack.c.b16 %v786, %v785
  %vm790 = vcmask 1042432
  %vm791 = vcmask 1046532
  %vm792 = vmor %vm790, %vm791
  %v793 = vrot.slane %v787, 5
  %v794 = vrot.slane %v793, 4
  %v795 = vrot.slane %v788, 5
  %v796 = vsel %vm792, %v794, %v795
  %v797 = vrot.slane %v795, 4
  %v798 = vrot.slane %v789, 5
  %v799 = vsel %vm792, %v797, %v798
  %v800 = vrot.slane %v798, 4
  %804 = vst.msk [vmem:[#allocation11 + $0xc] sm:$0xff] %vm680, %v796
  %805 = vst.msk [vmem:[#allocation11 + $0x2c] sm:$0xff] %vm680, %v799
  %806 = vst.msk [vmem:[#allocation11 + $0x4c] sm:$0x33] %vm685, %v800
  %v807 = vld [vmem:[#allocation2] sm:$0xf8]
  %v808 = vld [vmem:[#allocation2 + $0x8] sm:$0xf8]
  %v809 = vld [vmem:[#allocation2 + $0x10] sm:$0xff]
  %v810 = vld [vmem:[#allocation2 + $0x18] sm:$0xff]
  %v811 = vld [vmem:[#allocation2 + $0x20] sm:$0x7f]
  %v812 = vld [vmem:[#allocation2 + $0x28] sm:$0x7f]
  %v813 = vpack.c.bf16 %v809, %v807
  %v814 = vpack.c.bf16 %v810, %v808
  %v815 = vpack.c.bf16 %v811, %v811
  %v816 = vpack.c.bf16 %v812, %v812
  %v821 = vunpack.c.l.b16 %v813
  %v822 = vunpack.c.l.b16 %v814
  %v823 = vunpack.c.h.b16 %v813
  %v824 = vunpack.c.h.b16 %v814
  %v825 = vunpack.c.l.b16 %v815
  %v826 = vunpack.c.l.b16 %v816
  %v827 = vpack.c.b16 %v822, %v821
  %v828 = vpack.c.b16 %v824, %v823
  %v829 = vpack.c.b16 %v826, %v825
  %vm830 = vsmask.f32 2304
  %vm831 = vsmask.f32 6416
  %vm832 = vmor %vm830, %vm831
  %v834 = vshrl.u32 %v827, 16
  %v836 = vrot.slane %v834, 5
  %v837 = vshll.u32 %v827, 16
  %v839 = vrot.slane %v837, 6
  %v840 = vor.u32 %v836, %v839
  %v841 = vrot.slane %v840, 4
  %v843 = vshrl.u32 %v828, 16
  %v845 = vrot.slane %v843, 5
  %v846 = vshll.u32 %v828, 16
  %v848 = vrot.slane %v846, 6
  %v849 = vor.u32 %v845, %v848
  %v850 = vsel %vm832, %v841, %v849
  %v851 = vrot.slane %v849, 4
  %v853 = vshrl.u32 %v829, 16
  %v855 = vrot.slane %v853, 5
  %v856 = vshll.u32 %v829, 16
  %v858 = vrot.slane %v856, 6
  %v859 = vor.u32 %v855, %v858
  %v860 = vsel %vm832, %v851, %v859
  %v861 = vrot.slane %v859, 4
  %862 = vrot.lane.b32.xlu0 %v850, 64
  %v863 = vpop.permute.xlu0 %862
  %864 = vrot.lane.b32.xlu0 %v860, 64
  %v865 = vpop.permute.xlu0 %864
  %866 = vrot.lane.b32.xlu0 %v861, 64
  %v867 = vpop.permute.xlu0 %866
  %v868 = vrot.slane %v863, 4
  %v869 = vrot.slane %v865, 4
  %v870 = vrot.slane %v867, 4
  %v871 = vsel %vm751, %v868, %v863
  %v872 = vsel %vm751, %v869, %v865
  %v873 = vsel %vm751, %v870, %v867
  %877 = vst.msk [vmem:[#allocation11 + $0x10] sm:$0xff] %vm760, %v871
  %878 = vst.msk [vmem:[#allocation11 + $0x30] sm:$0xff] %vm760, %v872
  %879 = vst.msk [vmem:[#allocation11 + $0x50] sm:$0x33] %vm765, %v873
  %v880 = vld [vmem:[#allocation2] sm:$0xf0]
  %v881 = vld [vmem:[#allocation2 + $0x8] sm:$0xf0]
  %v882 = vld [vmem:[#allocation2 + $0x10] sm:$0xff]
  %v883 = vld [vmem:[#allocation2 + $0x18] sm:$0xff]
  %v884 = vld [vmem:[#allocation2 + $0x20] sm:$0xff]
  %v885 = vld [vmem:[#allocation2 + $0x28] sm:$0xff]
  %v886 = vpack.c.bf16 %v882, %v880
  %v887 = vpack.c.bf16 %v883, %v881
  %v888 = vpack.c.bf16 %v884, %v884
  %v889 = vpack.c.bf16 %v885, %v885
  %v894 = vunpack.c.l.b16 %v886
  %v895 = vunpack.c.l.b16 %v887
  %v896 = vunpack.c.h.b16 %v886
  %v897 = vunpack.c.h.b16 %v887
  %v898 = vunpack.c.l.b16 %v888
  %v899 = vunpack.c.l.b16 %v889
  %v900 = vpack.c.b16 %v895, %v894
  %v901 = vpack.c.b16 %v897, %v896
  %v902 = vpack.c.b16 %v899, %v898
  %vm903 = vcmask 1041408
  %vm904 = vcmask 1045508
  %vm905 = vmor %vm903, %vm904
  %v906 = vrot.slane %v900, 6
  %v907 = vrot.slane %v906, 4
  %v908 = vrot.slane %v901, 6
  %v909 = vsel %vm905, %v907, %v908
  %v910 = vrot.slane %v908, 4
  %v911 = vrot.slane %v902, 6
  %v912 = vsel %vm905, %v910, %v911
  %v913 = vrot.slane %v911, 4
  %917 = vst.msk [vmem:[#allocation11 + $0x18] sm:$0xff] %vm680, %v909
  %918 = vst.msk [vmem:[#allocation11 + $0x38] sm:$0xff] %vm680, %v912
  %919 = vst.msk [vmem:[#allocation11 + $0x58] sm:$0x33] %vm685, %v913
  %v920 = vld [vmem:[#allocation2 + $0x30] sm:$0xff]
  %v921 = vld [vmem:[#allocation2 + $0x38] sm:$0xff]
  %v922 = vld [vmem:[#allocation2 + $0x40] sm:$0xff]
  %v923 = vld [vmem:[#allocation2 + $0x48] sm:$0xff]
  %v924 = vld [vmem:[#allocation2 + $0x50] sm:$0xf]
  %v925 = vld [vmem:[#allocation2 + $0x58] sm:$0xf]
  %v926 = vpack.c.bf16 %v922, %v920
  %v927 = vpack.c.bf16 %v923, %v921
  %v928 = vpack.c.bf16 %v924, %v924
  %v929 = vpack.c.bf16 %v925, %v925
  %v934 = vunpack.c.l.b16 %v926
  %v935 = vunpack.c.l.b16 %v927
  %v936 = vunpack.c.h.b16 %v926
  %v937 = vunpack.c.h.b16 %v927
  %v938 = vunpack.c.l.b16 %v928
  %v939 = vunpack.c.l.b16 %v929
  %v940 = vpack.c.b16 %v935, %v934
  %v941 = vpack.c.b16 %v937, %v936
  %v942 = vpack.c.b16 %v939, %v938
  %v943 = vrot.slane %v940, 6
  %v944 = vrot.slane %v943, 4
  %v945 = vrot.slane %v941, 6
  %v946 = vsel %vm905, %v944, %v945
  %v947 = vrot.slane %v945, 4
  %v948 = vrot.slane %v942, 6
  %v949 = vsel %vm905, %v947, %v948
  %vm953 = vcmask 1043458
  %vm954 = vcmask 523270
  %vm955 = vmor %vm954, %vm953
  %956 = vst.msk [vmem:[#allocation11 + $0x40] sm:$0xcc] %vm955, %v943
  %957 = vst.msk [vmem:[#allocation11 + $0x60] sm:$0xff] %vm680, %v946
  %958 = vst.msk [vmem:[#allocation11 + $0x80] sm:$0xff] %vm680, %v949
  %v959 = vld [vmem:[#allocation2 + $0x30] sm:$0xfe]
  %v960 = vld [vmem:[#allocation2 + $0x38] sm:$0xfe]
  %v961 = vld [vmem:[#allocation2 + $0x40] sm:$0xff]
  %v962 = vld [vmem:[#allocation2 + $0x48] sm:$0xff]
  %v963 = vld [vmem:[#allocation2 + $0x50] sm:$0x1f]
  %v964 = vld [vmem:[#allocation2 + $0x58] sm:$0x1f]
  %v965 = vpack.c.bf16 %v961, %v959
  %v966 = vpack.c.bf16 %v962, %v960
  %v967 = vpack.c.bf16 %v963, %v963
  %v968 = vpack.c.bf16 %v964, %v964
  %v973 = vunpack.c.l.b16 %v965
  %v974 = vunpack.c.l.b16 %v966
  %v975 = vunpack.c.h.b16 %v965
  %v976 = vunpack.c.h.b16 %v966
  %v977 = vunpack.c.l.b16 %v967
  %v978 = vunpack.c.l.b16 %v968
  %v979 = vpack.c.b16 %v974, %v973
  %v980 = vpack.c.b16 %v976, %v975
  %v981 = vpack.c.b16 %v978, %v977
  %vm982 = vsmask.f32 1280
  %vm983 = vsmask.f32 5392
  %vm984 = vmor %vm982, %vm983
  %v986 = vshrl.u32 %v979, 16
  %v988 = vrot.slane %v986, 6
  %v989 = vshll.u32 %v979, 16
  %v991 = vrot.slane %v989, 7
  %v992 = vor.u32 %v988, %v991
  %v993 = vrot.slane %v992, 4
  %v995 = vshrl.u32 %v980, 16
  %v997 = vrot.slane %v995, 6
  %v998 = vshll.u32 %v980, 16
  %v1000 = vrot.slane %v998, 7
  %v1001 = vor.u32 %v997, %v1000
  %v1002 = vsel %vm984, %v993, %v1001
  %v1003 = vrot.slane %v1001, 4
  %v1005 = vshrl.u32 %v981, 16
  %v1007 = vrot.slane %v1005, 6
  %v1008 = vshll.u32 %v981, 16
  %v1010 = vrot.slane %v1008, 7
  %v1011 = vor.u32 %v1007, %v1010
  %v1012 = vsel %vm984, %v1003, %v1011
  %1013 = vrot.lane.b32.xlu0 %v992, 64
  %v1014 = vpop.permute.xlu0 %1013
  %1015 = vrot.lane.b32.xlu0 %v1002, 64
  %v1016 = vpop.permute.xlu0 %1015
  %1017 = vrot.lane.b32.xlu0 %v1012, 64
  %v1018 = vpop.permute.xlu0 %1017
  %v1019 = vrot.slane %v1014, 4
  %v1020 = vrot.slane %v1016, 4
  %v1021 = vrot.slane %v1018, 4
  %v1022 = vsel %vm751, %v1019, %v1014
  %v1023 = vsel %vm751, %v1020, %v1016
  %v1024 = vsel %vm751, %v1021, %v1018
  %vm1028 = vcmask 1043970
  %vm1029 = vcmask 1047558
  %vm1030 = vmor %vm1029, %vm1028
  %1031 = vst.msk [vmem:[#allocation11 + $0x44] sm:$0xcc] %vm1030, %v1022
  %1032 = vst.msk [vmem:[#allocation11 + $0x64] sm:$0xff] %vm760, %v1023
  %1033 = vst.msk [vmem:[#allocation11 + $0x84] sm:$0xff] %vm760, %v1024
  %v1034 = vld [vmem:[#allocation2 + $0x30] sm:$0xfc]
  %v1035 = vld [vmem:[#allocation2 + $0x38] sm:$0xfc]
  %v1036 = vld [vmem:[#allocation2 + $0x40] sm:$0xff]
  %v1037 = vld [vmem:[#allocation2 + $0x48] sm:$0xff]
  %v1038 = vld [vmem:[#allocation2 + $0x50] sm:$0x3f]
  %v1039 = vld [vmem:[#allocation2 + $0x58] sm:$0x3f]
  %v1040 = vpack.c.bf16 %v1036, %v1034
  %v1041 = vpack.c.bf16 %v1037, %v1035
  %v1042 = vpack.c.bf16 %v1038, %v1038
  %v1043 = vpack.c.bf16 %v1039, %v1039
  %v1048 = vunpack.c.l.b16 %v1040
  %v1049 = vunpack.c.l.b16 %v1041
  %v1050 = vunpack.c.h.b16 %v1040
  %v1051 = vunpack.c.h.b16 %v1041
  %v1052 = vunpack.c.l.b16 %v1042
  %v1053 = vunpack.c.l.b16 %v1043
  %v1054 = vpack.c.b16 %v1049, %v1048
  %v1055 = vpack.c.b16 %v1051, %v1050
  %v1056 = vpack.c.b16 %v1053, %v1052
  %vm1057 = vcmask 1040384
  %vm1058 = vcmask 1044484
  %vm1059 = vmor %vm1057, %vm1058
  %v1060 = vrot.slane %v1054, 7
  %v1061 = vrot.slane %v1060, 4
  %v1062 = vrot.slane %v1055, 7
  %v1063 = vsel %vm1059, %v1061, %v1062
  %v1064 = vrot.slane %v1062, 4
  %v1065 = vrot.slane %v1056, 7
  %v1066 = vsel %vm1059, %v1064, %v1065
  %1070 = vst.msk [vmem:[#allocation11 + $0x4c] sm:$0xcc] %vm955, %v1060
  %1071 = vst.msk [vmem:[#allocation11 + $0x6c] sm:$0xff] %vm680, %v1063
  %1072 = vst.msk [vmem:[#allocation11 + $0x8c] sm:$0xff] %vm680, %v1066
  %v1073 = vld [vmem:[#allocation2 + $0x30] sm:$0xf8]
  %v1074 = vld [vmem:[#allocation2 + $0x38] sm:$0xf8]
  %v1075 = vld [vmem:[#allocation2 + $0x40] sm:$0xff]
  %v1076 = vld [vmem:[#allocation2 + $0x48] sm:$0xff]
  %v1077 = vld [vmem:[#allocation2 + $0x50] sm:$0x7f]
  %v1078 = vld [vmem:[#allocation2 + $0x58] sm:$0x7f]
  %v1079 = vpack.c.bf16 %v1075, %v1073
  %v1080 = vpack.c.bf16 %v1076, %v1074
  %v1081 = vpack.c.bf16 %v1077, %v1077
  %v1082 = vpack.c.bf16 %v1078, %v1078
  %v1087 = vunpack.c.l.b16 %v1079
  %v1088 = vunpack.c.l.b16 %v1080
  %v1089 = vunpack.c.h.b16 %v1079
  %v1090 = vunpack.c.h.b16 %v1080
  %v1091 = vunpack.c.l.b16 %v1081
  %v1092 = vunpack.c.l.b16 %v1082
  %v1093 = vpack.c.b16 %v1088, %v1087
  %v1094 = vpack.c.b16 %v1090, %v1089
  %v1095 = vpack.c.b16 %v1092, %v1091
  %vm1096 = vsmask.f32 256
  %vm1097 = vsmask.f32 4368
  %vm1098 = vmor %vm1096, %vm1097
  %v1100 = vshrl.u32 %v1093, 16
  %v1102 = vrot.slane %v1100, 7
  %v1103 = vshll.u32 %v1093, 16
  %v1105 = vor.u32 %v1102, %v1103
  %v1106 = vrot.slane %v1102, 4
  %v1108 = vshrl.u32 %v1094, 16
  %v1110 = vrot.slane %v1108, 7
  %v1111 = vshll.u32 %v1094, 16
  %v1113 = vor.u32 %v1110, %v1111
  %v1114 = vsel %vm1098, %v1106, %v1113
  %v1115 = vrot.slane %v1110, 4
  %v1117 = vshrl.u32 %v1095, 16
  %v1119 = vrot.slane %v1117, 7
  %v1120 = vshll.u32 %v1095, 16
  %v1122 = vor.u32 %v1119, %v1120
  %v1123 = vsel %vm1098, %v1115, %v1122
  %1124 = vrot.lane.b32.xlu0 %v1105, 64
  %v1125 = vpop.permute.xlu0 %1124
  %1126 = vrot.lane.b32.xlu0 %v1114, 64
  %v1127 = vpop.permute.xlu0 %1126
  %1128 = vrot.lane.b32.xlu0 %v1123, 64
  %v1129 = vpop.permute.xlu0 %1128
  %v1130 = vrot.slane %v1125, 4
  %v1131 = vrot.slane %v1127, 4
  %v1132 = vrot.slane %v1129, 4
  %v1133 = vsel %vm751, %v1130, %v1125
  %v1134 = vsel %vm751, %v1131, %v1127
  %v1135 = vsel %vm751, %v1132, %v1129
  %1139 = vst.msk [vmem:[#allocation11 + $0x50] sm:$0xcc] %vm1030, %v1133
  %1140 = vst.msk [vmem:[#allocation11 + $0x70] sm:$0xff] %vm760, %v1134
  %1141 = vst.msk [vmem:[#allocation11 + $0x90] sm:$0xff] %vm760, %v1135
  %v1142 = vld [vmem:[#allocation2 + $0x30] sm:$0xf0]
  %v1143 = vld [vmem:[#allocation2 + $0x38] sm:$0xf0]
  %v1144 = vld [vmem:[#allocation2 + $0x40] sm:$0xff]
  %v1145 = vld [vmem:[#allocation2 + $0x48] sm:$0xff]
  %v1146 = vld [vmem:[#allocation2 + $0x50] sm:$0xff]
  %v1147 = vld [vmem:[#allocation2 + $0x58] sm:$0xff]
  %v1148 = vpack.c.bf16 %v1144, %v1142
  %v1149 = vpack.c.bf16 %v1145, %v1143
  %v1150 = vpack.c.bf16 %v1146, %v1146
  %v1151 = vpack.c.bf16 %v1147, %v1147
  %v1156 = vunpack.c.l.b16 %v1148
  %v1157 = vunpack.c.l.b16 %v1149
  %v1158 = vunpack.c.h.b16 %v1148
  %v1159 = vunpack.c.h.b16 %v1149
  %v1160 = vunpack.c.l.b16 %v1150
  %v1161 = vunpack.c.l.b16 %v1151
  %v1162 = vpack.c.b16 %v1157, %v1156
  %v1163 = vpack.c.b16 %v1159, %v1158
  %v1164 = vpack.c.b16 %v1161, %v1160
  %1168 = vst.msk [vmem:[#allocation11 + $0x58] sm:$0xcc] %vm955, %v1162
  %1169 = vst.msk [vmem:[#allocation11 + $0x78] sm:$0xff] %vm680, %v1163
  %1170 = vst.msk [vmem:[#allocation11 + $0x98] sm:$0xff] %vm680, %v1164
  %v1171 = vld [vmem:[#allocation11] sm:$0xff]
  %v1172 = vld [vmem:[#allocation11 + $0x8] sm:$0xff]
  %v1173 = vld [vmem:[#allocation11 + $0x10] sm:$0xff]
  %v1174 = vld [vmem:[#allocation11 + $0x18] sm:$0xff]
  %v1175 = vld [vmem:[#allocation11 + $0x20] sm:$0xff]
  %v1176 = vld [vmem:[#allocation11 + $0x28] sm:$0xff]
  %v1177 = vld [vmem:[#allocation11 + $0x30] sm:$0xff]
  %v1178 = vld [vmem:[#allocation11 + $0x38] sm:$0xff]
  %v1179 = vld [vmem:[#allocation11 + $0x40] sm:$0xff]
  %v1180 = vld [vmem:[#allocation11 + $0x48] sm:$0xff]
  %v1181 = vld [vmem:[#allocation11 + $0x50] sm:$0xff]
  %v1182 = vld [vmem:[#allocation11 + $0x58] sm:$0xff]
  %v1183 = vld [vmem:[#allocation11 + $0x60] sm:$0xff]
  %v1184 = vld [vmem:[#allocation11 + $0x68] sm:$0xff]
  %v1185 = vld [vmem:[#allocation11 + $0x70] sm:$0xff]
  %v1186 = vld [vmem:[#allocation11 + $0x78] sm:$0xff]
  %v1187 = vld [vmem:[#allocation11 + $0x80] sm:$0xff]
  %v1188 = vld [vmem:[#allocation11 + $0x88] sm:$0xff]
  %v1189 = vld [vmem:[#allocation11 + $0x90] sm:$0xff]
  %v1190 = vld [vmem:[#allocation11 + $0x98] sm:$0xff]
  %v1191 = vld [vmem:[%s2] sm:$0xff]
  %v1192 = vld [vmem:[%s2 + $0x8] sm:$0xff]
  %v1193 = vld [vmem:[%s2 + $0x10] sm:$0xff]
  %v1194 = vld [vmem:[%s2 + $0x18] sm:$0xff]
  %v1195 = vld [vmem:[%s2 + $0x20] sm:$0xff]
  %v1196 = vld [vmem:[%s2 + $0x28] sm:$0xff]
  %v1197 = vld [vmem:[%s2 + $0x30] sm:$0xff]
  %v1198 = vld [vmem:[%s2 + $0x38] sm:$0xff]
  %v1199 = vld [vmem:[%s2 + $0x40] sm:$0xff]
  %v1200 = vld [vmem:[%s2 + $0x48] sm:$0xff]
  %v1201 = vld [vmem:[%s2 + $0x50] sm:$0xff]
  %v1202 = vld [vmem:[%s2 + $0x58] sm:$0xff]
  %v1203 = vld [vmem:[%s2 + $0x60] sm:$0xff]
  %v1204 = vld [vmem:[%s2 + $0x68] sm:$0xff]
  %v1205 = vld [vmem:[%s2 + $0x70] sm:$0xff]
  %v1206 = vld [vmem:[%s2 + $0x78] sm:$0xff]
  %v1207 = vld [vmem:[%s2 + $0x80] sm:$0xff]
  %v1208 = vld [vmem:[%s2 + $0x88] sm:$0xff]
  %v1209 = vld [vmem:[%s2 + $0x90] sm:$0xff]
  %v1210 = vld [vmem:[%s2 + $0x98] sm:$0xff]
  %v1211 = vld [vmem:[%s2 + $0xa0] sm:$0xff]
  %v1212 = vld [vmem:[%s2 + $0xa8] sm:$0xff]
  %v1213 = vld [vmem:[%s2 + $0xb0] sm:$0xff]
  %v1214 = vld [vmem:[%s2 + $0xb8] sm:$0xff]
  %v1215 = vld [vmem:[%s2 + $0xc0] sm:$0xff]
  %v1216 = vld [vmem:[%s2 + $0xc8] sm:$0xff]
  %v1217 = vld [vmem:[%s2 + $0xd0] sm:$0xff]
  %v1218 = vld [vmem:[%s2 + $0xd8] sm:$0xff]
  %v1219 = vld [vmem:[%s2 + $0xe0] sm:$0xff]
  %v1220 = vld [vmem:[%s2 + $0xe8] sm:$0xff]
  %v1221 = vld [vmem:[%s2 + $0xf0] sm:$0xff]
  %v1222 = vld [vmem:[%s2 + $0xf8] sm:$0xff]
  %v1223 = vld [vmem:[%s2 + $0x100] sm:$0xff]
  %v1224 = vld [vmem:[%s2 + $0x108] sm:$0xff]
  %v1225 = vld [vmem:[%s2 + $0x110] sm:$0xff]
  %v1226 = vld [vmem:[%s2 + $0x118] sm:$0xff]
  %v1227 = vld [vmem:[%s2 + $0x120] sm:$0xff]
  %v1228 = vld [vmem:[%s2 + $0x128] sm:$0xff]
  %v1229 = vld [vmem:[%s2 + $0x130] sm:$0xff]
  %v1230 = vld [vmem:[%s2 + $0x138] sm:$0xff]
  %v1231 = vld [vmem:[%s2 + $0x140] sm:$0xff]
  %v1232 = vld [vmem:[%s2 + $0x148] sm:$0xff]
  %v1233 = vld [vmem:[%s2 + $0x150] sm:$0xff]
  %v1234 = vld [vmem:[%s2 + $0x158] sm:$0xff]
  %v1235 = vld [vmem:[%s2 + $0x160] sm:$0xff]
  %v1236 = vld [vmem:[%s2 + $0x168] sm:$0xff]
  %v1237 = vld [vmem:[%s2 + $0x170] sm:$0xff]
  %v1238 = vld [vmem:[%s2 + $0x178] sm:$0xff]
  %v1239 = vld [vmem:[%s2 + $0x180] sm:$0xff]
  %v1240 = vld [vmem:[%s2 + $0x188] sm:$0xff]
  %v1241 = vld [vmem:[%s2 + $0x190] sm:$0xff]
  %v1242 = vld [vmem:[%s2 + $0x198] sm:$0xff]
  %v1243 = vld [vmem:[%s2 + $0x1a0] sm:$0xff]
  %v1244 = vld [vmem:[%s2 + $0x1a8] sm:$0xff]
  %v1245 = vld [vmem:[%s2 + $0x1b0] sm:$0xff]
  %v1246 = vld [vmem:[%s2 + $0x1b8] sm:$0xff]
  %v1247 = vld [vmem:[%s2 + $0x1c0] sm:$0xff]
  %v1248 = vld [vmem:[%s2 + $0x1c8] sm:$0xff]
  %v1249 = vld [vmem:[%s2 + $0x1d0] sm:$0xff]
  %v1250 = vld [vmem:[%s2 + $0x1d8] sm:$0xff]
  %v1251 = vld [vmem:[%s2 + $0x1e0] sm:$0xff]
  %v1252 = vld [vmem:[%s2 + $0x1e8] sm:$0xff]
  %v1253 = vld [vmem:[%s2 + $0x1f0] sm:$0xff]
  %v1254 = vld [vmem:[%s2 + $0x1f8] sm:$0xff]
  %v1255 = vld [vmem:[%s2 + $0x200] sm:$0xff]
  %v1256 = vld [vmem:[%s2 + $0x208] sm:$0xff]
  %v1257 = vld [vmem:[%s2 + $0x210] sm:$0xff]
  %v1258 = vld [vmem:[%s2 + $0x218] sm:$0xff]
  %v1259 = vld [vmem:[%s2 + $0x220] sm:$0xff]
  %v1260 = vld [vmem:[%s2 + $0x228] sm:$0xff]
  %v1261 = vld [vmem:[%s2 + $0x230] sm:$0xff]
  %v1262 = vld [vmem:[%s2 + $0x238] sm:$0xff]
  %v1263 = vld [vmem:[%s2 + $0x240] sm:$0xff]
  %v1264 = vld [vmem:[%s2 + $0x248] sm:$0xff]
  %v1265 = vld [vmem:[%s2 + $0x250] sm:$0xff]
  %v1266 = vld [vmem:[%s2 + $0x258] sm:$0xff]
  %v1267 = vld [vmem:[%s2 + $0x260] sm:$0xff]
  %v1268 = vld [vmem:[%s2 + $0x268] sm:$0xff]
  %v1269 = vld [vmem:[%s2 + $0x270] sm:$0xff]
  %v1270 = vld [vmem:[%s2 + $0x278] sm:$0xff]
  %v1271 = vld [vmem:[%s2 + $0x280] sm:$0xff]
  %v1272 = vld [vmem:[%s2 + $0x288] sm:$0xff]
  %v1273 = vld [vmem:[%s2 + $0x290] sm:$0xff]
  %v1274 = vld [vmem:[%s2 + $0x298] sm:$0xff]
  %v1275 = vld [vmem:[%s2 + $0x2a0] sm:$0xff]
  %v1276 = vld [vmem:[%s2 + $0x2a8] sm:$0xff]
  %v1277 = vld [vmem:[%s2 + $0x2b0] sm:$0xff]
  %v1278 = vld [vmem:[%s2 + $0x2b8] sm:$0xff]
  %v1279 = vld [vmem:[%s2 + $0x2c0] sm:$0xff]
  %v1280 = vld [vmem:[%s2 + $0x2c8] sm:$0xff]
  %v1281 = vld [vmem:[%s2 + $0x2d0] sm:$0xff]
  %v1282 = vld [vmem:[%s2 + $0x2d8] sm:$0xff]
  %v1283 = vld [vmem:[%s2 + $0x2e0] sm:$0xff]
  %v1284 = vld [vmem:[%s2 + $0x2e8] sm:$0xff]
  %v1285 = vld [vmem:[%s2 + $0x2f0] sm:$0xff]
  %v1286 = vld [vmem:[%s2 + $0x2f8] sm:$0xff]
  %v1287 = vld [vmem:[%s2 + $0x300] sm:$0xff]
  %v1288 = vld [vmem:[%s2 + $0x308] sm:$0xff]
  %v1289 = vld [vmem:[%s2 + $0x310] sm:$0xff]
  %v1290 = vld [vmem:[%s2 + $0x318] sm:$0xff]
  %v1291 = vld [vmem:[%s2 + $0x320] sm:$0xff]
  %v1292 = vld [vmem:[%s2 + $0x328] sm:$0xff]
  %v1293 = vld [vmem:[%s2 + $0x330] sm:$0xff]
  %v1294 = vld [vmem:[%s2 + $0x338] sm:$0xff]
  %v1295 = vld [vmem:[%s2 + $0x340] sm:$0xff]
  %v1296 = vld [vmem:[%s2 + $0x348] sm:$0xff]
  %v1297 = vld [vmem:[%s2 + $0x350] sm:$0xff]
  %v1298 = vld [vmem:[%s2 + $0x358] sm:$0xff]
  %v1299 = vld [vmem:[%s2 + $0x360] sm:$0xff]
  %v1300 = vld [vmem:[%s2 + $0x368] sm:$0xff]
  %v1301 = vld [vmem:[%s2 + $0x370] sm:$0xff]
  %v1302 = vld [vmem:[%s2 + $0x378] sm:$0xff]
  %v1303 = vld [vmem:[%s2 + $0x380] sm:$0xff]
  %v1304 = vld [vmem:[%s2 + $0x388] sm:$0xff]
  %v1305 = vld [vmem:[%s2 + $0x390] sm:$0xff]
  %v1306 = vld [vmem:[%s2 + $0x398] sm:$0xff]
  %v1307 = vld [vmem:[%s2 + $0x3a0] sm:$0xff]
  %v1308 = vld [vmem:[%s2 + $0x3a8] sm:$0xff]
  %v1309 = vld [vmem:[%s2 + $0x3b0] sm:$0xff]
  %v1310 = vld [vmem:[%s2 + $0x3b8] sm:$0xff]
  %v1311 = vld [vmem:[%s12] sm:$0x3]
  %v1313 = vlaneseq
  %v1314 = vshrl.u32 %v1313, 7
  %v1315 = vsub.s32 0, %v1314
  %v1316 = vrot.slane %v1311, %v1315
  %v1317 = vlaneseq
  %v1318 = vshrl.u32 %v1317, 7
  %v1319 = vsub.s32 1, %v1318
  %v1320 = vrot.slane %v1311, %v1319
  %v1343 = vunpack.c.l.b16 %v1171
  %v1344 = vunpack.c.h.b16 %v1171
  %v1345 = vunpack.c.l.b16 %v1172
  %v1346 = vunpack.c.h.b16 %v1172
  %v1347 = vunpack.c.l.b16 %v1173
  %v1348 = vunpack.c.h.b16 %v1173
  %v1349 = vunpack.c.l.b16 %v1174
  %v1350 = vunpack.c.h.b16 %v1174
  %v1351 = vunpack.c.l.b16 %v1175
  %v1352 = vunpack.c.h.b16 %v1175
  %v1353 = vunpack.c.l.b16 %v1176
  %v1354 = vunpack.c.h.b16 %v1176
  %v1355 = vunpack.c.l.b16 %v1177
  %v1356 = vunpack.c.h.b16 %v1177
  %v1357 = vunpack.c.l.b16 %v1178
  %v1358 = vunpack.c.h.b16 %v1178
  %v1359 = vunpack.c.l.b16 %v1179
  %v1360 = vunpack.c.h.b16 %v1179
  %v1361 = vunpack.c.l.b16 %v1180
  %v1362 = vunpack.c.h.b16 %v1180
  %v1363 = vunpack.c.l.b16 %v1181
  %v1364 = vunpack.c.h.b16 %v1181
  %v1365 = vunpack.c.l.b16 %v1182
  %v1366 = vunpack.c.h.b16 %v1182
  %v1367 = vunpack.c.l.b16 %v1183
  %v1368 = vunpack.c.h.b16 %v1183
  %v1369 = vunpack.c.l.b16 %v1184
  %v1370 = vunpack.c.h.b16 %v1184
  %v1371 = vunpack.c.l.b16 %v1185
  %v1372 = vunpack.c.h.b16 %v1185
  %v1373 = vunpack.c.l.b16 %v1186
  %v1374 = vunpack.c.h.b16 %v1186
  %v1375 = vunpack.c.l.b16 %v1187
  %v1376 = vunpack.c.h.b16 %v1187
  %v1377 = vunpack.c.l.b16 %v1188
  %v1378 = vunpack.c.h.b16 %v1188
  %v1379 = vunpack.c.l.b16 %v1189
  %v1380 = vunpack.c.h.b16 %v1189
  %v1381 = vunpack.c.l.b16 %v1190
  %v1382 = vunpack.c.h.b16 %v1190
  %v1383 = vpack.c.b16 %v1351, %v1343
  %v1384 = vpack.c.b16 %v1352, %v1344
  %v1385 = vpack.c.b16 %v1353, %v1345
  %v1386 = vpack.c.b16 %v1354, %v1346
  %v1387 = vpack.c.b16 %v1355, %v1347
  %v1388 = vpack.c.b16 %v1356, %v1348
  %v1389 = vpack.c.b16 %v1357, %v1349
  %v1390 = vpack.c.b16 %v1358, %v1350
  %v1391 = vpack.c.b16 %v1367, %v1359
  %v1392 = vpack.c.b16 %v1368, %v1360
  %v1393 = vpack.c.b16 %v1369, %v1361
  %v1394 = vpack.c.b16 %v1370, %v1362
  %v1395 = vpack.c.b16 %v1371, %v1363
  %v1396 = vpack.c.b16 %v1372, %v1364
  %v1397 = vpack.c.b16 %v1373, %v1365
  %v1398 = vpack.c.b16 %v1374, %v1366
  %v1399 = vpack.c.b16 %v1375, %v1375
  %v1400 = vpack.c.b16 %v1376, %v1376
  %v1401 = vpack.c.b16 %v1377, %v1377
  %v1402 = vpack.c.b16 %v1378, %v1378
  %v1403 = vpack.c.b16 %v1379, %v1379
  %v1404 = vpack.c.b16 %v1380, %v1380
  %v1405 = vpack.c.b16 %v1381, %v1381
  %v1406 = vpack.c.b16 %v1382, %v1382
  %v1548 = vunpack.c.l.b16 %v1191
  %v1549 = vunpack.c.h.b16 %v1191
  %v1550 = vunpack.c.l.b16 %v1192
  %v1551 = vunpack.c.h.b16 %v1192
  %v1552 = vunpack.c.l.b16 %v1193
  %v1553 = vunpack.c.h.b16 %v1193
  %v1554 = vunpack.c.l.b16 %v1194
  %v1555 = vunpack.c.h.b16 %v1194
  %v1556 = vunpack.c.l.b16 %v1195
  %v1557 = vunpack.c.h.b16 %v1195
  %v1558 = vunpack.c.l.b16 %v1196
  %v1559 = vunpack.c.h.b16 %v1196
  %v1560 = vunpack.c.l.b16 %v1197
  %v1561 = vunpack.c.h.b16 %v1197
  %v1562 = vunpack.c.l.b16 %v1198
  %v1563 = vunpack.c.h.b16 %v1198
  %v1564 = vunpack.c.l.b16 %v1199
  %v1565 = vunpack.c.h.b16 %v1199
  %v1566 = vunpack.c.l.b16 %v1200
  %v1567 = vunpack.c.h.b16 %v1200
  %v1568 = vunpack.c.l.b16 %v1201
  %v1569 = vunpack.c.h.b16 %v1201
  %v1570 = vunpack.c.l.b16 %v1202
  %v1571 = vunpack.c.h.b16 %v1202
  %v1572 = vunpack.c.l.b16 %v1203
  %v1573 = vunpack.c.h.b16 %v1203
  %v1574 = vunpack.c.l.b16 %v1204
  %v1575 = vunpack.c.h.b16 %v1204
  %v1576 = vunpack.c.l.b16 %v1205
  %v1577 = vunpack.c.h.b16 %v1205
  %v1578 = vunpack.c.l.b16 %v1206
  %v1579 = vunpack.c.h.b16 %v1206
  %v1580 = vunpack.c.l.b16 %v1207
  %v1581 = vunpack.c.h.b16 %v1207
  %v1582 = vunpack.c.l.b16 %v1208
  %v1583 = vunpack.c.h.b16 %v1208
  %v1584 = vunpack.c.l.b16 %v1209
  %v1585 = vunpack.c.h.b16 %v1209
  %v1586 = vunpack.c.l.b16 %v1210
  %v1587 = vunpack.c.h.b16 %v1210
  %v1588 = vunpack.c.l.b16 %v1211
  %v1589 = vunpack.c.h.b16 %v1211
  %v1590 = vunpack.c.l.b16 %v1212
  %v1591 = vunpack.c.h.b16 %v1212
  %v1592 = vunpack.c.l.b16 %v1213
  %v1593 = vunpack.c.h.b16 %v1213
  %v1594 = vunpack.c.l.b16 %v1214
  %v1595 = vunpack.c.h.b16 %v1214
  %v1596 = vunpack.c.l.b16 %v1215
  %v1597 = vunpack.c.h.b16 %v1215
  %v1598 = vunpack.c.l.b16 %v1216
  %v1599 = vunpack.c.h.b16 %v1216
  %v1600 = vunpack.c.l.b16 %v1217
  %v1601 = vunpack.c.h.b16 %v1217
  %v1602 = vunpack.c.l.b16 %v1218
  %v1603 = vunpack.c.h.b16 %v1218
  %v1604 = vunpack.c.l.b16 %v1219
  %v1605 = vunpack.c.h.b16 %v1219
  %v1606 = vunpack.c.l.b16 %v1220
  %v1607 = vunpack.c.h.b16 %v1220
  %v1608 = vunpack.c.l.b16 %v1221
  %v1609 = vunpack.c.h.b16 %v1221
  %v1610 = vunpack.c.l.b16 %v1222
  %v1611 = vunpack.c.h.b16 %v1222
  %v1612 = vunpack.c.l.b16 %v1223
  %v1613 = vunpack.c.h.b16 %v1223
  %v1614 = vunpack.c.l.b16 %v1224
  %v1615 = vunpack.c.h.b16 %v1224
  %v1616 = vunpack.c.l.b16 %v1225
  %v1617 = vunpack.c.h.b16 %v1225
  %v1618 = vunpack.c.l.b16 %v1226
  %v1619 = vunpack.c.h.b16 %v1226
  %v1620 = vunpack.c.l.b16 %v1227
  %v1621 = vunpack.c.h.b16 %v1227
  %v1622 = vunpack.c.l.b16 %v1228
  %v1623 = vunpack.c.h.b16 %v1228
  %v1624 = vunpack.c.l.b16 %v1229
  %v1625 = vunpack.c.h.b16 %v1229
  %v1626 = vunpack.c.l.b16 %v1230
  %v1627 = vunpack.c.h.b16 %v1230
  %v1628 = vunpack.c.l.b16 %v1231
  %v1629 = vunpack.c.h.b16 %v1231
  %v1630 = vunpack.c.l.b16 %v1232
  %v1631 = vunpack.c.h.b16 %v1232
  %v1632 = vunpack.c.l.b16 %v1233
  %v1633 = vunpack.c.h.b16 %v1233
  %v1634 = vunpack.c.l.b16 %v1234
  %v1635 = vunpack.c.h.b16 %v1234
  %v1636 = vunpack.c.l.b16 %v1235
  %v1637 = vunpack.c.h.b16 %v1235
  %v1638 = vunpack.c.l.b16 %v1236
  %v1639 = vunpack.c.h.b16 %v1236
  %v1640 = vunpack.c.l.b16 %v1237
  %v1641 = vunpack.c.h.b16 %v1237
  %v1642 = vunpack.c.l.b16 %v1238
  %v1643 = vunpack.c.h.b16 %v1238
  %v1644 = vunpack.c.l.b16 %v1239
  %v1645 = vunpack.c.h.b16 %v1239
  %v1646 = vunpack.c.l.b16 %v1240
  %v1647 = vunpack.c.h.b16 %v1240
  %v1648 = vunpack.c.l.b16 %v1241
  %v1649 = vunpack.c.h.b16 %v1241
  %v1650 = vunpack.c.l.b16 %v1242
  %v1651 = vunpack.c.h.b16 %v1242
  %v1652 = vunpack.c.l.b16 %v1243
  %v1653 = vunpack.c.h.b16 %v1243
  %v1654 = vunpack.c.l.b16 %v1244
  %v1655 = vunpack.c.h.b16 %v1244
  %v1656 = vunpack.c.l.b16 %v1245
  %v1657 = vunpack.c.h.b16 %v1245
  %v1658 = vunpack.c.l.b16 %v1246
  %v1659 = vunpack.c.h.b16 %v1246
  %v1660 = vunpack.c.l.b16 %v1247
  %v1661 = vunpack.c.h.b16 %v1247
  %v1662 = vunpack.c.l.b16 %v1248
  %v1663 = vunpack.c.h.b16 %v1248
  %v1664 = vunpack.c.l.b16 %v1249
  %v1665 = vunpack.c.h.b16 %v1249
  %v1666 = vunpack.c.l.b16 %v1250
  %v1667 = vunpack.c.h.b16 %v1250
  %v1668 = vunpack.c.l.b16 %v1251
  %v1669 = vunpack.c.h.b16 %v1251
  %v1670 = vunpack.c.l.b16 %v1252
  %v1671 = vunpack.c.h.b16 %v1252
  %v1672 = vunpack.c.l.b16 %v1253
  %v1673 = vunpack.c.h.b16 %v1253
  %v1674 = vunpack.c.l.b16 %v1254
  %v1675 = vunpack.c.h.b16 %v1254
  %v1676 = vunpack.c.l.b16 %v1255
  %v1677 = vunpack.c.h.b16 %v1255
  %v1678 = vunpack.c.l.b16 %v1256
  %v1679 = vunpack.c.h.b16 %v1256
  %v1680 = vunpack.c.l.b16 %v1257
  %v1681 = vunpack.c.h.b16 %v1257
  %v1682 = vunpack.c.l.b16 %v1258
  %v1683 = vunpack.c.h.b16 %v1258
  %v1684 = vunpack.c.l.b16 %v1259
  %v1685 = vunpack.c.h.b16 %v1259
  %v1686 = vunpack.c.l.b16 %v1260
  %v1687 = vunpack.c.h.b16 %v1260
  %v1688 = vunpack.c.l.b16 %v1261
  %v1689 = vunpack.c.h.b16 %v1261
  %v1690 = vunpack.c.l.b16 %v1262
  %v1691 = vunpack.c.h.b16 %v1262
  %v1692 = vunpack.c.l.b16 %v1263
  %v1693 = vunpack.c.h.b16 %v1263
  %v1694 = vunpack.c.l.b16 %v1264
  %v1695 = vunpack.c.h.b16 %v1264
  %v1696 = vunpack.c.l.b16 %v1265
  %v1697 = vunpack.c.h.b16 %v1265
  %v1698 = vunpack.c.l.b16 %v1266
  %v1699 = vunpack.c.h.b16 %v1266
  %v1700 = vunpack.c.l.b16 %v1267
  %v1701 = vunpack.c.h.b16 %v1267
  %v1702 = vunpack.c.l.b16 %v1268
  %v1703 = vunpack.c.h.b16 %v1268
  %v1704 = vunpack.c.l.b16 %v1269
  %v1705 = vunpack.c.h.b16 %v1269
  %v1706 = vunpack.c.l.b16 %v1270
  %v1707 = vunpack.c.h.b16 %v1270
  %v1708 = vunpack.c.l.b16 %v1271
  %v1709 = vunpack.c.h.b16 %v1271
  %v1710 = vunpack.c.l.b16 %v1272
  %v1711 = vunpack.c.h.b16 %v1272
  %v1712 = vunpack.c.l.b16 %v1273
  %v1713 = vunpack.c.h.b16 %v1273
  %v1714 = vunpack.c.l.b16 %v1274
  %v1715 = vunpack.c.h.b16 %v1274
  %v1716 = vunpack.c.l.b16 %v1275
  %v1717 = vunpack.c.h.b16 %v1275
  %v1718 = vunpack.c.l.b16 %v1276
  %v1719 = vunpack.c.h.b16 %v1276
  %v1720 = vunpack.c.l.b16 %v1277
  %v1721 = vunpack.c.h.b16 %v1277
  %v1722 = vunpack.c.l.b16 %v1278
  %v1723 = vunpack.c.h.b16 %v1278
  %v1724 = vunpack.c.l.b16 %v1279
  %v1725 = vunpack.c.h.b16 %v1279
  %v1726 = vunpack.c.l.b16 %v1280
  %v1727 = vunpack.c.h.b16 %v1280
  %v1728 = vunpack.c.l.b16 %v1281
  %v1729 = vunpack.c.h.b16 %v1281
  %v1730 = vunpack.c.l.b16 %v1282
  %v1731 = vunpack.c.h.b16 %v1282
  %v1732 = vunpack.c.l.b16 %v1283
  %v1733 = vunpack.c.h.b16 %v1283
  %v1734 = vunpack.c.l.b16 %v1284
  %v1735 = vunpack.c.h.b16 %v1284
  %v1736 = vunpack.c.l.b16 %v1285
  %v1737 = vunpack.c.h.b16 %v1285
  %v1738 = vunpack.c.l.b16 %v1286
  %v1739 = vunpack.c.h.b16 %v1286
  %v1740 = vunpack.c.l.b16 %v1287
  %v1741 = vunpack.c.h.b16 %v1287
  %v1742 = vunpack.c.l.b16 %v1288
  %v1743 = vunpack.c.h.b16 %v1288
  %v1744 = vunpack.c.l.b16 %v1289
  %v1745 = vunpack.c.h.b16 %v1289
  %v1746 = vunpack.c.l.b16 %v1290
  %v1747 = vunpack.c.h.b16 %v1290
  %v1748 = vunpack.c.l.b16 %v1291
  %v1749 = vunpack.c.h.b16 %v1291
  %v1750 = vunpack.c.l.b16 %v1292
  %v1751 = vunpack.c.h.b16 %v1292
  %v1752 = vunpack.c.l.b16 %v1293
  %v1753 = vunpack.c.h.b16 %v1293
  %v1754 = vunpack.c.l.b16 %v1294
  %v1755 = vunpack.c.h.b16 %v1294
  %v1756 = vunpack.c.l.b16 %v1295
  %v1757 = vunpack.c.h.b16 %v1295
  %v1758 = vunpack.c.l.b16 %v1296
  %v1759 = vunpack.c.h.b16 %v1296
  %v1760 = vunpack.c.l.b16 %v1297
  %v1761 = vunpack.c.h.b16 %v1297
  %v1762 = vunpack.c.l.b16 %v1298
  %v1763 = vunpack.c.h.b16 %v1298
  %v1764 = vunpack.c.l.b16 %v1299
  %v1765 = vunpack.c.h.b16 %v1299
  %v1766 = vunpack.c.l.b16 %v1300
  %v1767 = vunpack.c.h.b16 %v1300
  %v1768 = vunpack.c.l.b16 %v1301
  %v1769 = vunpack.c.h.b16 %v1301
  %v1770 = vunpack.c.l.b16 %v1302
  %v1771 = vunpack.c.h.b16 %v1302
  %v1772 = vunpack.c.l.b16 %v1303
  %v1773 = vunpack.c.h.b16 %v1303
  %v1774 = vunpack.c.l.b16 %v1304
  %v1775 = vunpack.c.h.b16 %v1304
  %v1776 = vunpack.c.l.b16 %v1305
  %v1777 = vunpack.c.h.b16 %v1305
  %v1778 = vunpack.c.l.b16 %v1306
  %v1779 = vunpack.c.h.b16 %v1306
  %v1780 = vunpack.c.l.b16 %v1307
  %v1781 = vunpack.c.h.b16 %v1307
  %v1782 = vunpack.c.l.b16 %v1308
  %v1783 = vunpack.c.h.b16 %v1308
  %v1784 = vunpack.c.l.b16 %v1309
  %v1785 = vunpack.c.h.b16 %v1309
  %v1786 = vunpack.c.l.b16 %v1310
  %v1787 = vunpack.c.h.b16 %v1310
  %v1788 = vpack.c.b16 %v1550, %v1548
  %v1789 = vpack.c.b16 %v1551, %v1549
  %v1790 = vpack.c.b16 %v1554, %v1552
  %v1791 = vpack.c.b16 %v1555, %v1553
  %v1792 = vpack.c.b16 %v1558, %v1556
  %v1793 = vpack.c.b16 %v1559, %v1557
  %v1794 = vpack.c.b16 %v1562, %v1560
  %v1795 = vpack.c.b16 %v1563, %v1561
  %v1796 = vpack.c.b16 %v1566, %v1564
  %v1797 = vpack.c.b16 %v1567, %v1565
  %v1798 = vpack.c.b16 %v1570, %v1568
  %v1799 = vpack.c.b16 %v1571, %v1569
  %v1800 = vpack.c.b16 %v1574, %v1572
  %v1801 = vpack.c.b16 %v1575, %v1573
  %v1802 = vpack.c.b16 %v1578, %v1576
  %v1803 = vpack.c.b16 %v1579, %v1577
  %v1804 = vpack.c.b16 %v1582, %v1580
  %v1805 = vpack.c.b16 %v1583, %v1581
  %v1806 = vpack.c.b16 %v1586, %v1584
  %v1807 = vpack.c.b16 %v1587, %v1585
  %v1808 = vpack.c.b16 %v1590, %v1588
  %v1809 = vpack.c.b16 %v1591, %v1589
  %v1810 = vpack.c.b16 %v1594, %v1592
  %v1811 = vpack.c.b16 %v1595, %v1593
  %v1812 = vpack.c.b16 %v1598, %v1596
  %v1813 = vpack.c.b16 %v1599, %v1597
  %v1814 = vpack.c.b16 %v1602, %v1600
  %v1815 = vpack.c.b16 %v1603, %v1601
  %v1816 = vpack.c.b16 %v1606, %v1604
  %v1817 = vpack.c.b16 %v1607, %v1605
  %v1818 = vpack.c.b16 %v1610, %v1608
  %v1819 = vpack.c.b16 %v1611, %v1609
  %v1820 = vpack.c.b16 %v1614, %v1612
  %v1821 = vpack.c.b16 %v1615, %v1613
  %v1822 = vpack.c.b16 %v1618, %v1616
  %v1823 = vpack.c.b16 %v1619, %v1617
  %v1824 = vpack.c.b16 %v1622, %v1620
  %v1825 = vpack.c.b16 %v1623, %v1621
  %v1826 = vpack.c.b16 %v1626, %v1624
  %v1827 = vpack.c.b16 %v1627, %v1625
  %v1828 = vpack.c.b16 %v1630, %v1628
  %v1829 = vpack.c.b16 %v1631, %v1629
  %v1830 = vpack.c.b16 %v1634, %v1632
  %v1831 = vpack.c.b16 %v1635, %v1633
  %v1832 = vpack.c.b16 %v1638, %v1636
  %v1833 = vpack.c.b16 %v1639, %v1637
  %v1834 = vpack.c.b16 %v1642, %v1640
  %v1835 = vpack.c.b16 %v1643, %v1641
  %v1836 = vpack.c.b16 %v1646, %v1644
  %v1837 = vpack.c.b16 %v1647, %v1645
  %v1838 = vpack.c.b16 %v1650, %v1648
  %v1839 = vpack.c.b16 %v1651, %v1649
  %v1840 = vpack.c.b16 %v1654, %v1652
  %v1841 = vpack.c.b16 %v1655, %v1653
  %v1842 = vpack.c.b16 %v1658, %v1656
  %v1843 = vpack.c.b16 %v1659, %v1657
  %v1844 = vpack.c.b16 %v1662, %v1660
  %v1845 = vpack.c.b16 %v1663, %v1661
  %v1846 = vpack.c.b16 %v1666, %v1664
  %v1847 = vpack.c.b16 %v1667, %v1665
  %v1848 = vpack.c.b16 %v1670, %v1668
  %v1849 = vpack.c.b16 %v1671, %v1669
  %v1850 = vpack.c.b16 %v1674, %v1672
  %v1851 = vpack.c.b16 %v1675, %v1673
  %v1852 = vpack.c.b16 %v1678, %v1676
  %v1853 = vpack.c.b16 %v1679, %v1677
  %v1854 = vpack.c.b16 %v1682, %v1680
  %v1855 = vpack.c.b16 %v1683, %v1681
  %v1856 = vpack.c.b16 %v1686, %v1684
  %v1857 = vpack.c.b16 %v1687, %v1685
  %v1858 = vpack.c.b16 %v1690, %v1688
  %v1859 = vpack.c.b16 %v1691, %v1689
  %v1860 = vpack.c.b16 %v1694, %v1692
  %v1861 = vpack.c.b16 %v1695, %v1693
  %v1862 = vpack.c.b16 %v1698, %v1696
  %v1863 = vpack.c.b16 %v1699, %v1697
  %v1864 = vpack.c.b16 %v1702, %v1700
  %v1865 = vpack.c.b16 %v1703, %v1701
  %v1866 = vpack.c.b16 %v1706, %v1704
  %v1867 = vpack.c.b16 %v1707, %v1705
  %v1868 = vpack.c.b16 %v1710, %v1708
  %v1869 = vpack.c.b16 %v1711, %v1709
  %v1870 = vpack.c.b16 %v1714, %v1712
  %v1871 = vpack.c.b16 %v1715, %v1713
  %v1872 = vpack.c.b16 %v1718, %v1716
  %v1873 = vpack.c.b16 %v1719, %v1717
  %v1874 = vpack.c.b16 %v1722, %v1720
  %v1875 = vpack.c.b16 %v1723, %v1721
  %v1876 = vpack.c.b16 %v1726, %v1724
  %v1877 = vpack.c.b16 %v1727, %v1725
  %v1878 = vpack.c.b16 %v1730, %v1728
  %v1879 = vpack.c.b16 %v1731, %v1729
  %v1880 = vpack.c.b16 %v1734, %v1732
  %v1881 = vpack.c.b16 %v1735, %v1733
  %v1882 = vpack.c.b16 %v1738, %v1736
  %v1883 = vpack.c.b16 %v1739, %v1737
  %v1884 = vpack.c.b16 %v1742, %v1740
  %v1885 = vpack.c.b16 %v1743, %v1741
  %v1886 = vpack.c.b16 %v1746, %v1744
  %v1887 = vpack.c.b16 %v1747, %v1745
  %v1888 = vpack.c.b16 %v1750, %v1748
  %v1889 = vpack.c.b16 %v1751, %v1749
  %v1890 = vpack.c.b16 %v1754, %v1752
  %v1891 = vpack.c.b16 %v1755, %v1753
  %v1892 = vpack.c.b16 %v1758, %v1756
  %v1893 = vpack.c.b16 %v1759, %v1757
  %v1894 = vpack.c.b16 %v1762, %v1760
  %v1895 = vpack.c.b16 %v1763, %v1761
  %v1896 = vpack.c.b16 %v1766, %v1764
  %v1897 = vpack.c.b16 %v1767, %v1765
  %v1898 = vpack.c.b16 %v1770, %v1768
  %v1899 = vpack.c.b16 %v1771, %v1769
  %v1900 = vpack.c.b16 %v1774, %v1772
  %v1901 = vpack.c.b16 %v1775, %v1773
  %v1902 = vpack.c.b16 %v1778, %v1776
  %v1903 = vpack.c.b16 %v1779, %v1777
  %v1904 = vpack.c.b16 %v1782, %v1780
  %v1905 = vpack.c.b16 %v1783, %v1781
  %v1906 = vpack.c.b16 %v1786, %v1784
  %v1907 = vpack.c.b16 %v1787, %v1785
  %v2029 = vsel %vm640, %v1390, 0
  %v2032 = vsel %vm640, %v1398, 0
  %v2035 = vsel %vm640, %v1406, 0
  %2037 = vmatprep.subr.bf16.mxu0 %v1789
  %2038 = vmatpush1.bf16.msra.mxu0 %v1788
  %2039 = vmatprep.subr.bf16.mxu0 %v1791
  %2040 = vmatpush1.bf16.msra.mxu0 %v1790
  %2041 = vmatprep.subr.bf16.mxu0 %v1793
  %2042 = vmatpush1.bf16.msra.mxu0 %v1792
  %2043 = vmatprep.subr.bf16.mxu0 %v1795
  %2044 = vmatpush1.bf16.msra.mxu0 %v1794
  %2045 = vmatprep.subr.bf16.mxu0 %v1797
  %2046 = vmatpush1.bf16.msra.mxu0 %v1796
  %2047 = vmatprep.subr.bf16.mxu0 %v1799
  %2048 = vmatpush1.bf16.msra.mxu0 %v1798
  %2049 = vmatprep.subr.bf16.mxu0 %v1801
  %2050 = vmatpush1.bf16.msra.mxu0 %v1800
  %2051 = vmatprep.subr.bf16.mxu0 %v1803
  %2052 = vmatpush1.bf16.msra.mxu0 %v1802
  %2053 = vmatprep.subr.bf16.mxu0 %v1805
  %2054 = vmatpush1.bf16.msra.mxu0 %v1804
  %2055 = vmatprep.subr.bf16.mxu0 %v1807
  %2056 = vmatpush1.bf16.msra.mxu0 %v1806
  %2057 = vmatprep.subr.bf16.mxu0 %v1809
  %2058 = vmatpush1.bf16.msra.mxu0 %v1808
  %2059 = vmatprep.subr.bf16.mxu0 %v1811
  %2060 = vmatpush1.bf16.msra.mxu0 %v1810
  %2061 = vmatprep.subr.bf16.mxu0 %v1813
  %2062 = vmatpush1.bf16.msra.mxu0 %v1812
  %2063 = vmatprep.subr.bf16.mxu0 %v1815
  %2064 = vmatpush1.bf16.msra.mxu0 %v1814
  %2065 = vmatprep.subr.bf16.mxu0 %v1817
  %2066 = vmatpush1.bf16.msra.mxu0 %v1816
  %2067 = vmatprep.subr.bf16.mxu0 %v1819
  %2068 = vmatpush1.bf16.msra.mxu0 %v1818
  %2069 = vmatprep.mubr.bf16.mxu0 %v1384
  %2070 = vmatmul.mubr.bf16.gmra.mrb[0].mxu0 %v1383
  %v2071 = vpop.f32.mrb[0].mxu0
  %v2072 = vadd.f32 %v1316, %v2071
  %v2073 = vpop.f32.mrb[0].mxu0
  %v2074 = vadd.f32 %v1320, %v2073
  %v2075 = vpop.f32.mrb[0].mxu0
  %v2076 = vadd.f32 %v1316, %v2075
  %v2077 = vpop.f32.mrb[0].mxu0
  %v2078 = vadd.f32 %v1320, %v2077
  %2079 = vmatprep.mubr.bf16.mxu0 %v1392
  %2080 = vmatmul.mubr.bf16.gmra.mrb[0].mxu0 %v1391
  %v2081 = vpop.f32.mrb[0].mxu0
  %v2082 = vadd.f32 %v1316, %v2081
  %v2083 = vpop.f32.mrb[0].mxu0
  %v2084 = vadd.f32 %v1320, %v2083
  %v2085 = vpop.f32.mrb[0].mxu0
  %v2086 = vadd.f32 %v1316, %v2085
  %v2087 = vpop.f32.mrb[0].mxu0
  %v2088 = vadd.f32 %v1320, %v2087
  %2089 = vmatprep.mubr.bf16.mxu0 %v1400
  %2090 = vmatmul.mubr.bf16.gmra.mrb[0].mxu0 %v1399
  %v2091 = vpop.f32.mrb[0].mxu0
  %v2092 = vadd.f32 %v1316, %v2091
  %v2093 = vpop.f32.mrb[0].mxu0
  %v2094 = vadd.f32 %v1320, %v2093
  %v2095 = vpop.f32.mrb[0].mxu0
  %v2096 = vpop.f32.mrb[0].mxu0
  %2097 = vdwg.mxu0
  %2098 = vmatprep.subr.bf16.mxu0 %v1821
  %2099 = vmatpush1.bf16.msra.mxu0 %v1820
  %2100 = vmatprep.subr.bf16.mxu0 %v1823
  %2101 = vmatpush1.bf16.msra.mxu0 %v1822
  %2102 = vmatprep.subr.bf16.mxu0 %v1825
  %2103 = vmatpush1.bf16.msra.mxu0 %v1824
  %2104 = vmatprep.subr.bf16.mxu0 %v1827
  %2105 = vmatpush1.bf16.msra.mxu0 %v1826
  %2106 = vmatprep.subr.bf16.mxu0 %v1829
  %2107 = vmatpush1.bf16.msra.mxu0 %v1828
  %2108 = vmatprep.subr.bf16.mxu0 %v1831
  %2109 = vmatpush1.bf16.msra.mxu0 %v1830
  %2110 = vmatprep.subr.bf16.mxu0 %v1833
  %2111 = vmatpush1.bf16.msra.mxu0 %v1832
  %2112 = vmatprep.subr.bf16.mxu0 %v1835
  %2113 = vmatpush1.bf16.msra.mxu0 %v1834
  %2114 = vmatprep.subr.bf16.mxu0 %v1837
  %2115 = vmatpush1.bf16.msra.mxu0 %v1836
  %2116 = vmatprep.subr.bf16.mxu0 %v1839
  %2117 = vmatpush1.bf16.msra.mxu0 %v1838
  %2118 = vmatprep.subr.bf16.mxu0 %v1841
  %2119 = vmatpush1.bf16.msra.mxu0 %v1840
  %2120 = vmatprep.subr.bf16.mxu0 %v1843
  %2121 = vmatpush1.bf16.msra.mxu0 %v1842
  %2122 = vmatprep.subr.bf16.mxu0 %v1845
  %2123 = vmatpush1.bf16.msra.mxu0 %v1844
  %2124 = vmatprep.subr.bf16.mxu0 %v1847
  %2125 = vmatpush1.bf16.msra.mxu0 %v1846
  %2126 = vmatprep.subr.bf16.mxu0 %v1849
  %2127 = vmatpush1.bf16.msra.mxu0 %v1848
  %2128 = vmatprep.subr.bf16.mxu0 %v1851
  %2129 = vmatpush1.bf16.msra.mxu0 %v1850
  %2130 = vmatprep.mubr.bf16.mxu0 %v1386
  %2131 = vmatmul.mubr.bf16.gmra.mrb[0].mxu0 %v1385
  %v2132 = vpop.f32.mrb[0].mxu0
  %v2133 = vadd.f32 %v2072, %v2132
  %v2134 = vpop.f32.mrb[0].mxu0
  %v2135 = vadd.f32 %v2074, %v2134
  %v2136 = vpop.f32.mrb[0].mxu0
  %v2137 = vadd.f32 %v2076, %v2136
  %v2138 = vpop.f32.mrb[0].mxu0
  %v2139 = vadd.f32 %v2078, %v2138
  %2140 = vmatprep.mubr.bf16.mxu0 %v1394
  %2141 = vmatmul.mubr.bf16.gmra.mrb[0].mxu0 %v1393
  %v2142 = vpop.f32.mrb[0].mxu0
  %v2143 = vadd.f32 %v2082, %v2142
  %v2144 = vpop.f32.mrb[0].mxu0
  %v2145 = vadd.f32 %v2084, %v2144
  %v2146 = vpop.f32.mrb[0].mxu0
  %v2147 = vadd.f32 %v2086, %v2146
  %v2148 = vpop.f32.mrb[0].mxu0
  %v2149 = vadd.f32 %v2088, %v2148
  %2150 = vmatprep.mubr.bf16.mxu0 %v1402
  %2151 = vmatmul.mubr.bf16.gmra.mrb[0].mxu0 %v1401
  %v2152 = vpop.f32.mrb[0].mxu0
  %v2153 = vadd.f32 %v2092, %v2152
  %v2154 = vpop.f32.mrb[0].mxu0
  %v2155 = vadd.f32 %v2094, %v2154
  %v2156 = vpop.f32.mrb[0].mxu0
  %v2157 = vpop.f32.mrb[0].mxu0
  %2158 = vdwg.mxu0
  %2159 = vmatprep.subr.bf16.mxu0 %v1853
  %2160 = vmatpush1.bf16.msra.mxu0 %v1852
  %2161 = vmatprep.subr.bf16.mxu0 %v1855
  %2162 = vmatpush1.bf16.msra.mxu0 %v1854
  %2163 = vmatprep.subr.bf16.mxu0 %v1857
  %2164 = vmatpush1.bf16.msra.mxu0 %v1856
  %2165 = vmatprep.subr.bf16.mxu0 %v1859
  %2166 = vmatpush1.bf16.msra.mxu0 %v1858
  %2167 = vmatprep.subr.bf16.mxu0 %v1861
  %2168 = vmatpush1.bf16.msra.mxu0 %v1860
  %2169 = vmatprep.subr.bf16.mxu0 %v1863
  %2170 = vmatpush1.bf16.msra.mxu0 %v1862
  %2171 = vmatprep.subr.bf16.mxu0 %v1865
  %2172 = vmatpush1.bf16.msra.mxu0 %v1864
  %2173 = vmatprep.subr.bf16.mxu0 %v1867
  %2174 = vmatpush1.bf16.msra.mxu0 %v1866
  %2175 = vmatprep.subr.bf16.mxu0 %v1869
  %2176 = vmatpush1.bf16.msra.mxu0 %v1868
  %2177 = vmatprep.subr.bf16.mxu0 %v1871
  %2178 = vmatpush1.bf16.msra.mxu0 %v1870
  %2179 = vmatprep.subr.bf16.mxu0 %v1873
  %2180 = vmatpush1.bf16.msra.mxu0 %v1872
  %2181 = vmatprep.subr.bf16.mxu0 %v1875
  %2182 = vmatpush1.bf16.msra.mxu0 %v1874
  %2183 = vmatprep.subr.bf16.mxu0 %v1877
  %2184 = vmatpush1.bf16.msra.mxu0 %v1876
  %2185 = vmatprep.subr.bf16.mxu0 %v1879
  %2186 = vmatpush1.bf16.msra.mxu0 %v1878
  %2187 = vmatprep.subr.bf16.mxu0 %v1881
  %2188 = vmatpush1.bf16.msra.mxu0 %v1880
  %2189 = vmatprep.subr.bf16.mxu0 %v1883
  %2190 = vmatpush1.bf16.msra.mxu0 %v1882
  %2191 = vmatprep.mubr.bf16.mxu0 %v1388
  %2192 = vmatmul.mubr.bf16.gmra.mrb[0].mxu0 %v1387
  %v2193 = vpop.f32.mrb[0].mxu0
  %v2194 = vadd.f32 %v2133, %v2193
  %v2195 = vpop.f32.mrb[0].mxu0
  %v2196 = vadd.f32 %v2135, %v2195
  %v2197 = vpop.f32.mrb[0].mxu0
  %v2198 = vadd.f32 %v2137, %v2197
  %v2199 = vpop.f32.mrb[0].mxu0
  %v2200 = vadd.f32 %v2139, %v2199
  %2201 = vmatprep.mubr.bf16.mxu0 %v1396
  %2202 = vmatmul.mubr.bf16.gmra.mrb[0].mxu0 %v1395
  %v2203 = vpop.f32.mrb[0].mxu0
  %v2204 = vadd.f32 %v2143, %v2203
  %v2205 = vpop.f32.mrb[0].mxu0
  %v2206 = vadd.f32 %v2145, %v2205
  %v2207 = vpop.f32.mrb[0].mxu0
  %v2208 = vadd.f32 %v2147, %v2207
  %v2209 = vpop.f32.mrb[0].mxu0
  %v2210 = vadd.f32 %v2149, %v2209
  %2211 = vmatprep.mubr.bf16.mxu0 %v1404
  %2212 = vmatmul.mubr.bf16.gmra.mrb[0].mxu0 %v1403
  %v2213 = vpop.f32.mrb[0].mxu0
  %v2214 = vadd.f32 %v2153, %v2213
  %v2215 = vpop.f32.mrb[0].mxu0
  %v2216 = vadd.f32 %v2155, %v2215
  %v2217 = vpop.f32.mrb[0].mxu0
  %v2218 = vpop.f32.mrb[0].mxu0
  %2219 = vdwg.mxu0
  %2220 = vmatprep.subr.bf16.mxu0 %v1885
  %2221 = vmatpush1.bf16.msra.mxu0 %v1884
  %2222 = vmatprep.subr.bf16.mxu0 %v1887
  %2223 = vmatpush1.bf16.msra.mxu0 %v1886
  %2224 = vmatprep.subr.bf16.mxu0 %v1889
  %2225 = vmatpush1.bf16.msra.mxu0 %v1888
  %2226 = vmatprep.subr.bf16.mxu0 %v1891
  %2227 = vmatpush1.bf16.msra.mxu0 %v1890
  %2228 = vmatprep.subr.bf16.mxu0 %v1893
  %2229 = vmatpush1.bf16.msra.mxu0 %v1892
  %2230 = vmatprep.subr.bf16.mxu0 %v1895
  %2231 = vmatpush1.bf16.msra.mxu0 %v1894
  %2232 = vmatprep.subr.bf16.mxu0 %v1897
  %2233 = vmatpush1.bf16.msra.mxu0 %v1896
  %2234 = vmatprep.subr.bf16.mxu0 %v1899
  %2235 = vmatpush1.bf16.msra.mxu0 %v1898
  %2236 = vmatprep.subr.bf16.mxu0 %v1901
  %2237 = vmatpush1.bf16.msra.mxu0 %v1900
  %2238 = vmatprep.subr.bf16.mxu0 %v1903
  %2239 = vmatpush1.bf16.msra.mxu0 %v1902
  %2240 = vmatprep.subr.bf16.mxu0 %v1905
  %2241 = vmatpush1.bf16.msra.mxu0 %v1904
  %2242 = vmatprep.subr.bf16.mxu0 %v1907
  %2243 = vmatpush1.bf16.msra.mxu0 %v1906
  %2244 = vmatprep.subr.bf16.mxu0 0
  %2245 = vmatpush1.bf16.msra.mxu0 0
  %2246 = vmatprep.subr.bf16.mxu0 0
  %2247 = vmatpush1.bf16.msra.mxu0 0
  %2248 = vmatprep.subr.bf16.mxu0 0
  %2249 = vmatpush1.bf16.msra.mxu0 0
  %2250 = vmatprep.subr.bf16.mxu0 0
  %2251 = vmatpush1.bf16.msra.mxu0 0
  %2252 = vmatprep.mubr.bf16.mxu0 %v2029
  %2253 = vmatmul.mubr.bf16.gmra.mrb[0].mxu0 %v1389
  %v2254 = vpop.f32.mrb[0].mxu0
  %v2255 = vadd.f32 %v2194, %v2254
  %v2256 = vpop.f32.mrb[0].mxu0
  %v2257 = vadd.f32 %v2196, %v2256
  %v2258 = vpop.f32.mrb[0].mxu0
  %v2259 = vadd.f32 %v2198, %v2258
  %v2260 = vpop.f32.mrb[0].mxu0
  %v2261 = vadd.f32 %v2200, %v2260
  %2262 = vmatprep.mubr.bf16.mxu0 %v2032
  %2263 = vmatmul.mubr.bf16.gmra.mrb[0].mxu0 %v1397
  %v2264 = vpop.f32.mrb[0].mxu0
  %v2265 = vadd.f32 %v2204, %v2264
  %v2266 = vpop.f32.mrb[0].mxu0
  %v2267 = vadd.f32 %v2206, %v2266
  %v2268 = vpop.f32.mrb[0].mxu0
  %v2269 = vadd.f32 %v2208, %v2268
  %v2270 = vpop.f32.mrb[0].mxu0
  %v2271 = vadd.f32 %v2210, %v2270
  %2272 = vmatprep.mubr.bf16.mxu0 %v2035
  %2273 = vmatmul.mubr.bf16.gmra.mrb[0].mxu0 %v1405
  %v2274 = vpop.f32.mrb[0].mxu0
  %v2275 = vadd.f32 %v2214, %v2274
  %v2276 = vpop.f32.mrb[0].mxu0
  %v2277 = vadd.f32 %v2216, %v2276
  %v2278 = vpop.f32.mrb[0].mxu0
  %v2279 = vpop.f32.mrb[0].mxu0
  %2280 = vdwg.mxu0
  %v2281 = vmax.f32 %v2255, 0.0
  %v2282 = vmax.f32 %v2257, 0.0
  %v2283 = vmax.f32 %v2259, 0.0
  %v2284 = vmax.f32 %v2261, 0.0
  %v2285 = vmax.f32 %v2265, 0.0
  %v2286 = vmax.f32 %v2267, 0.0
  %v2287 = vmax.f32 %v2269, 0.0
  %v2288 = vmax.f32 %v2271, 0.0
  %v2289 = vmax.f32 %v2275, 0.0
  %v2290 = vmax.f32 %v2277, 0.0
  %2291 = vst [vmem:[#allocation3] sm:$0xff] %v2281
  %vm2292 = vcmask 261120
  %2293 = vst.msk [vmem:[#allocation3 + $0x8] sm:$0xff] %vm2292, %v2282
  %2294 = vst [vmem:[#allocation3 + $0x10] sm:$0xff] %v2283
  %2295 = vst.msk [vmem:[#allocation3 + $0x18] sm:$0xff] %vm2292, %v2284
  %2296 = vst [vmem:[#allocation3 + $0x20] sm:$0xff] %v2285
  %2297 = vst.msk [vmem:[#allocation3 + $0x28] sm:$0xff] %vm2292, %v2286
  %2298 = vst [vmem:[#allocation3 + $0x30] sm:$0xff] %v2287
  %2299 = vst.msk [vmem:[#allocation3 + $0x38] sm:$0xff] %vm2292, %v2288
  %2300 = vst [vmem:[#allocation3 + $0x40] sm:$0xff] %v2289
  %2301 = vst.msk [vmem:[#allocation3 + $0x48] sm:$0xff] %vm2292, %v2290
  %v2302 = vld [vmem:[#allocation3] sm:$0xff]
  %v2303 = vld [vmem:[#allocation3 + $0x8] sm:$0xff]
  %v2304 = vld [vmem:[#allocation3 + $0x10] sm:$0xff]
  %v2305 = vld [vmem:[#allocation3 + $0x18] sm:$0xff]
  %v2306 = vpack.c.bf16 %v2304, %v2302
  %v2307 = vpack.c.bf16 %v2305, %v2303
  %v2310 = vunpack.c.l.b16 %v2306
  %v2311 = vunpack.c.l.b16 %v2307
  %v2312 = vunpack.c.h.b16 %v2306
  %v2313 = vunpack.c.h.b16 %v2307
  %v2314 = vpack.c.b16 %v2311, %v2310
  %v2315 = vpack.c.b16 %v2313, %v2312
  %vm2318 = vcmask 261124
  %vm2319 = vmor %vm2318, %vm678
  %2320 = vst.msk [vmem:[#allocation11] sm:$0xff] %vm2319, %v2314
  %2321 = vst.msk [vmem:[#allocation11 + $0x20] sm:$0xff] %vm2319, %v2315
  %v2322 = vld [vmem:[#allocation3] sm:$0xfe]
  %v2323 = vld [vmem:[#allocation3 + $0x8] sm:$0xfe]
  %v2324 = vld [vmem:[#allocation3 + $0x10] sm:$0xff]
  %v2325 = vld [vmem:[#allocation3 + $0x18] sm:$0xff]
  %v2326 = vld [vmem:[#allocation3 + $0x20] sm:$0x1]
  %v2327 = vld [vmem:[#allocation3 + $0x28] sm:$0x1]
  %v2328 = vpack.c.bf16 %v2324, %v2322
  %v2329 = vpack.c.bf16 %v2325, %v2323
  %v2330 = vpack.c.bf16 %v2326, %v2326
  %v2331 = vpack.c.bf16 %v2327, %v2327
  %v2336 = vunpack.c.l.b16 %v2328
  %v2337 = vunpack.c.l.b16 %v2329
  %v2338 = vunpack.c.h.b16 %v2328
  %v2339 = vunpack.c.h.b16 %v2329
  %v2340 = vunpack.c.l.b16 %v2330
  %v2341 = vunpack.c.l.b16 %v2331
  %v2342 = vpack.c.b16 %v2337, %v2336
  %v2343 = vpack.c.b16 %v2339, %v2338
  %v2344 = vpack.c.b16 %v2341, %v2340
  %v2346 = vshrl.u32 %v2342, 16
  %v2348 = vrot.slane %v2346, 4
  %v2349 = vshll.u32 %v2342, 16
  %v2351 = vrot.slane %v2349, 5
  %v2352 = vor.u32 %v2348, %v2351
  %v2353 = vrot.slane %v2352, 4
  %v2355 = vshll.u32 %v2343, 16
  %v2357 = vrot.slane %v2355, 5
  %v2358 = vsel %vm712, %v2353, %v2357
  %v2359 = vshrl.u32 %v2343, 16
  %v2361 = vrot.slane %v2359, 4
  %v2362 = vor.u32 %v2361, %v2357
  %v2363 = vrot.slane %v2362, 4
  %v2365 = vshll.u32 %v2344, 16
  %v2367 = vrot.slane %v2365, 5
  %v2368 = vsel %vm712, %v2363, %v2367
  %2369 = vrot.lane.b32.xlu0 %v2358, 32
  %v2370 = vpop.permute.xlu0 %2369
  %2371 = vrot.lane.b32.xlu0 %v2368, 32
  %v2372 = vpop.permute.xlu0 %2371
  %v2373 = vrot.slane %v2370, 4
  %v2374 = vrot.slane %v2372, 4
  %vm2375 = vcmask 261120
  %v2376 = vsel %vm2375, %v2373, %v2370
  %v2377 = vsel %vm2375, %v2374, %v2372
  %vm2380 = vcmask 1043712
  %vm2381 = vmor %vm679, %vm2380
  %2382 = vst.msk [vmem:[#allocation11 + $0x4] sm:$0xff] %vm2381, %v2376
  %2383 = vst.msk [vmem:[#allocation11 + $0x24] sm:$0xff] %vm2381, %v2377
  %v2384 = vld [vmem:[#allocation3] sm:$0xfc]
  %v2385 = vld [vmem:[#allocation3 + $0x8] sm:$0xfc]
  %v2386 = vld [vmem:[#allocation3 + $0x10] sm:$0xff]
  %v2387 = vld [vmem:[#allocation3 + $0x18] sm:$0xff]
  %v2388 = vld [vmem:[#allocation3 + $0x20] sm:$0x3]
  %v2389 = vld [vmem:[#allocation3 + $0x28] sm:$0x3]
  %v2390 = vpack.c.bf16 %v2386, %v2384
  %v2391 = vpack.c.bf16 %v2387, %v2385
  %v2392 = vpack.c.bf16 %v2388, %v2388
  %v2393 = vpack.c.bf16 %v2389, %v2389
  %v2398 = vunpack.c.l.b16 %v2390
  %v2399 = vunpack.c.l.b16 %v2391
  %v2400 = vunpack.c.h.b16 %v2390
  %v2401 = vunpack.c.h.b16 %v2391
  %v2402 = vunpack.c.l.b16 %v2392
  %v2403 = vunpack.c.l.b16 %v2393
  %v2404 = vpack.c.b16 %v2399, %v2398
  %v2405 = vpack.c.b16 %v2401, %v2400
  %v2406 = vpack.c.b16 %v2403, %v2402
  %v2407 = vrot.slane %v2404, 5
  %v2408 = vrot.slane %v2407, 4
  %v2409 = vrot.slane %v2405, 5
  %v2410 = vsel %vm792, %v2408, %v2409
  %v2411 = vrot.slane %v2409, 4
  %v2412 = vrot.slane %v2406, 5
  %v2413 = vsel %vm792, %v2411, %v2412
  %2414 = vrot.lane.b32.xlu0 %v2410, 64
  %v2415 = vpop.permute.xlu0 %2414
  %2416 = vrot.lane.b32.xlu0 %v2413, 64
  %v2417 = vpop.permute.xlu0 %2416
  %v2418 = vrot.slane %v2415, 4
  %v2419 = vrot.slane %v2417, 4
  %v2420 = vsel %vm751, %v2418, %v2415
  %v2421 = vsel %vm751, %v2419, %v2417
  %vm2424 = vcmask 785412
  %vm2425 = vmor %vm2424, %vm758
  %2426 = vst.msk [vmem:[#allocation11 + $0x8] sm:$0xff] %vm2425, %v2420
  %2427 = vst.msk [vmem:[#allocation11 + $0x28] sm:$0xff] %vm2425, %v2421
  %v2428 = vld [vmem:[#allocation3] sm:$0xf8]
  %v2429 = vld [vmem:[#allocation3 + $0x8] sm:$0xf8]
  %v2430 = vld [vmem:[#allocation3 + $0x10] sm:$0xff]
  %v2431 = vld [vmem:[#allocation3 + $0x18] sm:$0xff]
  %v2432 = vld [vmem:[#allocation3 + $0x20] sm:$0x7]
  %v2433 = vld [vmem:[#allocation3 + $0x28] sm:$0x7]
  %v2434 = vpack.c.bf16 %v2430, %v2428
  %v2435 = vpack.c.bf16 %v2431, %v2429
  %v2436 = vpack.c.bf16 %v2432, %v2432
  %v2437 = vpack.c.bf16 %v2433, %v2433
  %v2442 = vunpack.c.l.b16 %v2434
  %v2443 = vunpack.c.l.b16 %v2435
  %v2444 = vunpack.c.h.b16 %v2434
  %v2445 = vunpack.c.h.b16 %v2435
  %v2446 = vunpack.c.l.b16 %v2436
  %v2447 = vunpack.c.l.b16 %v2437
  %v2448 = vpack.c.b16 %v2443, %v2442
  %v2449 = vpack.c.b16 %v2445, %v2444
  %v2450 = vpack.c.b16 %v2447, %v2446
  %v2452 = vshrl.u32 %v2448, 16
  %v2454 = vrot.slane %v2452, 5
  %v2455 = vshll.u32 %v2448, 16
  %v2457 = vrot.slane %v2455, 6
  %v2458 = vor.u32 %v2454, %v2457
  %v2459 = vrot.slane %v2458, 4
  %v2461 = vshrl.u32 %v2449, 16
  %v2463 = vrot.slane %v2461, 5
  %v2464 = vshll.u32 %v2449, 16
  %v2466 = vrot.slane %v2464, 6
  %v2467 = vor.u32 %v2463, %v2466
  %v2468 = vsel %vm832, %v2459, %v2467
  %v2469 = vrot.slane %v2467, 4
  %v2471 = vshrl.u32 %v2450, 16
  %v2473 = vrot.slane %v2471, 5
  %v2474 = vshll.u32 %v2450, 16
  %v2476 = vrot.slane %v2474, 6
  %v2477 = vor.u32 %v2473, %v2476
  %v2478 = vsel %vm832, %v2469, %v2477
  %2479 = vrot.lane.b32.xlu0 %v2468, 96
  %v2480 = vpop.permute.xlu0 %2479
  %2481 = vrot.lane.b32.xlu0 %v2478, 96
  %v2482 = vpop.permute.xlu0 %2481
  %v2483 = vrot.slane %v2480, 4
  %v2484 = vrot.slane %v2482, 4
  %vm2485 = vcmask 785408
  %v2486 = vsel %vm2485, %v2483, %v2480
  %v2487 = vsel %vm2485, %v2484, %v2482
  %vm2490 = vcmask 1044224
  %vm2491 = vmor %vm759, %vm2490
  %2492 = vst.msk [vmem:[#allocation11 + $0xc] sm:$0xff] %vm2491, %v2486
  %2493 = vst.msk [vmem:[#allocation11 + $0x2c] sm:$0xff] %vm2491, %v2487
  %v2494 = vld [vmem:[#allocation3] sm:$0xf0]
  %v2495 = vld [vmem:[#allocation3 + $0x8] sm:$0xf0]
  %v2496 = vld [vmem:[#allocation3 + $0x10] sm:$0xff]
  %v2497 = vld [vmem:[#allocation3 + $0x18] sm:$0xff]
  %v2498 = vld [vmem:[#allocation3 + $0x20] sm:$0xf]
  %v2499 = vld [vmem:[#allocation3 + $0x28] sm:$0xf]
  %v2500 = vpack.c.bf16 %v2496, %v2494
  %v2501 = vpack.c.bf16 %v2497, %v2495
  %v2502 = vpack.c.bf16 %v2498, %v2498
  %v2503 = vpack.c.bf16 %v2499, %v2499
  %v2508 = vunpack.c.l.b16 %v2500
  %v2509 = vunpack.c.l.b16 %v2501
  %v2510 = vunpack.c.h.b16 %v2500
  %v2511 = vunpack.c.h.b16 %v2501
  %v2512 = vunpack.c.l.b16 %v2502
  %v2513 = vunpack.c.l.b16 %v2503
  %v2514 = vpack.c.b16 %v2509, %v2508
  %v2515 = vpack.c.b16 %v2511, %v2510
  %v2516 = vpack.c.b16 %v2513, %v2512
  %v2517 = vrot.slane %v2514, 6
  %v2518 = vrot.slane %v2517, 4
  %v2519 = vrot.slane %v2515, 6
  %v2520 = vsel %vm905, %v2518, %v2519
  %v2521 = vrot.slane %v2519, 4
  %v2522 = vrot.slane %v2516, 6
  %v2523 = vsel %vm905, %v2521, %v2522
  %2526 = vst.msk [vmem:[#allocation11 + $0x14] sm:$0xff] %vm2319, %v2520
  %2527 = vst.msk [vmem:[#allocation11 + $0x34] sm:$0xff] %vm2319, %v2523
  %v2528 = vld [vmem:[#allocation3 + $0x20] sm:$0xf0]
  %v2529 = vld [vmem:[#allocation3 + $0x28] sm:$0xf0]
  %v2530 = vld [vmem:[#allocation3 + $0x30] sm:$0xff]
  %v2531 = vld [vmem:[#allocation3 + $0x38] sm:$0xff]
  %v2532 = vld [vmem:[#allocation3 + $0x40] sm:$0xf]
  %v2533 = vld [vmem:[#allocation3 + $0x48] sm:$0xf]
  %v2534 = vpack.c.bf16 %v2530, %v2528
  %v2535 = vpack.c.bf16 %v2531, %v2529
  %v2536 = vpack.c.bf16 %v2532, %v2532
  %v2537 = vpack.c.bf16 %v2533, %v2533
  %v2542 = vunpack.c.l.b16 %v2534
  %v2543 = vunpack.c.l.b16 %v2535
  %v2544 = vunpack.c.h.b16 %v2534
  %v2545 = vunpack.c.h.b16 %v2535
  %v2546 = vunpack.c.l.b16 %v2536
  %v2547 = vunpack.c.l.b16 %v2537
  %v2548 = vpack.c.b16 %v2543, %v2542
  %v2549 = vpack.c.b16 %v2545, %v2544
  %v2550 = vpack.c.b16 %v2547, %v2546
  %v2551 = vrot.slane %v2548, 6
  %v2552 = vrot.slane %v2551, 4
  %v2553 = vrot.slane %v2549, 6
  %v2554 = vsel %vm905, %v2552, %v2553
  %v2555 = vrot.slane %v2553, 4
  %v2556 = vrot.slane %v2550, 6
  %v2557 = vsel %vm905, %v2555, %v2556
  %2560 = vst.msk [vmem:[#allocation11 + $0x40] sm:$0xff] %vm2319, %v2554
  %2561 = vst.msk [vmem:[#allocation11 + $0x60] sm:$0xff] %vm2319, %v2557
  %v2562 = vld [vmem:[#allocation3 + $0x20] sm:$0xe0]
  %v2563 = vld [vmem:[#allocation3 + $0x28] sm:$0xe0]
  %v2564 = vld [vmem:[#allocation3 + $0x30] sm:$0xff]
  %v2565 = vld [vmem:[#allocation3 + $0x38] sm:$0xff]
  %v2566 = vld [vmem:[#allocation3 + $0x40] sm:$0x1f]
  %v2567 = vld [vmem:[#allocation3 + $0x48] sm:$0x1f]
  %v2568 = vpack.c.bf16 %v2564, %v2562
  %v2569 = vpack.c.bf16 %v2565, %v2563
  %v2570 = vpack.c.bf16 %v2566, %v2566
  %v2571 = vpack.c.bf16 %v2567, %v2567
  %v2576 = vunpack.c.l.b16 %v2568
  %v2577 = vunpack.c.l.b16 %v2569
  %v2578 = vunpack.c.h.b16 %v2568
  %v2579 = vunpack.c.h.b16 %v2569
  %v2580 = vunpack.c.l.b16 %v2570
  %v2581 = vunpack.c.l.b16 %v2571
  %v2582 = vpack.c.b16 %v2577, %v2576
  %v2583 = vpack.c.b16 %v2579, %v2578
  %v2584 = vpack.c.b16 %v2581, %v2580
  %v2586 = vshrl.u32 %v2582, 16
  %v2588 = vrot.slane %v2586, 6
  %v2589 = vshll.u32 %v2582, 16
  %v2591 = vrot.slane %v2589, 7
  %v2592 = vor.u32 %v2588, %v2591
  %v2593 = vrot.slane %v2592, 4
  %v2595 = vshrl.u32 %v2583, 16
  %v2597 = vrot.slane %v2595, 6
  %v2598 = vshll.u32 %v2583, 16
  %v2600 = vrot.slane %v2598, 7
  %v2601 = vor.u32 %v2597, %v2600
  %v2602 = vsel %vm984, %v2593, %v2601
  %v2603 = vrot.slane %v2601, 4
  %v2605 = vshrl.u32 %v2584, 16
  %v2607 = vrot.slane %v2605, 6
  %v2608 = vshll.u32 %v2584, 16
  %v2610 = vrot.slane %v2608, 7
  %v2611 = vor.u32 %v2607, %v2610
  %v2612 = vsel %vm984, %v2603, %v2611
  %2613 = vrot.lane.b32.xlu0 %v2602, 32
  %v2614 = vpop.permute.xlu0 %2613
  %2615 = vrot.lane.b32.xlu0 %v2612, 32
  %v2616 = vpop.permute.xlu0 %2615
  %v2617 = vrot.slane %v2614, 4
  %v2618 = vrot.slane %v2616, 4
  %v2619 = vsel %vm2375, %v2617, %v2614
  %v2620 = vsel %vm2375, %v2618, %v2616
  %2623 = vst.msk [vmem:[#allocation11 + $0x44] sm:$0xff] %vm2381, %v2619
  %2624 = vst.msk [vmem:[#allocation11 + $0x64] sm:$0xff] %vm2381, %v2620
  %v2625 = vld [vmem:[#allocation3 + $0x20] sm:$0xc0]
  %v2626 = vld [vmem:[#allocation3 + $0x28] sm:$0xc0]
  %v2627 = vld [vmem:[#allocation3 + $0x30] sm:$0xff]
  %v2628 = vld [vmem:[#allocation3 + $0x38] sm:$0xff]
  %v2629 = vld [vmem:[#allocation3 + $0x40] sm:$0x3f]
  %v2630 = vld [vmem:[#allocation3 + $0x48] sm:$0x3f]
  %v2631 = vpack.c.bf16 %v2627, %v2625
  %v2632 = vpack.c.bf16 %v2628, %v2626
  %v2633 = vpack.c.bf16 %v2629, %v2629
  %v2634 = vpack.c.bf16 %v2630, %v2630
  %v2639 = vunpack.c.l.b16 %v2631
  %v2640 = vunpack.c.l.b16 %v2632
  %v2641 = vunpack.c.h.b16 %v2631
  %v2642 = vunpack.c.h.b16 %v2632
  %v2643 = vunpack.c.l.b16 %v2633
  %v2644 = vunpack.c.l.b16 %v2634
  %v2645 = vpack.c.b16 %v2640, %v2639
  %v2646 = vpack.c.b16 %v2642, %v2641
  %v2647 = vpack.c.b16 %v2644, %v2643
  %v2648 = vrot.slane %v2645, 7
  %v2649 = vrot.slane %v2648, 4
  %v2650 = vrot.slane %v2646, 7
  %v2651 = vsel %vm1059, %v2649, %v2650
  %v2652 = vrot.slane %v2650, 4
  %v2653 = vrot.slane %v2647, 7
  %v2654 = vsel %vm1059, %v2652, %v2653
  %2655 = vrot.lane.b32.xlu0 %v2651, 64
  %v2656 = vpop.permute.xlu0 %2655
  %2657 = vrot.lane.b32.xlu0 %v2654, 64
  %v2658 = vpop.permute.xlu0 %2657
  %v2659 = vrot.slane %v2656, 4
  %v2660 = vrot.slane %v2658, 4
  %v2661 = vsel %vm751, %v2659, %v2656
  %v2662 = vsel %vm751, %v2660, %v2658
  %2665 = vst.msk [vmem:[#allocation11 + $0x48] sm:$0xff] %vm2425, %v2661
  %2666 = vst.msk [vmem:[#allocation11 + $0x68] sm:$0xff] %vm2425, %v2662
  %v2667 = vld [vmem:[#allocation3 + $0x20] sm:$0x80]
  %v2668 = vld [vmem:[#allocation3 + $0x28] sm:$0x80]
  %v2669 = vld [vmem:[#allocation3 + $0x30] sm:$0xff]
  %v2670 = vld [vmem:[#allocation3 + $0x38] sm:$0xff]
  %v2671 = vld [vmem:[#allocation3 + $0x40] sm:$0x7f]
  %v2672 = vld [vmem:[#allocation3 + $0x48] sm:$0x7f]
  %v2673 = vpack.c.bf16 %v2669, %v2667
  %v2674 = vpack.c.bf16 %v2670, %v2668
  %v2675 = vpack.c.bf16 %v2671, %v2671
  %v2676 = vpack.c.bf16 %v2672, %v2672
  %v2681 = vunpack.c.l.b16 %v2673
  %v2682 = vunpack.c.l.b16 %v2674
  %v2683 = vunpack.c.h.b16 %v2673
  %v2684 = vunpack.c.h.b16 %v2674
  %v2685 = vunpack.c.l.b16 %v2675
  %v2686 = vunpack.c.l.b16 %v2676
  %v2687 = vpack.c.b16 %v2682, %v2681
  %v2688 = vpack.c.b16 %v2684, %v2683
  %v2689 = vpack.c.b16 %v2686, %v2685
  %v2691 = vshrl.u32 %v2687, 16
  %v2693 = vrot.slane %v2691, 7
  %v2694 = vrot.slane %v2693, 4
  %v2696 = vshrl.u32 %v2688, 16
  %v2698 = vrot.slane %v2696, 7
  %v2699 = vshll.u32 %v2688, 16
  %v2701 = vor.u32 %v2698, %v2699
  %v2702 = vsel %vm1098, %v2694, %v2701
  %v2703 = vrot.slane %v2698, 4
  %v2705 = vshrl.u32 %v2689, 16
  %v2707 = vrot.slane %v2705, 7
  %v2708 = vshll.u32 %v2689, 16
  %v2710 = vor.u32 %v2707, %v2708
  %v2711 = vsel %vm1098, %v2703, %v2710
  %2712 = vrot.lane.b32.xlu0 %v2702, 96
  %v2713 = vpop.permute.xlu0 %2712
  %2714 = vrot.lane.b32.xlu0 %v2711, 96
  %v2715 = vpop.permute.xlu0 %2714
  %v2716 = vrot.slane %v2713, 4
  %v2717 = vrot.slane %v2715, 4
  %v2718 = vsel %vm2485, %v2716, %v2713
  %v2719 = vsel %vm2485, %v2717, %v2715
  %2722 = vst.msk [vmem:[#allocation11 + $0x4c] sm:$0xff] %vm2491, %v2718
  %2723 = vst.msk [vmem:[#allocation11 + $0x6c] sm:$0xff] %vm2491, %v2719
  %v2724 = vld [vmem:[#allocation3 + $0x30] sm:$0xff]
  %v2725 = vld [vmem:[#allocation3 + $0x38] sm:$0xff]
  %v2726 = vld [vmem:[#allocation3 + $0x40] sm:$0xff]
  %v2727 = vld [vmem:[#allocation3 + $0x48] sm:$0xff]
  %v2728 = vpack.c.bf16 %v2726, %v2724
  %v2729 = vpack.c.bf16 %v2727, %v2725
  %v2732 = vunpack.c.l.b16 %v2728
  %v2733 = vunpack.c.l.b16 %v2729
  %v2734 = vunpack.c.h.b16 %v2728
  %v2735 = vunpack.c.h.b16 %v2729
  %v2736 = vpack.c.b16 %v2733, %v2732
  %v2737 = vpack.c.b16 %v2735, %v2734
  %2740 = vst.msk [vmem:[#allocation11 + $0x54] sm:$0xff] %vm2319, %v2736
  %2741 = vst.msk [vmem:[#allocation11 + $0x74] sm:$0xff] %vm2319, %v2737
  %v2742 = vld [vmem:[#allocation11] sm:$0xff]
  %v2743 = vld [vmem:[#allocation11 + $0x8] sm:$0xff]
  %v2744 = vld [vmem:[#allocation11 + $0x10] sm:$0xff]
  %v2745 = vld [vmem:[#allocation11 + $0x18] sm:$0xf]
  %v2746 = vld [vmem:[#allocation11 + $0x20] sm:$0xff]
  %v2747 = vld [vmem:[#allocation11 + $0x28] sm:$0xff]
  %v2748 = vld [vmem:[#allocation11 + $0x30] sm:$0xff]
  %v2749 = vld [vmem:[#allocation11 + $0x38] sm:$0xf]
  %v2750 = vld [vmem:[#allocation11 + $0x40] sm:$0xff]
  %v2751 = vld [vmem:[#allocation11 + $0x48] sm:$0xff]
  %v2752 = vld [vmem:[#allocation11 + $0x50] sm:$0xff]
  %v2753 = vld [vmem:[#allocation11 + $0x58] sm:$0xf]
  %v2754 = vld [vmem:[#allocation11 + $0x60] sm:$0xff]
  %v2755 = vld [vmem:[#allocation11 + $0x68] sm:$0xff]
  %v2756 = vld [vmem:[#allocation11 + $0x70] sm:$0xff]
  %v2757 = vld [vmem:[#allocation11 + $0x78] sm:$0xf]
  %v2758 = vld [vmem:[%s3] sm:$0xf]
  %v2759 = vld [vmem:[%s3 + $0x4] sm:$0xf]
  %v2760 = vld [vmem:[%s3 + $0x8] sm:$0xf]
  %v2761 = vld [vmem:[%s3 + $0xc] sm:$0xf]
  %v2762 = vld [vmem:[%s3 + $0x10] sm:$0xf]
  %v2763 = vld [vmem:[%s3 + $0x14] sm:$0xf]
  %v2764 = vld [vmem:[%s3 + $0x18] sm:$0xf]
  %v2765 = vld [vmem:[%s3 + $0x1c] sm:$0xf]
  %v2766 = vld [vmem:[%s3 + $0x20] sm:$0xf]
  %v2767 = vld [vmem:[%s3 + $0x24] sm:$0xf]
  %v2768 = vld [vmem:[%s3 + $0x28] sm:$0xf]
  %v2769 = vld [vmem:[%s3 + $0x2c] sm:$0xf]
  %v2770 = vld [vmem:[%s3 + $0x30] sm:$0xf]
  %v2771 = vld [vmem:[%s3 + $0x34] sm:$0xf]
  %v2772 = vld [vmem:[%s3 + $0x38] sm:$0xf]
  %v2773 = vld [vmem:[%s3 + $0x3c] sm:$0xf]
  %v2774 = vld [vmem:[%s3 + $0x40] sm:$0xf]
  %v2775 = vld [vmem:[%s3 + $0x44] sm:$0xf]
  %v2776 = vld [vmem:[%s3 + $0x48] sm:$0xf]
  %v2777 = vld [vmem:[%s3 + $0x4c] sm:$0xf]
  %v2778 = vld [vmem:[%s3 + $0x50] sm:$0xf]
  %v2779 = vld [vmem:[%s3 + $0x54] sm:$0xf]
  %v2780 = vld [vmem:[%s3 + $0x58] sm:$0xf]
  %v2781 = vld [vmem:[%s3 + $0x5c] sm:$0xf]
  %v2782 = vld [vmem:[%s3 + $0x60] sm:$0xf]
  %v2783 = vld [vmem:[%s3 + $0x64] sm:$0xf]
  %v2784 = vld [vmem:[%s3 + $0x68] sm:$0xf]
  %v2785 = vld [vmem:[%s3 + $0x6c] sm:$0xf]
  %v2786 = vld [vmem:[%s3 + $0x70] sm:$0xf]
  %v2787 = vld [vmem:[%s3 + $0x74] sm:$0xf]
  %v2788 = vld [vmem:[%s3 + $0x78] sm:$0xf]
  %v2789 = vld [vmem:[%s3 + $0x7c] sm:$0xf]
  %v2790 = vld [vmem:[%s3 + $0x80] sm:$0xf]
  %v2791 = vld [vmem:[%s3 + $0x84] sm:$0xf]
  %v2792 = vld [vmem:[%s3 + $0x88] sm:$0xf]
  %v2793 = vld [vmem:[%s3 + $0x8c] sm:$0xf]
  %v2794 = vld [vmem:[%s3 + $0x90] sm:$0xf]
  %v2795 = vld [vmem:[%s3 + $0x94] sm:$0xf]
  %v2796 = vld [vmem:[%s3 + $0x98] sm:$0xf]
  %v2797 = vld [vmem:[%s3 + $0x9c] sm:$0xf]
  %v2798 = vld [vmem:[%s3 + $0xa0] sm:$0xf]
  %v2799 = vld [vmem:[%s3 + $0xa4] sm:$0xf]
  %v2800 = vld [vmem:[%s3 + $0xa8] sm:$0xf]
  %v2801 = vld [vmem:[%s3 + $0xac] sm:$0xf]
  %v2802 = vld [vmem:[%s3 + $0xb0] sm:$0xf]
  %v2803 = vld [vmem:[%s3 + $0xb4] sm:$0xf]
  %v2804 = vld [vmem:[%s3 + $0xb8] sm:$0xf]
  %v2805 = vld [vmem:[%s3 + $0xbc] sm:$0xf]
  %v2806 = vld [vmem:[%s3 + $0xc0] sm:$0xf]
  %v2807 = vld [vmem:[%s3 + $0xc4] sm:$0xf]
  %v2808 = vld [vmem:[%s3 + $0xc8] sm:$0xf]
  %v2809 = vld [vmem:[%s3 + $0xcc] sm:$0xf]
  %v2810 = vld [vmem:[%s3 + $0xd0] sm:$0xf]
  %v2811 = vld [vmem:[%s3 + $0xd4] sm:$0xf]
  %v2812 = vld [vmem:[%s3 + $0xd8] sm:$0xf]
  %v2813 = vld [vmem:[%s3 + $0xdc] sm:$0xf]
  %v2814 = vld [vmem:[%s3 + $0xe0] sm:$0xf]
  %v2815 = vld [vmem:[%s3 + $0xe4] sm:$0xf]
  %v2816 = vld [vmem:[%s3 + $0xe8] sm:$0xf]
  %v2817 = vld [vmem:[%s3 + $0xec] sm:$0xf]
  %v2818 = vld [vmem:[%s3 + $0xf0] sm:$0xf]
  %v2819 = vld [vmem:[%s3 + $0xf4] sm:$0xf]
  %v2820 = vld [vmem:[%s3 + $0xf8] sm:$0xf]
  %v2821 = vld [vmem:[%s3 + $0xfc] sm:$0xf]
  %v2822 = vld [vmem:[%s3 + $0x100] sm:$0xf]
  %v2823 = vld [vmem:[%s3 + $0x104] sm:$0xf]
  %v2824 = vld [vmem:[%s3 + $0x108] sm:$0xf]
  %v2825 = vld [vmem:[%s3 + $0x10c] sm:$0xf]
  %v2826 = vld [vmem:[%s3 + $0x110] sm:$0xf]
  %v2827 = vld [vmem:[%s3 + $0x114] sm:$0xf]
  %v2828 = vld [vmem:[%s3 + $0x118] sm:$0xf]
  %v2829 = vld [vmem:[%s3 + $0x11c] sm:$0xf]
  %v2830 = vld [vmem:[%s3 + $0x120] sm:$0xf]
  %v2831 = vld [vmem:[%s3 + $0x124] sm:$0xf]
  %v2832 = vld [vmem:[%s3 + $0x128] sm:$0xf]
  %v2833 = vld [vmem:[%s3 + $0x12c] sm:$0xf]
  %v2834 = vld [vmem:[%s3 + $0x130] sm:$0xf]
  %v2835 = vld [vmem:[%s3 + $0x134] sm:$0xf]
  %v2836 = vld [vmem:[%s3 + $0x138] sm:$0xf]
  %v2837 = vld [vmem:[%s3 + $0x13c] sm:$0xf]
  %v2838 = vld [vmem:[%s3 + $0x140] sm:$0xf]
  %v2839 = vld [vmem:[%s3 + $0x144] sm:$0xf]
  %v2840 = vld [vmem:[%s3 + $0x148] sm:$0xf]
  %v2841 = vld [vmem:[%s3 + $0x14c] sm:$0xf]
  %v2842 = vld [vmem:[%s3 + $0x150] sm:$0xf]
  %v2843 = vld [vmem:[%s3 + $0x154] sm:$0xf]
  %v2844 = vld [vmem:[%s3 + $0x158] sm:$0xf]
  %v2845 = vld [vmem:[%s3 + $0x15c] sm:$0xf]
  %v2846 = vld [vmem:[%s3 + $0x160] sm:$0xf]
  %v2847 = vld [vmem:[%s3 + $0x164] sm:$0xf]
  %v2848 = vld [vmem:[%s3 + $0x168] sm:$0xf]
  %v2849 = vld [vmem:[%s3 + $0x16c] sm:$0xf]
  %v2850 = vld [vmem:[%s3 + $0x170] sm:$0xf]
  %v2851 = vld [vmem:[%s3 + $0x174] sm:$0xf]
  %v2852 = vld [vmem:[%s3 + $0x178] sm:$0xf]
  %v2853 = vld [vmem:[%s3 + $0x17c] sm:$0xf]
  %v2854 = vld [vmem:[%s3 + $0x180] sm:$0xf]
  %v2855 = vld [vmem:[%s3 + $0x184] sm:$0xf]
  %v2856 = vld [vmem:[%s3 + $0x188] sm:$0xf]
  %v2857 = vld [vmem:[%s3 + $0x18c] sm:$0xf]
  %v2858 = vld [vmem:[%s13] sm:$0x1]
  %v2860 = vlaneseq
  %v2861 = vshrl.u32 %v2860, 7
  %v2862 = vsub.s32 0, %v2861
  %v2863 = vrot.slane %v2858, %v2862
  %v2881 = vunpack.c.l.b16 %v2742
  %v2882 = vunpack.c.h.b16 %v2742
  %v2883 = vunpack.c.l.b16 %v2743
  %v2884 = vunpack.c.h.b16 %v2743
  %v2885 = vunpack.c.l.b16 %v2744
  %v2886 = vunpack.c.h.b16 %v2744
  %v2887 = vunpack.c.l.b16 %v2745
  %v2888 = vunpack.c.l.b16 %v2746
  %v2889 = vunpack.c.h.b16 %v2746
  %v2890 = vunpack.c.l.b16 %v2747
  %v2891 = vunpack.c.h.b16 %v2747
  %v2892 = vunpack.c.l.b16 %v2748
  %v2893 = vunpack.c.h.b16 %v2748
  %v2894 = vunpack.c.l.b16 %v2749
  %v2895 = vunpack.c.l.b16 %v2750
  %v2896 = vunpack.c.h.b16 %v2750
  %v2897 = vunpack.c.l.b16 %v2751
  %v2898 = vunpack.c.h.b16 %v2751
  %v2899 = vunpack.c.l.b16 %v2752
  %v2900 = vunpack.c.h.b16 %v2752
  %v2901 = vunpack.c.l.b16 %v2753
  %v2902 = vunpack.c.l.b16 %v2754
  %v2903 = vunpack.c.h.b16 %v2754
  %v2904 = vunpack.c.l.b16 %v2755
  %v2905 = vunpack.c.h.b16 %v2755
  %v2906 = vunpack.c.l.b16 %v2756
  %v2907 = vunpack.c.h.b16 %v2756
  %v2908 = vunpack.c.l.b16 %v2757
  %v2909 = vpack.c.b16 %v2888, %v2881
  %v2910 = vpack.c.b16 %v2889, %v2882
  %v2911 = vpack.c.b16 %v2890, %v2883
  %v2912 = vpack.c.b16 %v2891, %v2884
  %v2913 = vpack.c.b16 %v2892, %v2885
  %v2914 = vpack.c.b16 %v2893, %v2886
  %v2915 = vpack.c.b16 %v2894, %v2887
  %v2916 = vpack.c.b16 %v2902, %v2895
  %v2917 = vpack.c.b16 %v2903, %v2896
  %v2918 = vpack.c.b16 %v2904, %v2897
  %v2919 = vpack.c.b16 %v2905, %v2898
  %v2920 = vpack.c.b16 %v2906, %v2899
  %v2921 = vpack.c.b16 %v2907, %v2900
  %v2922 = vpack.c.b16 %v2908, %v2901
  %v3035 = vunpack.c.l.b16 %v2758
  %v3036 = vunpack.c.l.b16 %v2759
  %v3037 = vunpack.c.l.b16 %v2760
  %v3038 = vunpack.c.l.b16 %v2761
  %v3039 = vunpack.c.l.b16 %v2762
  %v3040 = vunpack.c.l.b16 %v2763
  %v3041 = vunpack.c.l.b16 %v2764
  %v3042 = vunpack.c.l.b16 %v2765
  %v3043 = vunpack.c.l.b16 %v2766
  %v3044 = vunpack.c.l.b16 %v2767
  %v3045 = vunpack.c.l.b16 %v2768
  %v3046 = vunpack.c.l.b16 %v2769
  %v3047 = vunpack.c.l.b16 %v2770
  %v3048 = vunpack.c.l.b16 %v2771
  %v3049 = vunpack.c.l.b16 %v2772
  %v3050 = vunpack.c.l.b16 %v2773
  %v3051 = vunpack.c.l.b16 %v2774
  %v3052 = vunpack.c.l.b16 %v2775
  %v3053 = vunpack.c.l.b16 %v2776
  %v3054 = vunpack.c.l.b16 %v2777
  %v3055 = vunpack.c.l.b16 %v2778
  %v3056 = vunpack.c.l.b16 %v2779
  %v3057 = vunpack.c.l.b16 %v2780
  %v3058 = vunpack.c.l.b16 %v2781
  %v3059 = vunpack.c.l.b16 %v2782
  %v3060 = vunpack.c.l.b16 %v2783
  %v3061 = vunpack.c.l.b16 %v2784
  %v3062 = vunpack.c.l.b16 %v2785
  %v3063 = vunpack.c.l.b16 %v2786
  %v3064 = vunpack.c.l.b16 %v2787
  %v3065 = vunpack.c.l.b16 %v2788
  %v3066 = vunpack.c.l.b16 %v2789
  %v3067 = vunpack.c.l.b16 %v2790
  %v3068 = vunpack.c.l.b16 %v2791
  %v3069 = vunpack.c.l.b16 %v2792
  %v3070 = vunpack.c.l.b16 %v2793
  %v3071 = vunpack.c.l.b16 %v2794
  %v3072 = vunpack.c.l.b16 %v2795
  %v3073 = vunpack.c.l.b16 %v2796
  %v3074 = vunpack.c.l.b16 %v2797
  %v3075 = vunpack.c.l.b16 %v2798
  %v3076 = vunpack.c.l.b16 %v2799
  %v3077 = vunpack.c.l.b16 %v2800
  %v3078 = vunpack.c.l.b16 %v2801
  %v3079 = vunpack.c.l.b16 %v2802
  %v3080 = vunpack.c.l.b16 %v2803
  %v3081 = vunpack.c.l.b16 %v2804
  %v3082 = vunpack.c.l.b16 %v2805
  %v3083 = vunpack.c.l.b16 %v2806
  %v3084 = vunpack.c.l.b16 %v2807
  %v3085 = vunpack.c.l.b16 %v2808
  %v3086 = vunpack.c.l.b16 %v2809
  %v3087 = vunpack.c.l.b16 %v2810
  %v3088 = vunpack.c.l.b16 %v2811
  %v3089 = vunpack.c.l.b16 %v2812
  %v3090 = vunpack.c.l.b16 %v2813
  %v3091 = vunpack.c.l.b16 %v2814
  %v3092 = vunpack.c.l.b16 %v2815
  %v3093 = vunpack.c.l.b16 %v2816
  %v3094 = vunpack.c.l.b16 %v2817
  %v3095 = vunpack.c.l.b16 %v2818
  %v3096 = vunpack.c.l.b16 %v2819
  %v3097 = vunpack.c.l.b16 %v2820
  %v3098 = vunpack.c.l.b16 %v2821
  %v3099 = vunpack.c.l.b16 %v2822
  %v3100 = vunpack.c.l.b16 %v2823
  %v3101 = vunpack.c.l.b16 %v2824
  %v3102 = vunpack.c.l.b16 %v2825
  %v3103 = vunpack.c.l.b16 %v2826
  %v3104 = vunpack.c.l.b16 %v2827
  %v3105 = vunpack.c.l.b16 %v2828
  %v3106 = vunpack.c.l.b16 %v2829
  %v3107 = vunpack.c.l.b16 %v2830
  %v3108 = vunpack.c.l.b16 %v2831
  %v3109 = vunpack.c.l.b16 %v2832
  %v3110 = vunpack.c.l.b16 %v2833
  %v3111 = vunpack.c.l.b16 %v2834
  %v3112 = vunpack.c.l.b16 %v2835
  %v3113 = vunpack.c.l.b16 %v2836
  %v3114 = vunpack.c.l.b16 %v2837
  %v3115 = vunpack.c.l.b16 %v2838
  %v3116 = vunpack.c.l.b16 %v2839
  %v3117 = vunpack.c.l.b16 %v2840
  %v3118 = vunpack.c.l.b16 %v2841
  %v3119 = vunpack.c.l.b16 %v2842
  %v3120 = vunpack.c.l.b16 %v2843
  %v3121 = vunpack.c.l.b16 %v2844
  %v3122 = vunpack.c.l.b16 %v2845
  %v3123 = vunpack.c.l.b16 %v2846
  %v3124 = vunpack.c.l.b16 %v2847
  %v3125 = vunpack.c.l.b16 %v2848
  %v3126 = vunpack.c.l.b16 %v2849
  %v3127 = vunpack.c.l.b16 %v2850
  %v3128 = vunpack.c.l.b16 %v2851
  %v3129 = vunpack.c.l.b16 %v2852
  %v3130 = vunpack.c.l.b16 %v2853
  %v3131 = vunpack.c.l.b16 %v2854
  %v3132 = vunpack.c.l.b16 %v2855
  %v3133 = vunpack.c.l.b16 %v2856
  %v3134 = vunpack.c.l.b16 %v2857
  %v3135 = vpack.c.b16 %v3036, %v3035
  %v3136 = vpack.c.b16 %v3038, %v3037
  %v3137 = vpack.c.b16 %v3040, %v3039
  %v3138 = vpack.c.b16 %v3042, %v3041
  %v3139 = vpack.c.b16 %v3044, %v3043
  %v3140 = vpack.c.b16 %v3046, %v3045
  %v3141 = vpack.c.b16 %v3048, %v3047
  %v3142 = vpack.c.b16 %v3050, %v3049
  %v3143 = vpack.c.b16 %v3052, %v3051
  %v3144 = vpack.c.b16 %v3054, %v3053
  %v3145 = vpack.c.b16 %v3056, %v3055
  %v3146 = vpack.c.b16 %v3058, %v3057
  %v3147 = vpack.c.b16 %v3060, %v3059
  %v3148 = vpack.c.b16 %v3062, %v3061
  %v3149 = vpack.c.b16 %v3064, %v3063
  %v3150 = vpack.c.b16 %v3066, %v3065
  %v3151 = vpack.c.b16 %v3068, %v3067
  %v3152 = vpack.c.b16 %v3070, %v3069
  %v3153 = vpack.c.b16 %v3072, %v3071
  %v3154 = vpack.c.b16 %v3074, %v3073
  %v3155 = vpack.c.b16 %v3076, %v3075
  %v3156 = vpack.c.b16 %v3078, %v3077
  %v3157 = vpack.c.b16 %v3080, %v3079
  %v3158 = vpack.c.b16 %v3082, %v3081
  %v3159 = vpack.c.b16 %v3084, %v3083
  %v3160 = vpack.c.b16 %v3086, %v3085
  %v3161 = vpack.c.b16 %v3088, %v3087
  %v3162 = vpack.c.b16 %v3090, %v3089
  %v3163 = vpack.c.b16 %v3092, %v3091
  %v3164 = vpack.c.b16 %v3094, %v3093
  %v3165 = vpack.c.b16 %v3096, %v3095
  %v3166 = vpack.c.b16 %v3098, %v3097
  %v3167 = vpack.c.b16 %v3100, %v3099
  %v3168 = vpack.c.b16 %v3102, %v3101
  %v3169 = vpack.c.b16 %v3104, %v3103
  %v3170 = vpack.c.b16 %v3106, %v3105
  %v3171 = vpack.c.b16 %v3108, %v3107
  %v3172 = vpack.c.b16 %v3110, %v3109
  %v3173 = vpack.c.b16 %v3112, %v3111
  %v3174 = vpack.c.b16 %v3114, %v3113
  %v3175 = vpack.c.b16 %v3116, %v3115
  %v3176 = vpack.c.b16 %v3118, %v3117
  %v3177 = vpack.c.b16 %v3120, %v3119
  %v3178 = vpack.c.b16 %v3122, %v3121
  %v3179 = vpack.c.b16 %v3124, %v3123
  %v3180 = vpack.c.b16 %v3126, %v3125
  %v3181 = vpack.c.b16 %v3128, %v3127
  %v3182 = vpack.c.b16 %v3130, %v3129
  %v3183 = vpack.c.b16 %v3132, %v3131
  %v3184 = vpack.c.b16 %v3134, %v3133
  %v3236 = vsel %vm2292, %v2915, 0
  %v3239 = vsel %vm2292, %v2922, 0
  %3241 = vmatprep.subr.bf16.mxu0 0
  %3242 = vmatpush1.bf16.msra.mxu0 %v3135
  %3243 = vmatprep.subr.bf16.mxu0 0
  %3244 = vmatpush1.bf16.msra.mxu0 %v3136
  %3245 = vmatprep.subr.bf16.mxu0 0
  %3246 = vmatpush1.bf16.msra.mxu0 %v3137
  %3247 = vmatprep.subr.bf16.mxu0 0
  %3248 = vmatpush1.bf16.msra.mxu0 %v3138
  %3249 = vmatprep.subr.bf16.mxu0 0
  %3250 = vmatpush1.bf16.msra.mxu0 %v3139
  %3251 = vmatprep.subr.bf16.mxu0 0
  %3252 = vmatpush1.bf16.msra.mxu0 %v3140
  %3253 = vmatprep.subr.bf16.mxu0 0
  %3254 = vmatpush1.bf16.msra.mxu0 %v3141
  %3255 = vmatprep.subr.bf16.mxu0 0
  %3256 = vmatpush1.bf16.msra.mxu0 %v3142
  %3257 = vmatprep.subr.bf16.mxu0 0
  %3258 = vmatpush1.bf16.msra.mxu0 %v3143
  %3259 = vmatprep.subr.bf16.mxu0 0
  %3260 = vmatpush1.bf16.msra.mxu0 %v3144
  %3261 = vmatprep.subr.bf16.mxu0 0
  %3262 = vmatpush1.bf16.msra.mxu0 %v3145
  %3263 = vmatprep.subr.bf16.mxu0 0
  %3264 = vmatpush1.bf16.msra.mxu0 %v3146
  %3265 = vmatprep.subr.bf16.mxu0 0
  %3266 = vmatpush1.bf16.msra.mxu0 %v3147
  %3267 = vmatprep.subr.bf16.mxu0 0
  %3268 = vmatpush1.bf16.msra.mxu0 %v3148
  %3269 = vmatprep.subr.bf16.mxu0 0
  %3270 = vmatpush1.bf16.msra.mxu0 %v3149
  %3271 = vmatprep.subr.bf16.mxu0 0
  %3272 = vmatpush1.bf16.msra.mxu0 %v3150
  %3273 = vmatprep.mubr.bf16.mxu0 %v2910
  %3274 = vmatmul.mubr.bf16.gmra.mrb[0].mxu0 %v2909
  %v3275 = vpop.f32.mrb[0].mxu0
  %v3276 = vadd.f32 %v2863, %v3275
  %v3277 = vpop.f32.mrb[0].mxu0
  %v3278 = vpop.f32.mrb[0].mxu0
  %v3279 = vadd.f32 %v2863, %v3278
  %v3280 = vpop.f32.mrb[0].mxu0
  %3281 = vmatprep.mubr.bf16.mxu0 %v2917
  %3282 = vmatmul.mubr.bf16.gmra.mrb[0].mxu0 %v2916
  %v3283 = vpop.f32.mrb[0].mxu0
  %v3284 = vadd.f32 %v2863, %v3283
  %v3285 = vpop.f32.mrb[0].mxu0
  %v3286 = vpop.f32.mrb[0].mxu0
  %v3287 = vadd.f32 %v2863, %v3286
  %v3288 = vpop.f32.mrb[0].mxu0
  %3289 = vdwg.mxu0
  %3290 = vmatprep.subr.bf16.mxu0 0
  %3291 = vmatpush1.bf16.msra.mxu0 %v3151
  %3292 = vmatprep.subr.bf16.mxu0 0
  %3293 = vmatpush1.bf16.msra.mxu0 %v3152
  %3294 = vmatprep.subr.bf16.mxu0 0
  %3295 = vmatpush1.bf16.msra.mxu0 %v3153
  %3296 = vmatprep.subr.bf16.mxu0 0
  %3297 = vmatpush1.bf16.msra.mxu0 %v3154
  %3298 = vmatprep.subr.bf16.mxu0 0
  %3299 = vmatpush1.bf16.msra.mxu0 %v3155
  %3300 = vmatprep.subr.bf16.mxu0 0
  %3301 = vmatpush1.bf16.msra.mxu0 %v3156
  %3302 = vmatprep.subr.bf16.mxu0 0
  %3303 = vmatpush1.bf16.msra.mxu0 %v3157
  %3304 = vmatprep.subr.bf16.mxu0 0
  %3305 = vmatpush1.bf16.msra.mxu0 %v3158
  %3306 = vmatprep.subr.bf16.mxu0 0
  %3307 = vmatpush1.bf16.msra.mxu0 %v3159
  %3308 = vmatprep.subr.bf16.mxu0 0
  %3309 = vmatpush1.bf16.msra.mxu0 %v3160
  %3310 = vmatprep.subr.bf16.mxu0 0
  %3311 = vmatpush1.bf16.msra.mxu0 %v3161
  %3312 = vmatprep.subr.bf16.mxu0 0
  %3313 = vmatpush1.bf16.msra.mxu0 %v3162
  %3314 = vmatprep.subr.bf16.mxu0 0
  %3315 = vmatpush1.bf16.msra.mxu0 %v3163
  %3316 = vmatprep.subr.bf16.mxu0 0
  %3317 = vmatpush1.bf16.msra.mxu0 %v3164
  %3318 = vmatprep.subr.bf16.mxu0 0
  %3319 = vmatpush1.bf16.msra.mxu0 %v3165
  %3320 = vmatprep.subr.bf16.mxu0 0
  %3321 = vmatpush1.bf16.msra.mxu0 %v3166
  %3322 = vmatprep.mubr.bf16.mxu0 %v2912
  %3323 = vmatmul.mubr.bf16.gmra.mrb[0].mxu0 %v2911
  %v3324 = vpop.f32.mrb[0].mxu0
  %v3325 = vadd.f32 %v3276, %v3324
  %v3326 = vpop.f32.mrb[0].mxu0
  %v3327 = vpop.f32.mrb[0].mxu0
  %v3328 = vadd.f32 %v3279, %v3327
  %v3329 = vpop.f32.mrb[0].mxu0
  %3330 = vmatprep.mubr.bf16.mxu0 %v2919
  %3331 = vmatmul.mubr.bf16.gmra.mrb[0].mxu0 %v2918
  %v3332 = vpop.f32.mrb[0].mxu0
  %v3333 = vadd.f32 %v3284, %v3332
  %v3334 = vpop.f32.mrb[0].mxu0
  %v3335 = vpop.f32.mrb[0].mxu0
  %v3336 = vadd.f32 %v3287, %v3335
  %v3337 = vpop.f32.mrb[0].mxu0
  %3338 = vdwg.mxu0
  %3339 = vmatprep.subr.bf16.mxu0 0
  %3340 = vmatpush1.bf16.msra.mxu0 %v3167
  %3341 = vmatprep.subr.bf16.mxu0 0
  %3342 = vmatpush1.bf16.msra.mxu0 %v3168
  %3343 = vmatprep.subr.bf16.mxu0 0
  %3344 = vmatpush1.bf16.msra.mxu0 %v3169
  %3345 = vmatprep.subr.bf16.mxu0 0
  %3346 = vmatpush1.bf16.msra.mxu0 %v3170
  %3347 = vmatprep.subr.bf16.mxu0 0
  %3348 = vmatpush1.bf16.msra.mxu0 %v3171
  %3349 = vmatprep.subr.bf16.mxu0 0
  %3350 = vmatpush1.bf16.msra.mxu0 %v3172
  %3351 = vmatprep.subr.bf16.mxu0 0
  %3352 = vmatpush1.bf16.msra.mxu0 %v3173
  %3353 = vmatprep.subr.bf16.mxu0 0
  %3354 = vmatpush1.bf16.msra.mxu0 %v3174
  %3355 = vmatprep.subr.bf16.mxu0 0
  %3356 = vmatpush1.bf16.msra.mxu0 %v3175
  %3357 = vmatprep.subr.bf16.mxu0 0
  %3358 = vmatpush1.bf16.msra.mxu0 %v3176
  %3359 = vmatprep.subr.bf16.mxu0 0
  %3360 = vmatpush1.bf16.msra.mxu0 %v3177
  %3361 = vmatprep.subr.bf16.mxu0 0
  %3362 = vmatpush1.bf16.msra.mxu0 %v3178
  %3363 = vmatprep.subr.bf16.mxu0 0
  %3364 = vmatpush1.bf16.msra.mxu0 %v3179
  %3365 = vmatprep.subr.bf16.mxu0 0
  %3366 = vmatpush1.bf16.msra.mxu0 %v3180
  %3367 = vmatprep.subr.bf16.mxu0 0
  %3368 = vmatpush1.bf16.msra.mxu0 %v3181
  %3369 = vmatprep.subr.bf16.mxu0 0
  %3370 = vmatpush1.bf16.msra.mxu0 %v3182
  %3371 = vmatprep.mubr.bf16.mxu0 %v2914
  %3372 = vmatmul.mubr.bf16.gmra.mrb[0].mxu0 %v2913
  %v3373 = vpop.f32.mrb[0].mxu0
  %v3374 = vadd.f32 %v3325, %v3373
  %v3375 = vpop.f32.mrb[0].mxu0
  %v3376 = vpop.f32.mrb[0].mxu0
  %v3377 = vadd.f32 %v3328, %v3376
  %v3378 = vpop.f32.mrb[0].mxu0
  %3379 = vmatprep.mubr.bf16.mxu0 %v2921
  %3380 = vmatmul.mubr.bf16.gmra.mrb[0].mxu0 %v2920
  %v3381 = vpop.f32.mrb[0].mxu0
  %v3382 = vadd.f32 %v3333, %v3381
  %v3383 = vpop.f32.mrb[0].mxu0
  %v3384 = vpop.f32.mrb[0].mxu0
  %v3385 = vadd.f32 %v3336, %v3384
  %v3386 = vpop.f32.mrb[0].mxu0
  %3387 = vdwg.mxu0
  %3388 = vmatprep.subr.bf16.mxu0 0
  %3389 = vmatpush1.bf16.msra.mxu0 %v3183
  %3390 = vmatprep.subr.bf16.mxu0 0
  %3391 = vmatpush1.bf16.msra.mxu0 %v3184
  %3392 = vmatprep.subr.bf16.mxu0 0
  %3393 = vmatpush1.bf16.msra.mxu0 0
  %3394 = vmatprep.subr.bf16.mxu0 0
  %3395 = vmatpush1.bf16.msra.mxu0 0
  %3396 = vmatprep.subr.bf16.mxu0 0
  %3397 = vmatpush1.bf16.msra.mxu0 0
  %3398 = vmatprep.subr.bf16.mxu0 0
  %3399 = vmatpush1.bf16.msra.mxu0 0
  %3400 = vmatprep.subr.bf16.mxu0 0
  %3401 = vmatpush1.bf16.msra.mxu0 0
  %3402 = vmatprep.subr.bf16.mxu0 0
  %3403 = vmatpush1.bf16.msra.mxu0 0
  %3404 = vmatprep.subr.bf16.mxu0 0
  %3405 = vmatpush1.bf16.msra.mxu0 0
  %3406 = vmatprep.subr.bf16.mxu0 0
  %3407 = vmatpush1.bf16.msra.mxu0 0
  %3408 = vmatprep.subr.bf16.mxu0 0
  %3409 = vmatpush1.bf16.msra.mxu0 0
  %3410 = vmatprep.subr.bf16.mxu0 0
  %3411 = vmatpush1.bf16.msra.mxu0 0
  %3412 = vmatprep.subr.bf16.mxu0 0
  %3413 = vmatpush1.bf16.msra.mxu0 0
  %3414 = vmatprep.subr.bf16.mxu0 0
  %3415 = vmatpush1.bf16.msra.mxu0 0
  %3416 = vmatprep.subr.bf16.mxu0 0
  %3417 = vmatpush1.bf16.msra.mxu0 0
  %3418 = vmatprep.subr.bf16.mxu0 0
  %3419 = vmatpush1.bf16.msra.mxu0 0
  %3420 = vmatprep.mubr.bf16.mxu0 0
  %3421 = vmatmul.mubr.bf16.gmra.mrb[0].mxu0 %v3236
  %v3422 = vpop.f32.mrb[0].mxu0
  %v3423 = vadd.f32 %v3374, %v3422
  %v3424 = vpop.f32.mrb[0].mxu0
  %v3425 = vpop.f32.mrb[0].mxu0
  %v3426 = vadd.f32 %v3377, %v3425
  %v3427 = vpop.f32.mrb[0].mxu0
  %3428 = vmatprep.mubr.bf16.mxu0 0
  %3429 = vmatmul.mubr.bf16.gmra.mrb[0].mxu0 %v3239
  %v3430 = vpop.f32.mrb[0].mxu0
  %v3431 = vadd.f32 %v3382, %v3430
  %v3432 = vpop.f32.mrb[0].mxu0
  %v3433 = vpop.f32.mrb[0].mxu0
  %v3434 = vadd.f32 %v3385, %v3433
  %v3435 = vpop.f32.mrb[0].mxu0
  %3436 = vdwg.mxu0
  %v3437 = vmax.f32 %v3423, 0.0
  %v3438 = vmax.f32 %v3426, 0.0
  %v3439 = vmax.f32 %v3431, 0.0
  %v3440 = vmax.f32 %v3434, 0.0
  %3441 = vst [vmem:[#allocation4] sm:$0xff] %v3437
  %3442 = vst [vmem:[#allocation4 + $0x8] sm:$0xff] %v3438
  %3443 = vst [vmem:[#allocation4 + $0x10] sm:$0xff] %v3439
  %3444 = vst [vmem:[#allocation4 + $0x18] sm:$0xff] %v3440
  %v3445 = vld [vmem:[#allocation4] sm:$0xff]
  %v3446 = vld [vmem:[#allocation4 + $0x8] sm:$0xf]
  %v3447 = vpack.c.bf16 %v3446, %v3445
  %v3449 = vunpack.c.l.b16 %v3447
  %v3450 = vunpack.c.h.b16 %v3447
  %v3451 = vpack.c.b16 %v3449, %v3449
  %v3452 = vpack.c.b16 %v3450, %v3450
  %3455 = vst [vmem:[#allocation11] sm:$0xf] %v3451
  %3456 = vst [vmem:[#allocation11 + $0x20] sm:$0x3] %v3452
  %v3457 = vld [vmem:[#allocation4 + $0x1] sm:$0xff]
  %v3458 = vld [vmem:[#allocation4 + $0x9] sm:$0xf]
  %v3459 = vpack.c.bf16 %v3458, %v3457
  %v3461 = vunpack.c.l.b16 %v3459
  %v3462 = vunpack.c.h.b16 %v3459
  %v3463 = vpack.c.b16 %v3461, %v3461
  %v3464 = vpack.c.b16 %v3462, %v3462
  %3467 = vst [vmem:[#allocation11 + $0x4] sm:$0xf] %v3463
  %3468 = vst [vmem:[#allocation11 + $0x24] sm:$0x3] %v3464
  %v3469 = vld [vmem:[#allocation4 + $0x2] sm:$0xff]
  %v3470 = vld [vmem:[#allocation4 + $0xa] sm:$0xf]
  %v3471 = vpack.c.bf16 %v3470, %v3469
  %v3473 = vunpack.c.l.b16 %v3471
  %v3474 = vunpack.c.h.b16 %v3471
  %v3475 = vpack.c.b16 %v3473, %v3473
  %v3476 = vpack.c.b16 %v3474, %v3474
  %3479 = vst [vmem:[#allocation11 + $0x8] sm:$0xf] %v3475
  %3480 = vst [vmem:[#allocation11 + $0x28] sm:$0x3] %v3476
  %v3481 = vld [vmem:[#allocation4 + $0x3] sm:$0xff]
  %v3482 = vld [vmem:[#allocation4 + $0xb] sm:$0xf]
  %v3483 = vpack.c.bf16 %v3482, %v3481
  %v3485 = vunpack.c.l.b16 %v3483
  %v3486 = vunpack.c.h.b16 %v3483
  %v3487 = vpack.c.b16 %v3485, %v3485
  %v3488 = vpack.c.b16 %v3486, %v3486
  %3491 = vst [vmem:[#allocation11 + $0xc] sm:$0xf] %v3487
  %3492 = vst [vmem:[#allocation11 + $0x2c] sm:$0x3] %v3488
  %v3493 = vld [vmem:[#allocation4 + $0x4] sm:$0xff]
  %v3494 = vld [vmem:[#allocation4 + $0xc] sm:$0xf]
  %v3495 = vpack.c.bf16 %v3494, %v3493
  %v3497 = vunpack.c.l.b16 %v3495
  %v3498 = vunpack.c.h.b16 %v3495
  %v3499 = vpack.c.b16 %v3497, %v3497
  %v3500 = vpack.c.b16 %v3498, %v3498
  %3503 = vst [vmem:[#allocation11 + $0x10] sm:$0xf] %v3499
  %3504 = vst [vmem:[#allocation11 + $0x30] sm:$0x3] %v3500
  %v3505 = vld [vmem:[#allocation4 + $0x10] sm:$0xff]
  %v3506 = vld [vmem:[#allocation4 + $0x18] sm:$0xf]
  %v3507 = vpack.c.bf16 %v3506, %v3505
  %v3509 = vunpack.c.l.b16 %v3507
  %v3510 = vunpack.c.h.b16 %v3507
  %v3511 = vpack.c.b16 %v3509, %v3509
  %v3512 = vpack.c.b16 %v3510, %v3510
  %v3513 = vrot.slane %v3511, 6
  %v3514 = vrot.slane %v3513, 4
  %v3515 = vrot.slane %v3512, 6
  %v3516 = vsel %vm905, %v3514, %v3515
  %3519 = vst [vmem:[#allocation11 + $0x20] sm:$0xc] %v3513
  %3520 = vst [vmem:[#allocation11 + $0x40] sm:$0xf] %v3516
  %v3521 = vld [vmem:[#allocation4 + $0x11] sm:$0xff]
  %v3522 = vld [vmem:[#allocation4 + $0x19] sm:$0xf]
  %v3523 = vpack.c.bf16 %v3522, %v3521
  %v3525 = vunpack.c.l.b16 %v3523
  %v3526 = vunpack.c.h.b16 %v3523
  %v3527 = vpack.c.b16 %v3525, %v3525
  %v3528 = vpack.c.b16 %v3526, %v3526
  %v3529 = vrot.slane %v3527, 6
  %v3530 = vrot.slane %v3529, 4
  %v3531 = vrot.slane %v3528, 6
  %v3532 = vsel %vm905, %v3530, %v3531
  %3535 = vst [vmem:[#allocation11 + $0x24] sm:$0xc] %v3529
  %3536 = vst [vmem:[#allocation11 + $0x44] sm:$0xf] %v3532
  %v3537 = vld [vmem:[#allocation4 + $0x12] sm:$0xff]
  %v3538 = vld [vmem:[#allocation4 + $0x1a] sm:$0xf]
  %v3539 = vpack.c.bf16 %v3538, %v3537
  %v3541 = vunpack.c.l.b16 %v3539
  %v3542 = vunpack.c.h.b16 %v3539
  %v3543 = vpack.c.b16 %v3541, %v3541
  %v3544 = vpack.c.b16 %v3542, %v3542
  %v3545 = vrot.slane %v3543, 6
  %v3546 = vrot.slane %v3545, 4
  %v3547 = vrot.slane %v3544, 6
  %v3548 = vsel %vm905, %v3546, %v3547
  %3551 = vst [vmem:[#allocation11 + $0x28] sm:$0xc] %v3545
  %3552 = vst [vmem:[#allocation11 + $0x48] sm:$0xf] %v3548
  %v3553 = vld [vmem:[#allocation4 + $0x13] sm:$0xff]
  %v3554 = vld [vmem:[#allocation4 + $0x1b] sm:$0xf]
  %v3555 = vpack.c.bf16 %v3554, %v3553
  %v3557 = vunpack.c.l.b16 %v3555
  %v3558 = vunpack.c.h.b16 %v3555
  %v3559 = vpack.c.b16 %v3557, %v3557
  %v3560 = vpack.c.b16 %v3558, %v3558
  %v3561 = vrot.slane %v3559, 6
  %v3562 = vrot.slane %v3561, 4
  %v3563 = vrot.slane %v3560, 6
  %v3564 = vsel %vm905, %v3562, %v3563
  %3567 = vst [vmem:[#allocation11 + $0x2c] sm:$0xc] %v3561
  %3568 = vst [vmem:[#allocation11 + $0x4c] sm:$0xf] %v3564
  %v3569 = vld [vmem:[#allocation4 + $0x14] sm:$0xff]
  %v3570 = vld [vmem:[#allocation4 + $0x1c] sm:$0xf]
  %v3571 = vpack.c.bf16 %v3570, %v3569
  %v3573 = vunpack.c.l.b16 %v3571
  %v3574 = vunpack.c.h.b16 %v3571
  %v3575 = vpack.c.b16 %v3573, %v3573
  %v3576 = vpack.c.b16 %v3574, %v3574
  %v3577 = vrot.slane %v3575, 6
  %v3578 = vrot.slane %v3577, 4
  %v3579 = vrot.slane %v3576, 6
  %v3580 = vsel %vm905, %v3578, %v3579
  %3583 = vst [vmem:[#allocation11 + $0x30] sm:$0xc] %v3577
  %3584 = vst [vmem:[#allocation11 + $0x50] sm:$0xf] %v3580
  %v3585 = vld [vmem:[#allocation11] sm:$0xff]
  %v3586 = vld [vmem:[#allocation11 + $0x8] sm:$0xff]
  %v3587 = vld [vmem:[#allocation11 + $0x10] sm:$0xf]
  %v3588 = vld [vmem:[#allocation11 + $0x20] sm:$0xff]
  %v3589 = vld [vmem:[#allocation11 + $0x28] sm:$0xff]
  %v3590 = vld [vmem:[#allocation11 + $0x30] sm:$0xf]
  %v3591 = vld [vmem:[#allocation11 + $0x40] sm:$0xff]
  %v3592 = vld [vmem:[#allocation11 + $0x48] sm:$0xff]
  %v3593 = vld [vmem:[#allocation11 + $0x50] sm:$0xf]
  %v3594 = vld [vmem:[%s4] sm:$0xf]
  %v3595 = vld [vmem:[%s4 + $0x4] sm:$0xf]
  %v3596 = vld [vmem:[%s4 + $0x8] sm:$0xf]
  %v3597 = vld [vmem:[%s4 + $0xc] sm:$0xf]
  %v3598 = vld [vmem:[%s4 + $0x10] sm:$0xf]
  %v3599 = vld [vmem:[%s4 + $0x14] sm:$0xf]
  %v3600 = vld [vmem:[%s4 + $0x18] sm:$0xf]
  %v3601 = vld [vmem:[%s4 + $0x1c] sm:$0xf]
  %v3602 = vld [vmem:[%s4 + $0x20] sm:$0xf]
  %v3603 = vld [vmem:[%s4 + $0x24] sm:$0xf]
  %v3604 = vld [vmem:[%s4 + $0x28] sm:$0xf]
  %v3605 = vld [vmem:[%s4 + $0x2c] sm:$0xf]
  %v3606 = vld [vmem:[%s4 + $0x30] sm:$0xf]
  %v3607 = vld [vmem:[%s4 + $0x34] sm:$0xf]
  %v3608 = vld [vmem:[%s4 + $0x38] sm:$0xf]
  %v3609 = vld [vmem:[%s4 + $0x3c] sm:$0xf]
  %v3610 = vld [vmem:[%s4 + $0x40] sm:$0xf]
  %v3611 = vld [vmem:[%s4 + $0x44] sm:$0xf]
  %v3612 = vld [vmem:[%s4 + $0x48] sm:$0xf]
  %v3613 = vld [vmem:[%s4 + $0x4c] sm:$0xf]
  %v3614 = vld [vmem:[%s4 + $0x50] sm:$0xf]
  %v3615 = vld [vmem:[%s4 + $0x54] sm:$0xf]
  %v3616 = vld [vmem:[%s4 + $0x58] sm:$0xf]
  %v3617 = vld [vmem:[%s4 + $0x5c] sm:$0xf]
  %v3618 = vld [vmem:[%s4 + $0x60] sm:$0xf]
  %v3619 = vld [vmem:[%s4 + $0x64] sm:$0xf]
  %v3620 = vld [vmem:[%s4 + $0x68] sm:$0xf]
  %v3621 = vld [vmem:[%s4 + $0x6c] sm:$0xf]
  %v3622 = vld [vmem:[%s4 + $0x70] sm:$0xf]
  %v3623 = vld [vmem:[%s4 + $0x74] sm:$0xf]
  %v3624 = vld [vmem:[%s4 + $0x78] sm:$0xf]
  %v3625 = vld [vmem:[%s4 + $0x7c] sm:$0xf]
  %v3626 = vld [vmem:[%s4 + $0x80] sm:$0xf]
  %v3627 = vld [vmem:[%s4 + $0x84] sm:$0xf]
  %v3628 = vld [vmem:[%s4 + $0x88] sm:$0xf]
  %v3629 = vld [vmem:[%s4 + $0x8c] sm:$0xf]
  %v3630 = vld [vmem:[%s4 + $0x90] sm:$0xf]
  %v3631 = vld [vmem:[%s4 + $0x94] sm:$0xf]
  %v3632 = vld [vmem:[%s4 + $0x98] sm:$0xf]
  %v3633 = vld [vmem:[%s4 + $0x9c] sm:$0xf]
  %v3634 = vld [vmem:[%s4 + $0xa0] sm:$0xf]
  %v3635 = vld [vmem:[%s4 + $0xa4] sm:$0xf]
  %v3636 = vld [vmem:[%s4 + $0xa8] sm:$0xf]
  %v3637 = vld [vmem:[%s4 + $0xac] sm:$0xf]
  %v3638 = vld [vmem:[%s4 + $0xb0] sm:$0xf]
  %v3639 = vld [vmem:[%s4 + $0xb4] sm:$0xf]
  %v3640 = vld [vmem:[%s4 + $0xb8] sm:$0xf]
  %v3641 = vld [vmem:[%s4 + $0xbc] sm:$0xf]
  %v3642 = vld [vmem:[%s4 + $0xc0] sm:$0xf]
  %v3643 = vld [vmem:[%s4 + $0xc4] sm:$0xf]
  %v3644 = vld [vmem:[%s4 + $0xc8] sm:$0xf]
  %v3645 = vld [vmem:[%s4 + $0xcc] sm:$0xf]
  %v3646 = vld [vmem:[%s4 + $0xd0] sm:$0xf]
  %v3647 = vld [vmem:[%s4 + $0xd4] sm:$0xf]
  %v3648 = vld [vmem:[%s4 + $0xd8] sm:$0xf]
  %v3649 = vld [vmem:[%s4 + $0xdc] sm:$0xf]
  %v3650 = vld [vmem:[%s4 + $0xe0] sm:$0xf]
  %v3651 = vld [vmem:[%s4 + $0xe4] sm:$0xf]
  %v3652 = vld [vmem:[%s4 + $0xe8] sm:$0xf]
  %v3653 = vld [vmem:[%s4 + $0xec] sm:$0xf]
  %v3654 = vld [vmem:[%s4 + $0xf0] sm:$0xf]
  %v3655 = vld [vmem:[%s4 + $0xf4] sm:$0xf]
  %v3656 = vld [vmem:[%s4 + $0xf8] sm:$0xf]
  %v3657 = vld [vmem:[%s4 + $0xfc] sm:$0xf]
  %v3658 = vld [vmem:[%s4 + $0x100] sm:$0xf]
  %v3659 = vld [vmem:[%s4 + $0x104] sm:$0xf]
  %v3660 = vld [vmem:[%s4 + $0x108] sm:$0xf]
  %v3661 = vld [vmem:[%s4 + $0x10c] sm:$0xf]
  %v3662 = vld [vmem:[%s4 + $0x110] sm:$0xf]
  %v3663 = vld [vmem:[%s4 + $0x114] sm:$0xf]
  %v3664 = vld [vmem:[%s4 + $0x118] sm:$0xf]
  %v3665 = vld [vmem:[%s4 + $0x11c] sm:$0xf]
  %v3666 = vld [vmem:[%s4 + $0x120] sm:$0xf]
  %v3667 = vld [vmem:[%s4 + $0x124] sm:$0xf]
  %v3668 = vld [vmem:[%s4 + $0x128] sm:$0xf]
  %v3669 = vld [vmem:[%s4 + $0x12c] sm:$0xf]
  %v3670 = vld [vmem:[%s4 + $0x130] sm:$0xf]
  %v3671 = vld [vmem:[%s4 + $0x134] sm:$0xf]
  %v3672 = vld [vmem:[%s4 + $0x138] sm:$0xf]
  %v3673 = vld [vmem:[%s4 + $0x13c] sm:$0xf]
  %v3674 = vld [vmem:[%s14] sm:$0x1]
  %v3676 = vlaneseq
  %v3677 = vshrl.u32 %v3676, 7
  %v3678 = vsub.s32 0, %v3677
  %v3679 = vrot.slane %v3674, %v3678
  %v3690 = vunpack.c.l.b16 %v3585
  %v3691 = vunpack.c.h.b16 %v3585
  %v3692 = vunpack.c.l.b16 %v3586
  %v3693 = vunpack.c.h.b16 %v3586
  %v3694 = vunpack.c.l.b16 %v3587
  %v3695 = vunpack.c.l.b16 %v3588
  %v3696 = vunpack.c.h.b16 %v3588
  %v3697 = vunpack.c.l.b16 %v3589
  %v3698 = vunpack.c.h.b16 %v3589
  %v3699 = vunpack.c.l.b16 %v3590
  %v3700 = vunpack.c.l.b16 %v3591
  %v3701 = vunpack.c.h.b16 %v3591
  %v3702 = vunpack.c.l.b16 %v3592
  %v3703 = vunpack.c.h.b16 %v3592
  %v3704 = vunpack.c.l.b16 %v3593
  %v3705 = vpack.c.b16 %v3695, %v3690
  %v3706 = vpack.c.b16 %v3696, %v3691
  %v3707 = vpack.c.b16 %v3697, %v3692
  %v3708 = vpack.c.b16 %v3698, %v3693
  %v3709 = vpack.c.b16 %v3699, %v3694
  %v3710 = vpack.c.b16 %v3700, %v3700
  %v3711 = vpack.c.b16 %v3701, %v3701
  %v3712 = vpack.c.b16 %v3702, %v3702
  %v3713 = vpack.c.b16 %v3703, %v3703
  %v3714 = vpack.c.b16 %v3704, %v3704
  %v3805 = vunpack.c.l.b16 %v3594
  %v3806 = vunpack.c.l.b16 %v3595
  %v3807 = vunpack.c.l.b16 %v3596
  %v3808 = vunpack.c.l.b16 %v3597
  %v3809 = vunpack.c.l.b16 %v3598
  %v3810 = vunpack.c.l.b16 %v3599
  %v3811 = vunpack.c.l.b16 %v3600
  %v3812 = vunpack.c.l.b16 %v3601
  %v3813 = vunpack.c.l.b16 %v3602
  %v3814 = vunpack.c.l.b16 %v3603
  %v3815 = vunpack.c.l.b16 %v3604
  %v3816 = vunpack.c.l.b16 %v3605
  %v3817 = vunpack.c.l.b16 %v3606
  %v3818 = vunpack.c.l.b16 %v3607
  %v3819 = vunpack.c.l.b16 %v3608
  %v3820 = vunpack.c.l.b16 %v3609
  %v3821 = vunpack.c.l.b16 %v3610
  %v3822 = vunpack.c.l.b16 %v3611
  %v3823 = vunpack.c.l.b16 %v3612
  %v3824 = vunpack.c.l.b16 %v3613
  %v3825 = vunpack.c.l.b16 %v3614
  %v3826 = vunpack.c.l.b16 %v3615
  %v3827 = vunpack.c.l.b16 %v3616
  %v3828 = vunpack.c.l.b16 %v3617
  %v3829 = vunpack.c.l.b16 %v3618
  %v3830 = vunpack.c.l.b16 %v3619
  %v3831 = vunpack.c.l.b16 %v3620
  %v3832 = vunpack.c.l.b16 %v3621
  %v3833 = vunpack.c.l.b16 %v3622
  %v3834 = vunpack.c.l.b16 %v3623
  %v3835 = vunpack.c.l.b16 %v3624
  %v3836 = vunpack.c.l.b16 %v3625
  %v3837 = vunpack.c.l.b16 %v3626
  %v3838 = vunpack.c.l.b16 %v3627
  %v3839 = vunpack.c.l.b16 %v3628
  %v3840 = vunpack.c.l.b16 %v3629
  %v3841 = vunpack.c.l.b16 %v3630
  %v3842 = vunpack.c.l.b16 %v3631
  %v3843 = vunpack.c.l.b16 %v3632
  %v3844 = vunpack.c.l.b16 %v3633
  %v3845 = vunpack.c.l.b16 %v3634
  %v3846 = vunpack.c.l.b16 %v3635
  %v3847 = vunpack.c.l.b16 %v3636
  %v3848 = vunpack.c.l.b16 %v3637
  %v3849 = vunpack.c.l.b16 %v3638
  %v3850 = vunpack.c.l.b16 %v3639
  %v3851 = vunpack.c.l.b16 %v3640
  %v3852 = vunpack.c.l.b16 %v3641
  %v3853 = vunpack.c.l.b16 %v3642
  %v3854 = vunpack.c.l.b16 %v3643
  %v3855 = vunpack.c.l.b16 %v3644
  %v3856 = vunpack.c.l.b16 %v3645
  %v3857 = vunpack.c.l.b16 %v3646
  %v3858 = vunpack.c.l.b16 %v3647
  %v3859 = vunpack.c.l.b16 %v3648
  %v3860 = vunpack.c.l.b16 %v3649
  %v3861 = vunpack.c.l.b16 %v3650
  %v3862 = vunpack.c.l.b16 %v3651
  %v3863 = vunpack.c.l.b16 %v3652
  %v3864 = vunpack.c.l.b16 %v3653
  %v3865 = vunpack.c.l.b16 %v3654
  %v3866 = vunpack.c.l.b16 %v3655
  %v3867 = vunpack.c.l.b16 %v3656
  %v3868 = vunpack.c.l.b16 %v3657
  %v3869 = vunpack.c.l.b16 %v3658
  %v3870 = vunpack.c.l.b16 %v3659
  %v3871 = vunpack.c.l.b16 %v3660
  %v3872 = vunpack.c.l.b16 %v3661
  %v3873 = vunpack.c.l.b16 %v3662
  %v3874 = vunpack.c.l.b16 %v3663
  %v3875 = vunpack.c.l.b16 %v3664
  %v3876 = vunpack.c.l.b16 %v3665
  %v3877 = vunpack.c.l.b16 %v3666
  %v3878 = vunpack.c.l.b16 %v3667
  %v3879 = vunpack.c.l.b16 %v3668
  %v3880 = vunpack.c.l.b16 %v3669
  %v3881 = vunpack.c.l.b16 %v3670
  %v3882 = vunpack.c.l.b16 %v3671
  %v3883 = vunpack.c.l.b16 %v3672
  %v3884 = vunpack.c.l.b16 %v3673
  %v3885 = vpack.c.b16 %v3806, %v3805
  %v3886 = vpack.c.b16 %v3808, %v3807
  %v3887 = vpack.c.b16 %v3810, %v3809
  %v3888 = vpack.c.b16 %v3812, %v3811
  %v3889 = vpack.c.b16 %v3814, %v3813
  %v3890 = vpack.c.b16 %v3816, %v3815
  %v3891 = vpack.c.b16 %v3818, %v3817
  %v3892 = vpack.c.b16 %v3820, %v3819
  %v3893 = vpack.c.b16 %v3822, %v3821
  %v3894 = vpack.c.b16 %v3824, %v3823
  %v3895 = vpack.c.b16 %v3826, %v3825
  %v3896 = vpack.c.b16 %v3828, %v3827
  %v3897 = vpack.c.b16 %v3830, %v3829
  %v3898 = vpack.c.b16 %v3832, %v3831
  %v3899 = vpack.c.b16 %v3834, %v3833
  %v3900 = vpack.c.b16 %v3836, %v3835
  %v3901 = vpack.c.b16 %v3838, %v3837
  %v3902 = vpack.c.b16 %v3840, %v3839
  %v3903 = vpack.c.b16 %v3842, %v3841
  %v3904 = vpack.c.b16 %v3844, %v3843
  %v3905 = vpack.c.b16 %v3846, %v3845
  %v3906 = vpack.c.b16 %v3848, %v3847
  %v3907 = vpack.c.b16 %v3850, %v3849
  %v3908 = vpack.c.b16 %v3852, %v3851
  %v3909 = vpack.c.b16 %v3854, %v3853
  %v3910 = vpack.c.b16 %v3856, %v3855
  %v3911 = vpack.c.b16 %v3858, %v3857
  %v3912 = vpack.c.b16 %v3860, %v3859
  %v3913 = vpack.c.b16 %v3862, %v3861
  %v3914 = vpack.c.b16 %v3864, %v3863
  %v3915 = vpack.c.b16 %v3866, %v3865
  %v3916 = vpack.c.b16 %v3868, %v3867
  %v3917 = vpack.c.b16 %v3870, %v3869
  %v3918 = vpack.c.b16 %v3872, %v3871
  %v3919 = vpack.c.b16 %v3874, %v3873
  %v3920 = vpack.c.b16 %v3876, %v3875
  %v3921 = vpack.c.b16 %v3878, %v3877
  %v3922 = vpack.c.b16 %v3880, %v3879
  %v3923 = vpack.c.b16 %v3882, %v3881
  %v3924 = vpack.c.b16 %v3884, %v3883
  %3965 = vmatprep.subr.bf16.mxu0 0
  %3966 = vmatpush1.bf16.msra.mxu0 %v3885
  %3967 = vmatprep.subr.bf16.mxu0 0
  %3968 = vmatpush1.bf16.msra.mxu0 %v3886
  %3969 = vmatprep.subr.bf16.mxu0 0
  %3970 = vmatpush1.bf16.msra.mxu0 %v3887
  %3971 = vmatprep.subr.bf16.mxu0 0
  %3972 = vmatpush1.bf16.msra.mxu0 %v3888
  %3973 = vmatprep.subr.bf16.mxu0 0
  %3974 = vmatpush1.bf16.msra.mxu0 %v3889
  %3975 = vmatprep.subr.bf16.mxu0 0
  %3976 = vmatpush1.bf16.msra.mxu0 %v3890
  %3977 = vmatprep.subr.bf16.mxu0 0
  %3978 = vmatpush1.bf16.msra.mxu0 %v3891
  %3979 = vmatprep.subr.bf16.mxu0 0
  %3980 = vmatpush1.bf16.msra.mxu0 %v3892
  %3981 = vmatprep.subr.bf16.mxu0 0
  %3982 = vmatpush1.bf16.msra.mxu0 %v3893
  %3983 = vmatprep.subr.bf16.mxu0 0
  %3984 = vmatpush1.bf16.msra.mxu0 %v3894
  %3985 = vmatprep.subr.bf16.mxu0 0
  %3986 = vmatpush1.bf16.msra.mxu0 %v3895
  %3987 = vmatprep.subr.bf16.mxu0 0
  %3988 = vmatpush1.bf16.msra.mxu0 %v3896
  %3989 = vmatprep.subr.bf16.mxu0 0
  %3990 = vmatpush1.bf16.msra.mxu0 %v3897
  %3991 = vmatprep.subr.bf16.mxu0 0
  %3992 = vmatpush1.bf16.msra.mxu0 %v3898
  %3993 = vmatprep.subr.bf16.mxu0 0
  %3994 = vmatpush1.bf16.msra.mxu0 %v3899
  %3995 = vmatprep.subr.bf16.mxu0 0
  %3996 = vmatpush1.bf16.msra.mxu0 %v3900
  %3997 = vmatprep.mubr.bf16.mxu0 %v3706
  %3998 = vmatmul.mubr.bf16.gmra.mrb[0].mxu0 %v3705
  %v3999 = vpop.f32.mrb[0].mxu0
  %v4000 = vadd.f32 %v3679, %v3999
  %v4001 = vpop.f32.mrb[0].mxu0
  %v4002 = vpop.f32.mrb[0].mxu0
  %v4003 = vadd.f32 %v3679, %v4002
  %v4004 = vpop.f32.mrb[0].mxu0
  %4005 = vmatprep.mubr.bf16.mxu0 %v3711
  %4006 = vmatmul.mubr.bf16.gmra.mrb[0].mxu0 %v3710
  %v4007 = vpop.f32.mrb[0].mxu0
  %v4008 = vadd.f32 %v3679, %v4007
  %v4009 = vpop.f32.mrb[0].mxu0
  %v4010 = vpop.f32.mrb[0].mxu0
  %v4011 = vpop.f32.mrb[0].mxu0
  %4012 = vdwg.mxu0
  %4013 = vmatprep.subr.bf16.mxu0 0
  %4014 = vmatpush1.bf16.msra.mxu0 %v3901
  %4015 = vmatprep.subr.bf16.mxu0 0
  %4016 = vmatpush1.bf16.msra.mxu0 %v3902
  %4017 = vmatprep.subr.bf16.mxu0 0
  %4018 = vmatpush1.bf16.msra.mxu0 %v3903
  %4019 = vmatprep.subr.bf16.mxu0 0
  %4020 = vmatpush1.bf16.msra.mxu0 %v3904
  %4021 = vmatprep.subr.bf16.mxu0 0
  %4022 = vmatpush1.bf16.msra.mxu0 %v3905
  %4023 = vmatprep.subr.bf16.mxu0 0
  %4024 = vmatpush1.bf16.msra.mxu0 %v3906
  %4025 = vmatprep.subr.bf16.mxu0 0
  %4026 = vmatpush1.bf16.msra.mxu0 %v3907
  %4027 = vmatprep.subr.bf16.mxu0 0
  %4028 = vmatpush1.bf16.msra.mxu0 %v3908
  %4029 = vmatprep.subr.bf16.mxu0 0
  %4030 = vmatpush1.bf16.msra.mxu0 %v3909
  %4031 = vmatprep.subr.bf16.mxu0 0
  %4032 = vmatpush1.bf16.msra.mxu0 %v3910
  %4033 = vmatprep.subr.bf16.mxu0 0
  %4034 = vmatpush1.bf16.msra.mxu0 %v3911
  %4035 = vmatprep.subr.bf16.mxu0 0
  %4036 = vmatpush1.bf16.msra.mxu0 %v3912
  %4037 = vmatprep.subr.bf16.mxu0 0
  %4038 = vmatpush1.bf16.msra.mxu0 %v3913
  %4039 = vmatprep.subr.bf16.mxu0 0
  %4040 = vmatpush1.bf16.msra.mxu0 %v3914
  %4041 = vmatprep.subr.bf16.mxu0 0
  %4042 = vmatpush1.bf16.msra.mxu0 %v3915
  %4043 = vmatprep.subr.bf16.mxu0 0
  %4044 = vmatpush1.bf16.msra.mxu0 %v3916
  %4045 = vmatprep.mubr.bf16.mxu0 %v3708
  %4046 = vmatmul.mubr.bf16.gmra.mrb[0].mxu0 %v3707
  %v4047 = vpop.f32.mrb[0].mxu0
  %v4048 = vadd.f32 %v4000, %v4047
  %v4049 = vpop.f32.mrb[0].mxu0
  %v4050 = vpop.f32.mrb[0].mxu0
  %v4051 = vadd.f32 %v4003, %v4050
  %v4052 = vpop.f32.mrb[0].mxu0
  %4053 = vmatprep.mubr.bf16.mxu0 %v3713
  %4054 = vmatmul.mubr.bf16.gmra.mrb[0].mxu0 %v3712
  %v4055 = vpop.f32.mrb[0].mxu0
  %v4056 = vadd.f32 %v4008, %v4055
  %v4057 = vpop.f32.mrb[0].mxu0
  %v4058 = vpop.f32.mrb[0].mxu0
  %v4059 = vpop.f32.mrb[0].mxu0
  %4060 = vdwg.mxu0
  %4061 = vmatprep.subr.bf16.mxu0 0
  %4062 = vmatpush1.bf16.msra.mxu0 %v3917
  %4063 = vmatprep.subr.bf16.mxu0 0
  %4064 = vmatpush1.bf16.msra.mxu0 %v3918
  %4065 = vmatprep.subr.bf16.mxu0 0
  %4066 = vmatpush1.bf16.msra.mxu0 %v3919
  %4067 = vmatprep.subr.bf16.mxu0 0
  %4068 = vmatpush1.bf16.msra.mxu0 %v3920
  %4069 = vmatprep.subr.bf16.mxu0 0
  %4070 = vmatpush1.bf16.msra.mxu0 %v3921
  %4071 = vmatprep.subr.bf16.mxu0 0
  %4072 = vmatpush1.bf16.msra.mxu0 %v3922
  %4073 = vmatprep.subr.bf16.mxu0 0
  %4074 = vmatpush1.bf16.msra.mxu0 %v3923
  %4075 = vmatprep.subr.bf16.mxu0 0
  %4076 = vmatpush1.bf16.msra.mxu0 %v3924
  %4077 = vmatprep.subr.bf16.mxu0 0
  %4078 = vmatpush1.bf16.msra.mxu0 0
  %4079 = vmatprep.subr.bf16.mxu0 0
  %4080 = vmatpush1.bf16.msra.mxu0 0
  %4081 = vmatprep.subr.bf16.mxu0 0
  %4082 = vmatpush1.bf16.msra.mxu0 0
  %4083 = vmatprep.subr.bf16.mxu0 0
  %4084 = vmatpush1.bf16.msra.mxu0 0
  %4085 = vmatprep.subr.bf16.mxu0 0
  %4086 = vmatpush1.bf16.msra.mxu0 0
  %4087 = vmatprep.subr.bf16.mxu0 0
  %4088 = vmatpush1.bf16.msra.mxu0 0
  %4089 = vmatprep.subr.bf16.mxu0 0
  %4090 = vmatpush1.bf16.msra.mxu0 0
  %4091 = vmatprep.subr.bf16.mxu0 0
  %4092 = vmatpush1.bf16.msra.mxu0 0
  %4093 = vmatprep.mubr.bf16.mxu0 0
  %4094 = vmatmul.mubr.bf16.gmra.mrb[0].mxu0 %v3709
  %v4095 = vpop.f32.mrb[0].mxu0
  %v4096 = vadd.f32 %v4048, %v4095
  %v4097 = vpop.f32.mrb[0].mxu0
  %v4098 = vpop.f32.mrb[0].mxu0
  %v4099 = vadd.f32 %v4051, %v4098
  %v4100 = vpop.f32.mrb[0].mxu0
  %4101 = vmatprep.mubr.bf16.mxu0 0
  %4102 = vmatmul.mubr.bf16.gmra.mrb[0].mxu0 %v3714
  %v4103 = vpop.f32.mrb[0].mxu0
  %v4104 = vadd.f32 %v4056, %v4103
  %v4105 = vpop.f32.mrb[0].mxu0
  %v4106 = vpop.f32.mrb[0].mxu0
  %v4107 = vpop.f32.mrb[0].mxu0
  %4108 = vdwg.mxu0
  %v4109 = vmax.f32 %v4096, 0.0
  %v4110 = vmax.f32 %v4099, 0.0
  %v4111 = vmax.f32 %v4104, 0.0
  %vm4112 = vcmask 785408
  %4113 = vst.msk [vmem:[#allocation5] sm:$0xff] %vm4112, %v4109
  %4114 = vst.msk [vmem:[#allocation5 + $0x8] sm:$0xff] %vm4112, %v4110
  %4115 = vst.msk [vmem:[#allocation5 + $0x10] sm:$0xff] %vm4112, %v4111
  %v4116 = vld [vmem:[#allocation5] sm:$0xff]
  %v4117 = vpack.c.bf16 %v4116, %v4116
  %vm4118 = vcmask 781312
  %4119 = vst.msk [vmem:[#allocation11] sm:$0xf] %vm4118, %v4117
  %v4120 = vld [vmem:[#allocation5 + $0x1] sm:$0xff]
  %v4121 = vpack.c.bf16 %v4120, %v4120
  %v4123 = vunpack.c.l.b16 %v4121
  %v4124 = vpack.c.b16 %v4123, %v4123
  %4125 = vrot.lane.b32.xlu0 %v4124, 96
  %v4126 = vpop.permute.xlu0 %4125
  %v4127 = vrot.slane %v4126, 4
  %v4128 = vsel %vm2485, %v4127, %v4126
  %vm4130 = vmor %vm679, %vm2490
  %4131 = vst.msk [vmem:[#allocation11] sm:$0xff] %vm4130, %v4128
  %v4132 = vld [vmem:[#allocation5 + $0x2] sm:$0xff]
  %v4133 = vpack.c.bf16 %v4132, %v4132
  %v4135 = vunpack.c.l.b16 %v4133
  %v4136 = vpack.c.b16 %v4135, %v4135
  %4137 = vrot.lane.b32.xlu0 %v4136, 64
  %v4138 = vpop.permute.xlu0 %4137
  %v4139 = vrot.slane %v4138, 4
  %v4140 = vsel %vm751, %v4139, %v4138
  %vm4142 = vmor %vm2318, %vm758
  %4143 = vst.msk [vmem:[#allocation11 + $0x4] sm:$0xff] %vm4142, %v4140
  %v4144 = vld [vmem:[#allocation5 + $0x3] sm:$0xff]
  %v4145 = vpack.c.bf16 %v4144, %v4144
  %v4147 = vunpack.c.l.b16 %v4145
  %v4148 = vpack.c.b16 %v4147, %v4147
  %4149 = vrot.lane.b32.xlu0 %v4148, 32
  %v4150 = vpop.permute.xlu0 %4149
  %4152 = vst.msk [vmem:[#allocation11 + $0x8] sm:$0xf] %vm2380, %v4150
  %v4153 = vld [vmem:[#allocation5 + $0x4] sm:$0xff]
  %v4154 = vpack.c.bf16 %v4153, %v4153
  %4155 = vst.msk [vmem:[#allocation11 + $0xc] sm:$0xf] %vm4118, %v4154
  %v4156 = vld [vmem:[#allocation5 + $0xc] sm:$0xff]
  %v4157 = vpack.c.bf16 %v4156, %v4156
  %4158 = vst.msk [vmem:[#allocation11 + $0x20] sm:$0xf] %vm4118, %v4157
  %v4159 = vld [vmem:[#allocation5 + $0xd] sm:$0xff]
  %v4160 = vpack.c.bf16 %v4159, %v4159
  %v4162 = vunpack.c.l.b16 %v4160
  %v4163 = vpack.c.b16 %v4162, %v4162
  %4164 = vrot.lane.b32.xlu0 %v4163, 96
  %v4165 = vpop.permute.xlu0 %4164
  %v4166 = vrot.slane %v4165, 4
  %v4167 = vsel %vm2485, %v4166, %v4165
  %4169 = vst.msk [vmem:[#allocation11 + $0x20] sm:$0xff] %vm4130, %v4167
  %v4170 = vld [vmem:[#allocation5 + $0xe] sm:$0xff]
  %v4171 = vpack.c.bf16 %v4170, %v4170
  %v4173 = vunpack.c.l.b16 %v4171
  %v4174 = vpack.c.b16 %v4173, %v4173
  %4175 = vrot.lane.b32.xlu0 %v4174, 64
  %v4176 = vpop.permute.xlu0 %4175
  %v4177 = vrot.slane %v4176, 4
  %v4178 = vsel %vm751, %v4177, %v4176
  %4180 = vst.msk [vmem:[#allocation11 + $0x24] sm:$0xff] %vm4142, %v4178
  %v4181 = vld [vmem:[#allocation5 + $0xf] sm:$0xff]
  %v4182 = vpack.c.bf16 %v4181, %v4181
  %v4184 = vunpack.c.l.b16 %v4182
  %v4185 = vpack.c.b16 %v4184, %v4184
  %4186 = vrot.lane.b32.xlu0 %v4185, 32
  %v4187 = vpop.permute.xlu0 %4186
  %4189 = vst.msk [vmem:[#allocation11 + $0x28] sm:$0xf] %vm2380, %v4187
  %v4190 = vld [vmem:[#allocation5 + $0x10] sm:$0xff]
  %v4191 = vpack.c.bf16 %v4190, %v4190
  %4192 = vst.msk [vmem:[#allocation11 + $0x2c] sm:$0xf] %vm4118, %v4191
  %v4193 = vld [vmem:[#allocation11] sm:$0xff]
  %v4194 = vld [vmem:[#allocation11 + $0x8] sm:$0xff]
  %v4195 = vld [vmem:[#allocation11 + $0x20] sm:$0xff]
  %v4196 = vld [vmem:[#allocation11 + $0x28] sm:$0xff]
  %v4197 = vld [vmem:[%s5] sm:$0xf]
  %v4198 = vld [vmem:[%s5 + $0x4] sm:$0xf]
  %v4199 = vld [vmem:[%s5 + $0x8] sm:$0xf]
  %v4200 = vld [vmem:[%s5 + $0xc] sm:$0xf]
  %v4201 = vld [vmem:[%s5 + $0x10] sm:$0xf]
  %v4202 = vld [vmem:[%s5 + $0x14] sm:$0xf]
  %v4203 = vld [vmem:[%s5 + $0x18] sm:$0xf]
  %v4204 = vld [vmem:[%s5 + $0x1c] sm:$0xf]
  %v4205 = vld [vmem:[%s5 + $0x20] sm:$0xf]
  %v4206 = vld [vmem:[%s5 + $0x24] sm:$0xf]
  %v4207 = vld [vmem:[%s5 + $0x28] sm:$0xf]
  %v4208 = vld [vmem:[%s5 + $0x2c] sm:$0xf]
  %v4209 = vld [vmem:[%s5 + $0x30] sm:$0xf]
  %v4210 = vld [vmem:[%s5 + $0x34] sm:$0xf]
  %v4211 = vld [vmem:[%s5 + $0x38] sm:$0xf]
  %v4212 = vld [vmem:[%s5 + $0x3c] sm:$0xf]
  %v4213 = vld [vmem:[%s5 + $0x40] sm:$0xf]
  %v4214 = vld [vmem:[%s5 + $0x44] sm:$0xf]
  %v4215 = vld [vmem:[%s5 + $0x48] sm:$0xf]
  %v4216 = vld [vmem:[%s5 + $0x4c] sm:$0xf]
  %v4217 = vld [vmem:[%s5 + $0x50] sm:$0xf]
  %v4218 = vld [vmem:[%s5 + $0x54] sm:$0xf]
  %v4219 = vld [vmem:[%s5 + $0x58] sm:$0xf]
  %v4220 = vld [vmem:[%s5 + $0x5c] sm:$0xf]
  %v4221 = vld [vmem:[%s5 + $0x60] sm:$0xf]
  %v4222 = vld [vmem:[%s5 + $0x64] sm:$0xf]
  %v4223 = vld [vmem:[%s5 + $0x68] sm:$0xf]
  %v4224 = vld [vmem:[%s5 + $0x6c] sm:$0xf]
  %v4225 = vld [vmem:[%s5 + $0x70] sm:$0xf]
  %v4226 = vld [vmem:[%s5 + $0x74] sm:$0xf]
  %v4227 = vld [vmem:[%s5 + $0x78] sm:$0xf]
  %v4228 = vld [vmem:[%s5 + $0x7c] sm:$0xf]
  %v4229 = vld [vmem:[%s5 + $0x80] sm:$0xf]
  %v4230 = vld [vmem:[%s5 + $0x84] sm:$0xf]
  %v4231 = vld [vmem:[%s5 + $0x88] sm:$0xf]
  %v4232 = vld [vmem:[%s5 + $0x8c] sm:$0xf]
  %v4233 = vld [vmem:[%s5 + $0x90] sm:$0xf]
  %v4234 = vld [vmem:[%s5 + $0x94] sm:$0xf]
  %v4235 = vld [vmem:[%s5 + $0x98] sm:$0xf]
  %v4236 = vld [vmem:[%s5 + $0x9c] sm:$0xf]
  %v4237 = vld [vmem:[%s5 + $0xa0] sm:$0xf]
  %v4238 = vld [vmem:[%s5 + $0xa4] sm:$0xf]
  %v4239 = vld [vmem:[%s5 + $0xa8] sm:$0xf]
  %v4240 = vld [vmem:[%s5 + $0xac] sm:$0xf]
  %v4241 = vld [vmem:[%s5 + $0xb0] sm:$0xf]
  %v4242 = vld [vmem:[%s5 + $0xb4] sm:$0xf]
  %v4243 = vld [vmem:[%s5 + $0xb8] sm:$0xf]
  %v4244 = vld [vmem:[%s5 + $0xbc] sm:$0xf]
  %v4245 = vld [vmem:[%s5 + $0xc0] sm:$0xf]
  %v4246 = vld [vmem:[%s5 + $0xc4] sm:$0xf]
  %v4247 = vld [vmem:[%s5 + $0xc8] sm:$0xf]
  %v4248 = vld [vmem:[%s5 + $0xcc] sm:$0xf]
  %v4249 = vld [vmem:[%s5 + $0xd0] sm:$0xf]
  %v4250 = vld [vmem:[%s5 + $0xd4] sm:$0xf]
  %v4251 = vld [vmem:[%s5 + $0xd8] sm:$0xf]
  %v4252 = vld [vmem:[%s5 + $0xdc] sm:$0xf]
  %v4253 = vld [vmem:[%s5 + $0xe0] sm:$0xf]
  %v4254 = vld [vmem:[%s5 + $0xe4] sm:$0xf]
  %v4255 = vld [vmem:[%s5 + $0xe8] sm:$0xf]
  %v4256 = vld [vmem:[%s5 + $0xec] sm:$0xf]
  %v4257 = vld [vmem:[%s15] sm:$0x1]
  %v4259 = vlaneseq
  %v4260 = vshrl.u32 %v4259, 7
  %v4261 = vsub.s32 0, %v4260
  %v4262 = vrot.slane %v4257, %v4261
  %v4268 = vunpack.c.l.b16 %v4193
  %v4269 = vunpack.c.h.b16 %v4193
  %v4270 = vunpack.c.l.b16 %v4194
  %v4271 = vunpack.c.h.b16 %v4194
  %v4272 = vunpack.c.l.b16 %v4195
  %v4273 = vunpack.c.h.b16 %v4195
  %v4274 = vunpack.c.l.b16 %v4196
  %v4275 = vunpack.c.h.b16 %v4196
  %v4276 = vpack.c.b16 %v4272, %v4268
  %v4277 = vpack.c.b16 %v4273, %v4269
  %v4278 = vpack.c.b16 %v4274, %v4270
  %v4279 = vpack.c.b16 %v4275, %v4271
  %v4343 = vunpack.c.l.b16 %v4197
  %v4344 = vunpack.c.l.b16 %v4198
  %v4345 = vunpack.c.l.b16 %v4199
  %v4346 = vunpack.c.l.b16 %v4200
  %v4347 = vunpack.c.l.b16 %v4201
  %v4348 = vunpack.c.l.b16 %v4202
  %v4349 = vunpack.c.l.b16 %v4203
  %v4350 = vunpack.c.l.b16 %v4204
  %v4351 = vunpack.c.l.b16 %v4205
  %v4352 = vunpack.c.l.b16 %v4206
  %v4353 = vunpack.c.l.b16 %v4207
  %v4354 = vunpack.c.l.b16 %v4208
  %v4355 = vunpack.c.l.b16 %v4209
  %v4356 = vunpack.c.l.b16 %v4210
  %v4357 = vunpack.c.l.b16 %v4211
  %v4358 = vunpack.c.l.b16 %v4212
  %v4359 = vunpack.c.l.b16 %v4213
  %v4360 = vunpack.c.l.b16 %v4214
  %v4361 = vunpack.c.l.b16 %v4215
  %v4362 = vunpack.c.l.b16 %v4216
  %v4363 = vunpack.c.l.b16 %v4217
  %v4364 = vunpack.c.l.b16 %v4218
  %v4365 = vunpack.c.l.b16 %v4219
  %v4366 = vunpack.c.l.b16 %v4220
  %v4367 = vunpack.c.l.b16 %v4221
  %v4368 = vunpack.c.l.b16 %v4222
  %v4369 = vunpack.c.l.b16 %v4223
  %v4370 = vunpack.c.l.b16 %v4224
  %v4371 = vunpack.c.l.b16 %v4225
  %v4372 = vunpack.c.l.b16 %v4226
  %v4373 = vunpack.c.l.b16 %v4227
  %v4374 = vunpack.c.l.b16 %v4228
  %v4375 = vunpack.c.l.b16 %v4229
  %v4376 = vunpack.c.l.b16 %v4230
  %v4377 = vunpack.c.l.b16 %v4231
  %v4378 = vunpack.c.l.b16 %v4232
  %v4379 = vunpack.c.l.b16 %v4233
  %v4380 = vunpack.c.l.b16 %v4234
  %v4381 = vunpack.c.l.b16 %v4235
  %v4382 = vunpack.c.l.b16 %v4236
  %v4383 = vunpack.c.l.b16 %v4237
  %v4384 = vunpack.c.l.b16 %v4238
  %v4385 = vunpack.c.l.b16 %v4239
  %v4386 = vunpack.c.l.b16 %v4240
  %v4387 = vunpack.c.l.b16 %v4241
  %v4388 = vunpack.c.l.b16 %v4242
  %v4389 = vunpack.c.l.b16 %v4243
  %v4390 = vunpack.c.l.b16 %v4244
  %v4391 = vunpack.c.l.b16 %v4245
  %v4392 = vunpack.c.l.b16 %v4246
  %v4393 = vunpack.c.l.b16 %v4247
  %v4394 = vunpack.c.l.b16 %v4248
  %v4395 = vunpack.c.l.b16 %v4249
  %v4396 = vunpack.c.l.b16 %v4250
  %v4397 = vunpack.c.l.b16 %v4251
  %v4398 = vunpack.c.l.b16 %v4252
  %v4399 = vunpack.c.l.b16 %v4253
  %v4400 = vunpack.c.l.b16 %v4254
  %v4401 = vunpack.c.l.b16 %v4255
  %v4402 = vunpack.c.l.b16 %v4256
  %v4403 = vpack.c.b16 %v4344, %v4343
  %v4404 = vpack.c.b16 %v4346, %v4345
  %v4405 = vpack.c.b16 %v4348, %v4347
  %v4406 = vpack.c.b16 %v4350, %v4349
  %v4407 = vpack.c.b16 %v4352, %v4351
  %v4408 = vpack.c.b16 %v4354, %v4353
  %v4409 = vpack.c.b16 %v4356, %v4355
  %v4410 = vpack.c.b16 %v4358, %v4357
  %v4411 = vpack.c.b16 %v4360, %v4359
  %v4412 = vpack.c.b16 %v4362, %v4361
  %v4413 = vpack.c.b16 %v4364, %v4363
  %v4414 = vpack.c.b16 %v4366, %v4365
  %v4415 = vpack.c.b16 %v4368, %v4367
  %v4416 = vpack.c.b16 %v4370, %v4369
  %v4417 = vpack.c.b16 %v4372, %v4371
  %v4418 = vpack.c.b16 %v4374, %v4373
  %v4419 = vpack.c.b16 %v4376, %v4375
  %v4420 = vpack.c.b16 %v4378, %v4377
  %v4421 = vpack.c.b16 %v4380, %v4379
  %v4422 = vpack.c.b16 %v4382, %v4381
  %v4423 = vpack.c.b16 %v4384, %v4383
  %v4424 = vpack.c.b16 %v4386, %v4385
  %v4425 = vpack.c.b16 %v4388, %v4387
  %v4426 = vpack.c.b16 %v4390, %v4389
  %v4427 = vpack.c.b16 %v4392, %v4391
  %v4428 = vpack.c.b16 %v4394, %v4393
  %v4429 = vpack.c.b16 %v4396, %v4395
  %v4430 = vpack.c.b16 %v4398, %v4397
  %v4431 = vpack.c.b16 %v4400, %v4399
  %v4432 = vpack.c.b16 %v4402, %v4401
  %v4464 = vsel %vm4112, %v4279, 0
  %4466 = vmatprep.subr.bf16.mxu0 0
  %4467 = vmatpush1.bf16.msra.mxu0 %v4403
  %4468 = vmatprep.subr.bf16.mxu0 0
  %4469 = vmatpush1.bf16.msra.mxu0 %v4404
  %4470 = vmatprep.subr.bf16.mxu0 0
  %4471 = vmatpush1.bf16.msra.mxu0 %v4405
  %4472 = vmatprep.subr.bf16.mxu0 0
  %4473 = vmatpush1.bf16.msra.mxu0 %v4406
  %4474 = vmatprep.subr.bf16.mxu0 0
  %4475 = vmatpush1.bf16.msra.mxu0 %v4407
  %4476 = vmatprep.subr.bf16.mxu0 0
  %4477 = vmatpush1.bf16.msra.mxu0 %v4408
  %4478 = vmatprep.subr.bf16.mxu0 0
  %4479 = vmatpush1.bf16.msra.mxu0 %v4409
  %4480 = vmatprep.subr.bf16.mxu0 0
  %4481 = vmatpush1.bf16.msra.mxu0 %v4410
  %4482 = vmatprep.subr.bf16.mxu0 0
  %4483 = vmatpush1.bf16.msra.mxu0 %v4411
  %4484 = vmatprep.subr.bf16.mxu0 0
  %4485 = vmatpush1.bf16.msra.mxu0 %v4412
  %4486 = vmatprep.subr.bf16.mxu0 0
  %4487 = vmatpush1.bf16.msra.mxu0 %v4413
  %4488 = vmatprep.subr.bf16.mxu0 0
  %4489 = vmatpush1.bf16.msra.mxu0 %v4414
  %4490 = vmatprep.subr.bf16.mxu0 0
  %4491 = vmatpush1.bf16.msra.mxu0 %v4415
  %4492 = vmatprep.subr.bf16.mxu0 0
  %4493 = vmatpush1.bf16.msra.mxu0 %v4416
  %4494 = vmatprep.subr.bf16.mxu0 0
  %4495 = vmatpush1.bf16.msra.mxu0 %v4417
  %4496 = vmatprep.subr.bf16.mxu0 0
  %4497 = vmatpush1.bf16.msra.mxu0 %v4418
  %4498 = vmatprep.mubr.bf16.mxu0 %v4277
  %4499 = vmatmul.mubr.bf16.gmra.mrb[0].mxu0 %v4276
  %v4500 = vpop.f32.mrb[0].mxu0
  %v4501 = vadd.f32 %v4262, %v4500
  %v4502 = vpop.f32.mrb[0].mxu0
  %v4503 = vpop.f32.mrb[0].mxu0
  %v4504 = vadd.f32 %v4262, %v4503
  %v4505 = vpop.f32.mrb[0].mxu0
  %4506 = vdwg.mxu0
  %4507 = vmatprep.subr.bf16.mxu0 0
  %4508 = vmatpush1.bf16.msra.mxu0 %v4419
  %4509 = vmatprep.subr.bf16.mxu0 0
  %4510 = vmatpush1.bf16.msra.mxu0 %v4420
  %4511 = vmatprep.subr.bf16.mxu0 0
  %4512 = vmatpush1.bf16.msra.mxu0 %v4421
  %4513 = vmatprep.subr.bf16.mxu0 0
  %4514 = vmatpush1.bf16.msra.mxu0 %v4422
  %4515 = vmatprep.subr.bf16.mxu0 0
  %4516 = vmatpush1.bf16.msra.mxu0 %v4423
  %4517 = vmatprep.subr.bf16.mxu0 0
  %4518 = vmatpush1.bf16.msra.mxu0 %v4424
  %4519 = vmatprep.subr.bf16.mxu0 0
  %4520 = vmatpush1.bf16.msra.mxu0 %v4425
  %4521 = vmatprep.subr.bf16.mxu0 0
  %4522 = vmatpush1.bf16.msra.mxu0 %v4426
  %4523 = vmatprep.subr.bf16.mxu0 0
  %4524 = vmatpush1.bf16.msra.mxu0 %v4427
  %4525 = vmatprep.subr.bf16.mxu0 0
  %4526 = vmatpush1.bf16.msra.mxu0 %v4428
  %4527 = vmatprep.subr.bf16.mxu0 0
  %4528 = vmatpush1.bf16.msra.mxu0 %v4429
  %4529 = vmatprep.subr.bf16.mxu0 0
  %4530 = vmatpush1.bf16.msra.mxu0 %v4430
  %4531 = vmatprep.subr.bf16.mxu0 0
  %4532 = vmatpush1.bf16.msra.mxu0 %v4431
  %4533 = vmatprep.subr.bf16.mxu0 0
  %4534 = vmatpush1.bf16.msra.mxu0 %v4432
  %4535 = vmatprep.subr.bf16.mxu0 0
  %4536 = vmatpush1.bf16.msra.mxu0 0
  %4537 = vmatprep.subr.bf16.mxu0 0
  %4538 = vmatpush1.bf16.msra.mxu0 0
  %4539 = vmatprep.mubr.bf16.mxu0 %v4464
  %4540 = vmatmul.mubr.bf16.gmra.mrb[0].mxu0 %v4278
  %v4541 = vpop.f32.mrb[0].mxu0
  %v4542 = vadd.f32 %v4501, %v4541
  %v4543 = vpop.f32.mrb[0].mxu0
  %v4544 = vpop.f32.mrb[0].mxu0
  %v4545 = vadd.f32 %v4504, %v4544
  %v4546 = vpop.f32.mrb[0].mxu0
  %4547 = vdwg.mxu0
  %v4548 = vmax.f32 %v4542, 0.0
  %v4549 = vmax.f32 %v4545, 0.0
  %4550 = vst.msk [vmem:[#allocation6 + $0x4] sm:$0xff] %vm640, %v4548
  %4551 = vst.msk [vmem:[#allocation6 + $0x14] sm:$0xff] %vm640, %v4549
  %v4552 = vld [vmem:[#allocation5] sm:$0xff]
  %v4553 = vld [vmem:[#allocation5 + $0x8] sm:$0xff]
  %v4554 = vld [vmem:[#allocation5 + $0x10] sm:$0xff]
  %v4555 = vld [vmem:[#allocation6] sm:$0xff]
  %v4556 = vld [vmem:[#allocation6 + $0x8] sm:$0xf]
  %v4557 = vpack.c.bf16 %v4556, %v4555
  %v4559 = vunpack.c.l.b16 %v4557
  %v4560 = vunpack.c.h.b16 %v4557
  %v4561 = vpack.c.b16 %v4559, %v4559
  %v4562 = vpack.c.b16 %v4560, %v4560
  %vm4565 = vcmask 519168
  %4566 = vst.msk [vmem:[#allocation11] sm:$0xf] %vm4565, %v4561
  %vm4567 = vcmask 517120
  %4568 = vst.msk [vmem:[#allocation11 + $0x20] sm:$0x3] %vm4567, %v4562
  %v4569 = vld [vmem:[#allocation6 + $0x1] sm:$0xff]
  %v4570 = vld [vmem:[#allocation6 + $0x9] sm:$0xf]
  %v4571 = vpack.c.bf16 %v4570, %v4569
  %v4573 = vunpack.c.l.b16 %v4571
  %v4574 = vunpack.c.h.b16 %v4571
  %v4575 = vpack.c.b16 %v4573, %v4573
  %v4576 = vpack.c.b16 %v4574, %v4574
  %4577 = vrot.lane.b32.xlu0 %v4575, 64
  %v4578 = vpop.permute.xlu0 %4577
  %4579 = vrot.lane.b32.xlu0 %v4576, 64
  %v4580 = vpop.permute.xlu0 %4579
  %4583 = vst.msk [vmem:[#allocation11] sm:$0xf] %vm758, %v4578
  %4584 = vst.msk [vmem:[#allocation11 + $0x20] sm:$0x3] %vm763, %v4580
  %v4585 = vld [vmem:[#allocation6 + $0x2] sm:$0xff]
  %v4586 = vld [vmem:[#allocation6 + $0xa] sm:$0xf]
  %v4587 = vpack.c.bf16 %v4586, %v4585
  %v4589 = vunpack.c.l.b16 %v4587
  %v4590 = vunpack.c.h.b16 %v4587
  %v4591 = vpack.c.b16 %v4589, %v4589
  %v4592 = vpack.c.b16 %v4590, %v4590
  %4595 = vst.msk [vmem:[#allocation11 + $0x4] sm:$0xf] %vm4565, %v4591
  %4596 = vst.msk [vmem:[#allocation11 + $0x24] sm:$0x3] %vm4567, %v4592
  %v4597 = vld [vmem:[#allocation6 + $0x3] sm:$0xff]
  %v4598 = vld [vmem:[#allocation6 + $0xb] sm:$0xf]
  %v4599 = vpack.c.bf16 %v4598, %v4597
  %v4601 = vunpack.c.l.b16 %v4599
  %v4602 = vunpack.c.h.b16 %v4599
  %v4603 = vpack.c.b16 %v4601, %v4601
  %v4604 = vpack.c.b16 %v4602, %v4602
  %4605 = vrot.lane.b32.xlu0 %v4603, 64
  %v4606 = vpop.permute.xlu0 %4605
  %4607 = vrot.lane.b32.xlu0 %v4604, 64
  %v4608 = vpop.permute.xlu0 %4607
  %4611 = vst.msk [vmem:[#allocation11 + $0x4] sm:$0xf] %vm758, %v4606
  %4612 = vst.msk [vmem:[#allocation11 + $0x24] sm:$0x3] %vm763, %v4608
  %v4613 = vld [vmem:[#allocation6 + $0x4] sm:$0xff]
  %v4614 = vld [vmem:[#allocation6 + $0xc] sm:$0xf]
  %v4615 = vpack.c.bf16 %v4614, %v4613
  %v4617 = vunpack.c.l.b16 %v4615
  %v4618 = vunpack.c.h.b16 %v4615
  %v4619 = vpack.c.b16 %v4617, %v4617
  %v4620 = vpack.c.b16 %v4618, %v4618
  %4623 = vst.msk [vmem:[#allocation11 + $0x8] sm:$0xf] %vm4565, %v4619
  %4624 = vst.msk [vmem:[#allocation11 + $0x28] sm:$0x3] %vm4567, %v4620
  %v4625 = vld [vmem:[#allocation6 + $0x10] sm:$0xff]
  %v4626 = vld [vmem:[#allocation6 + $0x18] sm:$0xf]
  %v4627 = vpack.c.bf16 %v4626, %v4625
  %v4629 = vunpack.c.l.b16 %v4627
  %v4630 = vunpack.c.h.b16 %v4627
  %v4631 = vpack.c.b16 %v4629, %v4629
  %v4632 = vpack.c.b16 %v4630, %v4630
  %v4633 = vrot.slane %v4631, 6
  %v4634 = vrot.slane %v4633, 4
  %v4635 = vrot.slane %v4632, 6
  %v4636 = vsel %vm905, %v4634, %v4635
  %vm4639 = vcmask 519170
  %4640 = vst.msk [vmem:[#allocation11 + $0x20] sm:$0xc] %vm4639, %v4633
  %4641 = vst.msk [vmem:[#allocation11 + $0x40] sm:$0xf] %vm4565, %v4636
  %v4642 = vld [vmem:[#allocation6 + $0x11] sm:$0xff]
  %v4643 = vld [vmem:[#allocation6 + $0x19] sm:$0xf]
  %v4644 = vpack.c.bf16 %v4643, %v4642
  %v4646 = vunpack.c.l.b16 %v4644
  %v4647 = vunpack.c.h.b16 %v4644
  %v4648 = vpack.c.b16 %v4646, %v4646
  %v4649 = vpack.c.b16 %v4647, %v4647
  %v4650 = vrot.slane %v4648, 6
  %v4651 = vrot.slane %v4650, 4
  %v4652 = vrot.slane %v4649, 6
  %v4653 = vsel %vm905, %v4651, %v4652
  %4654 = vrot.lane.b32.xlu0 %v4650, 64
  %v4655 = vpop.permute.xlu0 %4654
  %4656 = vrot.lane.b32.xlu0 %v4653, 64
  %v4657 = vpop.permute.xlu0 %4656
  %4660 = vst.msk [vmem:[#allocation11 + $0x20] sm:$0xc] %vm1028, %v4655
  %4661 = vst.msk [vmem:[#allocation11 + $0x40] sm:$0xf] %vm758, %v4657
  %v4662 = vld [vmem:[#allocation6 + $0x12] sm:$0xff]
  %v4663 = vld [vmem:[#allocation6 + $0x1a] sm:$0xf]
  %v4664 = vpack.c.bf16 %v4663, %v4662
  %v4666 = vunpack.c.l.b16 %v4664
  %v4667 = vunpack.c.h.b16 %v4664
  %v4668 = vpack.c.b16 %v4666, %v4666
  %v4669 = vpack.c.b16 %v4667, %v4667
  %v4670 = vrot.slane %v4668, 6
  %v4671 = vrot.slane %v4670, 4
  %v4672 = vrot.slane %v4669, 6
  %v4673 = vsel %vm905, %v4671, %v4672
  %4676 = vst.msk [vmem:[#allocation11 + $0x24] sm:$0xc] %vm4639, %v4670
  %4677 = vst.msk [vmem:[#allocation11 + $0x44] sm:$0xf] %vm4565, %v4673
  %v4678 = vld [vmem:[#allocation6 + $0x13] sm:$0xff]
  %v4679 = vld [vmem:[#allocation6 + $0x1b] sm:$0xf]
  %v4680 = vpack.c.bf16 %v4679, %v4678
  %v4682 = vunpack.c.l.b16 %v4680
  %v4683 = vunpack.c.h.b16 %v4680
  %v4684 = vpack.c.b16 %v4682, %v4682
  %v4685 = vpack.c.b16 %v4683, %v4683
  %v4686 = vrot.slane %v4684, 6
  %v4687 = vrot.slane %v4686, 4
  %v4688 = vrot.slane %v4685, 6
  %v4689 = vsel %vm905, %v4687, %v4688
  %4690 = vrot.lane.b32.xlu0 %v4686, 64
  %v4691 = vpop.permute.xlu0 %4690
  %4692 = vrot.lane.b32.xlu0 %v4689, 64
  %v4693 = vpop.permute.xlu0 %4692
  %4696 = vst.msk [vmem:[#allocation11 + $0x24] sm:$0xc] %vm1028, %v4691
  %4697 = vst.msk [vmem:[#allocation11 + $0x44] sm:$0xf] %vm758, %v4693
  %v4698 = vld [vmem:[#allocation6 + $0x14] sm:$0xff]
  %v4699 = vld [vmem:[#allocation6 + $0x1c] sm:$0xf]
  %v4700 = vpack.c.bf16 %v4699, %v4698
  %v4702 = vunpack.c.l.b16 %v4700
  %v4703 = vunpack.c.h.b16 %v4700
  %v4704 = vpack.c.b16 %v4702, %v4702
  %v4705 = vpack.c.b16 %v4703, %v4703
  %v4706 = vrot.slane %v4704, 6
  %v4707 = vrot.slane %v4706, 4
  %v4708 = vrot.slane %v4705, 6
  %v4709 = vsel %vm905, %v4707, %v4708
  %4712 = vst.msk [vmem:[#allocation11 + $0x28] sm:$0xc] %vm4639, %v4706
  %4713 = vst.msk [vmem:[#allocation11 + $0x48] sm:$0xf] %vm4565, %v4709
  %v4714 = vld [vmem:[#allocation11] sm:$0xff]
  %v4715 = vld [vmem:[#allocation11 + $0x8] sm:$0xf]
  %v4716 = vld [vmem:[#allocation11 + $0x20] sm:$0xff]
  %v4717 = vld [vmem:[#allocation11 + $0x28] sm:$0xf]
  %v4718 = vld [vmem:[#allocation11 + $0x40] sm:$0xff]
  %v4719 = vld [vmem:[#allocation11 + $0x48] sm:$0xf]
  %v4720 = vld [vmem:[%s6] sm:$0xf]
  %v4721 = vld [vmem:[%s6 + $0x4] sm:$0xf]
  %v4722 = vld [vmem:[%s6 + $0x8] sm:$0xf]
  %v4723 = vld [vmem:[%s6 + $0xc] sm:$0xf]
  %v4724 = vld [vmem:[%s6 + $0x10] sm:$0xf]
  %v4725 = vld [vmem:[%s6 + $0x14] sm:$0xf]
  %v4726 = vld [vmem:[%s6 + $0x18] sm:$0xf]
  %v4727 = vld [vmem:[%s6 + $0x1c] sm:$0xf]
  %v4728 = vld [vmem:[%s6 + $0x20] sm:$0xf]
  %v4729 = vld [vmem:[%s6 + $0x24] sm:$0xf]
  %v4730 = vld [vmem:[%s6 + $0x28] sm:$0xf]
  %v4731 = vld [vmem:[%s6 + $0x2c] sm:$0xf]
  %v4732 = vld [vmem:[%s6 + $0x30] sm:$0xf]
  %v4733 = vld [vmem:[%s6 + $0x34] sm:$0xf]
  %v4734 = vld [vmem:[%s6 + $0x38] sm:$0xf]
  %v4735 = vld [vmem:[%s6 + $0x3c] sm:$0xf]
  %v4736 = vld [vmem:[%s6 + $0x40] sm:$0xf]
  %v4737 = vld [vmem:[%s6 + $0x44] sm:$0xf]
  %v4738 = vld [vmem:[%s6 + $0x48] sm:$0xf]
  %v4739 = vld [vmem:[%s6 + $0x4c] sm:$0xf]
  %v4740 = vld [vmem:[%s6 + $0x50] sm:$0xf]
  %v4741 = vld [vmem:[%s6 + $0x54] sm:$0xf]
  %v4742 = vld [vmem:[%s6 + $0x58] sm:$0xf]
  %v4743 = vld [vmem:[%s6 + $0x5c] sm:$0xf]
  %v4744 = vld [vmem:[%s6 + $0x60] sm:$0xf]
  %v4745 = vld [vmem:[%s6 + $0x64] sm:$0xf]
  %v4746 = vld [vmem:[%s6 + $0x68] sm:$0xf]
  %v4747 = vld [vmem:[%s6 + $0x6c] sm:$0xf]
  %v4748 = vld [vmem:[%s6 + $0x70] sm:$0xf]
  %v4749 = vld [vmem:[%s6 + $0x74] sm:$0xf]
  %v4750 = vld [vmem:[%s6 + $0x78] sm:$0xf]
  %v4751 = vld [vmem:[%s6 + $0x7c] sm:$0xf]
  %v4752 = vld [vmem:[%s6 + $0x80] sm:$0xf]
  %v4753 = vld [vmem:[%s6 + $0x84] sm:$0xf]
  %v4754 = vld [vmem:[%s6 + $0x88] sm:$0xf]
  %v4755 = vld [vmem:[%s6 + $0x8c] sm:$0xf]
  %v4756 = vld [vmem:[%s6 + $0x90] sm:$0xf]
  %v4757 = vld [vmem:[%s6 + $0x94] sm:$0xf]
  %v4758 = vld [vmem:[%s6 + $0x98] sm:$0xf]
  %v4759 = vld [vmem:[%s6 + $0x9c] sm:$0xf]
  %v4760 = vld [vmem:[%s16] sm:$0x1]
  %v4762 = vlaneseq
  %v4763 = vshrl.u32 %v4762, 7
  %v4764 = vsub.s32 0, %v4763
  %v4765 = vrot.slane %v4760, %v4764
  %v4773 = vunpack.c.l.b16 %v4714
  %v4774 = vunpack.c.h.b16 %v4714
  %v4775 = vunpack.c.l.b16 %v4715
  %v4776 = vunpack.c.l.b16 %v4716
  %v4777 = vunpack.c.h.b16 %v4716
  %v4778 = vunpack.c.l.b16 %v4717
  %v4779 = vunpack.c.l.b16 %v4718
  %v4780 = vunpack.c.h.b16 %v4718
  %v4781 = vunpack.c.l.b16 %v4719
  %v4782 = vpack.c.b16 %v4776, %v4773
  %v4783 = vpack.c.b16 %v4777, %v4774
  %v4784 = vpack.c.b16 %v4778, %v4775
  %v4785 = vpack.c.b16 %v4779, %v4779
  %v4786 = vpack.c.b16 %v4780, %v4780
  %v4787 = vpack.c.b16 %v4781, %v4781
  %v4832 = vunpack.c.l.b16 %v4720
  %v4833 = vunpack.c.l.b16 %v4721
  %v4834 = vunpack.c.l.b16 %v4722
  %v4835 = vunpack.c.l.b16 %v4723
  %v4836 = vunpack.c.l.b16 %v4724
  %v4837 = vunpack.c.l.b16 %v4725
  %v4838 = vunpack.c.l.b16 %v4726
  %v4839 = vunpack.c.l.b16 %v4727
  %v4840 = vunpack.c.l.b16 %v4728
  %v4841 = vunpack.c.l.b16 %v4729
  %v4842 = vunpack.c.l.b16 %v4730
  %v4843 = vunpack.c.l.b16 %v4731
  %v4844 = vunpack.c.l.b16 %v4732
  %v4845 = vunpack.c.l.b16 %v4733
  %v4846 = vunpack.c.l.b16 %v4734
  %v4847 = vunpack.c.l.b16 %v4735
  %v4848 = vunpack.c.l.b16 %v4736
  %v4849 = vunpack.c.l.b16 %v4737
  %v4850 = vunpack.c.l.b16 %v4738
  %v4851 = vunpack.c.l.b16 %v4739
  %v4852 = vunpack.c.l.b16 %v4740
  %v4853 = vunpack.c.l.b16 %v4741
  %v4854 = vunpack.c.l.b16 %v4742
  %v4855 = vunpack.c.l.b16 %v4743
  %v4856 = vunpack.c.l.b16 %v4744
  %v4857 = vunpack.c.l.b16 %v4745
  %v4858 = vunpack.c.l.b16 %v4746
  %v4859 = vunpack.c.l.b16 %v4747
  %v4860 = vunpack.c.l.b16 %v4748
  %v4861 = vunpack.c.l.b16 %v4749
  %v4862 = vunpack.c.l.b16 %v4750
  %v4863 = vunpack.c.l.b16 %v4751
  %v4864 = vunpack.c.l.b16 %v4752
  %v4865 = vunpack.c.l.b16 %v4753
  %v4866 = vunpack.c.l.b16 %v4754
  %v4867 = vunpack.c.l.b16 %v4755
  %v4868 = vunpack.c.l.b16 %v4756
  %v4869 = vunpack.c.l.b16 %v4757
  %v4870 = vunpack.c.l.b16 %v4758
  %v4871 = vunpack.c.l.b16 %v4759
  %v4872 = vpack.c.b16 %v4833, %v4832
  %v4873 = vpack.c.b16 %v4835, %v4834
  %v4874 = vpack.c.b16 %v4837, %v4836
  %v4875 = vpack.c.b16 %v4839, %v4838
  %v4876 = vpack.c.b16 %v4841, %v4840
  %v4877 = vpack.c.b16 %v4843, %v4842
  %v4878 = vpack.c.b16 %v4845, %v4844
  %v4879 = vpack.c.b16 %v4847, %v4846
  %v4880 = vpack.c.b16 %v4849, %v4848
  %v4881 = vpack.c.b16 %v4851, %v4850
  %v4882 = vpack.c.b16 %v4853, %v4852
  %v4883 = vpack.c.b16 %v4855, %v4854
  %v4884 = vpack.c.b16 %v4857, %v4856
  %v4885 = vpack.c.b16 %v4859, %v4858
  %v4886 = vpack.c.b16 %v4861, %v4860
  %v4887 = vpack.c.b16 %v4863, %v4862
  %v4888 = vpack.c.b16 %v4865, %v4864
  %v4889 = vpack.c.b16 %v4867, %v4866
  %v4890 = vpack.c.b16 %v4869, %v4868
  %v4891 = vpack.c.b16 %v4871, %v4870
  %v4913 = vsel %vm640, %v4784, 0
  %v4916 = vsel %vm640, %v4787, 0
  %4918 = vmatprep.subr.bf16.mxu0 0
  %4919 = vmatpush1.bf16.msra.mxu0 %v4872
  %4920 = vmatprep.subr.bf16.mxu0 0
  %4921 = vmatpush1.bf16.msra.mxu0 %v4873
  %4922 = vmatprep.subr.bf16.mxu0 0
  %4923 = vmatpush1.bf16.msra.mxu0 %v4874
  %4924 = vmatprep.subr.bf16.mxu0 0
  %4925 = vmatpush1.bf16.msra.mxu0 %v4875
  %4926 = vmatprep.subr.bf16.mxu0 0
  %4927 = vmatpush1.bf16.msra.mxu0 %v4876
  %4928 = vmatprep.subr.bf16.mxu0 0
  %4929 = vmatpush1.bf16.msra.mxu0 %v4877
  %4930 = vmatprep.subr.bf16.mxu0 0
  %4931 = vmatpush1.bf16.msra.mxu0 %v4878
  %4932 = vmatprep.subr.bf16.mxu0 0
  %4933 = vmatpush1.bf16.msra.mxu0 %v4879
  %4934 = vmatprep.subr.bf16.mxu0 0
  %4935 = vmatpush1.bf16.msra.mxu0 %v4880
  %4936 = vmatprep.subr.bf16.mxu0 0
  %4937 = vmatpush1.bf16.msra.mxu0 %v4881
  %4938 = vmatprep.subr.bf16.mxu0 0
  %4939 = vmatpush1.bf16.msra.mxu0 %v4882
  %4940 = vmatprep.subr.bf16.mxu0 0
  %4941 = vmatpush1.bf16.msra.mxu0 %v4883
  %4942 = vmatprep.subr.bf16.mxu0 0
  %4943 = vmatpush1.bf16.msra.mxu0 %v4884
  %4944 = vmatprep.subr.bf16.mxu0 0
  %4945 = vmatpush1.bf16.msra.mxu0 %v4885
  %4946 = vmatprep.subr.bf16.mxu0 0
  %4947 = vmatpush1.bf16.msra.mxu0 %v4886
  %4948 = vmatprep.subr.bf16.mxu0 0
  %4949 = vmatpush1.bf16.msra.mxu0 %v4887
  %4950 = vmatprep.mubr.bf16.mxu0 %v4783
  %4951 = vmatmul.mubr.bf16.gmra.mrb[0].mxu0 %v4782
  %v4952 = vpop.f32.mrb[0].mxu0
  %v4953 = vadd.f32 %v4765, %v4952
  %v4954 = vpop.f32.mrb[0].mxu0
  %v4955 = vpop.f32.mrb[0].mxu0
  %v4956 = vadd.f32 %v4765, %v4955
  %v4957 = vpop.f32.mrb[0].mxu0
  %4958 = vmatprep.mubr.bf16.mxu0 %v4786
  %4959 = vmatmul.mubr.bf16.gmra.mrb[0].mxu0 %v4785
  %v4960 = vpop.f32.mrb[0].mxu0
  %v4961 = vadd.f32 %v4765, %v4960
  %v4962 = vpop.f32.mrb[0].mxu0
  %v4963 = vpop.f32.mrb[0].mxu0
  %v4964 = vpop.f32.mrb[0].mxu0
  %4965 = vdwg.mxu0
  %4966 = vmatprep.subr.bf16.mxu0 0
  %4967 = vmatpush1.bf16.msra.mxu0 %v4888
  %4968 = vmatprep.subr.bf16.mxu0 0
  %4969 = vmatpush1.bf16.msra.mxu0 %v4889
  %4970 = vmatprep.subr.bf16.mxu0 0
  %4971 = vmatpush1.bf16.msra.mxu0 %v4890
  %4972 = vmatprep.subr.bf16.mxu0 0
  %4973 = vmatpush1.bf16.msra.mxu0 %v4891
  %4974 = vmatprep.subr.bf16.mxu0 0
  %4975 = vmatpush1.bf16.msra.mxu0 0
  %4976 = vmatprep.subr.bf16.mxu0 0
  %4977 = vmatpush1.bf16.msra.mxu0 0
  %4978 = vmatprep.subr.bf16.mxu0 0
  %4979 = vmatpush1.bf16.msra.mxu0 0
  %4980 = vmatprep.subr.bf16.mxu0 0
  %4981 = vmatpush1.bf16.msra.mxu0 0
  %4982 = vmatprep.subr.bf16.mxu0 0
  %4983 = vmatpush1.bf16.msra.mxu0 0
  %4984 = vmatprep.subr.bf16.mxu0 0
  %4985 = vmatpush1.bf16.msra.mxu0 0
  %4986 = vmatprep.subr.bf16.mxu0 0
  %4987 = vmatpush1.bf16.msra.mxu0 0
  %4988 = vmatprep.subr.bf16.mxu0 0
  %4989 = vmatpush1.bf16.msra.mxu0 0
  %4990 = vmatprep.subr.bf16.mxu0 0
  %4991 = vmatpush1.bf16.msra.mxu0 0
  %4992 = vmatprep.subr.bf16.mxu0 0
  %4993 = vmatpush1.bf16.msra.mxu0 0
  %4994 = vmatprep.subr.bf16.mxu0 0
  %4995 = vmatpush1.bf16.msra.mxu0 0
  %4996 = vmatprep.subr.bf16.mxu0 0
  %4997 = vmatpush1.bf16.msra.mxu0 0
  %4998 = vmatprep.mubr.bf16.mxu0 0
  %4999 = vmatmul.mubr.bf16.gmra.mrb[0].mxu0 %v4913
  %v5000 = vpop.f32.mrb[0].mxu0
  %v5001 = vadd.f32 %v4953, %v5000
  %v5002 = vpop.f32.mrb[0].mxu0
  %v5003 = vpop.f32.mrb[0].mxu0
  %v5004 = vadd.f32 %v4956, %v5003
  %v5005 = vpop.f32.mrb[0].mxu0
  %5006 = vmatprep.mubr.bf16.mxu0 0
  %5007 = vmatmul.mubr.bf16.gmra.mrb[0].mxu0 %v4916
  %v5008 = vpop.f32.mrb[0].mxu0
  %v5009 = vadd.f32 %v4961, %v5008
  %v5010 = vpop.f32.mrb[0].mxu0
  %v5011 = vpop.f32.mrb[0].mxu0
  %v5012 = vpop.f32.mrb[0].mxu0
  %5013 = vdwg.mxu0
  %v5014 = vadd.f32 %v5001, %v4552
  %v5015 = vadd.f32 %v5004, %v4553
  %v5016 = vadd.f32 %v5009, %v4554
  %v5017 = vmax.f32 %v5014, 0.0
  %v5018 = vmax.f32 %v5015, 0.0
  %v5019 = vmax.f32 %v5016, 0.0
  %5020 = vst.msk [vmem:[#allocation7 + $0x4] sm:$0xff] %vm4112, %v5017
  %5021 = vst.msk [vmem:[#allocation7 + $0xc] sm:$0xf] %vm4118, %v5018
  %5022 = vst.msk [vmem:[#allocation7 + $0x14] sm:$0xf0] %vm2424, %v5018
  %5023 = vst.msk [vmem:[#allocation7 + $0x1c] sm:$0xff] %vm4112, %v5019
  %v5024 = vld [vmem:[#allocation7] sm:$0xff]
  %v5025 = vld [vmem:[#allocation7 + $0x8] sm:$0xff]
  %v5026 = vpack.c.bf16 %v5025, %v5024
  %v5028 = vunpack.c.l.b16 %v5026
  %v5029 = vunpack.c.h.b16 %v5026
  %v5030 = vpack.c.b16 %v5028, %v5028
  %v5031 = vpack.c.b16 %v5029, %v5029
  %5034 = vst.msk [vmem:[#allocation11] sm:$0xf] %vm4118, %v5030
  %5035 = vst.msk [vmem:[#allocation11 + $0x20] sm:$0xf] %vm4118, %v5031
  %v5036 = vld [vmem:[#allocation7 + $0x1] sm:$0xff]
  %v5037 = vld [vmem:[#allocation7 + $0x9] sm:$0xff]
  %v5038 = vpack.c.bf16 %v5037, %v5036
  %v5040 = vunpack.c.l.b16 %v5038
  %v5041 = vunpack.c.h.b16 %v5038
  %v5042 = vpack.c.b16 %v5040, %v5040
  %v5043 = vpack.c.b16 %v5041, %v5041
  %5044 = vrot.lane.b32.xlu0 %v5042, 96
  %v5045 = vpop.permute.xlu0 %5044
  %5046 = vrot.lane.b32.xlu0 %v5043, 96
  %v5047 = vpop.permute.xlu0 %5046
  %v5048 = vrot.slane %v5045, 4
  %v5049 = vrot.slane %v5047, 4
  %v5050 = vsel %vm2485, %v5048, %v5045
  %v5051 = vsel %vm2485, %v5049, %v5047
  %5054 = vst.msk [vmem:[#allocation11] sm:$0xff] %vm4130, %v5050
  %5055 = vst.msk [vmem:[#allocation11 + $0x20] sm:$0xff] %vm4130, %v5051
  %v5056 = vld [vmem:[#allocation7 + $0x2] sm:$0xff]
  %v5057 = vld [vmem:[#allocation7 + $0xa] sm:$0xff]
  %v5058 = vpack.c.bf16 %v5057, %v5056
  %v5060 = vunpack.c.l.b16 %v5058
  %v5061 = vunpack.c.h.b16 %v5058
  %v5062 = vpack.c.b16 %v5060, %v5060
  %v5063 = vpack.c.b16 %v5061, %v5061
  %5064 = vrot.lane.b32.xlu0 %v5062, 64
  %v5065 = vpop.permute.xlu0 %5064
  %5066 = vrot.lane.b32.xlu0 %v5063, 64
  %v5067 = vpop.permute.xlu0 %5066
  %v5068 = vrot.slane %v5065, 4
  %v5069 = vrot.slane %v5067, 4
  %v5070 = vsel %vm751, %v5068, %v5065
  %v5071 = vsel %vm751, %v5069, %v5067
  %5074 = vst.msk [vmem:[#allocation11 + $0x4] sm:$0xff] %vm4142, %v5070
  %5075 = vst.msk [vmem:[#allocation11 + $0x24] sm:$0xff] %vm4142, %v5071
  %v5076 = vld [vmem:[#allocation7 + $0x3] sm:$0xff]
  %v5077 = vld [vmem:[#allocation7 + $0xb] sm:$0xff]
  %v5078 = vpack.c.bf16 %v5077, %v5076
  %v5080 = vunpack.c.l.b16 %v5078
  %v5081 = vunpack.c.h.b16 %v5078
  %v5082 = vpack.c.b16 %v5080, %v5080
  %v5083 = vpack.c.b16 %v5081, %v5081
  %5084 = vrot.lane.b32.xlu0 %v5082, 32
  %v5085 = vpop.permute.xlu0 %5084
  %5086 = vrot.lane.b32.xlu0 %v5083, 32
  %v5087 = vpop.permute.xlu0 %5086
  %5090 = vst.msk [vmem:[#allocation11 + $0x8] sm:$0xf] %vm2380, %v5085
  %5091 = vst.msk [vmem:[#allocation11 + $0x28] sm:$0xf] %vm2380, %v5087
  %v5092 = vld [vmem:[#allocation7 + $0x4] sm:$0xff]
  %v5093 = vld [vmem:[#allocation7 + $0xc] sm:$0xff]
  %v5094 = vpack.c.bf16 %v5093, %v5092
  %v5096 = vunpack.c.l.b16 %v5094
  %v5097 = vunpack.c.h.b16 %v5094
  %v5098 = vpack.c.b16 %v5096, %v5096
  %v5099 = vpack.c.b16 %v5097, %v5097
  %5102 = vst.msk [vmem:[#allocation11 + $0xc] sm:$0xf] %vm4118, %v5098
  %5103 = vst.msk [vmem:[#allocation11 + $0x2c] sm:$0xf] %vm4118, %v5099
  %v5104 = vld [vmem:[#allocation7 + $0x14] sm:$0xff]
  %v5105 = vld [vmem:[#allocation7 + $0x1c] sm:$0xff]
  %v5106 = vpack.c.bf16 %v5105, %v5104
  %v5108 = vunpack.c.l.b16 %v5106
  %v5109 = vunpack.c.h.b16 %v5106
  %v5110 = vpack.c.b16 %v5108, %v5108
  %v5111 = vpack.c.b16 %v5109, %v5109
  %5114 = vst.msk [vmem:[#allocation11 + $0x40] sm:$0xf] %vm4118, %v5110
  %5115 = vst.msk [vmem:[#allocation11 + $0x60] sm:$0xf] %vm4118, %v5111
  %v5116 = vld [vmem:[#allocation7 + $0x15] sm:$0xff]
  %v5117 = vld [vmem:[#allocation7 + $0x1d] sm:$0xff]
  %v5118 = vpack.c.bf16 %v5117, %v5116
  %v5120 = vunpack.c.l.b16 %v5118
  %v5121 = vunpack.c.h.b16 %v5118
  %v5122 = vpack.c.b16 %v5120, %v5120
  %v5123 = vpack.c.b16 %v5121, %v5121
  %5124 = vrot.lane.b32.xlu0 %v5122, 96
  %v5125 = vpop.permute.xlu0 %5124
  %5126 = vrot.lane.b32.xlu0 %v5123, 96
  %v5127 = vpop.permute.xlu0 %5126
  %v5128 = vrot.slane %v5125, 4
  %v5129 = vrot.slane %v5127, 4
  %v5130 = vsel %vm2485, %v5128, %v5125
  %v5131 = vsel %vm2485, %v5129, %v5127
  %5134 = vst.msk [vmem:[#allocation11 + $0x40] sm:$0xff] %vm4130, %v5130
  %5135 = vst.msk [vmem:[#allocation11 + $0x60] sm:$0xff] %vm4130, %v5131
  %v5136 = vld [vmem:[#allocation7 + $0x16] sm:$0xff]
  %v5137 = vld [vmem:[#allocation7 + $0x1e] sm:$0xff]
  %v5138 = vpack.c.bf16 %v5137, %v5136
  %v5140 = vunpack.c.l.b16 %v5138
  %v5141 = vunpack.c.h.b16 %v5138
  %v5142 = vpack.c.b16 %v5140, %v5140
  %v5143 = vpack.c.b16 %v5141, %v5141
  %5144 = vrot.lane.b32.xlu0 %v5142, 64
  %v5145 = vpop.permute.xlu0 %5144
  %5146 = vrot.lane.b32.xlu0 %v5143, 64
  %v5147 = vpop.permute.xlu0 %5146
  %v5148 = vrot.slane %v5145, 4
  %v5149 = vrot.slane %v5147, 4
  %v5150 = vsel %vm751, %v5148, %v5145
  %v5151 = vsel %vm751, %v5149, %v5147
  %5154 = vst.msk [vmem:[#allocation11 + $0x44] sm:$0xff] %vm4142, %v5150
  %5155 = vst.msk [vmem:[#allocation11 + $0x64] sm:$0xff] %vm4142, %v5151
  %v5156 = vld [vmem:[#allocation7 + $0x17] sm:$0xff]
  %v5157 = vld [vmem:[#allocation7 + $0x1f] sm:$0xff]
  %v5158 = vpack.c.bf16 %v5157, %v5156
  %v5160 = vunpack.c.l.b16 %v5158
  %v5161 = vunpack.c.h.b16 %v5158
  %v5162 = vpack.c.b16 %v5160, %v5160
  %v5163 = vpack.c.b16 %v5161, %v5161
  %5164 = vrot.lane.b32.xlu0 %v5162, 32
  %v5165 = vpop.permute.xlu0 %5164
  %5166 = vrot.lane.b32.xlu0 %v5163, 32
  %v5167 = vpop.permute.xlu0 %5166
  %5170 = vst.msk [vmem:[#allocation11 + $0x48] sm:$0xf] %vm2380, %v5165
  %5171 = vst.msk [vmem:[#allocation11 + $0x68] sm:$0xf] %vm2380, %v5167
  %v5172 = vld [vmem:[#allocation7 + $0x18] sm:$0xff]
  %v5173 = vld [vmem:[#allocation7 + $0x20] sm:$0xff]
  %v5174 = vpack.c.bf16 %v5173, %v5172
  %v5176 = vunpack.c.l.b16 %v5174
  %v5177 = vunpack.c.h.b16 %v5174
  %v5178 = vpack.c.b16 %v5176, %v5176
  %v5179 = vpack.c.b16 %v5177, %v5177
  %5182 = vst.msk [vmem:[#allocation11 + $0x4c] sm:$0xf] %vm4118, %v5178
  %5183 = vst.msk [vmem:[#allocation11 + $0x6c] sm:$0xf] %vm4118, %v5179
  %v5184 = vld [vmem:[#allocation11] sm:$0xff]
  %v5185 = vld [vmem:[#allocation11 + $0x8] sm:$0xff]
  %v5186 = vld [vmem:[#allocation11 + $0x20] sm:$0xff]
  %v5187 = vld [vmem:[#allocation11 + $0x28] sm:$0xff]
  %v5188 = vld [vmem:[#allocation11 + $0x40] sm:$0xff]
  %v5189 = vld [vmem:[#allocation11 + $0x48] sm:$0xff]
  %v5190 = vld [vmem:[#allocation11 + $0x60] sm:$0xff]
  %v5191 = vld [vmem:[#allocation11 + $0x68] sm:$0xff]
  %v5192 = vld [vmem:[%s7] sm:$0xf]
  %v5193 = vld [vmem:[%s7 + $0x4] sm:$0xf]
  %v5194 = vld [vmem:[%s7 + $0x8] sm:$0xf]
  %v5195 = vld [vmem:[%s7 + $0xc] sm:$0xf]
  %v5196 = vld [vmem:[%s7 + $0x10] sm:$0xf]
  %v5197 = vld [vmem:[%s7 + $0x14] sm:$0xf]
  %v5198 = vld [vmem:[%s7 + $0x18] sm:$0xf]
  %v5199 = vld [vmem:[%s7 + $0x1c] sm:$0xf]
  %v5200 = vld [vmem:[%s7 + $0x20] sm:$0xf]
  %v5201 = vld [vmem:[%s7 + $0x24] sm:$0xf]
  %v5202 = vld [vmem:[%s7 + $0x28] sm:$0xf]
  %v5203 = vld [vmem:[%s7 + $0x2c] sm:$0xf]
  %v5204 = vld [vmem:[%s7 + $0x30] sm:$0xf]
  %v5205 = vld [vmem:[%s7 + $0x34] sm:$0xf]
  %v5206 = vld [vmem:[%s7 + $0x38] sm:$0xf]
  %v5207 = vld [vmem:[%s7 + $0x3c] sm:$0xf]
  %v5208 = vld [vmem:[%s7 + $0x40] sm:$0xf]
  %v5209 = vld [vmem:[%s7 + $0x44] sm:$0xf]
  %v5210 = vld [vmem:[%s7 + $0x48] sm:$0xf]
  %v5211 = vld [vmem:[%s7 + $0x4c] sm:$0xf]
  %v5212 = vld [vmem:[%s7 + $0x50] sm:$0xf]
  %v5213 = vld [vmem:[%s7 + $0x54] sm:$0xf]
  %v5214 = vld [vmem:[%s7 + $0x58] sm:$0xf]
  %v5215 = vld [vmem:[%s7 + $0x5c] sm:$0xf]
  %v5216 = vld [vmem:[%s7 + $0x60] sm:$0xf]
  %v5217 = vld [vmem:[%s7 + $0x64] sm:$0xf]
  %v5218 = vld [vmem:[%s7 + $0x68] sm:$0xf]
  %v5219 = vld [vmem:[%s7 + $0x6c] sm:$0xf]
  %v5220 = vld [vmem:[%s7 + $0x70] sm:$0xf]
  %v5221 = vld [vmem:[%s7 + $0x74] sm:$0xf]
  %v5222 = vld [vmem:[%s7 + $0x78] sm:$0xf]
  %v5223 = vld [vmem:[%s7 + $0x7c] sm:$0xf]
  %v5224 = vld [vmem:[%s7 + $0x80] sm:$0xf]
  %v5225 = vld [vmem:[%s7 + $0x84] sm:$0xf]
  %v5226 = vld [vmem:[%s7 + $0x88] sm:$0xf]
  %v5227 = vld [vmem:[%s7 + $0x8c] sm:$0xf]
  %v5228 = vld [vmem:[%s7 + $0x90] sm:$0xf]
  %v5229 = vld [vmem:[%s7 + $0x94] sm:$0xf]
  %v5230 = vld [vmem:[%s7 + $0x98] sm:$0xf]
  %v5231 = vld [vmem:[%s7 + $0x9c] sm:$0xf]
  %v5232 = vld [vmem:[%s7 + $0xa0] sm:$0xf]
  %v5233 = vld [vmem:[%s7 + $0xa4] sm:$0xf]
  %v5234 = vld [vmem:[%s7 + $0xa8] sm:$0xf]
  %v5235 = vld [vmem:[%s7 + $0xac] sm:$0xf]
  %v5236 = vld [vmem:[%s7 + $0xb0] sm:$0xf]
  %v5237 = vld [vmem:[%s7 + $0xb4] sm:$0xf]
  %v5238 = vld [vmem:[%s7 + $0xb8] sm:$0xf]
  %v5239 = vld [vmem:[%s7 + $0xbc] sm:$0xf]
  %v5240 = vld [vmem:[%s7 + $0xc0] sm:$0xf]
  %v5241 = vld [vmem:[%s7 + $0xc4] sm:$0xf]
  %v5242 = vld [vmem:[%s7 + $0xc8] sm:$0xf]
  %v5243 = vld [vmem:[%s7 + $0xcc] sm:$0xf]
  %v5244 = vld [vmem:[%s7 + $0xd0] sm:$0xf]
  %v5245 = vld [vmem:[%s7 + $0xd4] sm:$0xf]
  %v5246 = vld [vmem:[%s7 + $0xd8] sm:$0xf]
  %v5247 = vld [vmem:[%s7 + $0xdc] sm:$0xf]
  %v5248 = vld [vmem:[%s7 + $0xe0] sm:$0xf]
  %v5249 = vld [vmem:[%s7 + $0xe4] sm:$0xf]
  %v5250 = vld [vmem:[%s7 + $0xe8] sm:$0xf]
  %v5251 = vld [vmem:[%s7 + $0xec] sm:$0xf]
  %v5252 = vld [vmem:[%s17] sm:$0x1]
  %v5254 = vlaneseq
  %v5255 = vshrl.u32 %v5254, 7
  %v5256 = vsub.s32 0, %v5255
  %v5257 = vrot.slane %v5252, %v5256
  %v5267 = vunpack.c.l.b16 %v5184
  %v5268 = vunpack.c.h.b16 %v5184
  %v5269 = vunpack.c.l.b16 %v5185
  %v5270 = vunpack.c.h.b16 %v5185
  %v5271 = vunpack.c.l.b16 %v5186
  %v5272 = vunpack.c.h.b16 %v5186
  %v5273 = vunpack.c.l.b16 %v5187
  %v5274 = vunpack.c.h.b16 %v5187
  %v5275 = vunpack.c.l.b16 %v5188
  %v5276 = vunpack.c.h.b16 %v5188
  %v5277 = vunpack.c.l.b16 %v5189
  %v5278 = vunpack.c.h.b16 %v5189
  %v5279 = vunpack.c.l.b16 %v5190
  %v5280 = vunpack.c.h.b16 %v5190
  %v5281 = vunpack.c.l.b16 %v5191
  %v5282 = vunpack.c.h.b16 %v5191
  %v5283 = vpack.c.b16 %v5271, %v5267
  %v5284 = vpack.c.b16 %v5272, %v5268
  %v5285 = vpack.c.b16 %v5273, %v5269
  %v5286 = vpack.c.b16 %v5274, %v5270
  %v5287 = vpack.c.b16 %v5279, %v5275
  %v5288 = vpack.c.b16 %v5280, %v5276
  %v5289 = vpack.c.b16 %v5281, %v5277
  %v5290 = vpack.c.b16 %v5282, %v5278
  %v5357 = vunpack.c.l.b16 %v5192
  %v5358 = vunpack.c.l.b16 %v5193
  %v5359 = vunpack.c.l.b16 %v5194
  %v5360 = vunpack.c.l.b16 %v5195
  %v5361 = vunpack.c.l.b16 %v5196
  %v5362 = vunpack.c.l.b16 %v5197
  %v5363 = vunpack.c.l.b16 %v5198
  %v5364 = vunpack.c.l.b16 %v5199
  %v5365 = vunpack.c.l.b16 %v5200
  %v5366 = vunpack.c.l.b16 %v5201
  %v5367 = vunpack.c.l.b16 %v5202
  %v5368 = vunpack.c.l.b16 %v5203
  %v5369 = vunpack.c.l.b16 %v5204
  %v5370 = vunpack.c.l.b16 %v5205
  %v5371 = vunpack.c.l.b16 %v5206
  %v5372 = vunpack.c.l.b16 %v5207
  %v5373 = vunpack.c.l.b16 %v5208
  %v5374 = vunpack.c.l.b16 %v5209
  %v5375 = vunpack.c.l.b16 %v5210
  %v5376 = vunpack.c.l.b16 %v5211
  %v5377 = vunpack.c.l.b16 %v5212
  %v5378 = vunpack.c.l.b16 %v5213
  %v5379 = vunpack.c.l.b16 %v5214
  %v5380 = vunpack.c.l.b16 %v5215
  %v5381 = vunpack.c.l.b16 %v5216
  %v5382 = vunpack.c.l.b16 %v5217
  %v5383 = vunpack.c.l.b16 %v5218
  %v5384 = vunpack.c.l.b16 %v5219
  %v5385 = vunpack.c.l.b16 %v5220
  %v5386 = vunpack.c.l.b16 %v5221
  %v5387 = vunpack.c.l.b16 %v5222
  %v5388 = vunpack.c.l.b16 %v5223
  %v5389 = vunpack.c.l.b16 %v5224
  %v5390 = vunpack.c.l.b16 %v5225
  %v5391 = vunpack.c.l.b16 %v5226
  %v5392 = vunpack.c.l.b16 %v5227
  %v5393 = vunpack.c.l.b16 %v5228
  %v5394 = vunpack.c.l.b16 %v5229
  %v5395 = vunpack.c.l.b16 %v5230
  %v5396 = vunpack.c.l.b16 %v5231
  %v5397 = vunpack.c.l.b16 %v5232
  %v5398 = vunpack.c.l.b16 %v5233
  %v5399 = vunpack.c.l.b16 %v5234
  %v5400 = vunpack.c.l.b16 %v5235
  %v5401 = vunpack.c.l.b16 %v5236
  %v5402 = vunpack.c.l.b16 %v5237
  %v5403 = vunpack.c.l.b16 %v5238
  %v5404 = vunpack.c.l.b16 %v5239
  %v5405 = vunpack.c.l.b16 %v5240
  %v5406 = vunpack.c.l.b16 %v5241
  %v5407 = vunpack.c.l.b16 %v5242
  %v5408 = vunpack.c.l.b16 %v5243
  %v5409 = vunpack.c.l.b16 %v5244
  %v5410 = vunpack.c.l.b16 %v5245
  %v5411 = vunpack.c.l.b16 %v5246
  %v5412 = vunpack.c.l.b16 %v5247
  %v5413 = vunpack.c.l.b16 %v5248
  %v5414 = vunpack.c.l.b16 %v5249
  %v5415 = vunpack.c.l.b16 %v5250
  %v5416 = vunpack.c.l.b16 %v5251
  %v5417 = vpack.c.b16 %v5358, %v5357
  %v5418 = vpack.c.b16 %v5360, %v5359
  %v5419 = vpack.c.b16 %v5362, %v5361
  %v5420 = vpack.c.b16 %v5364, %v5363
  %v5421 = vpack.c.b16 %v5366, %v5365
  %v5422 = vpack.c.b16 %v5368, %v5367
  %v5423 = vpack.c.b16 %v5370, %v5369
  %v5424 = vpack.c.b16 %v5372, %v5371
  %v5425 = vpack.c.b16 %v5374, %v5373
  %v5426 = vpack.c.b16 %v5376, %v5375
  %v5427 = vpack.c.b16 %v5378, %v5377
  %v5428 = vpack.c.b16 %v5380, %v5379
  %v5429 = vpack.c.b16 %v5382, %v5381
  %v5430 = vpack.c.b16 %v5384, %v5383
  %v5431 = vpack.c.b16 %v5386, %v5385
  %v5432 = vpack.c.b16 %v5388, %v5387
  %v5433 = vpack.c.b16 %v5390, %v5389
  %v5434 = vpack.c.b16 %v5392, %v5391
  %v5435 = vpack.c.b16 %v5394, %v5393
  %v5436 = vpack.c.b16 %v5396, %v5395
  %v5437 = vpack.c.b16 %v5398, %v5397
  %v5438 = vpack.c.b16 %v5400, %v5399
  %v5439 = vpack.c.b16 %v5402, %v5401
  %v5440 = vpack.c.b16 %v5404, %v5403
  %v5441 = vpack.c.b16 %v5406, %v5405
  %v5442 = vpack.c.b16 %v5408, %v5407
  %v5443 = vpack.c.b16 %v5410, %v5409
  %v5444 = vpack.c.b16 %v5412, %v5411
  %v5445 = vpack.c.b16 %v5414, %v5413
  %v5446 = vpack.c.b16 %v5416, %v5415
  %v5478 = vsel %vm4112, %v5286, 0
  %v5481 = vsel %vm4112, %v5290, 0
  %5483 = vmatprep.subr.bf16.mxu0 0
  %5484 = vmatpush1.bf16.msra.mxu0 %v5417
  %5485 = vmatprep.subr.bf16.mxu0 0
  %5486 = vmatpush1.bf16.msra.mxu0 %v5418
  %5487 = vmatprep.subr.bf16.mxu0 0
  %5488 = vmatpush1.bf16.msra.mxu0 %v5419
  %5489 = vmatprep.subr.bf16.mxu0 0
  %5490 = vmatpush1.bf16.msra.mxu0 %v5420
  %5491 = vmatprep.subr.bf16.mxu0 0
  %5492 = vmatpush1.bf16.msra.mxu0 %v5421
  %5493 = vmatprep.subr.bf16.mxu0 0
  %5494 = vmatpush1.bf16.msra.mxu0 %v5422
  %5495 = vmatprep.subr.bf16.mxu0 0
  %5496 = vmatpush1.bf16.msra.mxu0 %v5423
  %5497 = vmatprep.subr.bf16.mxu0 0
  %5498 = vmatpush1.bf16.msra.mxu0 %v5424
  %5499 = vmatprep.subr.bf16.mxu0 0
  %5500 = vmatpush1.bf16.msra.mxu0 %v5425
  %5501 = vmatprep.subr.bf16.mxu0 0
  %5502 = vmatpush1.bf16.msra.mxu0 %v5426
  %5503 = vmatprep.subr.bf16.mxu0 0
  %5504 = vmatpush1.bf16.msra.mxu0 %v5427
  %5505 = vmatprep.subr.bf16.mxu0 0
  %5506 = vmatpush1.bf16.msra.mxu0 %v5428
  %5507 = vmatprep.subr.bf16.mxu0 0
  %5508 = vmatpush1.bf16.msra.mxu0 %v5429
  %5509 = vmatprep.subr.bf16.mxu0 0
  %5510 = vmatpush1.bf16.msra.mxu0 %v5430
  %5511 = vmatprep.subr.bf16.mxu0 0
  %5512 = vmatpush1.bf16.msra.mxu0 %v5431
  %5513 = vmatprep.subr.bf16.mxu0 0
  %5514 = vmatpush1.bf16.msra.mxu0 %v5432
  %5515 = vmatprep.mubr.bf16.mxu0 %v5284
  %5516 = vmatmul.mubr.bf16.gmra.mrb[0].mxu0 %v5283
  %v5517 = vpop.f32.mrb[0].mxu0
  %v5518 = vadd.f32 %v5257, %v5517
  %v5519 = vpop.f32.mrb[0].mxu0
  %v5520 = vpop.f32.mrb[0].mxu0
  %v5521 = vadd.f32 %v5257, %v5520
  %v5522 = vpop.f32.mrb[0].mxu0
  %5523 = vmatprep.mubr.bf16.mxu0 %v5288
  %5524 = vmatmul.mubr.bf16.gmra.mrb[0].mxu0 %v5287
  %v5525 = vpop.f32.mrb[0].mxu0
  %v5526 = vadd.f32 %v5257, %v5525
  %v5527 = vpop.f32.mrb[0].mxu0
  %v5528 = vpop.f32.mrb[0].mxu0
  %v5529 = vadd.f32 %v5257, %v5528
  %v5530 = vpop.f32.mrb[0].mxu0
  %5531 = vdwg.mxu0
  %5532 = vmatprep.subr.bf16.mxu0 0
  %5533 = vmatpush1.bf16.msra.mxu0 %v5433
  %5534 = vmatprep.subr.bf16.mxu0 0
  %5535 = vmatpush1.bf16.msra.mxu0 %v5434
  %5536 = vmatprep.subr.bf16.mxu0 0
  %5537 = vmatpush1.bf16.msra.mxu0 %v5435
  %5538 = vmatprep.subr.bf16.mxu0 0
  %5539 = vmatpush1.bf16.msra.mxu0 %v5436
  %5540 = vmatprep.subr.bf16.mxu0 0
  %5541 = vmatpush1.bf16.msra.mxu0 %v5437
  %5542 = vmatprep.subr.bf16.mxu0 0
  %5543 = vmatpush1.bf16.msra.mxu0 %v5438
  %5544 = vmatprep.subr.bf16.mxu0 0
  %5545 = vmatpush1.bf16.msra.mxu0 %v5439
  %5546 = vmatprep.subr.bf16.mxu0 0
  %5547 = vmatpush1.bf16.msra.mxu0 %v5440
  %5548 = vmatprep.subr.bf16.mxu0 0
  %5549 = vmatpush1.bf16.msra.mxu0 %v5441
  %5550 = vmatprep.subr.bf16.mxu0 0
  %5551 = vmatpush1.bf16.msra.mxu0 %v5442
  %5552 = vmatprep.subr.bf16.mxu0 0
  %5553 = vmatpush1.bf16.msra.mxu0 %v5443
  %5554 = vmatprep.subr.bf16.mxu0 0
  %5555 = vmatpush1.bf16.msra.mxu0 %v5444
  %5556 = vmatprep.subr.bf16.mxu0 0
  %5557 = vmatpush1.bf16.msra.mxu0 %v5445
  %5558 = vmatprep.subr.bf16.mxu0 0
  %5559 = vmatpush1.bf16.msra.mxu0 %v5446
  %5560 = vmatprep.subr.bf16.mxu0 0
  %5561 = vmatpush1.bf16.msra.mxu0 0
  %5562 = vmatprep.subr.bf16.mxu0 0
  %5563 = vmatpush1.bf16.msra.mxu0 0
  %5564 = vmatprep.mubr.bf16.mxu0 %v5478
  %5565 = vmatmul.mubr.bf16.gmra.mrb[0].mxu0 %v5285
  %v5566 = vpop.f32.mrb[0].mxu0
  %v5567 = vadd.f32 %v5518, %v5566
  %v5568 = vpop.f32.mrb[0].mxu0
  %v5569 = vpop.f32.mrb[0].mxu0
  %v5570 = vadd.f32 %v5521, %v5569
  %v5571 = vpop.f32.mrb[0].mxu0
  %5572 = vmatprep.mubr.bf16.mxu0 %v5481
  %5573 = vmatmul.mubr.bf16.gmra.mrb[0].mxu0 %v5289
  %v5574 = vpop.f32.mrb[0].mxu0
  %v5575 = vadd.f32 %v5526, %v5574
  %v5576 = vpop.f32.mrb[0].mxu0
  %v5577 = vpop.f32.mrb[0].mxu0
  %v5578 = vadd.f32 %v5529, %v5577
  %v5579 = vpop.f32.mrb[0].mxu0
  %5580 = vdwg.mxu0
  %v5581 = vmax.f32 %v5567, 0.0
  %v5582 = vmax.f32 %v5570, 0.0
  %v5583 = vmax.f32 %v5575, 0.0
  %v5584 = vmax.f32 %v5578, 0.0
  %5585 = vst [vmem:[#allocation8 + $0x4] sm:$0xff] %v5581
  %5586 = vst [vmem:[#allocation8 + $0xc] sm:$0xff] %v5582
  %5587 = vst [vmem:[#allocation8 + $0x1c] sm:$0xff] %v5583
  %5588 = vst [vmem:[#allocation8 + $0x24] sm:$0xff] %v5584
  %v5589 = vld [vmem:[#allocation3] sm:$0xff]
  %v5590 = vld [vmem:[#allocation3 + $0x8] sm:$0xff]
  %v5591 = vld [vmem:[#allocation3 + $0x10] sm:$0xff]
  %v5592 = vld [vmem:[#allocation3 + $0x18] sm:$0xff]
  %v5593 = vld [vmem:[#allocation3 + $0x20] sm:$0xff]
  %v5594 = vld [vmem:[#allocation3 + $0x28] sm:$0xff]
  %v5595 = vld [vmem:[#allocation3 + $0x30] sm:$0xff]
  %v5596 = vld [vmem:[#allocation3 + $0x38] sm:$0xff]
  %v5597 = vld [vmem:[#allocation3 + $0x40] sm:$0xff]
  %v5598 = vld [vmem:[#allocation3 + $0x48] sm:$0xff]
  %v5599 = vld [vmem:[#allocation8] sm:$0xff]
  %v5600 = vld [vmem:[#allocation8 + $0x8] sm:$0xff]
  %v5601 = vld [vmem:[#allocation8 + $0x10] sm:$0xf]
  %v5602 = vpack.c.bf16 %v5600, %v5599
  %v5603 = vpack.c.bf16 %v5601, %v5601
  %v5606 = vunpack.c.l.b16 %v5602
  %v5607 = vunpack.c.h.b16 %v5602
  %v5608 = vunpack.c.l.b16 %v5603
  %v5609 = vpack.c.b16 %v5606, %v5606
  %v5610 = vpack.c.b16 %v5607, %v5607
  %v5611 = vpack.c.b16 %v5608, %v5608
  %5615 = vst [vmem:[#allocation11] sm:$0xf] %v5609
  %5616 = vst [vmem:[#allocation11 + $0x20] sm:$0xf] %v5610
  %5617 = vst [vmem:[#allocation11 + $0x40] sm:$0x3] %v5611
  %v5618 = vld [vmem:[#allocation8 + $0x1] sm:$0xff]
  %v5619 = vld [vmem:[#allocation8 + $0x9] sm:$0xff]
  %v5620 = vld [vmem:[#allocation8 + $0x11] sm:$0xf]
  %v5621 = vpack.c.bf16 %v5619, %v5618
  %v5622 = vpack.c.bf16 %v5620, %v5620
  %v5625 = vunpack.c.l.b16 %v5621
  %v5626 = vunpack.c.h.b16 %v5621
  %v5627 = vunpack.c.l.b16 %v5622
  %v5628 = vpack.c.b16 %v5625, %v5625
  %v5629 = vpack.c.b16 %v5626, %v5626
  %v5630 = vpack.c.b16 %v5627, %v5627
  %5634 = vst [vmem:[#allocation11 + $0x4] sm:$0xf] %v5628
  %5635 = vst [vmem:[#allocation11 + $0x24] sm:$0xf] %v5629
  %5636 = vst [vmem:[#allocation11 + $0x44] sm:$0x3] %v5630
  %v5637 = vld [vmem:[#allocation8 + $0x2] sm:$0xff]
  %v5638 = vld [vmem:[#allocation8 + $0xa] sm:$0xff]
  %v5639 = vld [vmem:[#allocation8 + $0x12] sm:$0xf]
  %v5640 = vpack.c.bf16 %v5638, %v5637
  %v5641 = vpack.c.bf16 %v5639, %v5639
  %v5644 = vunpack.c.l.b16 %v5640
  %v5645 = vunpack.c.h.b16 %v5640
  %v5646 = vunpack.c.l.b16 %v5641
  %v5647 = vpack.c.b16 %v5644, %v5644
  %v5648 = vpack.c.b16 %v5645, %v5645
  %v5649 = vpack.c.b16 %v5646, %v5646
  %5653 = vst [vmem:[#allocation11 + $0x8] sm:$0xf] %v5647
  %5654 = vst [vmem:[#allocation11 + $0x28] sm:$0xf] %v5648
  %5655 = vst [vmem:[#allocation11 + $0x48] sm:$0x3] %v5649
  %v5656 = vld [vmem:[#allocation8 + $0x3] sm:$0xff]
  %v5657 = vld [vmem:[#allocation8 + $0xb] sm:$0xff]
  %v5658 = vld [vmem:[#allocation8 + $0x13] sm:$0xf]
  %v5659 = vpack.c.bf16 %v5657, %v5656
  %v5660 = vpack.c.bf16 %v5658, %v5658
  %v5663 = vunpack.c.l.b16 %v5659
  %v5664 = vunpack.c.h.b16 %v5659
  %v5665 = vunpack.c.l.b16 %v5660
  %v5666 = vpack.c.b16 %v5663, %v5663
  %v5667 = vpack.c.b16 %v5664, %v5664
  %v5668 = vpack.c.b16 %v5665, %v5665
  %5672 = vst [vmem:[#allocation11 + $0xc] sm:$0xf] %v5666
  %5673 = vst [vmem:[#allocation11 + $0x2c] sm:$0xf] %v5667
  %5674 = vst [vmem:[#allocation11 + $0x4c] sm:$0x3] %v5668
  %v5675 = vld [vmem:[#allocation8 + $0x4] sm:$0xff]
  %v5676 = vld [vmem:[#allocation8 + $0xc] sm:$0xff]
  %v5677 = vld [vmem:[#allocation8 + $0x14] sm:$0xf]
  %v5678 = vpack.c.bf16 %v5676, %v5675
  %v5679 = vpack.c.bf16 %v5677, %v5677
  %v5682 = vunpack.c.l.b16 %v5678
  %v5683 = vunpack.c.h.b16 %v5678
  %v5684 = vunpack.c.l.b16 %v5679
  %v5685 = vpack.c.b16 %v5682, %v5682
  %v5686 = vpack.c.b16 %v5683, %v5683
  %v5687 = vpack.c.b16 %v5684, %v5684
  %5691 = vst [vmem:[#allocation11 + $0x10] sm:$0xf] %v5685
  %5692 = vst [vmem:[#allocation11 + $0x30] sm:$0xf] %v5686
  %5693 = vst [vmem:[#allocation11 + $0x50] sm:$0x3] %v5687
  %v5694 = vld [vmem:[#allocation8 + $0x18] sm:$0xff]
  %v5695 = vld [vmem:[#allocation8 + $0x20] sm:$0xff]
  %v5696 = vld [vmem:[#allocation8 + $0x28] sm:$0xf]
  %v5697 = vpack.c.bf16 %v5695, %v5694
  %v5698 = vpack.c.bf16 %v5696, %v5696
  %v5701 = vunpack.c.l.b16 %v5697
  %v5702 = vunpack.c.h.b16 %v5697
  %v5703 = vunpack.c.l.b16 %v5698
  %v5704 = vpack.c.b16 %v5701, %v5701
  %v5705 = vpack.c.b16 %v5702, %v5702
  %v5706 = vpack.c.b16 %v5703, %v5703
  %v5707 = vrot.slane %v5704, 6
  %v5708 = vrot.slane %v5707, 4
  %v5709 = vrot.slane %v5705, 6
  %v5710 = vsel %vm905, %v5708, %v5709
  %v5711 = vrot.slane %v5709, 4
  %v5712 = vrot.slane %v5706, 6
  %v5713 = vsel %vm905, %v5711, %v5712
  %5717 = vst [vmem:[#allocation11 + $0x40] sm:$0xc] %v5707
  %5718 = vst [vmem:[#allocation11 + $0x60] sm:$0xf] %v5710
  %5719 = vst [vmem:[#allocation11 + $0x80] sm:$0xf] %v5713
  %v5720 = vld [vmem:[#allocation8 + $0x19] sm:$0xff]
  %v5721 = vld [vmem:[#allocation8 + $0x21] sm:$0xff]
  %v5722 = vld [vmem:[#allocation8 + $0x29] sm:$0xf]
  %v5723 = vpack.c.bf16 %v5721, %v5720
  %v5724 = vpack.c.bf16 %v5722, %v5722
  %v5727 = vunpack.c.l.b16 %v5723
  %v5728 = vunpack.c.h.b16 %v5723
  %v5729 = vunpack.c.l.b16 %v5724
  %v5730 = vpack.c.b16 %v5727, %v5727
  %v5731 = vpack.c.b16 %v5728, %v5728
  %v5732 = vpack.c.b16 %v5729, %v5729
  %v5733 = vrot.slane %v5730, 6
  %v5734 = vrot.slane %v5733, 4
  %v5735 = vrot.slane %v5731, 6
  %v5736 = vsel %vm905, %v5734, %v5735
  %v5737 = vrot.slane %v5735, 4
  %v5738 = vrot.slane %v5732, 6
  %v5739 = vsel %vm905, %v5737, %v5738
  %5743 = vst [vmem:[#allocation11 + $0x44] sm:$0xc] %v5733
  %5744 = vst [vmem:[#allocation11 + $0x64] sm:$0xf] %v5736
  %5745 = vst [vmem:[#allocation11 + $0x84] sm:$0xf] %v5739
  %v5746 = vld [vmem:[#allocation8 + $0x1a] sm:$0xff]
  %v5747 = vld [vmem:[#allocation8 + $0x22] sm:$0xff]
  %v5748 = vld [vmem:[#allocation8 + $0x2a] sm:$0xf]
  %v5749 = vpack.c.bf16 %v5747, %v5746
  %v5750 = vpack.c.bf16 %v5748, %v5748
  %v5753 = vunpack.c.l.b16 %v5749
  %v5754 = vunpack.c.h.b16 %v5749
  %v5755 = vunpack.c.l.b16 %v5750
  %v5756 = vpack.c.b16 %v5753, %v5753
  %v5757 = vpack.c.b16 %v5754, %v5754
  %v5758 = vpack.c.b16 %v5755, %v5755
  %v5759 = vrot.slane %v5756, 6
  %v5760 = vrot.slane %v5759, 4
  %v5761 = vrot.slane %v5757, 6
  %v5762 = vsel %vm905, %v5760, %v5761
  %v5763 = vrot.slane %v5761, 4
  %v5764 = vrot.slane %v5758, 6
  %v5765 = vsel %vm905, %v5763, %v5764
  %5769 = vst [vmem:[#allocation11 + $0x48] sm:$0xc] %v5759
  %5770 = vst [vmem:[#allocation11 + $0x68] sm:$0xf] %v5762
  %5771 = vst [vmem:[#allocation11 + $0x88] sm:$0xf] %v5765
  %v5772 = vld [vmem:[#allocation8 + $0x1b] sm:$0xff]
  %v5773 = vld [vmem:[#allocation8 + $0x23] sm:$0xff]
  %v5774 = vld [vmem:[#allocation8 + $0x2b] sm:$0xf]
  %v5775 = vpack.c.bf16 %v5773, %v5772
  %v5776 = vpack.c.bf16 %v5774, %v5774
  %v5779 = vunpack.c.l.b16 %v5775
  %v5780 = vunpack.c.h.b16 %v5775
  %v5781 = vunpack.c.l.b16 %v5776
  %v5782 = vpack.c.b16 %v5779, %v5779
  %v5783 = vpack.c.b16 %v5780, %v5780
  %v5784 = vpack.c.b16 %v5781, %v5781
  %v5785 = vrot.slane %v5782, 6
  %v5786 = vrot.slane %v5785, 4
  %v5787 = vrot.slane %v5783, 6
  %v5788 = vsel %vm905, %v5786, %v5787
  %v5789 = vrot.slane %v5787, 4
  %v5790 = vrot.slane %v5784, 6
  %v5791 = vsel %vm905, %v5789, %v5790
  %5795 = vst [vmem:[#allocation11 + $0x4c] sm:$0xc] %v5785
  %5796 = vst [vmem:[#allocation11 + $0x6c] sm:$0xf] %v5788
  %5797 = vst [vmem:[#allocation11 + $0x8c] sm:$0xf] %v5791
  %v5798 = vld [vmem:[#allocation8 + $0x1c] sm:$0xff]
  %v5799 = vld [vmem:[#allocation8 + $0x24] sm:$0xff]
  %v5800 = vld [vmem:[#allocation8 + $0x2c] sm:$0xf]
  %v5801 = vpack.c.bf16 %v5799, %v5798
  %v5802 = vpack.c.bf16 %v5800, %v5800
  %v5805 = vunpack.c.l.b16 %v5801
  %v5806 = vunpack.c.h.b16 %v5801
  %v5807 = vunpack.c.l.b16 %v5802
  %v5808 = vpack.c.b16 %v5805, %v5805
  %v5809 = vpack.c.b16 %v5806, %v5806
  %v5810 = vpack.c.b16 %v5807, %v5807
  %v5811 = vrot.slane %v5808, 6
  %v5812 = vrot.slane %v5811, 4
  %v5813 = vrot.slane %v5809, 6
  %v5814 = vsel %vm905, %v5812, %v5813
  %v5815 = vrot.slane %v5813, 4
  %v5816 = vrot.slane %v5810, 6
  %v5817 = vsel %vm905, %v5815, %v5816
  %5821 = vst [vmem:[#allocation11 + $0x50] sm:$0xc] %v5811
  %5822 = vst [vmem:[#allocation11 + $0x70] sm:$0xf] %v5814
  %5823 = vst [vmem:[#allocation11 + $0x90] sm:$0xf] %v5817
  %v5824 = vld [vmem:[#allocation11] sm:$0xff]
  %v5825 = vld [vmem:[#allocation11 + $0x8] sm:$0xff]
  %v5826 = vld [vmem:[#allocation11 + $0x10] sm:$0xf]
  %v5827 = vld [vmem:[#allocation11 + $0x20] sm:$0xff]
  %v5828 = vld [vmem:[#allocation11 + $0x28] sm:$0xff]
  %v5829 = vld [vmem:[#allocation11 + $0x30] sm:$0xf]
  %v5830 = vld [vmem:[#allocation11 + $0x40] sm:$0xff]
  %v5831 = vld [vmem:[#allocation11 + $0x48] sm:$0xff]
  %v5832 = vld [vmem:[#allocation11 + $0x50] sm:$0xf]
  %v5833 = vld [vmem:[#allocation11 + $0x60] sm:$0xff]
  %v5834 = vld [vmem:[#allocation11 + $0x68] sm:$0xff]
  %v5835 = vld [vmem:[#allocation11 + $0x70] sm:$0xf]
  %v5836 = vld [vmem:[#allocation11 + $0x80] sm:$0xff]
  %v5837 = vld [vmem:[#allocation11 + $0x88] sm:$0xff]
  %v5838 = vld [vmem:[#allocation11 + $0x90] sm:$0xf]
  %v5839 = vld [vmem:[%s8] sm:$0xff]
  %v5840 = vld [vmem:[%s8 + $0x8] sm:$0xff]
  %v5841 = vld [vmem:[%s8 + $0x10] sm:$0xff]
  %v5842 = vld [vmem:[%s8 + $0x18] sm:$0xff]
  %v5843 = vld [vmem:[%s8 + $0x20] sm:$0xff]
  %v5844 = vld [vmem:[%s8 + $0x28] sm:$0xff]
  %v5845 = vld [vmem:[%s8 + $0x30] sm:$0xff]
  %v5846 = vld [vmem:[%s8 + $0x38] sm:$0xff]
  %v5847 = vld [vmem:[%s8 + $0x40] sm:$0xff]
  %v5848 = vld [vmem:[%s8 + $0x48] sm:$0xff]
  %v5849 = vld [vmem:[%s8 + $0x50] sm:$0xff]
  %v5850 = vld [vmem:[%s8 + $0x58] sm:$0xff]
  %v5851 = vld [vmem:[%s8 + $0x60] sm:$0xff]
  %v5852 = vld [vmem:[%s8 + $0x68] sm:$0xff]
  %v5853 = vld [vmem:[%s8 + $0x70] sm:$0xff]
  %v5854 = vld [vmem:[%s8 + $0x78] sm:$0xff]
  %v5855 = vld [vmem:[%s8 + $0x80] sm:$0xff]
  %v5856 = vld [vmem:[%s8 + $0x88] sm:$0xff]
  %v5857 = vld [vmem:[%s8 + $0x90] sm:$0xff]
  %v5858 = vld [vmem:[%s8 + $0x98] sm:$0xff]
  %v5859 = vld [vmem:[%s8 + $0xa0] sm:$0xff]
  %v5860 = vld [vmem:[%s8 + $0xa8] sm:$0xff]
  %v5861 = vld [vmem:[%s8 + $0xb0] sm:$0xff]
  %v5862 = vld [vmem:[%s8 + $0xb8] sm:$0xff]
  %v5863 = vld [vmem:[%s8 + $0xc0] sm:$0xff]
  %v5864 = vld [vmem:[%s8 + $0xc8] sm:$0xff]
  %v5865 = vld [vmem:[%s8 + $0xd0] sm:$0xff]
  %v5866 = vld [vmem:[%s8 + $0xd8] sm:$0xff]
  %v5867 = vld [vmem:[%s8 + $0xe0] sm:$0xff]
  %v5868 = vld [vmem:[%s8 + $0xe8] sm:$0xff]
  %v5869 = vld [vmem:[%s8 + $0xf0] sm:$0xff]
  %v5870 = vld [vmem:[%s8 + $0xf8] sm:$0xff]
  %v5871 = vld [vmem:[%s8 + $0x100] sm:$0xff]
  %v5872 = vld [vmem:[%s8 + $0x108] sm:$0xff]
  %v5873 = vld [vmem:[%s8 + $0x110] sm:$0xff]
  %v5874 = vld [vmem:[%s8 + $0x118] sm:$0xff]
  %v5875 = vld [vmem:[%s8 + $0x120] sm:$0xff]
  %v5876 = vld [vmem:[%s8 + $0x128] sm:$0xff]
  %v5877 = vld [vmem:[%s8 + $0x130] sm:$0xff]
  %v5878 = vld [vmem:[%s8 + $0x138] sm:$0xff]
  %v5879 = vld [vmem:[%s8 + $0x140] sm:$0xff]
  %v5880 = vld [vmem:[%s8 + $0x148] sm:$0xff]
  %v5881 = vld [vmem:[%s8 + $0x150] sm:$0xff]
  %v5882 = vld [vmem:[%s8 + $0x158] sm:$0xff]
  %v5883 = vld [vmem:[%s8 + $0x160] sm:$0xff]
  %v5884 = vld [vmem:[%s8 + $0x168] sm:$0xff]
  %v5885 = vld [vmem:[%s8 + $0x170] sm:$0xff]
  %v5886 = vld [vmem:[%s8 + $0x178] sm:$0xff]
  %v5887 = vld [vmem:[%s8 + $0x180] sm:$0xff]
  %v5888 = vld [vmem:[%s8 + $0x188] sm:$0xff]
  %v5889 = vld [vmem:[%s8 + $0x190] sm:$0xff]
  %v5890 = vld [vmem:[%s8 + $0x198] sm:$0xff]
  %v5891 = vld [vmem:[%s8 + $0x1a0] sm:$0xff]
  %v5892 = vld [vmem:[%s8 + $0x1a8] sm:$0xff]
  %v5893 = vld [vmem:[%s8 + $0x1b0] sm:$0xff]
  %v5894 = vld [vmem:[%s8 + $0x1b8] sm:$0xff]
  %v5895 = vld [vmem:[%s8 + $0x1c0] sm:$0xff]
  %v5896 = vld [vmem:[%s8 + $0x1c8] sm:$0xff]
  %v5897 = vld [vmem:[%s8 + $0x1d0] sm:$0xff]
  %v5898 = vld [vmem:[%s8 + $0x1d8] sm:$0xff]
  %v5899 = vld [vmem:[%s8 + $0x1e0] sm:$0xff]
  %v5900 = vld [vmem:[%s8 + $0x1e8] sm:$0xff]
  %v5901 = vld [vmem:[%s8 + $0x1f0] sm:$0xff]
  %v5902 = vld [vmem:[%s8 + $0x1f8] sm:$0xff]
  %v5903 = vld [vmem:[%s8 + $0x200] sm:$0xff]
  %v5904 = vld [vmem:[%s8 + $0x208] sm:$0xff]
  %v5905 = vld [vmem:[%s8 + $0x210] sm:$0xff]
  %v5906 = vld [vmem:[%s8 + $0x218] sm:$0xff]
  %v5907 = vld [vmem:[%s8 + $0x220] sm:$0xff]
  %v5908 = vld [vmem:[%s8 + $0x228] sm:$0xff]
  %v5909 = vld [vmem:[%s8 + $0x230] sm:$0xff]
  %v5910 = vld [vmem:[%s8 + $0x238] sm:$0xff]
  %v5911 = vld [vmem:[%s8 + $0x240] sm:$0xff]
  %v5912 = vld [vmem:[%s8 + $0x248] sm:$0xff]
  %v5913 = vld [vmem:[%s8 + $0x250] sm:$0xff]
  %v5914 = vld [vmem:[%s8 + $0x258] sm:$0xff]
  %v5915 = vld [vmem:[%s8 + $0x260] sm:$0xff]
  %v5916 = vld [vmem:[%s8 + $0x268] sm:$0xff]
  %v5917 = vld [vmem:[%s8 + $0x270] sm:$0xff]
  %v5918 = vld [vmem:[%s8 + $0x278] sm:$0xff]
  %v5919 = vld [vmem:[%s18] sm:$0x3]
  %v5921 = vlaneseq
  %v5922 = vshrl.u32 %v5921, 7
  %v5923 = vsub.s32 0, %v5922
  %v5924 = vrot.slane %v5919, %v5923
  %v5925 = vlaneseq
  %v5926 = vshrl.u32 %v5925, 7
  %v5927 = vsub.s32 1, %v5926
  %v5928 = vrot.slane %v5919, %v5927
  %v5946 = vunpack.c.l.b16 %v5824
  %v5947 = vunpack.c.h.b16 %v5824
  %v5948 = vunpack.c.l.b16 %v5825
  %v5949 = vunpack.c.h.b16 %v5825
  %v5950 = vunpack.c.l.b16 %v5826
  %v5951 = vunpack.c.l.b16 %v5827
  %v5952 = vunpack.c.h.b16 %v5827
  %v5953 = vunpack.c.l.b16 %v5828
  %v5954 = vunpack.c.h.b16 %v5828
  %v5955 = vunpack.c.l.b16 %v5829
  %v5956 = vunpack.c.l.b16 %v5830
  %v5957 = vunpack.c.h.b16 %v5830
  %v5958 = vunpack.c.l.b16 %v5831
  %v5959 = vunpack.c.h.b16 %v5831
  %v5960 = vunpack.c.l.b16 %v5832
  %v5961 = vunpack.c.l.b16 %v5833
  %v5962 = vunpack.c.h.b16 %v5833
  %v5963 = vunpack.c.l.b16 %v5834
  %v5964 = vunpack.c.h.b16 %v5834
  %v5965 = vunpack.c.l.b16 %v5835
  %v5966 = vunpack.c.l.b16 %v5836
  %v5967 = vunpack.c.h.b16 %v5836
  %v5968 = vunpack.c.l.b16 %v5837
  %v5969 = vunpack.c.h.b16 %v5837
  %v5970 = vunpack.c.l.b16 %v5838
  %v5971 = vpack.c.b16 %v5951, %v5946
  %v5972 = vpack.c.b16 %v5952, %v5947
  %v5973 = vpack.c.b16 %v5953, %v5948
  %v5974 = vpack.c.b16 %v5954, %v5949
  %v5975 = vpack.c.b16 %v5955, %v5950
  %v5976 = vpack.c.b16 %v5961, %v5956
  %v5977 = vpack.c.b16 %v5962, %v5957
  %v5978 = vpack.c.b16 %v5963, %v5958
  %v5979 = vpack.c.b16 %v5964, %v5959
  %v5980 = vpack.c.b16 %v5965, %v5960
  %v5981 = vpack.c.b16 %v5966, %v5966
  %v5982 = vpack.c.b16 %v5967, %v5967
  %v5983 = vpack.c.b16 %v5968, %v5968
  %v5984 = vpack.c.b16 %v5969, %v5969
  %v5985 = vpack.c.b16 %v5970, %v5970
  %v6081 = vunpack.c.l.b16 %v5839
  %v6082 = vunpack.c.h.b16 %v5839
  %v6083 = vunpack.c.l.b16 %v5840
  %v6084 = vunpack.c.h.b16 %v5840
  %v6085 = vunpack.c.l.b16 %v5841
  %v6086 = vunpack.c.h.b16 %v5841
  %v6087 = vunpack.c.l.b16 %v5842
  %v6088 = vunpack.c.h.b16 %v5842
  %v6089 = vunpack.c.l.b16 %v5843
  %v6090 = vunpack.c.h.b16 %v5843
  %v6091 = vunpack.c.l.b16 %v5844
  %v6092 = vunpack.c.h.b16 %v5844
  %v6093 = vunpack.c.l.b16 %v5845
  %v6094 = vunpack.c.h.b16 %v5845
  %v6095 = vunpack.c.l.b16 %v5846
  %v6096 = vunpack.c.h.b16 %v5846
  %v6097 = vunpack.c.l.b16 %v5847
  %v6098 = vunpack.c.h.b16 %v5847
  %v6099 = vunpack.c.l.b16 %v5848
  %v6100 = vunpack.c.h.b16 %v5848
  %v6101 = vunpack.c.l.b16 %v5849
  %v6102 = vunpack.c.h.b16 %v5849
  %v6103 = vunpack.c.l.b16 %v5850
  %v6104 = vunpack.c.h.b16 %v5850
  %v6105 = vunpack.c.l.b16 %v5851
  %v6106 = vunpack.c.h.b16 %v5851
  %v6107 = vunpack.c.l.b16 %v5852
  %v6108 = vunpack.c.h.b16 %v5852
  %v6109 = vunpack.c.l.b16 %v5853
  %v6110 = vunpack.c.h.b16 %v5853
  %v6111 = vunpack.c.l.b16 %v5854
  %v6112 = vunpack.c.h.b16 %v5854
  %v6113 = vunpack.c.l.b16 %v5855
  %v6114 = vunpack.c.h.b16 %v5855
  %v6115 = vunpack.c.l.b16 %v5856
  %v6116 = vunpack.c.h.b16 %v5856
  %v6117 = vunpack.c.l.b16 %v5857
  %v6118 = vunpack.c.h.b16 %v5857
  %v6119 = vunpack.c.l.b16 %v5858
  %v6120 = vunpack.c.h.b16 %v5858
  %v6121 = vunpack.c.l.b16 %v5859
  %v6122 = vunpack.c.h.b16 %v5859
  %v6123 = vunpack.c.l.b16 %v5860
  %v6124 = vunpack.c.h.b16 %v5860
  %v6125 = vunpack.c.l.b16 %v5861
  %v6126 = vunpack.c.h.b16 %v5861
  %v6127 = vunpack.c.l.b16 %v5862
  %v6128 = vunpack.c.h.b16 %v5862
  %v6129 = vunpack.c.l.b16 %v5863
  %v6130 = vunpack.c.h.b16 %v5863
  %v6131 = vunpack.c.l.b16 %v5864
  %v6132 = vunpack.c.h.b16 %v5864
  %v6133 = vunpack.c.l.b16 %v5865
  %v6134 = vunpack.c.h.b16 %v5865
  %v6135 = vunpack.c.l.b16 %v5866
  %v6136 = vunpack.c.h.b16 %v5866
  %v6137 = vunpack.c.l.b16 %v5867
  %v6138 = vunpack.c.h.b16 %v5867
  %v6139 = vunpack.c.l.b16 %v5868
  %v6140 = vunpack.c.h.b16 %v5868
  %v6141 = vunpack.c.l.b16 %v5869
  %v6142 = vunpack.c.h.b16 %v5869
  %v6143 = vunpack.c.l.b16 %v5870
  %v6144 = vunpack.c.h.b16 %v5870
  %v6145 = vunpack.c.l.b16 %v5871
  %v6146 = vunpack.c.h.b16 %v5871
  %v6147 = vunpack.c.l.b16 %v5872
  %v6148 = vunpack.c.h.b16 %v5872
  %v6149 = vunpack.c.l.b16 %v5873
  %v6150 = vunpack.c.h.b16 %v5873
  %v6151 = vunpack.c.l.b16 %v5874
  %v6152 = vunpack.c.h.b16 %v5874
  %v6153 = vunpack.c.l.b16 %v5875
  %v6154 = vunpack.c.h.b16 %v5875
  %v6155 = vunpack.c.l.b16 %v5876
  %v6156 = vunpack.c.h.b16 %v5876
  %v6157 = vunpack.c.l.b16 %v5877
  %v6158 = vunpack.c.h.b16 %v5877
  %v6159 = vunpack.c.l.b16 %v5878
  %v6160 = vunpack.c.h.b16 %v5878
  %v6161 = vunpack.c.l.b16 %v5879
  %v6162 = vunpack.c.h.b16 %v5879
  %v6163 = vunpack.c.l.b16 %v5880
  %v6164 = vunpack.c.h.b16 %v5880
  %v6165 = vunpack.c.l.b16 %v5881
  %v6166 = vunpack.c.h.b16 %v5881
  %v6167 = vunpack.c.l.b16 %v5882
  %v6168 = vunpack.c.h.b16 %v5882
  %v6169 = vunpack.c.l.b16 %v5883
  %v6170 = vunpack.c.h.b16 %v5883
  %v6171 = vunpack.c.l.b16 %v5884
  %v6172 = vunpack.c.h.b16 %v5884
  %v6173 = vunpack.c.l.b16 %v5885
  %v6174 = vunpack.c.h.b16 %v5885
  %v6175 = vunpack.c.l.b16 %v5886
  %v6176 = vunpack.c.h.b16 %v5886
  %v6177 = vunpack.c.l.b16 %v5887
  %v6178 = vunpack.c.h.b16 %v5887
  %v6179 = vunpack.c.l.b16 %v5888
  %v6180 = vunpack.c.h.b16 %v5888
  %v6181 = vunpack.c.l.b16 %v5889
  %v6182 = vunpack.c.h.b16 %v5889
  %v6183 = vunpack.c.l.b16 %v5890
  %v6184 = vunpack.c.h.b16 %v5890
  %v6185 = vunpack.c.l.b16 %v5891
  %v6186 = vunpack.c.h.b16 %v5891
  %v6187 = vunpack.c.l.b16 %v5892
  %v6188 = vunpack.c.h.b16 %v5892
  %v6189 = vunpack.c.l.b16 %v5893
  %v6190 = vunpack.c.h.b16 %v5893
  %v6191 = vunpack.c.l.b16 %v5894
  %v6192 = vunpack.c.h.b16 %v5894
  %v6193 = vunpack.c.l.b16 %v5895
  %v6194 = vunpack.c.h.b16 %v5895
  %v6195 = vunpack.c.l.b16 %v5896
  %v6196 = vunpack.c.h.b16 %v5896
  %v6197 = vunpack.c.l.b16 %v5897
  %v6198 = vunpack.c.h.b16 %v5897
  %v6199 = vunpack.c.l.b16 %v5898
  %v6200 = vunpack.c.h.b16 %v5898
  %v6201 = vunpack.c.l.b16 %v5899
  %v6202 = vunpack.c.h.b16 %v5899
  %v6203 = vunpack.c.l.b16 %v5900
  %v6204 = vunpack.c.h.b16 %v5900
  %v6205 = vunpack.c.l.b16 %v5901
  %v6206 = vunpack.c.h.b16 %v5901
  %v6207 = vunpack.c.l.b16 %v5902
  %v6208 = vunpack.c.h.b16 %v5902
  %v6209 = vunpack.c.l.b16 %v5903
  %v6210 = vunpack.c.h.b16 %v5903
  %v6211 = vunpack.c.l.b16 %v5904
  %v6212 = vunpack.c.h.b16 %v5904
  %v6213 = vunpack.c.l.b16 %v5905
  %v6214 = vunpack.c.h.b16 %v5905
  %v6215 = vunpack.c.l.b16 %v5906
  %v6216 = vunpack.c.h.b16 %v5906
  %v6217 = vunpack.c.l.b16 %v5907
  %v6218 = vunpack.c.h.b16 %v5907
  %v6219 = vunpack.c.l.b16 %v5908
  %v6220 = vunpack.c.h.b16 %v5908
  %v6221 = vunpack.c.l.b16 %v5909
  %v6222 = vunpack.c.h.b16 %v5909
  %v6223 = vunpack.c.l.b16 %v5910
  %v6224 = vunpack.c.h.b16 %v5910
  %v6225 = vunpack.c.l.b16 %v5911
  %v6226 = vunpack.c.h.b16 %v5911
  %v6227 = vunpack.c.l.b16 %v5912
  %v6228 = vunpack.c.h.b16 %v5912
  %v6229 = vunpack.c.l.b16 %v5913
  %v6230 = vunpack.c.h.b16 %v5913
  %v6231 = vunpack.c.l.b16 %v5914
  %v6232 = vunpack.c.h.b16 %v5914
  %v6233 = vunpack.c.l.b16 %v5915
  %v6234 = vunpack.c.h.b16 %v5915
  %v6235 = vunpack.c.l.b16 %v5916
  %v6236 = vunpack.c.h.b16 %v5916
  %v6237 = vunpack.c.l.b16 %v5917
  %v6238 = vunpack.c.h.b16 %v5917
  %v6239 = vunpack.c.l.b16 %v5918
  %v6240 = vunpack.c.h.b16 %v5918
  %v6241 = vpack.c.b16 %v6083, %v6081
  %v6242 = vpack.c.b16 %v6084, %v6082
  %v6243 = vpack.c.b16 %v6087, %v6085
  %v6244 = vpack.c.b16 %v6088, %v6086
  %v6245 = vpack.c.b16 %v6091, %v6089
  %v6246 = vpack.c.b16 %v6092, %v6090
  %v6247 = vpack.c.b16 %v6095, %v6093
  %v6248 = vpack.c.b16 %v6096, %v6094
  %v6249 = vpack.c.b16 %v6099, %v6097
  %v6250 = vpack.c.b16 %v6100, %v6098
  %v6251 = vpack.c.b16 %v6103, %v6101
  %v6252 = vpack.c.b16 %v6104, %v6102
  %v6253 = vpack.c.b16 %v6107, %v6105
  %v6254 = vpack.c.b16 %v6108, %v6106
  %v6255 = vpack.c.b16 %v6111, %v6109
  %v6256 = vpack.c.b16 %v6112, %v6110
  %v6257 = vpack.c.b16 %v6115, %v6113
  %v6258 = vpack.c.b16 %v6116, %v6114
  %v6259 = vpack.c.b16 %v6119, %v6117
  %v6260 = vpack.c.b16 %v6120, %v6118
  %v6261 = vpack.c.b16 %v6123, %v6121
  %v6262 = vpack.c.b16 %v6124, %v6122
  %v6263 = vpack.c.b16 %v6127, %v6125
  %v6264 = vpack.c.b16 %v6128, %v6126
  %v6265 = vpack.c.b16 %v6131, %v6129
  %v6266 = vpack.c.b16 %v6132, %v6130
  %v6267 = vpack.c.b16 %v6135, %v6133
  %v6268 = vpack.c.b16 %v6136, %v6134
  %v6269 = vpack.c.b16 %v6139, %v6137
  %v6270 = vpack.c.b16 %v6140, %v6138
  %v6271 = vpack.c.b16 %v6143, %v6141
  %v6272 = vpack.c.b16 %v6144, %v6142
  %v6273 = vpack.c.b16 %v6147, %v6145
  %v6274 = vpack.c.b16 %v6148, %v6146
  %v6275 = vpack.c.b16 %v6151, %v6149
  %v6276 = vpack.c.b16 %v6152, %v6150
  %v6277 = vpack.c.b16 %v6155, %v6153
  %v6278 = vpack.c.b16 %v6156, %v6154
  %v6279 = vpack.c.b16 %v6159, %v6157
  %v6280 = vpack.c.b16 %v6160, %v6158
  %v6281 = vpack.c.b16 %v6163, %v6161
  %v6282 = vpack.c.b16 %v6164, %v6162
  %v6283 = vpack.c.b16 %v6167, %v6165
  %v6284 = vpack.c.b16 %v6168, %v6166
  %v6285 = vpack.c.b16 %v6171, %v6169
  %v6286 = vpack.c.b16 %v6172, %v6170
  %v6287 = vpack.c.b16 %v6175, %v6173
  %v6288 = vpack.c.b16 %v6176, %v6174
  %v6289 = vpack.c.b16 %v6179, %v6177
  %v6290 = vpack.c.b16 %v6180, %v6178
  %v6291 = vpack.c.b16 %v6183, %v6181
  %v6292 = vpack.c.b16 %v6184, %v6182
  %v6293 = vpack.c.b16 %v6187, %v6185
  %v6294 = vpack.c.b16 %v6188, %v6186
  %v6295 = vpack.c.b16 %v6191, %v6189
  %v6296 = vpack.c.b16 %v6192, %v6190
  %v6297 = vpack.c.b16 %v6195, %v6193
  %v6298 = vpack.c.b16 %v6196, %v6194
  %v6299 = vpack.c.b16 %v6199, %v6197
  %v6300 = vpack.c.b16 %v6200, %v6198
  %v6301 = vpack.c.b16 %v6203, %v6201
  %v6302 = vpack.c.b16 %v6204, %v6202
  %v6303 = vpack.c.b16 %v6207, %v6205
  %v6304 = vpack.c.b16 %v6208, %v6206
  %v6305 = vpack.c.b16 %v6211, %v6209
  %v6306 = vpack.c.b16 %v6212, %v6210
  %v6307 = vpack.c.b16 %v6215, %v6213
  %v6308 = vpack.c.b16 %v6216, %v6214
  %v6309 = vpack.c.b16 %v6219, %v6217
  %v6310 = vpack.c.b16 %v6220, %v6218
  %v6311 = vpack.c.b16 %v6223, %v6221
  %v6312 = vpack.c.b16 %v6224, %v6222
  %v6313 = vpack.c.b16 %v6227, %v6225
  %v6314 = vpack.c.b16 %v6228, %v6226
  %v6315 = vpack.c.b16 %v6231, %v6229
  %v6316 = vpack.c.b16 %v6232, %v6230
  %v6317 = vpack.c.b16 %v6235, %v6233
  %v6318 = vpack.c.b16 %v6236, %v6234
  %v6319 = vpack.c.b16 %v6239, %v6237
  %v6320 = vpack.c.b16 %v6240, %v6238
  %6401 = vmatprep.subr.bf16.mxu0 %v6242
  %6402 = vmatpush1.bf16.msra.mxu0 %v6241
  %6403 = vmatprep.subr.bf16.mxu0 %v6244
  %6404 = vmatpush1.bf16.msra.mxu0 %v6243
  %6405 = vmatprep.subr.bf16.mxu0 %v6246
  %6406 = vmatpush1.bf16.msra.mxu0 %v6245
  %6407 = vmatprep.subr.bf16.mxu0 %v6248
  %6408 = vmatpush1.bf16.msra.mxu0 %v6247
  %6409 = vmatprep.subr.bf16.mxu0 %v6250
  %6410 = vmatpush1.bf16.msra.mxu0 %v6249
  %6411 = vmatprep.subr.bf16.mxu0 %v6252
  %6412 = vmatpush1.bf16.msra.mxu0 %v6251
  %6413 = vmatprep.subr.bf16.mxu0 %v6254
  %6414 = vmatpush1.bf16.msra.mxu0 %v6253
  %6415 = vmatprep.subr.bf16.mxu0 %v6256
  %6416 = vmatpush1.bf16.msra.mxu0 %v6255
  %6417 = vmatprep.subr.bf16.mxu0 %v6258
  %6418 = vmatpush1.bf16.msra.mxu0 %v6257
  %6419 = vmatprep.subr.bf16.mxu0 %v6260
  %6420 = vmatpush1.bf16.msra.mxu0 %v6259
  %6421 = vmatprep.subr.bf16.mxu0 %v6262
  %6422 = vmatpush1.bf16.msra.mxu0 %v6261
  %6423 = vmatprep.subr.bf16.mxu0 %v6264
  %6424 = vmatpush1.bf16.msra.mxu0 %v6263
  %6425 = vmatprep.subr.bf16.mxu0 %v6266
  %6426 = vmatpush1.bf16.msra.mxu0 %v6265
  %6427 = vmatprep.subr.bf16.mxu0 %v6268
  %6428 = vmatpush1.bf16.msra.mxu0 %v6267
  %6429 = vmatprep.subr.bf16.mxu0 %v6270
  %6430 = vmatpush1.bf16.msra.mxu0 %v6269
  %6431 = vmatprep.subr.bf16.mxu0 %v6272
  %6432 = vmatpush1.bf16.msra.mxu0 %v6271
  %6433 = vmatprep.mubr.bf16.mxu0 %v5972
  %6434 = vmatmul.mubr.bf16.gmra.mrb[0].mxu0 %v5971
  %v6435 = vpop.f32.mrb[0].mxu0
  %v6436 = vadd.f32 %v5924, %v6435
  %v6437 = vpop.f32.mrb[0].mxu0
  %v6438 = vadd.f32 %v5928, %v6437
  %v6439 = vpop.f32.mrb[0].mxu0
  %v6440 = vadd.f32 %v5924, %v6439
  %v6441 = vpop.f32.mrb[0].mxu0
  %v6442 = vadd.f32 %v5928, %v6441
  %6443 = vmatprep.mubr.bf16.mxu0 %v5977
  %6444 = vmatmul.mubr.bf16.gmra.mrb[0].mxu0 %v5976
  %v6445 = vpop.f32.mrb[0].mxu0
  %v6446 = vadd.f32 %v5924, %v6445
  %v6447 = vpop.f32.mrb[0].mxu0
  %v6448 = vadd.f32 %v5928, %v6447
  %v6449 = vpop.f32.mrb[0].mxu0
  %v6450 = vadd.f32 %v5924, %v6449
  %v6451 = vpop.f32.mrb[0].mxu0
  %v6452 = vadd.f32 %v5928, %v6451
  %6453 = vmatprep.mubr.bf16.mxu0 %v5982
  %6454 = vmatmul.mubr.bf16.gmra.mrb[0].mxu0 %v5981
  %v6455 = vpop.f32.mrb[0].mxu0
  %v6456 = vadd.f32 %v5924, %v6455
  %v6457 = vpop.f32.mrb[0].mxu0
  %v6458 = vadd.f32 %v5928, %v6457
  %v6459 = vpop.f32.mrb[0].mxu0
  %v6460 = vpop.f32.mrb[0].mxu0
  %6461 = vdwg.mxu0
  %6462 = vmatprep.subr.bf16.mxu0 %v6274
  %6463 = vmatpush1.bf16.msra.mxu0 %v6273
  %6464 = vmatprep.subr.bf16.mxu0 %v6276
  %6465 = vmatpush1.bf16.msra.mxu0 %v6275
  %6466 = vmatprep.subr.bf16.mxu0 %v6278
  %6467 = vmatpush1.bf16.msra.mxu0 %v6277
  %6468 = vmatprep.subr.bf16.mxu0 %v6280
  %6469 = vmatpush1.bf16.msra.mxu0 %v6279
  %6470 = vmatprep.subr.bf16.mxu0 %v6282
  %6471 = vmatpush1.bf16.msra.mxu0 %v6281
  %6472 = vmatprep.subr.bf16.mxu0 %v6284
  %6473 = vmatpush1.bf16.msra.mxu0 %v6283
  %6474 = vmatprep.subr.bf16.mxu0 %v6286
  %6475 = vmatpush1.bf16.msra.mxu0 %v6285
  %6476 = vmatprep.subr.bf16.mxu0 %v6288
  %6477 = vmatpush1.bf16.msra.mxu0 %v6287
  %6478 = vmatprep.subr.bf16.mxu0 %v6290
  %6479 = vmatpush1.bf16.msra.mxu0 %v6289
  %6480 = vmatprep.subr.bf16.mxu0 %v6292
  %6481 = vmatpush1.bf16.msra.mxu0 %v6291
  %6482 = vmatprep.subr.bf16.mxu0 %v6294
  %6483 = vmatpush1.bf16.msra.mxu0 %v6293
  %6484 = vmatprep.subr.bf16.mxu0 %v6296
  %6485 = vmatpush1.bf16.msra.mxu0 %v6295
  %6486 = vmatprep.subr.bf16.mxu0 %v6298
  %6487 = vmatpush1.bf16.msra.mxu0 %v6297
  %6488 = vmatprep.subr.bf16.mxu0 %v6300
  %6489 = vmatpush1.bf16.msra.mxu0 %v6299
  %6490 = vmatprep.subr.bf16.mxu0 %v6302
  %6491 = vmatpush1.bf16.msra.mxu0 %v6301
  %6492 = vmatprep.subr.bf16.mxu0 %v6304
  %6493 = vmatpush1.bf16.msra.mxu0 %v6303
  %6494 = vmatprep.mubr.bf16.mxu0 %v5974
  %6495 = vmatmul.mubr.bf16.gmra.mrb[0].mxu0 %v5973
  %v6496 = vpop.f32.mrb[0].mxu0
  %v6497 = vadd.f32 %v6436, %v6496
  %v6498 = vpop.f32.mrb[0].mxu0
  %v6499 = vadd.f32 %v6438, %v6498
  %v6500 = vpop.f32.mrb[0].mxu0
  %v6501 = vadd.f32 %v6440, %v6500
  %v6502 = vpop.f32.mrb[0].mxu0
  %v6503 = vadd.f32 %v6442, %v6502
  %6504 = vmatprep.mubr.bf16.mxu0 %v5979
  %6505 = vmatmul.mubr.bf16.gmra.mrb[0].mxu0 %v5978
  %v6506 = vpop.f32.mrb[0].mxu0
  %v6507 = vadd.f32 %v6446, %v6506
  %v6508 = vpop.f32.mrb[0].mxu0
  %v6509 = vadd.f32 %v6448, %v6508
  %v6510 = vpop.f32.mrb[0].mxu0
  %v6511 = vadd.f32 %v6450, %v6510
  %v6512 = vpop.f32.mrb[0].mxu0
  %v6513 = vadd.f32 %v6452, %v6512
  %6514 = vmatprep.mubr.bf16.mxu0 %v5984
  %6515 = vmatmul.mubr.bf16.gmra.mrb[0].mxu0 %v5983
  %v6516 = vpop.f32.mrb[0].mxu0
  %v6517 = vadd.f32 %v6456, %v6516
  %v6518 = vpop.f32.mrb[0].mxu0
  %v6519 = vadd.f32 %v6458, %v6518
  %v6520 = vpop.f32.mrb[0].mxu0
  %v6521 = vpop.f32.mrb[0].mxu0
  %6522 = vdwg.mxu0
  %6523 = vmatprep.subr.bf16.mxu0 %v6306
  %6524 = vmatpush1.bf16.msra.mxu0 %v6305
  %6525 = vmatprep.subr.bf16.mxu0 %v6308
  %6526 = vmatpush1.bf16.msra.mxu0 %v6307
  %6527 = vmatprep.subr.bf16.mxu0 %v6310
  %6528 = vmatpush1.bf16.msra.mxu0 %v6309
  %6529 = vmatprep.subr.bf16.mxu0 %v6312
  %6530 = vmatpush1.bf16.msra.mxu0 %v6311
  %6531 = vmatprep.subr.bf16.mxu0 %v6314
  %6532 = vmatpush1.bf16.msra.mxu0 %v6313
  %6533 = vmatprep.subr.bf16.mxu0 %v6316
  %6534 = vmatpush1.bf16.msra.mxu0 %v6315
  %6535 = vmatprep.subr.bf16.mxu0 %v6318
  %6536 = vmatpush1.bf16.msra.mxu0 %v6317
  %6537 = vmatprep.subr.bf16.mxu0 %v6320
  %6538 = vmatpush1.bf16.msra.mxu0 %v6319
  %6539 = vmatprep.subr.bf16.mxu0 0
  %6540 = vmatpush1.bf16.msra.mxu0 0
  %6541 = vmatprep.subr.bf16.mxu0 0
  %6542 = vmatpush1.bf16.msra.mxu0 0
  %6543 = vmatprep.subr.bf16.mxu0 0
  %6544 = vmatpush1.bf16.msra.mxu0 0
  %6545 = vmatprep.subr.bf16.mxu0 0
  %6546 = vmatpush1.bf16.msra.mxu0 0
  %6547 = vmatprep.subr.bf16.mxu0 0
  %6548 = vmatpush1.bf16.msra.mxu0 0
  %6549 = vmatprep.subr.bf16.mxu0 0
  %6550 = vmatpush1.bf16.msra.mxu0 0
  %6551 = vmatprep.subr.bf16.mxu0 0
  %6552 = vmatpush1.bf16.msra.mxu0 0
  %6553 = vmatprep.subr.bf16.mxu0 0
  %6554 = vmatpush1.bf16.msra.mxu0 0
  %6555 = vmatprep.mubr.bf16.mxu0 0
  %6556 = vmatmul.mubr.bf16.gmra.mrb[0].mxu0 %v5975
  %v6557 = vpop.f32.mrb[0].mxu0
  %v6558 = vadd.f32 %v6497, %v6557
  %v6559 = vpop.f32.mrb[0].mxu0
  %v6560 = vadd.f32 %v6499, %v6559
  %v6561 = vpop.f32.mrb[0].mxu0
  %v6562 = vadd.f32 %v6501, %v6561
  %v6563 = vpop.f32.mrb[0].mxu0
  %v6564 = vadd.f32 %v6503, %v6563
  %6565 = vmatprep.mubr.bf16.mxu0 0
  %6566 = vmatmul.mubr.bf16.gmra.mrb[0].mxu0 %v5980
  %v6567 = vpop.f32.mrb[0].mxu0
  %v6568 = vadd.f32 %v6507, %v6567
  %v6569 = vpop.f32.mrb[0].mxu0
  %v6570 = vadd.f32 %v6509, %v6569
  %v6571 = vpop.f32.mrb[0].mxu0
  %v6572 = vadd.f32 %v6511, %v6571
  %v6573 = vpop.f32.mrb[0].mxu0
  %v6574 = vadd.f32 %v6513, %v6573
  %6575 = vmatprep.mubr.bf16.mxu0 0
  %6576 = vmatmul.mubr.bf16.gmra.mrb[0].mxu0 %v5985
  %v6577 = vpop.f32.mrb[0].mxu0
  %v6578 = vadd.f32 %v6517, %v6577
  %v6579 = vpop.f32.mrb[0].mxu0
  %v6580 = vadd.f32 %v6519, %v6579
  %v6581 = vpop.f32.mrb[0].mxu0
  %v6582 = vpop.f32.mrb[0].mxu0
  %6583 = vdwg.mxu0
  %v6584 = vadd.f32 %v6558, %v5589
  %v6585 = vadd.f32 %v6560, %v5590
  %v6586 = vadd.f32 %v6562, %v5591
  %v6587 = vadd.f32 %v6564, %v5592
  %v6588 = vadd.f32 %v6568, %v5593
  %v6589 = vadd.f32 %v6570, %v5594
  %v6590 = vadd.f32 %v6572, %v5595
  %v6591 = vadd.f32 %v6574, %v5596
  %v6592 = vadd.f32 %v6578, %v5597
  %v6593 = vadd.f32 %v6580, %v5598
  %v6594 = vmax.f32 %v6584, 0.0
  %v6595 = vmax.f32 %v6585, 0.0
  %v6596 = vmax.f32 %v6586, 0.0
  %v6597 = vmax.f32 %v6587, 0.0
  %v6598 = vmax.f32 %v6588, 0.0
  %v6599 = vmax.f32 %v6589, 0.0
  %v6600 = vmax.f32 %v6590, 0.0
  %v6601 = vmax.f32 %v6591, 0.0
  %v6602 = vmax.f32 %v6592, 0.0
  %v6603 = vmax.f32 %v6593, 0.0
  %v6610 = vrot.slane %v6594, 4
  %v6611 = vrot.slane %v6595, 4
  %v6612 = vrot.slane %v6596, 4
  %v6613 = vsel %vm678, %v6610, %v6612
  %v6614 = vrot.slane %v6597, 4
  %v6615 = vsel %vm678, %v6611, %v6614
  %v6616 = vrot.slane %v6598, 4
  %v6617 = vsel %vm678, %v6612, %v6616
  %v6618 = vrot.slane %v6599, 4
  %v6619 = vsel %vm678, %v6614, %v6618
  %6626 = vst [vmem:[#allocation9] sm:$0xf0] %v6610
  %6627 = vst.msk [vmem:[#allocation9 + $0x8] sm:$0xf0] %vm2318, %v6611
  %6628 = vst [vmem:[#allocation9 + $0x10] sm:$0xff] %v6613
  %6629 = vst.msk [vmem:[#allocation9 + $0x18] sm:$0xff] %vm2292, %v6615
  %6630 = vst [vmem:[#allocation9 + $0x20] sm:$0xff] %v6617
  %6631 = vst.msk [vmem:[#allocation9 + $0x28] sm:$0xff] %vm2292, %v6619
  %v6636 = vrot.slane %v6600, 4
  %v6637 = vsel %vm678, %v6616, %v6636
  %v6638 = vrot.slane %v6601, 4
  %v6639 = vsel %vm678, %v6618, %v6638
  %v6640 = vrot.slane %v6602, 4
  %v6641 = vsel %vm678, %v6636, %v6640
  %v6642 = vrot.slane %v6603, 4
  %v6643 = vsel %vm678, %v6638, %v6642
  %6650 = vst [vmem:[#allocation9 + $0x40] sm:$0xff] %v6637
  %6651 = vst.msk [vmem:[#allocation9 + $0x48] sm:$0xff] %vm2292, %v6639
  %6652 = vst [vmem:[#allocation9 + $0x50] sm:$0xff] %v6641
  %6653 = vst.msk [vmem:[#allocation9 + $0x58] sm:$0xff] %vm2292, %v6643
  %6654 = vst [vmem:[#allocation9 + $0x60] sm:$0xf] %v6640
  %vm6655 = vcmask 257024
  %6656 = vst.msk [vmem:[#allocation9 + $0x68] sm:$0xf] %vm6655, %v6642
  %v6657 = vld [vmem:[#allocation9] sm:$0xff]
  %v6658 = vld [vmem:[#allocation9 + $0x8] sm:$0xff]
  %v6659 = vld [vmem:[#allocation9 + $0x10] sm:$0xff]
  %v6660 = vld [vmem:[#allocation9 + $0x18] sm:$0xff]
  %v6661 = vld [vmem:[#allocation9 + $0x20] sm:$0xff]
  %v6662 = vld [vmem:[#allocation9 + $0x28] sm:$0xff]
  %v6663 = vpack.c.bf16 %v6659, %v6657
  %v6664 = vpack.c.bf16 %v6660, %v6658
  %v6665 = vpack.c.bf16 %v6661, %v6661
  %v6666 = vpack.c.bf16 %v6662, %v6662
  %v6671 = vunpack.c.l.b16 %v6663
  %v6672 = vunpack.c.l.b16 %v6664
  %v6673 = vunpack.c.h.b16 %v6663
  %v6674 = vunpack.c.h.b16 %v6664
  %v6675 = vunpack.c.l.b16 %v6665
  %v6676 = vunpack.c.l.b16 %v6666
  %v6677 = vpack.c.b16 %v6672, %v6671
  %v6678 = vpack.c.b16 %v6674, %v6673
  %v6679 = vpack.c.b16 %v6676, %v6675
  %6683 = vst.msk [vmem:[#allocation11] sm:$0xff] %vm2319, %v6677
  %6684 = vst.msk [vmem:[#allocation11 + $0x20] sm:$0xff] %vm2319, %v6678
  %6685 = vst.msk [vmem:[#allocation11 + $0x40] sm:$0xff] %vm2319, %v6679
  %v6686 = vld [vmem:[#allocation9] sm:$0xfe]
  %v6687 = vld [vmem:[#allocation9 + $0x8] sm:$0xfe]
  %v6688 = vld [vmem:[#allocation9 + $0x10] sm:$0xff]
  %v6689 = vld [vmem:[#allocation9 + $0x18] sm:$0xff]
  %v6690 = vld [vmem:[#allocation9 + $0x20] sm:$0xff]
  %v6691 = vld [vmem:[#allocation9 + $0x28] sm:$0xff]
  %v6692 = vld [vmem:[#allocation9 + $0x30] sm:$0x1]
  %v6693 = vld [vmem:[#allocation9 + $0x38] sm:$0x1]
  %v6694 = vpack.c.bf16 %v6688, %v6686
  %v6695 = vpack.c.bf16 %v6689, %v6687
  %v6696 = vpack.c.bf16 %v6692, %v6690
  %v6697 = vpack.c.bf16 %v6693, %v6691
  %v6702 = vunpack.c.l.b16 %v6694
  %v6703 = vunpack.c.l.b16 %v6695
  %v6704 = vunpack.c.h.b16 %v6694
  %v6705 = vunpack.c.h.b16 %v6695
  %v6706 = vunpack.c.l.b16 %v6696
  %v6707 = vunpack.c.l.b16 %v6697
  %v6708 = vunpack.c.h.b16 %v6696
  %v6709 = vunpack.c.h.b16 %v6697
  %v6710 = vpack.c.b16 %v6703, %v6702
  %v6711 = vpack.c.b16 %v6705, %v6704
  %v6712 = vpack.c.b16 %v6707, %v6706
  %v6713 = vpack.c.b16 %v6709, %v6708
  %v6715 = vshrl.u32 %v6710, 16
  %v6717 = vrot.slane %v6715, 4
  %v6718 = vshll.u32 %v6710, 16
  %v6720 = vrot.slane %v6718, 5
  %v6721 = vor.u32 %v6717, %v6720
  %v6722 = vrot.slane %v6721, 4
  %v6724 = vshll.u32 %v6711, 16
  %v6726 = vrot.slane %v6724, 5
  %v6727 = vsel %vm712, %v6722, %v6726
  %v6728 = vshrl.u32 %v6711, 16
  %v6730 = vrot.slane %v6728, 4
  %v6731 = vor.u32 %v6730, %v6726
  %v6732 = vrot.slane %v6731, 4
  %v6734 = vshll.u32 %v6712, 16
  %v6736 = vrot.slane %v6734, 5
  %v6737 = vsel %vm712, %v6732, %v6736
  %v6738 = vshrl.u32 %v6712, 16
  %v6740 = vrot.slane %v6738, 4
  %v6741 = vor.u32 %v6740, %v6736
  %v6742 = vrot.slane %v6741, 4
  %v6744 = vshll.u32 %v6713, 16
  %v6746 = vrot.slane %v6744, 5
  %v6747 = vsel %vm712, %v6742, %v6746
  %6748 = vrot.lane.b32.xlu0 %v6727, 32
  %v6749 = vpop.permute.xlu0 %6748
  %6750 = vrot.lane.b32.xlu0 %v6737, 32
  %v6751 = vpop.permute.xlu0 %6750
  %6752 = vrot.lane.b32.xlu0 %v6747, 32
  %v6753 = vpop.permute.xlu0 %6752
  %v6754 = vrot.slane %v6749, 4
  %v6755 = vrot.slane %v6751, 4
  %v6756 = vrot.slane %v6753, 4
  %v6757 = vsel %vm2375, %v6754, %v6749
  %v6758 = vsel %vm2375, %v6755, %v6751
  %v6759 = vsel %vm2375, %v6756, %v6753
  %6763 = vst.msk [vmem:[#allocation11 + $0x4] sm:$0xff] %vm2381, %v6757
  %6764 = vst.msk [vmem:[#allocation11 + $0x24] sm:$0xff] %vm2381, %v6758
  %6765 = vst.msk [vmem:[#allocation11 + $0x44] sm:$0xff] %vm2381, %v6759
  %v6766 = vld [vmem:[#allocation9] sm:$0xfc]
  %v6767 = vld [vmem:[#allocation9 + $0x8] sm:$0xfc]
  %v6768 = vld [vmem:[#allocation9 + $0x10] sm:$0xff]
  %v6769 = vld [vmem:[#allocation9 + $0x18] sm:$0xff]
  %v6770 = vld [vmem:[#allocation9 + $0x20] sm:$0xff]
  %v6771 = vld [vmem:[#allocation9 + $0x28] sm:$0xff]
  %v6772 = vld [vmem:[#allocation9 + $0x30] sm:$0x3]
  %v6773 = vld [vmem:[#allocation9 + $0x38] sm:$0x3]
  %v6774 = vpack.c.bf16 %v6768, %v6766
  %v6775 = vpack.c.bf16 %v6769, %v6767
  %v6776 = vpack.c.bf16 %v6772, %v6770
  %v6777 = vpack.c.bf16 %v6773, %v6771
  %v6782 = vunpack.c.l.b16 %v6774
  %v6783 = vunpack.c.l.b16 %v6775
  %v6784 = vunpack.c.h.b16 %v6774
  %v6785 = vunpack.c.h.b16 %v6775
  %v6786 = vunpack.c.l.b16 %v6776
  %v6787 = vunpack.c.l.b16 %v6777
  %v6788 = vunpack.c.h.b16 %v6776
  %v6789 = vunpack.c.h.b16 %v6777
  %v6790 = vpack.c.b16 %v6783, %v6782
  %v6791 = vpack.c.b16 %v6785, %v6784
  %v6792 = vpack.c.b16 %v6787, %v6786
  %v6793 = vpack.c.b16 %v6789, %v6788
  %v6794 = vrot.slane %v6790, 5
  %v6795 = vrot.slane %v6794, 4
  %v6796 = vrot.slane %v6791, 5
  %v6797 = vsel %vm792, %v6795, %v6796
  %v6798 = vrot.slane %v6796, 4
  %v6799 = vrot.slane %v6792, 5
  %v6800 = vsel %vm792, %v6798, %v6799
  %v6801 = vrot.slane %v6799, 4
  %v6802 = vrot.slane %v6793, 5
  %v6803 = vsel %vm792, %v6801, %v6802
  %6804 = vrot.lane.b32.xlu0 %v6797, 64
  %v6805 = vpop.permute.xlu0 %6804
  %6806 = vrot.lane.b32.xlu0 %v6800, 64
  %v6807 = vpop.permute.xlu0 %6806
  %6808 = vrot.lane.b32.xlu0 %v6803, 64
  %v6809 = vpop.permute.xlu0 %6808
  %v6810 = vrot.slane %v6805, 4
  %v6811 = vrot.slane %v6807, 4
  %v6812 = vrot.slane %v6809, 4
  %v6813 = vsel %vm751, %v6810, %v6805
  %v6814 = vsel %vm751, %v6811, %v6807
  %v6815 = vsel %vm751, %v6812, %v6809
  %6819 = vst.msk [vmem:[#allocation11 + $0x8] sm:$0xff] %vm2425, %v6813
  %6820 = vst.msk [vmem:[#allocation11 + $0x28] sm:$0xff] %vm2425, %v6814
  %6821 = vst.msk [vmem:[#allocation11 + $0x48] sm:$0xff] %vm2425, %v6815
  %v6822 = vld [vmem:[#allocation9] sm:$0xf8]
  %v6823 = vld [vmem:[#allocation9 + $0x8] sm:$0xf8]
  %v6824 = vld [vmem:[#allocation9 + $0x10] sm:$0xff]
  %v6825 = vld [vmem:[#allocation9 + $0x18] sm:$0xff]
  %v6826 = vld [vmem:[#allocation9 + $0x20] sm:$0xff]
  %v6827 = vld [vmem:[#allocation9 + $0x28] sm:$0xff]
  %v6828 = vld [vmem:[#allocation9 + $0x30] sm:$0x7]
  %v6829 = vld [vmem:[#allocation9 + $0x38] sm:$0x7]
  %v6830 = vpack.c.bf16 %v6824, %v6822
  %v6831 = vpack.c.bf16 %v6825, %v6823
  %v6832 = vpack.c.bf16 %v6828, %v6826
  %v6833 = vpack.c.bf16 %v6829, %v6827
  %v6838 = vunpack.c.l.b16 %v6830
  %v6839 = vunpack.c.l.b16 %v6831
  %v6840 = vunpack.c.h.b16 %v6830
  %v6841 = vunpack.c.h.b16 %v6831
  %v6842 = vunpack.c.l.b16 %v6832
  %v6843 = vunpack.c.l.b16 %v6833
  %v6844 = vunpack.c.h.b16 %v6832
  %v6845 = vunpack.c.h.b16 %v6833
  %v6846 = vpack.c.b16 %v6839, %v6838
  %v6847 = vpack.c.b16 %v6841, %v6840
  %v6848 = vpack.c.b16 %v6843, %v6842
  %v6849 = vpack.c.b16 %v6845, %v6844
  %v6851 = vshrl.u32 %v6846, 16
  %v6853 = vrot.slane %v6851, 5
  %v6854 = vshll.u32 %v6846, 16
  %v6856 = vrot.slane %v6854, 6
  %v6857 = vor.u32 %v6853, %v6856
  %v6858 = vrot.slane %v6857, 4
  %v6860 = vshrl.u32 %v6847, 16
  %v6862 = vrot.slane %v6860, 5
  %v6863 = vshll.u32 %v6847, 16
  %v6865 = vrot.slane %v6863, 6
  %v6866 = vor.u32 %v6862, %v6865
  %v6867 = vsel %vm832, %v6858, %v6866
  %v6868 = vrot.slane %v6866, 4
  %v6870 = vshrl.u32 %v6848, 16
  %v6872 = vrot.slane %v6870, 5
  %v6873 = vshll.u32 %v6848, 16
  %v6875 = vrot.slane %v6873, 6
  %v6876 = vor.u32 %v6872, %v6875
  %v6877 = vsel %vm832, %v6868, %v6876
  %v6878 = vrot.slane %v6876, 4
  %v6880 = vshrl.u32 %v6849, 16
  %v6882 = vrot.slane %v6880, 5
  %v6883 = vshll.u32 %v6849, 16
  %v6885 = vrot.slane %v6883, 6
  %v6886 = vor.u32 %v6882, %v6885
  %v6887 = vsel %vm832, %v6878, %v6886
  %6888 = vrot.lane.b32.xlu0 %v6867, 96
  %v6889 = vpop.permute.xlu0 %6888
  %6890 = vrot.lane.b32.xlu0 %v6877, 96
  %v6891 = vpop.permute.xlu0 %6890
  %6892 = vrot.lane.b32.xlu0 %v6887, 96
  %v6893 = vpop.permute.xlu0 %6892
  %v6894 = vrot.slane %v6889, 4
  %v6895 = vrot.slane %v6891, 4
  %v6896 = vrot.slane %v6893, 4
  %v6897 = vsel %vm2485, %v6894, %v6889
  %v6898 = vsel %vm2485, %v6895, %v6891
  %v6899 = vsel %vm2485, %v6896, %v6893
  %6903 = vst.msk [vmem:[#allocation11 + $0xc] sm:$0xff] %vm2491, %v6897
  %6904 = vst.msk [vmem:[#allocation11 + $0x2c] sm:$0xff] %vm2491, %v6898
  %6905 = vst.msk [vmem:[#allocation11 + $0x4c] sm:$0xff] %vm2491, %v6899
  %v6906 = vld [vmem:[#allocation9] sm:$0xf0]
  %v6907 = vld [vmem:[#allocation9 + $0x8] sm:$0xf0]
  %v6908 = vld [vmem:[#allocation9 + $0x10] sm:$0xff]
  %v6909 = vld [vmem:[#allocation9 + $0x18] sm:$0xff]
  %v6910 = vld [vmem:[#allocation9 + $0x20] sm:$0xff]
  %v6911 = vld [vmem:[#allocation9 + $0x28] sm:$0xff]
  %v6912 = vld [vmem:[#allocation9 + $0x30] sm:$0xf]
  %v6913 = vld [vmem:[#allocation9 + $0x38] sm:$0xf]
  %v6914 = vpack.c.bf16 %v6908, %v6906
  %v6915 = vpack.c.bf16 %v6909, %v6907
  %v6916 = vpack.c.bf16 %v6912, %v6910
  %v6917 = vpack.c.bf16 %v6913, %v6911
  %v6922 = vunpack.c.l.b16 %v6914
  %v6923 = vunpack.c.l.b16 %v6915
  %v6924 = vunpack.c.h.b16 %v6914
  %v6925 = vunpack.c.h.b16 %v6915
  %v6926 = vunpack.c.l.b16 %v6916
  %v6927 = vunpack.c.l.b16 %v6917
  %v6928 = vunpack.c.h.b16 %v6916
  %v6929 = vunpack.c.h.b16 %v6917
  %v6930 = vpack.c.b16 %v6923, %v6922
  %v6931 = vpack.c.b16 %v6925, %v6924
  %v6932 = vpack.c.b16 %v6927, %v6926
  %v6933 = vpack.c.b16 %v6929, %v6928
  %v6934 = vrot.slane %v6930, 6
  %v6935 = vrot.slane %v6934, 4
  %v6936 = vrot.slane %v6931, 6
  %v6937 = vsel %vm905, %v6935, %v6936
  %v6938 = vrot.slane %v6936, 4
  %v6939 = vrot.slane %v6932, 6
  %v6940 = vsel %vm905, %v6938, %v6939
  %v6941 = vrot.slane %v6939, 4
  %v6942 = vrot.slane %v6933, 6
  %v6943 = vsel %vm905, %v6941, %v6942
  %6947 = vst.msk [vmem:[#allocation11 + $0x14] sm:$0xff] %vm2319, %v6937
  %6948 = vst.msk [vmem:[#allocation11 + $0x34] sm:$0xff] %vm2319, %v6940
  %6949 = vst.msk [vmem:[#allocation11 + $0x54] sm:$0xff] %vm2319, %v6943
  %v6950 = vld [vmem:[#allocation9 + $0x30] sm:$0xf0]
  %v6951 = vld [vmem:[#allocation9 + $0x38] sm:$0xf0]
  %v6952 = vld [vmem:[#allocation9 + $0x40] sm:$0xff]
  %v6953 = vld [vmem:[#allocation9 + $0x48] sm:$0xff]
  %v6954 = vld [vmem:[#allocation9 + $0x50] sm:$0xff]
  %v6955 = vld [vmem:[#allocation9 + $0x58] sm:$0xff]
  %v6956 = vld [vmem:[#allocation9 + $0x60] sm:$0xf]
  %v6957 = vld [vmem:[#allocation9 + $0x68] sm:$0xf]
  %v6958 = vpack.c.bf16 %v6952, %v6950
  %v6959 = vpack.c.bf16 %v6953, %v6951
  %v6960 = vpack.c.bf16 %v6956, %v6954
  %v6961 = vpack.c.bf16 %v6957, %v6955
  %v6966 = vunpack.c.l.b16 %v6958
  %v6967 = vunpack.c.l.b16 %v6959
  %v6968 = vunpack.c.h.b16 %v6958
  %v6969 = vunpack.c.h.b16 %v6959
  %v6970 = vunpack.c.l.b16 %v6960
  %v6971 = vunpack.c.l.b16 %v6961
  %v6972 = vunpack.c.h.b16 %v6960
  %v6973 = vunpack.c.h.b16 %v6961
  %v6974 = vpack.c.b16 %v6967, %v6966
  %v6975 = vpack.c.b16 %v6969, %v6968
  %v6976 = vpack.c.b16 %v6971, %v6970
  %v6977 = vpack.c.b16 %v6973, %v6972
  %v6978 = vrot.slane %v6974, 6
  %v6979 = vrot.slane %v6978, 4
  %v6980 = vrot.slane %v6975, 6
  %v6981 = vsel %vm905, %v6979, %v6980
  %v6982 = vrot.slane %v6980, 4
  %v6983 = vrot.slane %v6976, 6
  %v6984 = vsel %vm905, %v6982, %v6983
  %v6985 = vrot.slane %v6983, 4
  %v6986 = vrot.slane %v6977, 6
  %v6987 = vsel %vm905, %v6985, %v6986
  %6991 = vst.msk [vmem:[#allocation11 + $0x60] sm:$0xff] %vm2319, %v6981
  %6992 = vst.msk [vmem:[#allocation11 + $0x80] sm:$0xff] %vm2319, %v6984
  %6993 = vst.msk [vmem:[#allocation11 + $0xa0] sm:$0xff] %vm2319, %v6987
  %v6994 = vld [vmem:[#allocation9 + $0x30] sm:$0xe0]
  %v6995 = vld [vmem:[#allocation9 + $0x38] sm:$0xe0]
  %v6996 = vld [vmem:[#allocation9 + $0x40] sm:$0xff]
  %v6997 = vld [vmem:[#allocation9 + $0x48] sm:$0xff]
  %v6998 = vld [vmem:[#allocation9 + $0x50] sm:$0xff]
  %v6999 = vld [vmem:[#allocation9 + $0x58] sm:$0xff]
  %v7000 = vld [vmem:[#allocation9 + $0x60] sm:$0x1f]
  %v7001 = vld [vmem:[#allocation9 + $0x68] sm:$0x1f]
  %v7002 = vpack.c.bf16 %v6996, %v6994
  %v7003 = vpack.c.bf16 %v6997, %v6995
  %v7004 = vpack.c.bf16 %v7000, %v6998
  %v7005 = vpack.c.bf16 %v7001, %v6999
  %v7010 = vunpack.c.l.b16 %v7002
  %v7011 = vunpack.c.l.b16 %v7003
  %v7012 = vunpack.c.h.b16 %v7002
  %v7013 = vunpack.c.h.b16 %v7003
  %v7014 = vunpack.c.l.b16 %v7004
  %v7015 = vunpack.c.l.b16 %v7005
  %v7016 = vunpack.c.h.b16 %v7004
  %v7017 = vunpack.c.h.b16 %v7005
  %v7018 = vpack.c.b16 %v7011, %v7010
  %v7019 = vpack.c.b16 %v7013, %v7012
  %v7020 = vpack.c.b16 %v7015, %v7014
  %v7021 = vpack.c.b16 %v7017, %v7016
  %v7023 = vshrl.u32 %v7018, 16
  %v7025 = vrot.slane %v7023, 6
  %v7026 = vshll.u32 %v7018, 16
  %v7028 = vrot.slane %v7026, 7
  %v7029 = vor.u32 %v7025, %v7028
  %v7030 = vrot.slane %v7029, 4
  %v7032 = vshrl.u32 %v7019, 16
  %v7034 = vrot.slane %v7032, 6
  %v7035 = vshll.u32 %v7019, 16
  %v7037 = vrot.slane %v7035, 7
  %v7038 = vor.u32 %v7034, %v7037
  %v7039 = vsel %vm984, %v7030, %v7038
  %v7040 = vrot.slane %v7038, 4
  %v7042 = vshrl.u32 %v7020, 16
  %v7044 = vrot.slane %v7042, 6
  %v7045 = vshll.u32 %v7020, 16
  %v7047 = vrot.slane %v7045, 7
  %v7048 = vor.u32 %v7044, %v7047
  %v7049 = vsel %vm984, %v7040, %v7048
  %v7050 = vrot.slane %v7048, 4
  %v7052 = vshrl.u32 %v7021, 16
  %v7054 = vrot.slane %v7052, 6
  %v7055 = vshll.u32 %v7021, 16
  %v7057 = vrot.slane %v7055, 7
  %v7058 = vor.u32 %v7054, %v7057
  %v7059 = vsel %vm984, %v7050, %v7058
  %7060 = vrot.lane.b32.xlu0 %v7039, 32
  %v7061 = vpop.permute.xlu0 %7060
  %7062 = vrot.lane.b32.xlu0 %v7049, 32
  %v7063 = vpop.permute.xlu0 %7062
  %7064 = vrot.lane.b32.xlu0 %v7059, 32
  %v7065 = vpop.permute.xlu0 %7064
  %v7066 = vrot.slane %v7061, 4
  %v7067 = vrot.slane %v7063, 4
  %v7068 = vrot.slane %v7065, 4
  %v7069 = vsel %vm2375, %v7066, %v7061
  %v7070 = vsel %vm2375, %v7067, %v7063
  %v7071 = vsel %vm2375, %v7068, %v7065
  %7075 = vst.msk [vmem:[#allocation11 + $0x64] sm:$0xff] %vm2381, %v7069
  %7076 = vst.msk [vmem:[#allocation11 + $0x84] sm:$0xff] %vm2381, %v7070
  %7077 = vst.msk [vmem:[#allocation11 + $0xa4] sm:$0xff] %vm2381, %v7071
  %v7078 = vld [vmem:[#allocation9 + $0x30] sm:$0xc0]
  %v7079 = vld [vmem:[#allocation9 + $0x38] sm:$0xc0]
  %v7080 = vld [vmem:[#allocation9 + $0x40] sm:$0xff]
  %v7081 = vld [vmem:[#allocation9 + $0x48] sm:$0xff]
  %v7082 = vld [vmem:[#allocation9 + $0x50] sm:$0xff]
  %v7083 = vld [vmem:[#allocation9 + $0x58] sm:$0xff]
  %v7084 = vld [vmem:[#allocation9 + $0x60] sm:$0x3f]
  %v7085 = vld [vmem:[#allocation9 + $0x68] sm:$0x3f]
  %v7086 = vpack.c.bf16 %v7080, %v7078
  %v7087 = vpack.c.bf16 %v7081, %v7079
  %v7088 = vpack.c.bf16 %v7084, %v7082
  %v7089 = vpack.c.bf16 %v7085, %v7083
  %v7094 = vunpack.c.l.b16 %v7086
  %v7095 = vunpack.c.l.b16 %v7087
  %v7096 = vunpack.c.h.b16 %v7086
  %v7097 = vunpack.c.h.b16 %v7087
  %v7098 = vunpack.c.l.b16 %v7088
  %v7099 = vunpack.c.l.b16 %v7089
  %v7100 = vunpack.c.h.b16 %v7088
  %v7101 = vunpack.c.h.b16 %v7089
  %v7102 = vpack.c.b16 %v7095, %v7094
  %v7103 = vpack.c.b16 %v7097, %v7096
  %v7104 = vpack.c.b16 %v7099, %v7098
  %v7105 = vpack.c.b16 %v7101, %v7100
  %v7106 = vrot.slane %v7102, 7
  %v7107 = vrot.slane %v7106, 4
  %v7108 = vrot.slane %v7103, 7
  %v7109 = vsel %vm1059, %v7107, %v7108
  %v7110 = vrot.slane %v7108, 4
  %v7111 = vrot.slane %v7104, 7
  %v7112 = vsel %vm1059, %v7110, %v7111
  %v7113 = vrot.slane %v7111, 4
  %v7114 = vrot.slane %v7105, 7
  %v7115 = vsel %vm1059, %v7113, %v7114
  %7116 = vrot.lane.b32.xlu0 %v7109, 64
  %v7117 = vpop.permute.xlu0 %7116
  %7118 = vrot.lane.b32.xlu0 %v7112, 64
  %v7119 = vpop.permute.xlu0 %7118
  %7120 = vrot.lane.b32.xlu0 %v7115, 64
  %v7121 = vpop.permute.xlu0 %7120
  %v7122 = vrot.slane %v7117, 4
  %v7123 = vrot.slane %v7119, 4
  %v7124 = vrot.slane %v7121, 4
  %v7125 = vsel %vm751, %v7122, %v7117
  %v7126 = vsel %vm751, %v7123, %v7119
  %v7127 = vsel %vm751, %v7124, %v7121
  %7131 = vst.msk [vmem:[#allocation11 + $0x68] sm:$0xff] %vm2425, %v7125
  %7132 = vst.msk [vmem:[#allocation11 + $0x88] sm:$0xff] %vm2425, %v7126
  %7133 = vst.msk [vmem:[#allocation11 + $0xa8] sm:$0xff] %vm2425, %v7127
  %v7134 = vld [vmem:[#allocation9 + $0x30] sm:$0x80]
  %v7135 = vld [vmem:[#allocation9 + $0x38] sm:$0x80]
  %v7136 = vld [vmem:[#allocation9 + $0x40] sm:$0xff]
  %v7137 = vld [vmem:[#allocation9 + $0x48] sm:$0xff]
  %v7138 = vld [vmem:[#allocation9 + $0x50] sm:$0xff]
  %v7139 = vld [vmem:[#allocation9 + $0x58] sm:$0xff]
  %v7140 = vld [vmem:[#allocation9 + $0x60] sm:$0x7f]
  %v7141 = vld [vmem:[#allocation9 + $0x68] sm:$0x7f]
  %v7142 = vpack.c.bf16 %v7136, %v7134
  %v7143 = vpack.c.bf16 %v7137, %v7135
  %v7144 = vpack.c.bf16 %v7140, %v7138
  %v7145 = vpack.c.bf16 %v7141, %v7139
  %v7150 = vunpack.c.l.b16 %v7142
  %v7151 = vunpack.c.l.b16 %v7143
  %v7152 = vunpack.c.h.b16 %v7142
  %v7153 = vunpack.c.h.b16 %v7143
  %v7154 = vunpack.c.l.b16 %v7144
  %v7155 = vunpack.c.l.b16 %v7145
  %v7156 = vunpack.c.h.b16 %v7144
  %v7157 = vunpack.c.h.b16 %v7145
  %v7158 = vpack.c.b16 %v7151, %v7150
  %v7159 = vpack.c.b16 %v7153, %v7152
  %v7160 = vpack.c.b16 %v7155, %v7154
  %v7161 = vpack.c.b16 %v7157, %v7156
  %v7163 = vshrl.u32 %v7158, 16
  %v7165 = vrot.slane %v7163, 7
  %v7166 = vrot.slane %v7165, 4
  %v7168 = vshrl.u32 %v7159, 16
  %v7170 = vrot.slane %v7168, 7
  %v7171 = vshll.u32 %v7159, 16
  %v7173 = vor.u32 %v7170, %v7171
  %v7174 = vsel %vm1098, %v7166, %v7173
  %v7175 = vrot.slane %v7170, 4
  %v7177 = vshrl.u32 %v7160, 16
  %v7179 = vrot.slane %v7177, 7
  %v7180 = vshll.u32 %v7160, 16
  %v7182 = vor.u32 %v7179, %v7180
  %v7183 = vsel %vm1098, %v7175, %v7182
  %v7184 = vrot.slane %v7179, 4
  %v7186 = vshrl.u32 %v7161, 16
  %v7188 = vrot.slane %v7186, 7
  %v7189 = vshll.u32 %v7161, 16
  %v7191 = vor.u32 %v7188, %v7189
  %v7192 = vsel %vm1098, %v7184, %v7191
  %7193 = vrot.lane.b32.xlu0 %v7174, 96
  %v7194 = vpop.permute.xlu0 %7193
  %7195 = vrot.lane.b32.xlu0 %v7183, 96
  %v7196 = vpop.permute.xlu0 %7195
  %7197 = vrot.lane.b32.xlu0 %v7192, 96
  %v7198 = vpop.permute.xlu0 %7197
  %v7199 = vrot.slane %v7194, 4
  %v7200 = vrot.slane %v7196, 4
  %v7201 = vrot.slane %v7198, 4
  %v7202 = vsel %vm2485, %v7199, %v7194
  %v7203 = vsel %vm2485, %v7200, %v7196
  %v7204 = vsel %vm2485, %v7201, %v7198
  %7208 = vst.msk [vmem:[#allocation11 + $0x6c] sm:$0xff] %vm2491, %v7202
  %7209 = vst.msk [vmem:[#allocation11 + $0x8c] sm:$0xff] %vm2491, %v7203
  %7210 = vst.msk [vmem:[#allocation11 + $0xac] sm:$0xff] %vm2491, %v7204
  %v7211 = vld [vmem:[#allocation9 + $0x40] sm:$0xff]
  %v7212 = vld [vmem:[#allocation9 + $0x48] sm:$0xff]
  %v7213 = vld [vmem:[#allocation9 + $0x50] sm:$0xff]
  %v7214 = vld [vmem:[#allocation9 + $0x58] sm:$0xff]
  %v7215 = vld [vmem:[#allocation9 + $0x60] sm:$0xff]
  %v7216 = vld [vmem:[#allocation9 + $0x68] sm:$0xff]
  %v7217 = vpack.c.bf16 %v7213, %v7211
  %v7218 = vpack.c.bf16 %v7214, %v7212
  %v7219 = vpack.c.bf16 %v7215, %v7215
  %v7220 = vpack.c.bf16 %v7216, %v7216
  %v7225 = vunpack.c.l.b16 %v7217
  %v7226 = vunpack.c.l.b16 %v7218
  %v7227 = vunpack.c.h.b16 %v7217
  %v7228 = vunpack.c.h.b16 %v7218
  %v7229 = vunpack.c.l.b16 %v7219
  %v7230 = vunpack.c.l.b16 %v7220
  %v7231 = vpack.c.b16 %v7226, %v7225
  %v7232 = vpack.c.b16 %v7228, %v7227
  %v7233 = vpack.c.b16 %v7230, %v7229
  %7237 = vst.msk [vmem:[#allocation11 + $0x74] sm:$0xff] %vm2319, %v7231
  %7238 = vst.msk [vmem:[#allocation11 + $0x94] sm:$0xff] %vm2319, %v7232
  %7239 = vst.msk [vmem:[#allocation11 + $0xb4] sm:$0xff] %vm2319, %v7233
  %v7240 = vld [vmem:[#allocation11] sm:$0xff]
  %v7241 = vld [vmem:[#allocation11 + $0x8] sm:$0xff]
  %v7242 = vld [vmem:[#allocation11 + $0x10] sm:$0xff]
  %v7243 = vld [vmem:[#allocation11 + $0x18] sm:$0xf]
  %v7244 = vld [vmem:[#allocation11 + $0x20] sm:$0xff]
  %v7245 = vld [vmem:[#allocation11 + $0x28] sm:$0xff]
  %v7246 = vld [vmem:[#allocation11 + $0x30] sm:$0xff]
  %v7247 = vld [vmem:[#allocation11 + $0x38] sm:$0xf]
  %v7248 = vld [vmem:[#allocation11 + $0x40] sm:$0xff]
  %v7249 = vld [vmem:[#allocation11 + $0x48] sm:$0xff]
  %v7250 = vld [vmem:[#allocation11 + $0x50] sm:$0xff]
  %v7251 = vld [vmem:[#allocation11 + $0x58] sm:$0xf]
  %v7252 = vld [vmem:[#allocation11 + $0x60] sm:$0xff]
  %v7253 = vld [vmem:[#allocation11 + $0x68] sm:$0xff]
  %v7254 = vld [vmem:[#allocation11 + $0x70] sm:$0xff]
  %v7255 = vld [vmem:[#allocation11 + $0x78] sm:$0xf]
  %v7256 = vld [vmem:[#allocation11 + $0x80] sm:$0xff]
  %v7257 = vld [vmem:[#allocation11 + $0x88] sm:$0xff]
  %v7258 = vld [vmem:[#allocation11 + $0x90] sm:$0xff]
  %v7259 = vld [vmem:[#allocation11 + $0x98] sm:$0xf]
  %v7260 = vld [vmem:[#allocation11 + $0xa0] sm:$0xff]
  %v7261 = vld [vmem:[#allocation11 + $0xa8] sm:$0xff]
  %v7262 = vld [vmem:[#allocation11 + $0xb0] sm:$0xff]
  %v7263 = vld [vmem:[#allocation11 + $0xb8] sm:$0xf]
  %v7264 = vld [vmem:[%s9] sm:$0xff]
  %v7265 = vld [vmem:[%s9 + $0x8] sm:$0xff]
  %v7266 = vld [vmem:[%s9 + $0x10] sm:$0xff]
  %v7267 = vld [vmem:[%s9 + $0x18] sm:$0xff]
  %v7268 = vld [vmem:[%s9 + $0x20] sm:$0xff]
  %v7269 = vld [vmem:[%s9 + $0x28] sm:$0xff]
  %v7270 = vld [vmem:[%s9 + $0x30] sm:$0xff]
  %v7271 = vld [vmem:[%s9 + $0x38] sm:$0xff]
  %v7272 = vld [vmem:[%s9 + $0x40] sm:$0xff]
  %v7273 = vld [vmem:[%s9 + $0x48] sm:$0xff]
  %v7274 = vld [vmem:[%s9 + $0x50] sm:$0xff]
  %v7275 = vld [vmem:[%s9 + $0x58] sm:$0xff]
  %v7276 = vld [vmem:[%s9 + $0x60] sm:$0xff]
  %v7277 = vld [vmem:[%s9 + $0x68] sm:$0xff]
  %v7278 = vld [vmem:[%s9 + $0x70] sm:$0xff]
  %v7279 = vld [vmem:[%s9 + $0x78] sm:$0xff]
  %v7280 = vld [vmem:[%s9 + $0x80] sm:$0xff]
  %v7281 = vld [vmem:[%s9 + $0x88] sm:$0xff]
  %v7282 = vld [vmem:[%s9 + $0x90] sm:$0xff]
  %v7283 = vld [vmem:[%s9 + $0x98] sm:$0xff]
  %v7284 = vld [vmem:[%s9 + $0xa0] sm:$0xff]
  %v7285 = vld [vmem:[%s9 + $0xa8] sm:$0xff]
  %v7286 = vld [vmem:[%s9 + $0xb0] sm:$0xff]
  %v7287 = vld [vmem:[%s9 + $0xb8] sm:$0xff]
  %v7288 = vld [vmem:[%s9 + $0xc0] sm:$0xff]
  %v7289 = vld [vmem:[%s9 + $0xc8] sm:$0xff]
  %v7290 = vld [vmem:[%s9 + $0xd0] sm:$0xff]
  %v7291 = vld [vmem:[%s9 + $0xd8] sm:$0xff]
  %v7292 = vld [vmem:[%s9 + $0xe0] sm:$0xff]
  %v7293 = vld [vmem:[%s9 + $0xe8] sm:$0xff]
  %v7294 = vld [vmem:[%s9 + $0xf0] sm:$0xff]
  %v7295 = vld [vmem:[%s9 + $0xf8] sm:$0xff]
  %v7296 = vld [vmem:[%s9 + $0x100] sm:$0xff]
  %v7297 = vld [vmem:[%s9 + $0x108] sm:$0xff]
  %v7298 = vld [vmem:[%s9 + $0x110] sm:$0xff]
  %v7299 = vld [vmem:[%s9 + $0x118] sm:$0xff]
  %v7300 = vld [vmem:[%s9 + $0x120] sm:$0xff]
  %v7301 = vld [vmem:[%s9 + $0x128] sm:$0xff]
  %v7302 = vld [vmem:[%s9 + $0x130] sm:$0xff]
  %v7303 = vld [vmem:[%s9 + $0x138] sm:$0xff]
  %v7304 = vld [vmem:[%s9 + $0x140] sm:$0xff]
  %v7305 = vld [vmem:[%s9 + $0x148] sm:$0xff]
  %v7306 = vld [vmem:[%s9 + $0x150] sm:$0xff]
  %v7307 = vld [vmem:[%s9 + $0x158] sm:$0xff]
  %v7308 = vld [vmem:[%s9 + $0x160] sm:$0xff]
  %v7309 = vld [vmem:[%s9 + $0x168] sm:$0xff]
  %v7310 = vld [vmem:[%s9 + $0x170] sm:$0xff]
  %v7311 = vld [vmem:[%s9 + $0x178] sm:$0xff]
  %v7312 = vld [vmem:[%s9 + $0x180] sm:$0xff]
  %v7313 = vld [vmem:[%s9 + $0x188] sm:$0xff]
  %v7314 = vld [vmem:[%s9 + $0x190] sm:$0xff]
  %v7315 = vld [vmem:[%s9 + $0x198] sm:$0xff]
  %v7316 = vld [vmem:[%s9 + $0x1a0] sm:$0xff]
  %v7317 = vld [vmem:[%s9 + $0x1a8] sm:$0xff]
  %v7318 = vld [vmem:[%s9 + $0x1b0] sm:$0xff]
  %v7319 = vld [vmem:[%s9 + $0x1b8] sm:$0xff]
  %v7320 = vld [vmem:[%s9 + $0x1c0] sm:$0xff]
  %v7321 = vld [vmem:[%s9 + $0x1c8] sm:$0xff]
  %v7322 = vld [vmem:[%s9 + $0x1d0] sm:$0xff]
  %v7323 = vld [vmem:[%s9 + $0x1d8] sm:$0xff]
  %v7324 = vld [vmem:[%s9 + $0x1e0] sm:$0xff]
  %v7325 = vld [vmem:[%s9 + $0x1e8] sm:$0xff]
  %v7326 = vld [vmem:[%s9 + $0x1f0] sm:$0xff]
  %v7327 = vld [vmem:[%s9 + $0x1f8] sm:$0xff]
  %v7328 = vld [vmem:[%s9 + $0x200] sm:$0xff]
  %v7329 = vld [vmem:[%s9 + $0x208] sm:$0xff]
  %v7330 = vld [vmem:[%s9 + $0x210] sm:$0xff]
  %v7331 = vld [vmem:[%s9 + $0x218] sm:$0xff]
  %v7332 = vld [vmem:[%s9 + $0x220] sm:$0xff]
  %v7333 = vld [vmem:[%s9 + $0x228] sm:$0xff]
  %v7334 = vld [vmem:[%s9 + $0x230] sm:$0xff]
  %v7335 = vld [vmem:[%s9 + $0x238] sm:$0xff]
  %v7336 = vld [vmem:[%s9 + $0x240] sm:$0xff]
  %v7337 = vld [vmem:[%s9 + $0x248] sm:$0xff]
  %v7338 = vld [vmem:[%s9 + $0x250] sm:$0xff]
  %v7339 = vld [vmem:[%s9 + $0x258] sm:$0xff]
  %v7340 = vld [vmem:[%s9 + $0x260] sm:$0xff]
  %v7341 = vld [vmem:[%s9 + $0x268] sm:$0xff]
  %v7342 = vld [vmem:[%s9 + $0x270] sm:$0xff]
  %v7343 = vld [vmem:[%s9 + $0x278] sm:$0xff]
  %v7344 = vld [vmem:[%s9 + $0x280] sm:$0xff]
  %v7345 = vld [vmem:[%s9 + $0x288] sm:$0xff]
  %v7346 = vld [vmem:[%s9 + $0x290] sm:$0xff]
  %v7347 = vld [vmem:[%s9 + $0x298] sm:$0xff]
  %v7348 = vld [vmem:[%s9 + $0x2a0] sm:$0xff]
  %v7349 = vld [vmem:[%s9 + $0x2a8] sm:$0xff]
  %v7350 = vld [vmem:[%s9 + $0x2b0] sm:$0xff]
  %v7351 = vld [vmem:[%s9 + $0x2b8] sm:$0xff]
  %v7352 = vld [vmem:[%s9 + $0x2c0] sm:$0xff]
  %v7353 = vld [vmem:[%s9 + $0x2c8] sm:$0xff]
  %v7354 = vld [vmem:[%s9 + $0x2d0] sm:$0xff]
  %v7355 = vld [vmem:[%s9 + $0x2d8] sm:$0xff]
  %v7356 = vld [vmem:[%s9 + $0x2e0] sm:$0xff]
  %v7357 = vld [vmem:[%s9 + $0x2e8] sm:$0xff]
  %v7358 = vld [vmem:[%s9 + $0x2f0] sm:$0xff]
  %v7359 = vld [vmem:[%s9 + $0x2f8] sm:$0xff]
  %v7360 = vld [vmem:[%s9 + $0x300] sm:$0xff]
  %v7361 = vld [vmem:[%s9 + $0x308] sm:$0xff]
  %v7362 = vld [vmem:[%s9 + $0x310] sm:$0xff]
  %v7363 = vld [vmem:[%s9 + $0x318] sm:$0xff]
  %v7364 = vld [vmem:[%s19] sm:$0x3]
  %v7366 = vlaneseq
  %v7367 = vshrl.u32 %v7366, 7
  %v7368 = vsub.s32 0, %v7367
  %v7369 = vrot.slane %v7364, %v7368
  %v7370 = vlaneseq
  %v7371 = vshrl.u32 %v7370, 7
  %v7372 = vsub.s32 1, %v7371
  %v7373 = vrot.slane %v7364, %v7372
  %v7400 = vunpack.c.l.b16 %v7240
  %v7401 = vunpack.c.h.b16 %v7240
  %v7402 = vunpack.c.l.b16 %v7241
  %v7403 = vunpack.c.h.b16 %v7241
  %v7404 = vunpack.c.l.b16 %v7242
  %v7405 = vunpack.c.h.b16 %v7242
  %v7406 = vunpack.c.l.b16 %v7243
  %v7407 = vunpack.c.l.b16 %v7244
  %v7408 = vunpack.c.h.b16 %v7244
  %v7409 = vunpack.c.l.b16 %v7245
  %v7410 = vunpack.c.h.b16 %v7245
  %v7411 = vunpack.c.l.b16 %v7246
  %v7412 = vunpack.c.h.b16 %v7246
  %v7413 = vunpack.c.l.b16 %v7247
  %v7414 = vunpack.c.l.b16 %v7248
  %v7415 = vunpack.c.h.b16 %v7248
  %v7416 = vunpack.c.l.b16 %v7249
  %v7417 = vunpack.c.h.b16 %v7249
  %v7418 = vunpack.c.l.b16 %v7250
  %v7419 = vunpack.c.h.b16 %v7250
  %v7420 = vunpack.c.l.b16 %v7251
  %v7421 = vunpack.c.l.b16 %v7252
  %v7422 = vunpack.c.h.b16 %v7252
  %v7423 = vunpack.c.l.b16 %v7253
  %v7424 = vunpack.c.h.b16 %v7253
  %v7425 = vunpack.c.l.b16 %v7254
  %v7426 = vunpack.c.h.b16 %v7254
  %v7427 = vunpack.c.l.b16 %v7255
  %v7428 = vunpack.c.l.b16 %v7256
  %v7429 = vunpack.c.h.b16 %v7256
  %v7430 = vunpack.c.l.b16 %v7257
  %v7431 = vunpack.c.h.b16 %v7257
  %v7432 = vunpack.c.l.b16 %v7258
  %v7433 = vunpack.c.h.b16 %v7258
  %v7434 = vunpack.c.l.b16 %v7259
  %v7435 = vunpack.c.l.b16 %v7260
  %v7436 = vunpack.c.h.b16 %v7260
  %v7437 = vunpack.c.l.b16 %v7261
  %v7438 = vunpack.c.h.b16 %v7261
  %v7439 = vunpack.c.l.b16 %v7262
  %v7440 = vunpack.c.h.b16 %v7262
  %v7441 = vunpack.c.l.b16 %v7263
  %v7442 = vpack.c.b16 %v7407, %v7400
  %v7443 = vpack.c.b16 %v7408, %v7401
  %v7444 = vpack.c.b16 %v7409, %v7402
  %v7445 = vpack.c.b16 %v7410, %v7403
  %v7446 = vpack.c.b16 %v7411, %v7404
  %v7447 = vpack.c.b16 %v7412, %v7405
  %v7448 = vpack.c.b16 %v7413, %v7406
  %v7449 = vpack.c.b16 %v7421, %v7414
  %v7450 = vpack.c.b16 %v7422, %v7415
  %v7451 = vpack.c.b16 %v7423, %v7416
  %v7452 = vpack.c.b16 %v7424, %v7417
  %v7453 = vpack.c.b16 %v7425, %v7418
  %v7454 = vpack.c.b16 %v7426, %v7419
  %v7455 = vpack.c.b16 %v7427, %v7420
  %v7456 = vpack.c.b16 %v7435, %v7428
  %v7457 = vpack.c.b16 %v7436, %v7429
  %v7458 = vpack.c.b16 %v7437, %v7430
  %v7459 = vpack.c.b16 %v7438, %v7431
  %v7460 = vpack.c.b16 %v7439, %v7432
  %v7461 = vpack.c.b16 %v7440, %v7433
  %v7462 = vpack.c.b16 %v7441, %v7434
  %v7581 = vunpack.c.l.b16 %v7264
  %v7582 = vunpack.c.h.b16 %v7264
  %v7583 = vunpack.c.l.b16 %v7265
  %v7584 = vunpack.c.h.b16 %v7265
  %v7585 = vunpack.c.l.b16 %v7266
  %v7586 = vunpack.c.h.b16 %v7266
  %v7587 = vunpack.c.l.b16 %v7267
  %v7588 = vunpack.c.h.b16 %v7267
  %v7589 = vunpack.c.l.b16 %v7268
  %v7590 = vunpack.c.h.b16 %v7268
  %v7591 = vunpack.c.l.b16 %v7269
  %v7592 = vunpack.c.h.b16 %v7269
  %v7593 = vunpack.c.l.b16 %v7270
  %v7594 = vunpack.c.h.b16 %v7270
  %v7595 = vunpack.c.l.b16 %v7271
  %v7596 = vunpack.c.h.b16 %v7271
  %v7597 = vunpack.c.l.b16 %v7272
  %v7598 = vunpack.c.h.b16 %v7272
  %v7599 = vunpack.c.l.b16 %v7273
  %v7600 = vunpack.c.h.b16 %v7273
  %v7601 = vunpack.c.l.b16 %v7274
  %v7602 = vunpack.c.h.b16 %v7274
  %v7603 = vunpack.c.l.b16 %v7275
  %v7604 = vunpack.c.h.b16 %v7275
  %v7605 = vunpack.c.l.b16 %v7276
  %v7606 = vunpack.c.h.b16 %v7276
  %v7607 = vunpack.c.l.b16 %v7277
  %v7608 = vunpack.c.h.b16 %v7277
  %v7609 = vunpack.c.l.b16 %v7278
  %v7610 = vunpack.c.h.b16 %v7278
  %v7611 = vunpack.c.l.b16 %v7279
  %v7612 = vunpack.c.h.b16 %v7279
  %v7613 = vunpack.c.l.b16 %v7280
  %v7614 = vunpack.c.h.b16 %v7280
  %v7615 = vunpack.c.l.b16 %v7281
  %v7616 = vunpack.c.h.b16 %v7281
  %v7617 = vunpack.c.l.b16 %v7282
  %v7618 = vunpack.c.h.b16 %v7282
  %v7619 = vunpack.c.l.b16 %v7283
  %v7620 = vunpack.c.h.b16 %v7283
  %v7621 = vunpack.c.l.b16 %v7284
  %v7622 = vunpack.c.h.b16 %v7284
  %v7623 = vunpack.c.l.b16 %v7285
  %v7624 = vunpack.c.h.b16 %v7285
  %v7625 = vunpack.c.l.b16 %v7286
  %v7626 = vunpack.c.h.b16 %v7286
  %v7627 = vunpack.c.l.b16 %v7287
  %v7628 = vunpack.c.h.b16 %v7287
  %v7629 = vunpack.c.l.b16 %v7288
  %v7630 = vunpack.c.h.b16 %v7288
  %v7631 = vunpack.c.l.b16 %v7289
  %v7632 = vunpack.c.h.b16 %v7289
  %v7633 = vunpack.c.l.b16 %v7290
  %v7634 = vunpack.c.h.b16 %v7290
  %v7635 = vunpack.c.l.b16 %v7291
  %v7636 = vunpack.c.h.b16 %v7291
  %v7637 = vunpack.c.l.b16 %v7292
  %v7638 = vunpack.c.h.b16 %v7292
  %v7639 = vunpack.c.l.b16 %v7293
  %v7640 = vunpack.c.h.b16 %v7293
  %v7641 = vunpack.c.l.b16 %v7294
  %v7642 = vunpack.c.h.b16 %v7294
  %v7643 = vunpack.c.l.b16 %v7295
  %v7644 = vunpack.c.h.b16 %v7295
  %v7645 = vunpack.c.l.b16 %v7296
  %v7646 = vunpack.c.h.b16 %v7296
  %v7647 = vunpack.c.l.b16 %v7297
  %v7648 = vunpack.c.h.b16 %v7297
  %v7649 = vunpack.c.l.b16 %v7298
  %v7650 = vunpack.c.h.b16 %v7298
  %v7651 = vunpack.c.l.b16 %v7299
  %v7652 = vunpack.c.h.b16 %v7299
  %v7653 = vunpack.c.l.b16 %v7300
  %v7654 = vunpack.c.h.b16 %v7300
  %v7655 = vunpack.c.l.b16 %v7301
  %v7656 = vunpack.c.h.b16 %v7301
  %v7657 = vunpack.c.l.b16 %v7302
  %v7658 = vunpack.c.h.b16 %v7302
  %v7659 = vunpack.c.l.b16 %v7303
  %v7660 = vunpack.c.h.b16 %v7303
  %v7661 = vunpack.c.l.b16 %v7304
  %v7662 = vunpack.c.h.b16 %v7304
  %v7663 = vunpack.c.l.b16 %v7305
  %v7664 = vunpack.c.h.b16 %v7305
  %v7665 = vunpack.c.l.b16 %v7306
  %v7666 = vunpack.c.h.b16 %v7306
  %v7667 = vunpack.c.l.b16 %v7307
  %v7668 = vunpack.c.h.b16 %v7307
  %v7669 = vunpack.c.l.b16 %v7308
  %v7670 = vunpack.c.h.b16 %v7308
  %v7671 = vunpack.c.l.b16 %v7309
  %v7672 = vunpack.c.h.b16 %v7309
  %v7673 = vunpack.c.l.b16 %v7310
  %v7674 = vunpack.c.h.b16 %v7310
  %v7675 = vunpack.c.l.b16 %v7311
  %v7676 = vunpack.c.h.b16 %v7311
  %v7677 = vunpack.c.l.b16 %v7312
  %v7678 = vunpack.c.h.b16 %v7312
  %v7679 = vunpack.c.l.b16 %v7313
  %v7680 = vunpack.c.h.b16 %v7313
  %v7681 = vunpack.c.l.b16 %v7314
  %v7682 = vunpack.c.h.b16 %v7314
  %v7683 = vunpack.c.l.b16 %v7315
  %v7684 = vunpack.c.h.b16 %v7315
  %v7685 = vunpack.c.l.b16 %v7316
  %v7686 = vunpack.c.h.b16 %v7316
  %v7687 = vunpack.c.l.b16 %v7317
  %v7688 = vunpack.c.h.b16 %v7317
  %v7689 = vunpack.c.l.b16 %v7318
  %v7690 = vunpack.c.h.b16 %v7318
  %v7691 = vunpack.c.l.b16 %v7319
  %v7692 = vunpack.c.h.b16 %v7319
  %v7693 = vunpack.c.l.b16 %v7320
  %v7694 = vunpack.c.h.b16 %v7320
  %v7695 = vunpack.c.l.b16 %v7321
  %v7696 = vunpack.c.h.b16 %v7321
  %v7697 = vunpack.c.l.b16 %v7322
  %v7698 = vunpack.c.h.b16 %v7322
  %v7699 = vunpack.c.l.b16 %v7323
  %v7700 = vunpack.c.h.b16 %v7323
  %v7701 = vunpack.c.l.b16 %v7324
  %v7702 = vunpack.c.h.b16 %v7324
  %v7703 = vunpack.c.l.b16 %v7325
  %v7704 = vunpack.c.h.b16 %v7325
  %v7705 = vunpack.c.l.b16 %v7326
  %v7706 = vunpack.c.h.b16 %v7326
  %v7707 = vunpack.c.l.b16 %v7327
  %v7708 = vunpack.c.h.b16 %v7327
  %v7709 = vunpack.c.l.b16 %v7328
  %v7710 = vunpack.c.h.b16 %v7328
  %v7711 = vunpack.c.l.b16 %v7329
  %v7712 = vunpack.c.h.b16 %v7329
  %v7713 = vunpack.c.l.b16 %v7330
  %v7714 = vunpack.c.h.b16 %v7330
  %v7715 = vunpack.c.l.b16 %v7331
  %v7716 = vunpack.c.h.b16 %v7331
  %v7717 = vunpack.c.l.b16 %v7332
  %v7718 = vunpack.c.h.b16 %v7332
  %v7719 = vunpack.c.l.b16 %v7333
  %v7720 = vunpack.c.h.b16 %v7333
  %v7721 = vunpack.c.l.b16 %v7334
  %v7722 = vunpack.c.h.b16 %v7334
  %v7723 = vunpack.c.l.b16 %v7335
  %v7724 = vunpack.c.h.b16 %v7335
  %v7725 = vunpack.c.l.b16 %v7336
  %v7726 = vunpack.c.h.b16 %v7336
  %v7727 = vunpack.c.l.b16 %v7337
  %v7728 = vunpack.c.h.b16 %v7337
  %v7729 = vunpack.c.l.b16 %v7338
  %v7730 = vunpack.c.h.b16 %v7338
  %v7731 = vunpack.c.l.b16 %v7339
  %v7732 = vunpack.c.h.b16 %v7339
  %v7733 = vunpack.c.l.b16 %v7340
  %v7734 = vunpack.c.h.b16 %v7340
  %v7735 = vunpack.c.l.b16 %v7341
  %v7736 = vunpack.c.h.b16 %v7341
  %v7737 = vunpack.c.l.b16 %v7342
  %v7738 = vunpack.c.h.b16 %v7342
  %v7739 = vunpack.c.l.b16 %v7343
  %v7740 = vunpack.c.h.b16 %v7343
  %v7741 = vunpack.c.l.b16 %v7344
  %v7742 = vunpack.c.h.b16 %v7344
  %v7743 = vunpack.c.l.b16 %v7345
  %v7744 = vunpack.c.h.b16 %v7345
  %v7745 = vunpack.c.l.b16 %v7346
  %v7746 = vunpack.c.h.b16 %v7346
  %v7747 = vunpack.c.l.b16 %v7347
  %v7748 = vunpack.c.h.b16 %v7347
  %v7749 = vunpack.c.l.b16 %v7348
  %v7750 = vunpack.c.h.b16 %v7348
  %v7751 = vunpack.c.l.b16 %v7349
  %v7752 = vunpack.c.h.b16 %v7349
  %v7753 = vunpack.c.l.b16 %v7350
  %v7754 = vunpack.c.h.b16 %v7350
  %v7755 = vunpack.c.l.b16 %v7351
  %v7756 = vunpack.c.h.b16 %v7351
  %v7757 = vunpack.c.l.b16 %v7352
  %v7758 = vunpack.c.h.b16 %v7352
  %v7759 = vunpack.c.l.b16 %v7353
  %v7760 = vunpack.c.h.b16 %v7353
  %v7761 = vunpack.c.l.b16 %v7354
  %v7762 = vunpack.c.h.b16 %v7354
  %v7763 = vunpack.c.l.b16 %v7355
  %v7764 = vunpack.c.h.b16 %v7355
  %v7765 = vunpack.c.l.b16 %v7356
  %v7766 = vunpack.c.h.b16 %v7356
  %v7767 = vunpack.c.l.b16 %v7357
  %v7768 = vunpack.c.h.b16 %v7357
  %v7769 = vunpack.c.l.b16 %v7358
  %v7770 = vunpack.c.h.b16 %v7358
  %v7771 = vunpack.c.l.b16 %v7359
  %v7772 = vunpack.c.h.b16 %v7359
  %v7773 = vunpack.c.l.b16 %v7360
  %v7774 = vunpack.c.h.b16 %v7360
  %v7775 = vunpack.c.l.b16 %v7361
  %v7776 = vunpack.c.h.b16 %v7361
  %v7777 = vunpack.c.l.b16 %v7362
  %v7778 = vunpack.c.h.b16 %v7362
  %v7779 = vunpack.c.l.b16 %v7363
  %v7780 = vunpack.c.h.b16 %v7363
  %v7781 = vpack.c.b16 %v7583, %v7581
  %v7782 = vpack.c.b16 %v7584, %v7582
  %v7783 = vpack.c.b16 %v7587, %v7585
  %v7784 = vpack.c.b16 %v7588, %v7586
  %v7785 = vpack.c.b16 %v7591, %v7589
  %v7786 = vpack.c.b16 %v7592, %v7590
  %v7787 = vpack.c.b16 %v7595, %v7593
  %v7788 = vpack.c.b16 %v7596, %v7594
  %v7789 = vpack.c.b16 %v7599, %v7597
  %v7790 = vpack.c.b16 %v7600, %v7598
  %v7791 = vpack.c.b16 %v7603, %v7601
  %v7792 = vpack.c.b16 %v7604, %v7602
  %v7793 = vpack.c.b16 %v7607, %v7605
  %v7794 = vpack.c.b16 %v7608, %v7606
  %v7795 = vpack.c.b16 %v7611, %v7609
  %v7796 = vpack.c.b16 %v7612, %v7610
  %v7797 = vpack.c.b16 %v7615, %v7613
  %v7798 = vpack.c.b16 %v7616, %v7614
  %v7799 = vpack.c.b16 %v7619, %v7617
  %v7800 = vpack.c.b16 %v7620, %v7618
  %v7801 = vpack.c.b16 %v7623, %v7621
  %v7802 = vpack.c.b16 %v7624, %v7622
  %v7803 = vpack.c.b16 %v7627, %v7625
  %v7804 = vpack.c.b16 %v7628, %v7626
  %v7805 = vpack.c.b16 %v7631, %v7629
  %v7806 = vpack.c.b16 %v7632, %v7630
  %v7807 = vpack.c.b16 %v7635, %v7633
  %v7808 = vpack.c.b16 %v7636, %v7634
  %v7809 = vpack.c.b16 %v7639, %v7637
  %v7810 = vpack.c.b16 %v7640, %v7638
  %v7811 = vpack.c.b16 %v7643, %v7641
  %v7812 = vpack.c.b16 %v7644, %v7642
  %v7813 = vpack.c.b16 %v7647, %v7645
  %v7814 = vpack.c.b16 %v7648, %v7646
  %v7815 = vpack.c.b16 %v7651, %v7649
  %v7816 = vpack.c.b16 %v7652, %v7650
  %v7817 = vpack.c.b16 %v7655, %v7653
  %v7818 = vpack.c.b16 %v7656, %v7654
  %v7819 = vpack.c.b16 %v7659, %v7657
  %v7820 = vpack.c.b16 %v7660, %v7658
  %v7821 = vpack.c.b16 %v7663, %v7661
  %v7822 = vpack.c.b16 %v7664, %v7662
  %v7823 = vpack.c.b16 %v7667, %v7665
  %v7824 = vpack.c.b16 %v7668, %v7666
  %v7825 = vpack.c.b16 %v7671, %v7669
  %v7826 = vpack.c.b16 %v7672, %v7670
  %v7827 = vpack.c.b16 %v7675, %v7673
  %v7828 = vpack.c.b16 %v7676, %v7674
  %v7829 = vpack.c.b16 %v7679, %v7677
  %v7830 = vpack.c.b16 %v7680, %v7678
  %v7831 = vpack.c.b16 %v7683, %v7681
  %v7832 = vpack.c.b16 %v7684, %v7682
  %v7833 = vpack.c.b16 %v7687, %v7685
  %v7834 = vpack.c.b16 %v7688, %v7686
  %v7835 = vpack.c.b16 %v7691, %v7689
  %v7836 = vpack.c.b16 %v7692, %v7690
  %v7837 = vpack.c.b16 %v7695, %v7693
  %v7838 = vpack.c.b16 %v7696, %v7694
  %v7839 = vpack.c.b16 %v7699, %v7697
  %v7840 = vpack.c.b16 %v7700, %v7698
  %v7841 = vpack.c.b16 %v7703, %v7701
  %v7842 = vpack.c.b16 %v7704, %v7702
  %v7843 = vpack.c.b16 %v7707, %v7705
  %v7844 = vpack.c.b16 %v7708, %v7706
  %v7845 = vpack.c.b16 %v7711, %v7709
  %v7846 = vpack.c.b16 %v7712, %v7710
  %v7847 = vpack.c.b16 %v7715, %v7713
  %v7848 = vpack.c.b16 %v7716, %v7714
  %v7849 = vpack.c.b16 %v7719, %v7717
  %v7850 = vpack.c.b16 %v7720, %v7718
  %v7851 = vpack.c.b16 %v7723, %v7721
  %v7852 = vpack.c.b16 %v7724, %v7722
  %v7853 = vpack.c.b16 %v7727, %v7725
  %v7854 = vpack.c.b16 %v7728, %v7726
  %v7855 = vpack.c.b16 %v7731, %v7729
  %v7856 = vpack.c.b16 %v7732, %v7730
  %v7857 = vpack.c.b16 %v7735, %v7733
  %v7858 = vpack.c.b16 %v7736, %v7734
  %v7859 = vpack.c.b16 %v7739, %v7737
  %v7860 = vpack.c.b16 %v7740, %v7738
  %v7861 = vpack.c.b16 %v7743, %v7741
  %v7862 = vpack.c.b16 %v7744, %v7742
  %v7863 = vpack.c.b16 %v7747, %v7745
  %v7864 = vpack.c.b16 %v7748, %v7746
  %v7865 = vpack.c.b16 %v7751, %v7749
  %v7866 = vpack.c.b16 %v7752, %v7750
  %v7867 = vpack.c.b16 %v7755, %v7753
  %v7868 = vpack.c.b16 %v7756, %v7754
  %v7869 = vpack.c.b16 %v7759, %v7757
  %v7870 = vpack.c.b16 %v7760, %v7758
  %v7871 = vpack.c.b16 %v7763, %v7761
  %v7872 = vpack.c.b16 %v7764, %v7762
  %v7873 = vpack.c.b16 %v7767, %v7765
  %v7874 = vpack.c.b16 %v7768, %v7766
  %v7875 = vpack.c.b16 %v7771, %v7769
  %v7876 = vpack.c.b16 %v7772, %v7770
  %v7877 = vpack.c.b16 %v7775, %v7773
  %v7878 = vpack.c.b16 %v7776, %v7774
  %v7879 = vpack.c.b16 %v7779, %v7777
  %v7880 = vpack.c.b16 %v7780, %v7778
  %v7982 = vsel %vm2292, %v7448, 0
  %v7985 = vsel %vm2292, %v7455, 0
  %v7988 = vsel %vm2292, %v7462, 0
  %7990 = vmatprep.subr.bf16.mxu0 %v7782
  %7991 = vmatpush1.bf16.msra.mxu0 %v7781
  %7992 = vmatprep.subr.bf16.mxu0 %v7784
  %7993 = vmatpush1.bf16.msra.mxu0 %v7783
  %7994 = vmatprep.subr.bf16.mxu0 %v7786
  %7995 = vmatpush1.bf16.msra.mxu0 %v7785
  %7996 = vmatprep.subr.bf16.mxu0 %v7788
  %7997 = vmatpush1.bf16.msra.mxu0 %v7787
  %7998 = vmatprep.subr.bf16.mxu0 %v7790
  %7999 = vmatpush1.bf16.msra.mxu0 %v7789
  %8000 = vmatprep.subr.bf16.mxu0 %v7792
  %8001 = vmatpush1.bf16.msra.mxu0 %v7791
  %8002 = vmatprep.subr.bf16.mxu0 %v7794
  %8003 = vmatpush1.bf16.msra.mxu0 %v7793
  %8004 = vmatprep.subr.bf16.mxu0 %v7796
  %8005 = vmatpush1.bf16.msra.mxu0 %v7795
  %8006 = vmatprep.subr.bf16.mxu0 %v7798
  %8007 = vmatpush1.bf16.msra.mxu0 %v7797
  %8008 = vmatprep.subr.bf16.mxu0 %v7800
  %8009 = vmatpush1.bf16.msra.mxu0 %v7799
  %8010 = vmatprep.subr.bf16.mxu0 %v7802
  %8011 = vmatpush1.bf16.msra.mxu0 %v7801
  %8012 = vmatprep.subr.bf16.mxu0 %v7804
  %8013 = vmatpush1.bf16.msra.mxu0 %v7803
  %8014 = vmatprep.subr.bf16.mxu0 %v7806
  %8015 = vmatpush1.bf16.msra.mxu0 %v7805
  %8016 = vmatprep.subr.bf16.mxu0 %v7808
  %8017 = vmatpush1.bf16.msra.mxu0 %v7807
  %8018 = vmatprep.subr.bf16.mxu0 %v7810
  %8019 = vmatpush1.bf16.msra.mxu0 %v7809
  %8020 = vmatprep.subr.bf16.mxu0 %v7812
  %8021 = vmatpush1.bf16.msra.mxu0 %v7811
  %8022 = vmatprep.mubr.bf16.mxu0 %v7443
  %8023 = vmatmul.mubr.bf16.gmra.mrb[0].mxu0 %v7442
  %v8024 = vpop.f32.mrb[0].mxu0
  %v8025 = vadd.f32 %v7369, %v8024
  %v8026 = vpop.f32.mrb[0].mxu0
  %v8027 = vadd.f32 %v7373, %v8026
  %v8028 = vpop.f32.mrb[0].mxu0
  %v8029 = vadd.f32 %v7369, %v8028
  %v8030 = vpop.f32.mrb[0].mxu0
  %v8031 = vadd.f32 %v7373, %v8030
  %8032 = vmatprep.mubr.bf16.mxu0 %v7450
  %8033 = vmatmul.mubr.bf16.gmra.mrb[0].mxu0 %v7449
  %v8034 = vpop.f32.mrb[0].mxu0
  %v8035 = vadd.f32 %v7369, %v8034
  %v8036 = vpop.f32.mrb[0].mxu0
  %v8037 = vadd.f32 %v7373, %v8036
  %v8038 = vpop.f32.mrb[0].mxu0
  %v8039 = vadd.f32 %v7369, %v8038
  %v8040 = vpop.f32.mrb[0].mxu0
  %v8041 = vadd.f32 %v7373, %v8040
  %8042 = vmatprep.mubr.bf16.mxu0 %v7457
  %8043 = vmatmul.mubr.bf16.gmra.mrb[0].mxu0 %v7456
  %v8044 = vpop.f32.mrb[0].mxu0
  %v8045 = vadd.f32 %v7369, %v8044
  %v8046 = vpop.f32.mrb[0].mxu0
  %v8047 = vadd.f32 %v7373, %v8046
  %v8048 = vpop.f32.mrb[0].mxu0
  %v8049 = vadd.f32 %v7369, %v8048
  %v8050 = vpop.f32.mrb[0].mxu0
  %v8051 = vadd.f32 %v7373, %v8050
  %8052 = vdwg.mxu0
  %8053 = vmatprep.subr.bf16.mxu0 %v7814
  %8054 = vmatpush1.bf16.msra.mxu0 %v7813
  %8055 = vmatprep.subr.bf16.mxu0 %v7816
  %8056 = vmatpush1.bf16.msra.mxu0 %v7815
  %8057 = vmatprep.subr.bf16.mxu0 %v7818
  %8058 = vmatpush1.bf16.msra.mxu0 %v7817
  %8059 = vmatprep.subr.bf16.mxu0 %v7820
  %8060 = vmatpush1.bf16.msra.mxu0 %v7819
  %8061 = vmatprep.subr.bf16.mxu0 %v7822
  %8062 = vmatpush1.bf16.msra.mxu0 %v7821
  %8063 = vmatprep.subr.bf16.mxu0 %v7824
  %8064 = vmatpush1.bf16.msra.mxu0 %v7823
  %8065 = vmatprep.subr.bf16.mxu0 %v7826
  %8066 = vmatpush1.bf16.msra.mxu0 %v7825
  %8067 = vmatprep.subr.bf16.mxu0 %v7828
  %8068 = vmatpush1.bf16.msra.mxu0 %v7827
  %8069 = vmatprep.subr.bf16.mxu0 %v7830
  %8070 = vmatpush1.bf16.msra.mxu0 %v7829
  %8071 = vmatprep.subr.bf16.mxu0 %v7832
  %8072 = vmatpush1.bf16.msra.mxu0 %v7831
  %8073 = vmatprep.subr.bf16.mxu0 %v7834
  %8074 = vmatpush1.bf16.msra.mxu0 %v7833
  %8075 = vmatprep.subr.bf16.mxu0 %v7836
  %8076 = vmatpush1.bf16.msra.mxu0 %v7835
  %8077 = vmatprep.subr.bf16.mxu0 %v7838
  %8078 = vmatpush1.bf16.msra.mxu0 %v7837
  %8079 = vmatprep.subr.bf16.mxu0 %v7840
  %8080 = vmatpush1.bf16.msra.mxu0 %v7839
  %8081 = vmatprep.subr.bf16.mxu0 %v7842
  %8082 = vmatpush1.bf16.msra.mxu0 %v7841
  %8083 = vmatprep.subr.bf16.mxu0 %v7844
  %8084 = vmatpush1.bf16.msra.mxu0 %v7843
  %8085 = vmatprep.mubr.bf16.mxu0 %v7445
  %8086 = vmatmul.mubr.bf16.gmra.mrb[0].mxu0 %v7444
  %v8087 = vpop.f32.mrb[0].mxu0
  %v8088 = vadd.f32 %v8025, %v8087
  %v8089 = vpop.f32.mrb[0].mxu0
  %v8090 = vadd.f32 %v8027, %v8089
  %v8091 = vpop.f32.mrb[0].mxu0
  %v8092 = vadd.f32 %v8029, %v8091
  %v8093 = vpop.f32.mrb[0].mxu0
  %v8094 = vadd.f32 %v8031, %v8093
  %8095 = vmatprep.mubr.bf16.mxu0 %v7452
  %8096 = vmatmul.mubr.bf16.gmra.mrb[0].mxu0 %v7451
  %v8097 = vpop.f32.mrb[0].mxu0
  %v8098 = vadd.f32 %v8035, %v8097
  %v8099 = vpop.f32.mrb[0].mxu0
  %v8100 = vadd.f32 %v8037, %v8099
  %v8101 = vpop.f32.mrb[0].mxu0
  %v8102 = vadd.f32 %v8039, %v8101
  %v8103 = vpop.f32.mrb[0].mxu0
  %v8104 = vadd.f32 %v8041, %v8103
  %8105 = vmatprep.mubr.bf16.mxu0 %v7459
  %8106 = vmatmul.mubr.bf16.gmra.mrb[0].mxu0 %v7458
  %v8107 = vpop.f32.mrb[0].mxu0
  %v8108 = vadd.f32 %v8045, %v8107
  %v8109 = vpop.f32.mrb[0].mxu0
  %v8110 = vadd.f32 %v8047, %v8109
  %v8111 = vpop.f32.mrb[0].mxu0
  %v8112 = vadd.f32 %v8049, %v8111
  %v8113 = vpop.f32.mrb[0].mxu0
  %v8114 = vadd.f32 %v8051, %v8113
  %8115 = vdwg.mxu0
  %8116 = vmatprep.subr.bf16.mxu0 %v7846
  %8117 = vmatpush1.bf16.msra.mxu0 %v7845
  %8118 = vmatprep.subr.bf16.mxu0 %v7848
  %8119 = vmatpush1.bf16.msra.mxu0 %v7847
  %8120 = vmatprep.subr.bf16.mxu0 %v7850
  %8121 = vmatpush1.bf16.msra.mxu0 %v7849
  %8122 = vmatprep.subr.bf16.mxu0 %v7852
  %8123 = vmatpush1.bf16.msra.mxu0 %v7851
  %8124 = vmatprep.subr.bf16.mxu0 %v7854
  %8125 = vmatpush1.bf16.msra.mxu0 %v7853
  %8126 = vmatprep.subr.bf16.mxu0 %v7856
  %8127 = vmatpush1.bf16.msra.mxu0 %v7855
  %8128 = vmatprep.subr.bf16.mxu0 %v7858
  %8129 = vmatpush1.bf16.msra.mxu0 %v7857
  %8130 = vmatprep.subr.bf16.mxu0 %v7860
  %8131 = vmatpush1.bf16.msra.mxu0 %v7859
  %8132 = vmatprep.subr.bf16.mxu0 %v7862
  %8133 = vmatpush1.bf16.msra.mxu0 %v7861
  %8134 = vmatprep.subr.bf16.mxu0 %v7864
  %8135 = vmatpush1.bf16.msra.mxu0 %v7863
  %8136 = vmatprep.subr.bf16.mxu0 %v7866
  %8137 = vmatpush1.bf16.msra.mxu0 %v7865
  %8138 = vmatprep.subr.bf16.mxu0 %v7868
  %8139 = vmatpush1.bf16.msra.mxu0 %v7867
  %8140 = vmatprep.subr.bf16.mxu0 %v7870
  %8141 = vmatpush1.bf16.msra.mxu0 %v7869
  %8142 = vmatprep.subr.bf16.mxu0 %v7872
  %8143 = vmatpush1.bf16.msra.mxu0 %v7871
  %8144 = vmatprep.subr.bf16.mxu0 %v7874
  %8145 = vmatpush1.bf16.msra.mxu0 %v7873
  %8146 = vmatprep.subr.bf16.mxu0 %v7876
  %8147 = vmatpush1.bf16.msra.mxu0 %v7875
  %8148 = vmatprep.mubr.bf16.mxu0 %v7447
  %8149 = vmatmul.mubr.bf16.gmra.mrb[0].mxu0 %v7446
  %v8150 = vpop.f32.mrb[0].mxu0
  %v8151 = vadd.f32 %v8088, %v8150
  %v8152 = vpop.f32.mrb[0].mxu0
  %v8153 = vadd.f32 %v8090, %v8152
  %v8154 = vpop.f32.mrb[0].mxu0
  %v8155 = vadd.f32 %v8092, %v8154
  %v8156 = vpop.f32.mrb[0].mxu0
  %v8157 = vadd.f32 %v8094, %v8156
  %8158 = vmatprep.mubr.bf16.mxu0 %v7454
  %8159 = vmatmul.mubr.bf16.gmra.mrb[0].mxu0 %v7453
  %v8160 = vpop.f32.mrb[0].mxu0
  %v8161 = vadd.f32 %v8098, %v8160
  %v8162 = vpop.f32.mrb[0].mxu0
  %v8163 = vadd.f32 %v8100, %v8162
  %v8164 = vpop.f32.mrb[0].mxu0
  %v8165 = vadd.f32 %v8102, %v8164
  %v8166 = vpop.f32.mrb[0].mxu0
  %v8167 = vadd.f32 %v8104, %v8166
  %8168 = vmatprep.mubr.bf16.mxu0 %v7461
  %8169 = vmatmul.mubr.bf16.gmra.mrb[0].mxu0 %v7460
  %v8170 = vpop.f32.mrb[0].mxu0
  %v8171 = vadd.f32 %v8108, %v8170
  %v8172 = vpop.f32.mrb[0].mxu0
  %v8173 = vadd.f32 %v8110, %v8172
  %v8174 = vpop.f32.mrb[0].mxu0
  %v8175 = vadd.f32 %v8112, %v8174
  %v8176 = vpop.f32.mrb[0].mxu0
  %v8177 = vadd.f32 %v8114, %v8176
  %8178 = vdwg.mxu0
  %8179 = vmatprep.subr.bf16.mxu0 %v7878
  %8180 = vmatpush1.bf16.msra.mxu0 %v7877
  %8181 = vmatprep.subr.bf16.mxu0 %v7880
  %8182 = vmatpush1.bf16.msra.mxu0 %v7879
  %8183 = vmatprep.subr.bf16.mxu0 0
  %8184 = vmatpush1.bf16.msra.mxu0 0
  %8185 = vmatprep.subr.bf16.mxu0 0
  %8186 = vmatpush1.bf16.msra.mxu0 0
  %8187 = vmatprep.subr.bf16.mxu0 0
  %8188 = vmatpush1.bf16.msra.mxu0 0
  %8189 = vmatprep.subr.bf16.mxu0 0
  %8190 = vmatpush1.bf16.msra.mxu0 0
  %8191 = vmatprep.subr.bf16.mxu0 0
  %8192 = vmatpush1.bf16.msra.mxu0 0
  %8193 = vmatprep.subr.bf16.mxu0 0
  %8194 = vmatpush1.bf16.msra.mxu0 0
  %8195 = vmatprep.subr.bf16.mxu0 0
  %8196 = vmatpush1.bf16.msra.mxu0 0
  %8197 = vmatprep.subr.bf16.mxu0 0
  %8198 = vmatpush1.bf16.msra.mxu0 0
  %8199 = vmatprep.subr.bf16.mxu0 0
  %8200 = vmatpush1.bf16.msra.mxu0 0
  %8201 = vmatprep.subr.bf16.mxu0 0
  %8202 = vmatpush1.bf16.msra.mxu0 0
  %8203 = vmatprep.subr.bf16.mxu0 0
  %8204 = vmatpush1.bf16.msra.mxu0 0
  %8205 = vmatprep.subr.bf16.mxu0 0
  %8206 = vmatpush1.bf16.msra.mxu0 0
  %8207 = vmatprep.subr.bf16.mxu0 0
  %8208 = vmatpush1.bf16.msra.mxu0 0
  %8209 = vmatprep.subr.bf16.mxu0 0
  %8210 = vmatpush1.bf16.msra.mxu0 0
  %8211 = vmatprep.mubr.bf16.mxu0 0
  %8212 = vmatmul.mubr.bf16.gmra.mrb[0].mxu0 %v7982
  %v8213 = vpop.f32.mrb[0].mxu0
  %v8214 = vadd.f32 %v8151, %v8213
  %v8215 = vpop.f32.mrb[0].mxu0
  %v8216 = vadd.f32 %v8153, %v8215
  %v8217 = vpop.f32.mrb[0].mxu0
  %v8218 = vadd.f32 %v8155, %v8217
  %v8219 = vpop.f32.mrb[0].mxu0
  %v8220 = vadd.f32 %v8157, %v8219
  %8221 = vmatprep.mubr.bf16.mxu0 0
  %8222 = vmatmul.mubr.bf16.gmra.mrb[0].mxu0 %v7985
  %v8223 = vpop.f32.mrb[0].mxu0
  %v8224 = vadd.f32 %v8161, %v8223
  %v8225 = vpop.f32.mrb[0].mxu0
  %v8226 = vadd.f32 %v8163, %v8225
  %v8227 = vpop.f32.mrb[0].mxu0
  %v8228 = vadd.f32 %v8165, %v8227
  %v8229 = vpop.f32.mrb[0].mxu0
  %v8230 = vadd.f32 %v8167, %v8229
  %8231 = vmatprep.mubr.bf16.mxu0 0
  %8232 = vmatmul.mubr.bf16.gmra.mrb[0].mxu0 %v7988
  %v8233 = vpop.f32.mrb[0].mxu0
  %v8234 = vadd.f32 %v8171, %v8233
  %v8235 = vpop.f32.mrb[0].mxu0
  %v8236 = vadd.f32 %v8173, %v8235
  %v8237 = vpop.f32.mrb[0].mxu0
  %v8238 = vadd.f32 %v8175, %v8237
  %v8239 = vpop.f32.mrb[0].mxu0
  %v8240 = vadd.f32 %v8177, %v8239
  %8241 = vdwg.mxu0
  %v8242 = vmax.f32 %v8214, 0.0
  %v8243 = vmax.f32 %v8216, 0.0
  %v8244 = vmax.f32 %v8218, 0.0
  %v8245 = vmax.f32 %v8220, 0.0
  %v8246 = vmax.f32 %v8224, 0.0
  %v8247 = vmax.f32 %v8226, 0.0
  %v8248 = vmax.f32 %v8228, 0.0
  %v8249 = vmax.f32 %v8230, 0.0
  %v8250 = vmax.f32 %v8234, 0.0
  %v8251 = vmax.f32 %v8236, 0.0
  %v8252 = vmax.f32 %v8238, 0.0
  %v8253 = vmax.f32 %v8240, 0.0
  %v8260 = vrot.slane %v8242, 4
  %v8261 = vrot.slane %v8243, 4
  %v8262 = vrot.slane %v8244, 4
  %v8263 = vsel %vm678, %v8260, %v8262
  %v8264 = vrot.slane %v8245, 4
  %v8265 = vsel %vm678, %v8261, %v8264
  %v8266 = vrot.slane %v8246, 4
  %v8267 = vsel %vm678, %v8262, %v8266
  %v8268 = vrot.slane %v8247, 4
  %v8269 = vsel %vm678, %v8264, %v8268
  %8278 = vst [vmem:[#allocation10] sm:$0xf0] %v8260
  %8279 = vst.msk [vmem:[#allocation10 + $0x8] sm:$0xf0] %vm679, %v8261
  %8280 = vst [vmem:[#allocation10 + $0x10] sm:$0xff] %v8263
  %8281 = vst.msk [vmem:[#allocation10 + $0x18] sm:$0xff] %vm640, %v8265
  %8282 = vst [vmem:[#allocation10 + $0x20] sm:$0xff] %v8267
  %8283 = vst.msk [vmem:[#allocation10 + $0x28] sm:$0xff] %vm640, %v8269
  %8284 = vst [vmem:[#allocation10 + $0x30] sm:$0xf] %v8266
  %8285 = vst.msk [vmem:[#allocation10 + $0x38] sm:$0xf] %vm4565, %v8268
  %v8292 = vrot.slane %v8248, 4
  %v8293 = vrot.slane %v8249, 4
  %v8294 = vrot.slane %v8250, 4
  %v8295 = vsel %vm678, %v8292, %v8294
  %v8296 = vrot.slane %v8251, 4
  %v8297 = vsel %vm678, %v8293, %v8296
  %v8298 = vrot.slane %v8252, 4
  %v8299 = vsel %vm678, %v8294, %v8298
  %v8300 = vrot.slane %v8253, 4
  %v8301 = vsel %vm678, %v8296, %v8300
  %8310 = vst [vmem:[#allocation10 + $0x40] sm:$0xf0] %v8292
  %8311 = vst.msk [vmem:[#allocation10 + $0x48] sm:$0xf0] %vm679, %v8293
  %8312 = vst [vmem:[#allocation10 + $0x50] sm:$0xff] %v8295
  %8313 = vst.msk [vmem:[#allocation10 + $0x58] sm:$0xff] %vm640, %v8297
  %8314 = vst [vmem:[#allocation10 + $0x60] sm:$0xff] %v8299
  %8315 = vst.msk [vmem:[#allocation10 + $0x68] sm:$0xff] %vm640, %v8301
  %8316 = vst [vmem:[#allocation10 + $0x70] sm:$0xf] %v8298
  %8317 = vst.msk [vmem:[#allocation10 + $0x78] sm:$0xf] %vm4565, %v8300
  %v8318 = vld [vmem:[#allocation10] sm:$0xff]
  %v8319 = vld [vmem:[#allocation10 + $0x8] sm:$0xff]
  %v8320 = vld [vmem:[#allocation10 + $0x10] sm:$0xff]
  %v8321 = vld [vmem:[#allocation10 + $0x18] sm:$0xff]
  %v8322 = vld [vmem:[#allocation10 + $0x20] sm:$0xff]
  %v8323 = vld [vmem:[#allocation10 + $0x28] sm:$0xff]
  %v8324 = vld [vmem:[#allocation10 + $0x30] sm:$0xf]
  %v8325 = vld [vmem:[#allocation10 + $0x38] sm:$0xf]
  %v8326 = vpack.c.bf16 %v8320, %v8318
  %v8327 = vpack.c.bf16 %v8321, %v8319
  %v8328 = vpack.c.bf16 %v8324, %v8322
  %v8329 = vpack.c.bf16 %v8325, %v8323
  %v8334 = vunpack.c.l.b16 %v8326
  %v8335 = vunpack.c.l.b16 %v8327
  %v8336 = vunpack.c.h.b16 %v8326
  %v8337 = vunpack.c.h.b16 %v8327
  %v8338 = vunpack.c.l.b16 %v8328
  %v8339 = vunpack.c.l.b16 %v8329
  %v8340 = vunpack.c.h.b16 %v8328
  %v8341 = vunpack.c.h.b16 %v8329
  %v8342 = vpack.c.b16 %v8335, %v8334
  %v8343 = vpack.c.b16 %v8337, %v8336
  %v8344 = vpack.c.b16 %v8339, %v8338
  %v8345 = vpack.c.b16 %v8341, %v8340
  %8350 = vst.msk [vmem:[#allocation11] sm:$0xff] %vm680, %v8342
  %8351 = vst.msk [vmem:[#allocation11 + $0x20] sm:$0xff] %vm680, %v8343
  %8352 = vst.msk [vmem:[#allocation11 + $0x40] sm:$0xff] %vm680, %v8344
  %8353 = vst.msk [vmem:[#allocation11 + $0x60] sm:$0x33] %vm685, %v8345
  %v8354 = vld [vmem:[#allocation10] sm:$0xfe]
  %v8355 = vld [vmem:[#allocation10 + $0x8] sm:$0xfe]
  %v8356 = vld [vmem:[#allocation10 + $0x10] sm:$0xff]
  %v8357 = vld [vmem:[#allocation10 + $0x18] sm:$0xff]
  %v8358 = vld [vmem:[#allocation10 + $0x20] sm:$0xff]
  %v8359 = vld [vmem:[#allocation10 + $0x28] sm:$0xff]
  %v8360 = vld [vmem:[#allocation10 + $0x30] sm:$0x1f]
  %v8361 = vld [vmem:[#allocation10 + $0x38] sm:$0x1f]
  %v8362 = vpack.c.bf16 %v8356, %v8354
  %v8363 = vpack.c.bf16 %v8357, %v8355
  %v8364 = vpack.c.bf16 %v8360, %v8358
  %v8365 = vpack.c.bf16 %v8361, %v8359
  %v8370 = vunpack.c.l.b16 %v8362
  %v8371 = vunpack.c.l.b16 %v8363
  %v8372 = vunpack.c.h.b16 %v8362
  %v8373 = vunpack.c.h.b16 %v8363
  %v8374 = vunpack.c.l.b16 %v8364
  %v8375 = vunpack.c.l.b16 %v8365
  %v8376 = vunpack.c.h.b16 %v8364
  %v8377 = vunpack.c.h.b16 %v8365
  %v8378 = vpack.c.b16 %v8371, %v8370
  %v8379 = vpack.c.b16 %v8373, %v8372
  %v8380 = vpack.c.b16 %v8375, %v8374
  %v8381 = vpack.c.b16 %v8377, %v8376
  %v8383 = vshrl.u32 %v8378, 16
  %v8385 = vrot.slane %v8383, 4
  %v8386 = vshll.u32 %v8378, 16
  %v8388 = vrot.slane %v8386, 5
  %v8389 = vor.u32 %v8385, %v8388
  %v8390 = vrot.slane %v8389, 4
  %v8392 = vshll.u32 %v8379, 16
  %v8394 = vrot.slane %v8392, 5
  %v8395 = vsel %vm712, %v8390, %v8394
  %v8396 = vshrl.u32 %v8379, 16
  %v8398 = vrot.slane %v8396, 4
  %v8399 = vor.u32 %v8398, %v8394
  %v8400 = vrot.slane %v8399, 4
  %v8402 = vshll.u32 %v8380, 16
  %v8404 = vrot.slane %v8402, 5
  %v8405 = vsel %vm712, %v8400, %v8404
  %v8406 = vshrl.u32 %v8380, 16
  %v8408 = vrot.slane %v8406, 4
  %v8409 = vor.u32 %v8408, %v8404
  %v8410 = vrot.slane %v8409, 4
  %v8412 = vshll.u32 %v8381, 16
  %v8414 = vrot.slane %v8412, 5
  %v8415 = vsel %vm712, %v8410, %v8414
  %v8416 = vshrl.u32 %v8381, 16
  %v8418 = vrot.slane %v8416, 4
  %v8419 = vor.u32 %v8418, %v8414
  %v8420 = vrot.slane %v8419, 4
  %8421 = vrot.lane.b32.xlu0 %v8395, 64
  %v8422 = vpop.permute.xlu0 %8421
  %8423 = vrot.lane.b32.xlu0 %v8405, 64
  %v8424 = vpop.permute.xlu0 %8423
  %8425 = vrot.lane.b32.xlu0 %v8415, 64
  %v8426 = vpop.permute.xlu0 %8425
  %8427 = vrot.lane.b32.xlu0 %v8420, 64
  %v8428 = vpop.permute.xlu0 %8427
  %v8429 = vrot.slane %v8422, 4
  %v8430 = vrot.slane %v8424, 4
  %v8431 = vrot.slane %v8426, 4
  %v8432 = vrot.slane %v8428, 4
  %v8433 = vsel %vm751, %v8429, %v8422
  %v8434 = vsel %vm751, %v8430, %v8424
  %v8435 = vsel %vm751, %v8431, %v8426
  %v8436 = vsel %vm751, %v8432, %v8428
  %8441 = vst.msk [vmem:[#allocation11 + $0x4] sm:$0xff] %vm760, %v8433
  %8442 = vst.msk [vmem:[#allocation11 + $0x24] sm:$0xff] %vm760, %v8434
  %8443 = vst.msk [vmem:[#allocation11 + $0x44] sm:$0xff] %vm760, %v8435
  %8444 = vst.msk [vmem:[#allocation11 + $0x64] sm:$0x33] %vm765, %v8436
  %v8445 = vld [vmem:[#allocation10] sm:$0xfc]
  %v8446 = vld [vmem:[#allocation10 + $0x8] sm:$0xfc]
  %v8447 = vld [vmem:[#allocation10 + $0x10] sm:$0xff]
  %v8448 = vld [vmem:[#allocation10 + $0x18] sm:$0xff]
  %v8449 = vld [vmem:[#allocation10 + $0x20] sm:$0xff]
  %v8450 = vld [vmem:[#allocation10 + $0x28] sm:$0xff]
  %v8451 = vld [vmem:[#allocation10 + $0x30] sm:$0x3f]
  %v8452 = vld [vmem:[#allocation10 + $0x38] sm:$0x3f]
  %v8453 = vpack.c.bf16 %v8447, %v8445
  %v8454 = vpack.c.bf16 %v8448, %v8446
  %v8455 = vpack.c.bf16 %v8451, %v8449
  %v8456 = vpack.c.bf16 %v8452, %v8450
  %v8461 = vunpack.c.l.b16 %v8453
  %v8462 = vunpack.c.l.b16 %v8454
  %v8463 = vunpack.c.h.b16 %v8453
  %v8464 = vunpack.c.h.b16 %v8454
  %v8465 = vunpack.c.l.b16 %v8455
  %v8466 = vunpack.c.l.b16 %v8456
  %v8467 = vunpack.c.h.b16 %v8455
  %v8468 = vunpack.c.h.b16 %v8456
  %v8469 = vpack.c.b16 %v8462, %v8461
  %v8470 = vpack.c.b16 %v8464, %v8463
  %v8471 = vpack.c.b16 %v8466, %v8465
  %v8472 = vpack.c.b16 %v8468, %v8467
  %v8473 = vrot.slane %v8469, 5
  %v8474 = vrot.slane %v8473, 4
  %v8475 = vrot.slane %v8470, 5
  %v8476 = vsel %vm792, %v8474, %v8475
  %v8477 = vrot.slane %v8475, 4
  %v8478 = vrot.slane %v8471, 5
  %v8479 = vsel %vm792, %v8477, %v8478
  %v8480 = vrot.slane %v8478, 4
  %v8481 = vrot.slane %v8472, 5
  %v8482 = vsel %vm792, %v8480, %v8481
  %v8483 = vrot.slane %v8481, 4
  %8488 = vst.msk [vmem:[#allocation11 + $0xc] sm:$0xff] %vm680, %v8476
  %8489 = vst.msk [vmem:[#allocation11 + $0x2c] sm:$0xff] %vm680, %v8479
  %8490 = vst.msk [vmem:[#allocation11 + $0x4c] sm:$0xff] %vm680, %v8482
  %8491 = vst.msk [vmem:[#allocation11 + $0x6c] sm:$0x33] %vm685, %v8483
  %v8492 = vld [vmem:[#allocation10] sm:$0xf8]
  %v8493 = vld [vmem:[#allocation10 + $0x8] sm:$0xf8]
  %v8494 = vld [vmem:[#allocation10 + $0x10] sm:$0xff]
  %v8495 = vld [vmem:[#allocation10 + $0x18] sm:$0xff]
  %v8496 = vld [vmem:[#allocation10 + $0x20] sm:$0xff]
  %v8497 = vld [vmem:[#allocation10 + $0x28] sm:$0xff]
  %v8498 = vld [vmem:[#allocation10 + $0x30] sm:$0x7f]
  %v8499 = vld [vmem:[#allocation10 + $0x38] sm:$0x7f]
  %v8500 = vpack.c.bf16 %v8494, %v8492
  %v8501 = vpack.c.bf16 %v8495, %v8493
  %v8502 = vpack.c.bf16 %v8498, %v8496
  %v8503 = vpack.c.bf16 %v8499, %v8497
  %v8508 = vunpack.c.l.b16 %v8500
  %v8509 = vunpack.c.l.b16 %v8501
  %v8510 = vunpack.c.h.b16 %v8500
  %v8511 = vunpack.c.h.b16 %v8501
  %v8512 = vunpack.c.l.b16 %v8502
  %v8513 = vunpack.c.l.b16 %v8503
  %v8514 = vunpack.c.h.b16 %v8502
  %v8515 = vunpack.c.h.b16 %v8503
  %v8516 = vpack.c.b16 %v8509, %v8508
  %v8517 = vpack.c.b16 %v8511, %v8510
  %v8518 = vpack.c.b16 %v8513, %v8512
  %v8519 = vpack.c.b16 %v8515, %v8514
  %v8521 = vshrl.u32 %v8516, 16
  %v8523 = vrot.slane %v8521, 5
  %v8524 = vshll.u32 %v8516, 16
  %v8526 = vrot.slane %v8524, 6
  %v8527 = vor.u32 %v8523, %v8526
  %v8528 = vrot.slane %v8527, 4
  %v8530 = vshrl.u32 %v8517, 16
  %v8532 = vrot.slane %v8530, 5
  %v8533 = vshll.u32 %v8517, 16
  %v8535 = vrot.slane %v8533, 6
  %v8536 = vor.u32 %v8532, %v8535
  %v8537 = vsel %vm832, %v8528, %v8536
  %v8538 = vrot.slane %v8536, 4
  %v8540 = vshrl.u32 %v8518, 16
  %v8542 = vrot.slane %v8540, 5
  %v8543 = vshll.u32 %v8518, 16
  %v8545 = vrot.slane %v8543, 6
  %v8546 = vor.u32 %v8542, %v8545
  %v8547 = vsel %vm832, %v8538, %v8546
  %v8548 = vrot.slane %v8546, 4
  %v8550 = vshrl.u32 %v8519, 16
  %v8552 = vrot.slane %v8550, 5
  %v8553 = vshll.u32 %v8519, 16
  %v8555 = vrot.slane %v8553, 6
  %v8556 = vor.u32 %v8552, %v8555
  %v8557 = vsel %vm832, %v8548, %v8556
  %v8558 = vrot.slane %v8556, 4
  %8559 = vrot.lane.b32.xlu0 %v8537, 64
  %v8560 = vpop.permute.xlu0 %8559
  %8561 = vrot.lane.b32.xlu0 %v8547, 64
  %v8562 = vpop.permute.xlu0 %8561
  %8563 = vrot.lane.b32.xlu0 %v8557, 64
  %v8564 = vpop.permute.xlu0 %8563
  %8565 = vrot.lane.b32.xlu0 %v8558, 64
  %v8566 = vpop.permute.xlu0 %8565
  %v8567 = vrot.slane %v8560, 4
  %v8568 = vrot.slane %v8562, 4
  %v8569 = vrot.slane %v8564, 4
  %v8570 = vrot.slane %v8566, 4
  %v8571 = vsel %vm751, %v8567, %v8560
  %v8572 = vsel %vm751, %v8568, %v8562
  %v8573 = vsel %vm751, %v8569, %v8564
  %v8574 = vsel %vm751, %v8570, %v8566
  %8579 = vst.msk [vmem:[#allocation11 + $0x10] sm:$0xff] %vm760, %v8571
  %8580 = vst.msk [vmem:[#allocation11 + $0x30] sm:$0xff] %vm760, %v8572
  %8581 = vst.msk [vmem:[#allocation11 + $0x50] sm:$0xff] %vm760, %v8573
  %8582 = vst.msk [vmem:[#allocation11 + $0x70] sm:$0x33] %vm765, %v8574
  %v8583 = vld [vmem:[#allocation10] sm:$0xf0]
  %v8584 = vld [vmem:[#allocation10 + $0x8] sm:$0xf0]
  %v8585 = vld [vmem:[#allocation10 + $0x10] sm:$0xff]
  %v8586 = vld [vmem:[#allocation10 + $0x18] sm:$0xff]
  %v8587 = vld [vmem:[#allocation10 + $0x20] sm:$0xff]
  %v8588 = vld [vmem:[#allocation10 + $0x28] sm:$0xff]
  %v8589 = vld [vmem:[#allocation10 + $0x30] sm:$0xff]
  %v8590 = vld [vmem:[#allocation10 + $0x38] sm:$0xff]
  %v8591 = vpack.c.bf16 %v8585, %v8583
  %v8592 = vpack.c.bf16 %v8586, %v8584
  %v8593 = vpack.c.bf16 %v8589, %v8587
  %v8594 = vpack.c.bf16 %v8590, %v8588
  %v8599 = vunpack.c.l.b16 %v8591
  %v8600 = vunpack.c.l.b16 %v8592
  %v8601 = vunpack.c.h.b16 %v8591
  %v8602 = vunpack.c.h.b16 %v8592
  %v8603 = vunpack.c.l.b16 %v8593
  %v8604 = vunpack.c.l.b16 %v8594
  %v8605 = vunpack.c.h.b16 %v8593
  %v8606 = vunpack.c.h.b16 %v8594
  %v8607 = vpack.c.b16 %v8600, %v8599
  %v8608 = vpack.c.b16 %v8602, %v8601
  %v8609 = vpack.c.b16 %v8604, %v8603
  %v8610 = vpack.c.b16 %v8606, %v8605
  %v8611 = vrot.slane %v8607, 6
  %v8612 = vrot.slane %v8611, 4
  %v8613 = vrot.slane %v8608, 6
  %v8614 = vsel %vm905, %v8612, %v8613
  %v8615 = vrot.slane %v8613, 4
  %v8616 = vrot.slane %v8609, 6
  %v8617 = vsel %vm905, %v8615, %v8616
  %v8618 = vrot.slane %v8616, 4
  %v8619 = vrot.slane %v8610, 6
  %v8620 = vsel %vm905, %v8618, %v8619
  %v8621 = vrot.slane %v8619, 4
  %8626 = vst.msk [vmem:[#allocation11 + $0x18] sm:$0xff] %vm680, %v8614
  %8627 = vst.msk [vmem:[#allocation11 + $0x38] sm:$0xff] %vm680, %v8617
  %8628 = vst.msk [vmem:[#allocation11 + $0x58] sm:$0xff] %vm680, %v8620
  %8629 = vst.msk [vmem:[#allocation11 + $0x78] sm:$0x33] %vm685, %v8621
  %v8630 = vld [vmem:[#allocation10 + $0x40] sm:$0xff]
  %v8631 = vld [vmem:[#allocation10 + $0x48] sm:$0xff]
  %v8632 = vld [vmem:[#allocation10 + $0x50] sm:$0xff]
  %v8633 = vld [vmem:[#allocation10 + $0x58] sm:$0xff]
  %v8634 = vld [vmem:[#allocation10 + $0x60] sm:$0xff]
  %v8635 = vld [vmem:[#allocation10 + $0x68] sm:$0xff]
  %v8636 = vld [vmem:[#allocation10 + $0x70] sm:$0xf]
  %v8637 = vld [vmem:[#allocation10 + $0x78] sm:$0xf]
  %v8638 = vpack.c.bf16 %v8632, %v8630
  %v8639 = vpack.c.bf16 %v8633, %v8631
  %v8640 = vpack.c.bf16 %v8636, %v8634
  %v8641 = vpack.c.bf16 %v8637, %v8635
  %v8646 = vunpack.c.l.b16 %v8638
  %v8647 = vunpack.c.l.b16 %v8639
  %v8648 = vunpack.c.h.b16 %v8638
  %v8649 = vunpack.c.h.b16 %v8639
  %v8650 = vunpack.c.l.b16 %v8640
  %v8651 = vunpack.c.l.b16 %v8641
  %v8652 = vunpack.c.h.b16 %v8640
  %v8653 = vunpack.c.h.b16 %v8641
  %v8654 = vpack.c.b16 %v8647, %v8646
  %v8655 = vpack.c.b16 %v8649, %v8648
  %v8656 = vpack.c.b16 %v8651, %v8650
  %v8657 = vpack.c.b16 %v8653, %v8652
  %v8658 = vrot.slane %v8654, 6
  %v8659 = vrot.slane %v8658, 4
  %v8660 = vrot.slane %v8655, 6
  %v8661 = vsel %vm905, %v8659, %v8660
  %v8662 = vrot.slane %v8660, 4
  %v8663 = vrot.slane %v8656, 6
  %v8664 = vsel %vm905, %v8662, %v8663
  %v8665 = vrot.slane %v8663, 4
  %v8666 = vrot.slane %v8657, 6
  %v8667 = vsel %vm905, %v8665, %v8666
  %8672 = vst.msk [vmem:[#allocation11 + $0x60] sm:$0xcc] %vm955, %v8658
  %8673 = vst.msk [vmem:[#allocation11 + $0x80] sm:$0xff] %vm680, %v8661
  %8674 = vst.msk [vmem:[#allocation11 + $0xa0] sm:$0xff] %vm680, %v8664
  %8675 = vst.msk [vmem:[#allocation11 + $0xc0] sm:$0xff] %vm680, %v8667
  %v8676 = vld [vmem:[#allocation10 + $0x40] sm:$0xfe]
  %v8677 = vld [vmem:[#allocation10 + $0x48] sm:$0xfe]
  %v8678 = vld [vmem:[#allocation10 + $0x50] sm:$0xff]
  %v8679 = vld [vmem:[#allocation10 + $0x58] sm:$0xff]
  %v8680 = vld [vmem:[#allocation10 + $0x60] sm:$0xff]
  %v8681 = vld [vmem:[#allocation10 + $0x68] sm:$0xff]
  %v8682 = vld [vmem:[#allocation10 + $0x70] sm:$0x1f]
  %v8683 = vld [vmem:[#allocation10 + $0x78] sm:$0x1f]
  %v8684 = vpack.c.bf16 %v8678, %v8676
  %v8685 = vpack.c.bf16 %v8679, %v8677
  %v8686 = vpack.c.bf16 %v8682, %v8680
  %v8687 = vpack.c.bf16 %v8683, %v8681
  %v8692 = vunpack.c.l.b16 %v8684
  %v8693 = vunpack.c.l.b16 %v8685
  %v8694 = vunpack.c.h.b16 %v8684
  %v8695 = vunpack.c.h.b16 %v8685
  %v8696 = vunpack.c.l.b16 %v8686
  %v8697 = vunpack.c.l.b16 %v8687
  %v8698 = vunpack.c.h.b16 %v8686
  %v8699 = vunpack.c.h.b16 %v8687
  %v8700 = vpack.c.b16 %v8693, %v8692
  %v8701 = vpack.c.b16 %v8695, %v8694
  %v8702 = vpack.c.b16 %v8697, %v8696
  %v8703 = vpack.c.b16 %v8699, %v8698
  %v8705 = vshrl.u32 %v8700, 16
  %v8707 = vrot.slane %v8705, 6
  %v8708 = vshll.u32 %v8700, 16
  %v8710 = vrot.slane %v8708, 7
  %v8711 = vor.u32 %v8707, %v8710
  %v8712 = vrot.slane %v8711, 4
  %v8714 = vshrl.u32 %v8701, 16
  %v8716 = vrot.slane %v8714, 6
  %v8717 = vshll.u32 %v8701, 16
  %v8719 = vrot.slane %v8717, 7
  %v8720 = vor.u32 %v8716, %v8719
  %v8721 = vsel %vm984, %v8712, %v8720
  %v8722 = vrot.slane %v8720, 4
  %v8724 = vshrl.u32 %v8702, 16
  %v8726 = vrot.slane %v8724, 6
  %v8727 = vshll.u32 %v8702, 16
  %v8729 = vrot.slane %v8727, 7
  %v8730 = vor.u32 %v8726, %v8729
  %v8731 = vsel %vm984, %v8722, %v8730
  %v8732 = vrot.slane %v8730, 4
  %v8734 = vshrl.u32 %v8703, 16
  %v8736 = vrot.slane %v8734, 6
  %v8737 = vshll.u32 %v8703, 16
  %v8739 = vrot.slane %v8737, 7
  %v8740 = vor.u32 %v8736, %v8739
  %v8741 = vsel %vm984, %v8732, %v8740
  %8742 = vrot.lane.b32.xlu0 %v8711, 64
  %v8743 = vpop.permute.xlu0 %8742
  %8744 = vrot.lane.b32.xlu0 %v8721, 64
  %v8745 = vpop.permute.xlu0 %8744
  %8746 = vrot.lane.b32.xlu0 %v8731, 64
  %v8747 = vpop.permute.xlu0 %8746
  %8748 = vrot.lane.b32.xlu0 %v8741, 64
  %v8749 = vpop.permute.xlu0 %8748
  %v8750 = vrot.slane %v8743, 4
  %v8751 = vrot.slane %v8745, 4
  %v8752 = vrot.slane %v8747, 4
  %v8753 = vrot.slane %v8749, 4
  %v8754 = vsel %vm751, %v8750, %v8743
  %v8755 = vsel %vm751, %v8751, %v8745
  %v8756 = vsel %vm751, %v8752, %v8747
  %v8757 = vsel %vm751, %v8753, %v8749
  %8762 = vst.msk [vmem:[#allocation11 + $0x64] sm:$0xcc] %vm1030, %v8754
  %8763 = vst.msk [vmem:[#allocation11 + $0x84] sm:$0xff] %vm760, %v8755
  %8764 = vst.msk [vmem:[#allocation11 + $0xa4] sm:$0xff] %vm760, %v8756
  %8765 = vst.msk [vmem:[#allocation11 + $0xc4] sm:$0xff] %vm760, %v8757
  %v8766 = vld [vmem:[#allocation10 + $0x40] sm:$0xfc]
  %v8767 = vld [vmem:[#allocation10 + $0x48] sm:$0xfc]
  %v8768 = vld [vmem:[#allocation10 + $0x50] sm:$0xff]
  %v8769 = vld [vmem:[#allocation10 + $0x58] sm:$0xff]
  %v8770 = vld [vmem:[#allocation10 + $0x60] sm:$0xff]
  %v8771 = vld [vmem:[#allocation10 + $0x68] sm:$0xff]
  %v8772 = vld [vmem:[#allocation10 + $0x70] sm:$0x3f]
  %v8773 = vld [vmem:[#allocation10 + $0x78] sm:$0x3f]
  %v8774 = vpack.c.bf16 %v8768, %v8766
  %v8775 = vpack.c.bf16 %v8769, %v8767
  %v8776 = vpack.c.bf16 %v8772, %v8770
  %v8777 = vpack.c.bf16 %v8773, %v8771
  %v8782 = vunpack.c.l.b16 %v8774
  %v8783 = vunpack.c.l.b16 %v8775
  %v8784 = vunpack.c.h.b16 %v8774
  %v8785 = vunpack.c.h.b16 %v8775
  %v8786 = vunpack.c.l.b16 %v8776
  %v8787 = vunpack.c.l.b16 %v8777
  %v8788 = vunpack.c.h.b16 %v8776
  %v8789 = vunpack.c.h.b16 %v8777
  %v8790 = vpack.c.b16 %v8783, %v8782
  %v8791 = vpack.c.b16 %v8785, %v8784
  %v8792 = vpack.c.b16 %v8787, %v8786
  %v8793 = vpack.c.b16 %v8789, %v8788
  %v8794 = vrot.slane %v8790, 7
  %v8795 = vrot.slane %v8794, 4
  %v8796 = vrot.slane %v8791, 7
  %v8797 = vsel %vm1059, %v8795, %v8796
  %v8798 = vrot.slane %v8796, 4
  %v8799 = vrot.slane %v8792, 7
  %v8800 = vsel %vm1059, %v8798, %v8799
  %v8801 = vrot.slane %v8799, 4
  %v8802 = vrot.slane %v8793, 7
  %v8803 = vsel %vm1059, %v8801, %v8802
  %8808 = vst.msk [vmem:[#allocation11 + $0x6c] sm:$0xcc] %vm955, %v8794
  %8809 = vst.msk [vmem:[#allocation11 + $0x8c] sm:$0xff] %vm680, %v8797
  %8810 = vst.msk [vmem:[#allocation11 + $0xac] sm:$0xff] %vm680, %v8800
  %8811 = vst.msk [vmem:[#allocation11 + $0xcc] sm:$0xff] %vm680, %v8803
  %v8812 = vld [vmem:[#allocation10 + $0x40] sm:$0xf8]
  %v8813 = vld [vmem:[#allocation10 + $0x48] sm:$0xf8]
  %v8814 = vld [vmem:[#allocation10 + $0x50] sm:$0xff]
  %v8815 = vld [vmem:[#allocation10 + $0x58] sm:$0xff]
  %v8816 = vld [vmem:[#allocation10 + $0x60] sm:$0xff]
  %v8817 = vld [vmem:[#allocation10 + $0x68] sm:$0xff]
  %v8818 = vld [vmem:[#allocation10 + $0x70] sm:$0x7f]
  %v8819 = vld [vmem:[#allocation10 + $0x78] sm:$0x7f]
  %v8820 = vpack.c.bf16 %v8814, %v8812
  %v8821 = vpack.c.bf16 %v8815, %v8813
  %v8822 = vpack.c.bf16 %v8818, %v8816
  %v8823 = vpack.c.bf16 %v8819, %v8817
  %v8828 = vunpack.c.l.b16 %v8820
  %v8829 = vunpack.c.l.b16 %v8821
  %v8830 = vunpack.c.h.b16 %v8820
  %v8831 = vunpack.c.h.b16 %v8821
  %v8832 = vunpack.c.l.b16 %v8822
  %v8833 = vunpack.c.l.b16 %v8823
  %v8834 = vunpack.c.h.b16 %v8822
  %v8835 = vunpack.c.h.b16 %v8823
  %v8836 = vpack.c.b16 %v8829, %v8828
  %v8837 = vpack.c.b16 %v8831, %v8830
  %v8838 = vpack.c.b16 %v8833, %v8832
  %v8839 = vpack.c.b16 %v8835, %v8834
  %v8841 = vshrl.u32 %v8836, 16
  %v8843 = vrot.slane %v8841, 7
  %v8844 = vshll.u32 %v8836, 16
  %v8846 = vor.u32 %v8843, %v8844
  %v8847 = vrot.slane %v8843, 4
  %v8849 = vshrl.u32 %v8837, 16
  %v8851 = vrot.slane %v8849, 7
  %v8852 = vshll.u32 %v8837, 16
  %v8854 = vor.u32 %v8851, %v8852
  %v8855 = vsel %vm1098, %v8847, %v8854
  %v8856 = vrot.slane %v8851, 4
  %v8858 = vshrl.u32 %v8838, 16
  %v8860 = vrot.slane %v8858, 7
  %v8861 = vshll.u32 %v8838, 16
  %v8863 = vor.u32 %v8860, %v8861
  %v8864 = vsel %vm1098, %v8856, %v8863
  %v8865 = vrot.slane %v8860, 4
  %v8867 = vshrl.u32 %v8839, 16
  %v8869 = vrot.slane %v8867, 7
  %v8870 = vshll.u32 %v8839, 16
  %v8872 = vor.u32 %v8869, %v8870
  %v8873 = vsel %vm1098, %v8865, %v8872
  %8874 = vrot.lane.b32.xlu0 %v8846, 64
  %v8875 = vpop.permute.xlu0 %8874
  %8876 = vrot.lane.b32.xlu0 %v8855, 64
  %v8877 = vpop.permute.xlu0 %8876
  %8878 = vrot.lane.b32.xlu0 %v8864, 64
  %v8879 = vpop.permute.xlu0 %8878
  %8880 = vrot.lane.b32.xlu0 %v8873, 64
  %v8881 = vpop.permute.xlu0 %8880
  %v8882 = vrot.slane %v8875, 4
  %v8883 = vrot.slane %v8877, 4
  %v8884 = vrot.slane %v8879, 4
  %v8885 = vrot.slane %v8881, 4
  %v8886 = vsel %vm751, %v8882, %v8875
  %v8887 = vsel %vm751, %v8883, %v8877
  %v8888 = vsel %vm751, %v8884, %v8879
  %v8889 = vsel %vm751, %v8885, %v8881
  %8894 = vst.msk [vmem:[#allocation11 + $0x70] sm:$0xcc] %vm1030, %v8886
  %8895 = vst.msk [vmem:[#allocation11 + $0x90] sm:$0xff] %vm760, %v8887
  %8896 = vst.msk [vmem:[#allocation11 + $0xb0] sm:$0xff] %vm760, %v8888
  %8897 = vst.msk [vmem:[#allocation11 + $0xd0] sm:$0xff] %vm760, %v8889
  %v8898 = vld [vmem:[#allocation10 + $0x40] sm:$0xf0]
  %v8899 = vld [vmem:[#allocation10 + $0x48] sm:$0xf0]
  %v8900 = vld [vmem:[#allocation10 + $0x50] sm:$0xff]
  %v8901 = vld [vmem:[#allocation10 + $0x58] sm:$0xff]
  %v8902 = vld [vmem:[#allocation10 + $0x60] sm:$0xff]
  %v8903 = vld [vmem:[#allocation10 + $0x68] sm:$0xff]
  %v8904 = vld [vmem:[#allocation10 + $0x70] sm:$0xff]
  %v8905 = vld [vmem:[#allocation10 + $0x78] sm:$0xff]
  %v8906 = vpack.c.bf16 %v8900, %v8898
  %v8907 = vpack.c.bf16 %v8901, %v8899
  %v8908 = vpack.c.bf16 %v8904, %v8902
  %v8909 = vpack.c.bf16 %v8905, %v8903
  %v8914 = vunpack.c.l.b16 %v8906
  %v8915 = vunpack.c.l.b16 %v8907
  %v8916 = vunpack.c.h.b16 %v8906
  %v8917 = vunpack.c.h.b16 %v8907
  %v8918 = vunpack.c.l.b16 %v8908
  %v8919 = vunpack.c.l.b16 %v8909
  %v8920 = vunpack.c.h.b16 %v8908
  %v8921 = vunpack.c.h.b16 %v8909
  %v8922 = vpack.c.b16 %v8915, %v8914
  %v8923 = vpack.c.b16 %v8917, %v8916
  %v8924 = vpack.c.b16 %v8919, %v8918
  %v8925 = vpack.c.b16 %v8921, %v8920
  %8930 = vst.msk [vmem:[#allocation11 + $0x78] sm:$0xcc] %vm955, %v8922
  %8931 = vst.msk [vmem:[#allocation11 + $0x98] sm:$0xff] %vm680, %v8923
  %8932 = vst.msk [vmem:[#allocation11 + $0xb8] sm:$0xff] %vm680, %v8924
  %8933 = vst.msk [vmem:[#allocation11 + $0xd8] sm:$0xff] %vm680, %v8925
  %v8934 = vld [vmem:[#allocation11] sm:$0xff]
  %v8935 = vld [vmem:[#allocation11 + $0x8] sm:$0xff]
  %v8936 = vld [vmem:[#allocation11 + $0x10] sm:$0xff]
  %v8937 = vld [vmem:[#allocation11 + $0x18] sm:$0xff]
  %v8938 = vld [vmem:[#allocation11 + $0x20] sm:$0xff]
  %v8939 = vld [vmem:[#allocation11 + $0x28] sm:$0xff]
  %v8940 = vld [vmem:[#allocation11 + $0x30] sm:$0xff]
  %v8941 = vld [vmem:[#allocation11 + $0x38] sm:$0xff]
  %v8942 = vld [vmem:[#allocation11 + $0x40] sm:$0xff]
  %v8943 = vld [vmem:[#allocation11 + $0x48] sm:$0xff]
  %v8944 = vld [vmem:[#allocation11 + $0x50] sm:$0xff]
  %v8945 = vld [vmem:[#allocation11 + $0x58] sm:$0xff]
  %v8946 = vld [vmem:[#allocation11 + $0x60] sm:$0xff]
  %v8947 = vld [vmem:[#allocation11 + $0x68] sm:$0xff]
  %v8948 = vld [vmem:[#allocation11 + $0x70] sm:$0xff]
  %v8949 = vld [vmem:[#allocation11 + $0x78] sm:$0xff]
  %v8950 = vld [vmem:[#allocation11 + $0x80] sm:$0xff]
  %v8951 = vld [vmem:[#allocation11 + $0x88] sm:$0xff]
  %v8952 = vld [vmem:[#allocation11 + $0x90] sm:$0xff]
  %v8953 = vld [vmem:[#allocation11 + $0x98] sm:$0xff]
  %v8954 = vld [vmem:[#allocation11 + $0xa0] sm:$0xff]
  %v8955 = vld [vmem:[#allocation11 + $0xa8] sm:$0xff]
  %v8956 = vld [vmem:[#allocation11 + $0xb0] sm:$0xff]
  %v8957 = vld [vmem:[#allocation11 + $0xb8] sm:$0xff]
  %v8958 = vld [vmem:[#allocation11 + $0xc0] sm:$0xff]
  %v8959 = vld [vmem:[#allocation11 + $0xc8] sm:$0xff]
  %v8960 = vld [vmem:[#allocation11 + $0xd0] sm:$0xff]
  %v8961 = vld [vmem:[#allocation11 + $0xd8] sm:$0xff]
  %v8962 = vld [vmem:[%s10] sm:$0xf]
  %v8963 = vld [vmem:[%s10 + $0x4] sm:$0xf]
  %v8964 = vld [vmem:[%s10 + $0x8] sm:$0xf]
  %v8965 = vld [vmem:[%s10 + $0xc] sm:$0xf]
  %v8966 = vld [vmem:[%s10 + $0x10] sm:$0xf]
  %v8967 = vld [vmem:[%s10 + $0x14] sm:$0xf]
  %v8968 = vld [vmem:[%s10 + $0x18] sm:$0xf]
  %v8969 = vld [vmem:[%s10 + $0x1c] sm:$0xf]
  %v8970 = vld [vmem:[%s10 + $0x20] sm:$0xf]
  %v8971 = vld [vmem:[%s10 + $0x24] sm:$0xf]
  %v8972 = vld [vmem:[%s10 + $0x28] sm:$0xf]
  %v8973 = vld [vmem:[%s10 + $0x2c] sm:$0xf]
  %v8974 = vld [vmem:[%s10 + $0x30] sm:$0xf]
  %v8975 = vld [vmem:[%s10 + $0x34] sm:$0xf]
  %v8976 = vld [vmem:[%s10 + $0x38] sm:$0xf]
  %v8977 = vld [vmem:[%s10 + $0x3c] sm:$0xf]
  %v8978 = vld [vmem:[%s10 + $0x40] sm:$0xf]
  %v8979 = vld [vmem:[%s10 + $0x44] sm:$0xf]
  %v8980 = vld [vmem:[%s10 + $0x48] sm:$0xf]
  %v8981 = vld [vmem:[%s10 + $0x4c] sm:$0xf]
  %v8982 = vld [vmem:[%s10 + $0x50] sm:$0xf]
  %v8983 = vld [vmem:[%s10 + $0x54] sm:$0xf]
  %v8984 = vld [vmem:[%s10 + $0x58] sm:$0xf]
  %v8985 = vld [vmem:[%s10 + $0x5c] sm:$0xf]
  %v8986 = vld [vmem:[%s10 + $0x60] sm:$0xf]
  %v8987 = vld [vmem:[%s10 + $0x64] sm:$0xf]
  %v8988 = vld [vmem:[%s10 + $0x68] sm:$0xf]
  %v8989 = vld [vmem:[%s10 + $0x6c] sm:$0xf]
  %v8990 = vld [vmem:[%s10 + $0x70] sm:$0xf]
  %v8991 = vld [vmem:[%s10 + $0x74] sm:$0xf]
  %v8992 = vld [vmem:[%s10 + $0x78] sm:$0xf]
  %v8993 = vld [vmem:[%s10 + $0x7c] sm:$0xf]
  %v8994 = vld [vmem:[%s10 + $0x80] sm:$0xf]
  %v8995 = vld [vmem:[%s10 + $0x84] sm:$0xf]
  %v8996 = vld [vmem:[%s10 + $0x88] sm:$0xf]
  %v8997 = vld [vmem:[%s10 + $0x8c] sm:$0xf]
  %v8998 = vld [vmem:[%s10 + $0x90] sm:$0xf]
  %v8999 = vld [vmem:[%s10 + $0x94] sm:$0xf]
  %v9000 = vld [vmem:[%s10 + $0x98] sm:$0xf]
  %v9001 = vld [vmem:[%s10 + $0x9c] sm:$0xf]
  %v9002 = vld [vmem:[%s10 + $0xa0] sm:$0xf]
  %v9003 = vld [vmem:[%s10 + $0xa4] sm:$0xf]
  %v9004 = vld [vmem:[%s10 + $0xa8] sm:$0xf]
  %v9005 = vld [vmem:[%s10 + $0xac] sm:$0xf]
  %v9006 = vld [vmem:[%s10 + $0xb0] sm:$0xf]
  %v9007 = vld [vmem:[%s10 + $0xb4] sm:$0xf]
  %v9008 = vld [vmem:[%s10 + $0xb8] sm:$0xf]
  %v9009 = vld [vmem:[%s10 + $0xbc] sm:$0xf]
  %v9010 = vld [vmem:[%s10 + $0xc0] sm:$0xf]
  %v9011 = vld [vmem:[%s10 + $0xc4] sm:$0xf]
  %v9012 = vld [vmem:[%s10 + $0xc8] sm:$0xf]
  %v9013 = vld [vmem:[%s10 + $0xcc] sm:$0xf]
  %v9014 = vld [vmem:[%s10 + $0xd0] sm:$0xf]
  %v9015 = vld [vmem:[%s10 + $0xd4] sm:$0xf]
  %v9016 = vld [vmem:[%s10 + $0xd8] sm:$0xf]
  %v9017 = vld [vmem:[%s10 + $0xdc] sm:$0xf]
  %v9018 = vld [vmem:[%s10 + $0xe0] sm:$0xf]
  %v9019 = vld [vmem:[%s10 + $0xe4] sm:$0xf]
  %v9020 = vld [vmem:[%s10 + $0xe8] sm:$0xf]
  %v9021 = vld [vmem:[%s10 + $0xec] sm:$0xf]
  %v9022 = vld [vmem:[%s10 + $0xf0] sm:$0xf]
  %v9023 = vld [vmem:[%s10 + $0xf4] sm:$0xf]
  %v9024 = vld [vmem:[%s10 + $0xf8] sm:$0xf]
  %v9025 = vld [vmem:[%s10 + $0xfc] sm:$0xf]
  %v9026 = vld [vmem:[%s10 + $0x100] sm:$0xf]
  %v9027 = vld [vmem:[%s10 + $0x104] sm:$0xf]
  %v9028 = vld [vmem:[%s10 + $0x108] sm:$0xf]
  %v9029 = vld [vmem:[%s10 + $0x10c] sm:$0xf]
  %v9030 = vld [vmem:[%s10 + $0x110] sm:$0xf]
  %v9031 = vld [vmem:[%s10 + $0x114] sm:$0xf]
  %v9032 = vld [vmem:[%s10 + $0x118] sm:$0xf]
  %v9033 = vld [vmem:[%s10 + $0x11c] sm:$0xf]
  %v9034 = vld [vmem:[%s10 + $0x120] sm:$0xf]
  %v9035 = vld [vmem:[%s10 + $0x124] sm:$0xf]
  %v9036 = vld [vmem:[%s10 + $0x128] sm:$0xf]
  %v9037 = vld [vmem:[%s10 + $0x12c] sm:$0xf]
  %v9038 = vld [vmem:[%s10 + $0x130] sm:$0xf]
  %v9039 = vld [vmem:[%s10 + $0x134] sm:$0xf]
  %v9040 = vld [vmem:[%s10 + $0x138] sm:$0xf]
  %v9041 = vld [vmem:[%s10 + $0x13c] sm:$0xf]
  %v9042 = vld [vmem:[%s10 + $0x140] sm:$0xf]
  %v9043 = vld [vmem:[%s10 + $0x144] sm:$0xf]
  %v9044 = vld [vmem:[%s10 + $0x148] sm:$0xf]
  %v9045 = vld [vmem:[%s10 + $0x14c] sm:$0xf]
  %v9046 = vld [vmem:[%s10 + $0x150] sm:$0xf]
  %v9047 = vld [vmem:[%s10 + $0x154] sm:$0xf]
  %v9048 = vld [vmem:[%s10 + $0x158] sm:$0xf]
  %v9049 = vld [vmem:[%s10 + $0x15c] sm:$0xf]
  %v9050 = vld [vmem:[%s10 + $0x160] sm:$0xf]
  %v9051 = vld [vmem:[%s10 + $0x164] sm:$0xf]
  %v9052 = vld [vmem:[%s10 + $0x168] sm:$0xf]
  %v9053 = vld [vmem:[%s10 + $0x16c] sm:$0xf]
  %v9054 = vld [vmem:[%s10 + $0x170] sm:$0xf]
  %v9055 = vld [vmem:[%s10 + $0x174] sm:$0xf]
  %v9056 = vld [vmem:[%s10 + $0x178] sm:$0xf]
  %v9057 = vld [vmem:[%s10 + $0x17c] sm:$0xf]
  %v9058 = vld [vmem:[%s10 + $0x180] sm:$0xf]
  %v9059 = vld [vmem:[%s10 + $0x184] sm:$0xf]
  %v9060 = vld [vmem:[%s10 + $0x188] sm:$0xf]
  %v9061 = vld [vmem:[%s10 + $0x18c] sm:$0xf]
  %v9062 = vld [vmem:[%s10 + $0x190] sm:$0xf]
  %v9063 = vld [vmem:[%s10 + $0x194] sm:$0xf]
  %v9064 = vld [vmem:[%s10 + $0x198] sm:$0xf]
  %v9065 = vld [vmem:[%s10 + $0x19c] sm:$0xf]
  %v9066 = vld [vmem:[%s10 + $0x1a0] sm:$0xf]
  %v9067 = vld [vmem:[%s10 + $0x1a4] sm:$0xf]
  %v9068 = vld [vmem:[%s10 + $0x1a8] sm:$0xf]
  %v9069 = vld [vmem:[%s10 + $0x1ac] sm:$0xf]
  %v9070 = vld [vmem:[%s10 + $0x1b0] sm:$0xf]
  %v9071 = vld [vmem:[%s10 + $0x1b4] sm:$0xf]
  %v9072 = vld [vmem:[%s10 + $0x1b8] sm:$0xf]
  %v9073 = vld [vmem:[%s10 + $0x1bc] sm:$0xf]
  %v9074 = vld [vmem:[%s10 + $0x1c0] sm:$0xf]
  %v9075 = vld [vmem:[%s10 + $0x1c4] sm:$0xf]
  %v9076 = vld [vmem:[%s10 + $0x1c8] sm:$0xf]
  %v9077 = vld [vmem:[%s10 + $0x1cc] sm:$0xf]
  %v9078 = vld [vmem:[%s10 + $0x1d0] sm:$0xf]
  %v9079 = vld [vmem:[%s10 + $0x1d4] sm:$0xf]
  %v9080 = vld [vmem:[%s10 + $0x1d8] sm:$0xf]
  %v9081 = vld [vmem:[%s10 + $0x1dc] sm:$0xf]
  %v9082 = vld [vmem:[%s20] sm:$0x1]
  %v9084 = vlaneseq
  %v9085 = vshrl.u32 %v9084, 7
  %v9086 = vsub.s32 0, %v9085
  %v9087 = vrot.slane %v9082, %v9086
  %v9117 = vunpack.c.l.b16 %v8934
  %v9118 = vunpack.c.h.b16 %v8934
  %v9119 = vunpack.c.l.b16 %v8935
  %v9120 = vunpack.c.h.b16 %v8935
  %v9121 = vunpack.c.l.b16 %v8936
  %v9122 = vunpack.c.h.b16 %v8936
  %v9123 = vunpack.c.l.b16 %v8937
  %v9124 = vunpack.c.h.b16 %v8937
  %v9125 = vunpack.c.l.b16 %v8938
  %v9126 = vunpack.c.h.b16 %v8938
  %v9127 = vunpack.c.l.b16 %v8939
  %v9128 = vunpack.c.h.b16 %v8939
  %v9129 = vunpack.c.l.b16 %v8940
  %v9130 = vunpack.c.h.b16 %v8940
  %v9131 = vunpack.c.l.b16 %v8941
  %v9132 = vunpack.c.h.b16 %v8941
  %v9133 = vunpack.c.l.b16 %v8942
  %v9134 = vunpack.c.h.b16 %v8942
  %v9135 = vunpack.c.l.b16 %v8943
  %v9136 = vunpack.c.h.b16 %v8943
  %v9137 = vunpack.c.l.b16 %v8944
  %v9138 = vunpack.c.h.b16 %v8944
  %v9139 = vunpack.c.l.b16 %v8945
  %v9140 = vunpack.c.h.b16 %v8945
  %v9141 = vunpack.c.l.b16 %v8946
  %v9142 = vunpack.c.h.b16 %v8946
  %v9143 = vunpack.c.l.b16 %v8947
  %v9144 = vunpack.c.h.b16 %v8947
  %v9145 = vunpack.c.l.b16 %v8948
  %v9146 = vunpack.c.h.b16 %v8948
  %v9147 = vunpack.c.l.b16 %v8949
  %v9148 = vunpack.c.h.b16 %v8949
  %v9149 = vunpack.c.l.b16 %v8950
  %v9150 = vunpack.c.h.b16 %v8950
  %v9151 = vunpack.c.l.b16 %v8951
  %v9152 = vunpack.c.h.b16 %v8951
  %v9153 = vunpack.c.l.b16 %v8952
  %v9154 = vunpack.c.h.b16 %v8952
  %v9155 = vunpack.c.l.b16 %v8953
  %v9156 = vunpack.c.h.b16 %v8953
  %v9157 = vunpack.c.l.b16 %v8954
  %v9158 = vunpack.c.h.b16 %v8954
  %v9159 = vunpack.c.l.b16 %v8955
  %v9160 = vunpack.c.h.b16 %v8955
  %v9161 = vunpack.c.l.b16 %v8956
  %v9162 = vunpack.c.h.b16 %v8956
  %v9163 = vunpack.c.l.b16 %v8957
  %v9164 = vunpack.c.h.b16 %v8957
  %v9165 = vunpack.c.l.b16 %v8958
  %v9166 = vunpack.c.h.b16 %v8958
  %v9167 = vunpack.c.l.b16 %v8959
  %v9168 = vunpack.c.h.b16 %v8959
  %v9169 = vunpack.c.l.b16 %v8960
  %v9170 = vunpack.c.h.b16 %v8960
  %v9171 = vunpack.c.l.b16 %v8961
  %v9172 = vunpack.c.h.b16 %v8961
  %v9173 = vpack.c.b16 %v9125, %v9117
  %v9174 = vpack.c.b16 %v9126, %v9118
  %v9175 = vpack.c.b16 %v9127, %v9119
  %v9176 = vpack.c.b16 %v9128, %v9120
  %v9177 = vpack.c.b16 %v9129, %v9121
  %v9178 = vpack.c.b16 %v9130, %v9122
  %v9179 = vpack.c.b16 %v9131, %v9123
  %v9180 = vpack.c.b16 %v9132, %v9124
  %v9181 = vpack.c.b16 %v9141, %v9133
  %v9182 = vpack.c.b16 %v9142, %v9134
  %v9183 = vpack.c.b16 %v9143, %v9135
  %v9184 = vpack.c.b16 %v9144, %v9136
  %v9185 = vpack.c.b16 %v9145, %v9137
  %v9186 = vpack.c.b16 %v9146, %v9138
  %v9187 = vpack.c.b16 %v9147, %v9139
  %v9188 = vpack.c.b16 %v9148, %v9140
  %v9189 = vpack.c.b16 %v9157, %v9149
  %v9190 = vpack.c.b16 %v9158, %v9150
  %v9191 = vpack.c.b16 %v9159, %v9151
  %v9192 = vpack.c.b16 %v9160, %v9152
  %v9193 = vpack.c.b16 %v9161, %v9153
  %v9194 = vpack.c.b16 %v9162, %v9154
  %v9195 = vpack.c.b16 %v9163, %v9155
  %v9196 = vpack.c.b16 %v9164, %v9156
  %v9197 = vpack.c.b16 %v9165, %v9165
  %v9198 = vpack.c.b16 %v9166, %v9166
  %v9199 = vpack.c.b16 %v9167, %v9167
  %v9200 = vpack.c.b16 %v9168, %v9168
  %v9201 = vpack.c.b16 %v9169, %v9169
  %v9202 = vpack.c.b16 %v9170, %v9170
  %v9203 = vpack.c.b16 %v9171, %v9171
  %v9204 = vpack.c.b16 %v9172, %v9172
  %v9353 = vunpack.c.l.b16 %v8962
  %v9354 = vunpack.c.l.b16 %v8963
  %v9355 = vunpack.c.l.b16 %v8964
  %v9356 = vunpack.c.l.b16 %v8965
  %v9357 = vunpack.c.l.b16 %v8966
  %v9358 = vunpack.c.l.b16 %v8967
  %v9359 = vunpack.c.l.b16 %v8968
  %v9360 = vunpack.c.l.b16 %v8969
  %v9361 = vunpack.c.l.b16 %v8970
  %v9362 = vunpack.c.l.b16 %v8971
  %v9363 = vunpack.c.l.b16 %v8972
  %v9364 = vunpack.c.l.b16 %v8973
  %v9365 = vunpack.c.l.b16 %v8974
  %v9366 = vunpack.c.l.b16 %v8975
  %v9367 = vunpack.c.l.b16 %v8976
  %v9368 = vunpack.c.l.b16 %v8977
  %v9369 = vunpack.c.l.b16 %v8978
  %v9370 = vunpack.c.l.b16 %v8979
  %v9371 = vunpack.c.l.b16 %v8980
  %v9372 = vunpack.c.l.b16 %v8981
  %v9373 = vunpack.c.l.b16 %v8982
  %v9374 = vunpack.c.l.b16 %v8983
  %v9375 = vunpack.c.l.b16 %v8984
  %v9376 = vunpack.c.l.b16 %v8985
  %v9377 = vunpack.c.l.b16 %v8986
  %v9378 = vunpack.c.l.b16 %v8987
  %v9379 = vunpack.c.l.b16 %v8988
  %v9380 = vunpack.c.l.b16 %v8989
  %v9381 = vunpack.c.l.b16 %v8990
  %v9382 = vunpack.c.l.b16 %v8991
  %v9383 = vunpack.c.l.b16 %v8992
  %v9384 = vunpack.c.l.b16 %v8993
  %v9385 = vunpack.c.l.b16 %v8994
  %v9386 = vunpack.c.l.b16 %v8995
  %v9387 = vunpack.c.l.b16 %v8996
  %v9388 = vunpack.c.l.b16 %v8997
  %v9389 = vunpack.c.l.b16 %v8998
  %v9390 = vunpack.c.l.b16 %v8999
  %v9391 = vunpack.c.l.b16 %v9000
  %v9392 = vunpack.c.l.b16 %v9001
  %v9393 = vunpack.c.l.b16 %v9002
  %v9394 = vunpack.c.l.b16 %v9003
  %v9395 = vunpack.c.l.b16 %v9004
  %v9396 = vunpack.c.l.b16 %v9005
  %v9397 = vunpack.c.l.b16 %v9006
  %v9398 = vunpack.c.l.b16 %v9007
  %v9399 = vunpack.c.l.b16 %v9008
  %v9400 = vunpack.c.l.b16 %v9009
  %v9401 = vunpack.c.l.b16 %v9010
  %v9402 = vunpack.c.l.b16 %v9011
  %v9403 = vunpack.c.l.b16 %v9012
  %v9404 = vunpack.c.l.b16 %v9013
  %v9405 = vunpack.c.l.b16 %v9014
  %v9406 = vunpack.c.l.b16 %v9015
  %v9407 = vunpack.c.l.b16 %v9016
  %v9408 = vunpack.c.l.b16 %v9017
  %v9409 = vunpack.c.l.b16 %v9018
  %v9410 = vunpack.c.l.b16 %v9019
  %v9411 = vunpack.c.l.b16 %v9020
  %v9412 = vunpack.c.l.b16 %v9021
  %v9413 = vunpack.c.l.b16 %v9022
  %v9414 = vunpack.c.l.b16 %v9023
  %v9415 = vunpack.c.l.b16 %v9024
  %v9416 = vunpack.c.l.b16 %v9025
  %v9417 = vunpack.c.l.b16 %v9026
  %v9418 = vunpack.c.l.b16 %v9027
  %v9419 = vunpack.c.l.b16 %v9028
  %v9420 = vunpack.c.l.b16 %v9029
  %v9421 = vunpack.c.l.b16 %v9030
  %v9422 = vunpack.c.l.b16 %v9031
  %v9423 = vunpack.c.l.b16 %v9032
  %v9424 = vunpack.c.l.b16 %v9033
  %v9425 = vunpack.c.l.b16 %v9034
  %v9426 = vunpack.c.l.b16 %v9035
  %v9427 = vunpack.c.l.b16 %v9036
  %v9428 = vunpack.c.l.b16 %v9037
  %v9429 = vunpack.c.l.b16 %v9038
  %v9430 = vunpack.c.l.b16 %v9039
  %v9431 = vunpack.c.l.b16 %v9040
  %v9432 = vunpack.c.l.b16 %v9041
  %v9433 = vunpack.c.l.b16 %v9042
  %v9434 = vunpack.c.l.b16 %v9043
  %v9435 = vunpack.c.l.b16 %v9044
  %v9436 = vunpack.c.l.b16 %v9045
  %v9437 = vunpack.c.l.b16 %v9046
  %v9438 = vunpack.c.l.b16 %v9047
  %v9439 = vunpack.c.l.b16 %v9048
  %v9440 = vunpack.c.l.b16 %v9049
  %v9441 = vunpack.c.l.b16 %v9050
  %v9442 = vunpack.c.l.b16 %v9051
  %v9443 = vunpack.c.l.b16 %v9052
  %v9444 = vunpack.c.l.b16 %v9053
  %v9445 = vunpack.c.l.b16 %v9054
  %v9446 = vunpack.c.l.b16 %v9055
  %v9447 = vunpack.c.l.b16 %v9056
  %v9448 = vunpack.c.l.b16 %v9057
  %v9449 = vunpack.c.l.b16 %v9058
  %v9450 = vunpack.c.l.b16 %v9059
  %v9451 = vunpack.c.l.b16 %v9060
  %v9452 = vunpack.c.l.b16 %v9061
  %v9453 = vunpack.c.l.b16 %v9062
  %v9454 = vunpack.c.l.b16 %v9063
  %v9455 = vunpack.c.l.b16 %v9064
  %v9456 = vunpack.c.l.b16 %v9065
  %v9457 = vunpack.c.l.b16 %v9066
  %v9458 = vunpack.c.l.b16 %v9067
  %v9459 = vunpack.c.l.b16 %v9068
  %v9460 = vunpack.c.l.b16 %v9069
  %v9461 = vunpack.c.l.b16 %v9070
  %v9462 = vunpack.c.l.b16 %v9071
  %v9463 = vunpack.c.l.b16 %v9072
  %v9464 = vunpack.c.l.b16 %v9073
  %v9465 = vunpack.c.l.b16 %v9074
  %v9466 = vunpack.c.l.b16 %v9075
  %v9467 = vunpack.c.l.b16 %v9076
  %v9468 = vunpack.c.l.b16 %v9077
  %v9469 = vunpack.c.l.b16 %v9078
  %v9470 = vunpack.c.l.b16 %v9079
  %v9471 = vunpack.c.l.b16 %v9080
  %v9472 = vunpack.c.l.b16 %v9081
  %v9473 = vpack.c.b16 %v9354, %v9353
  %v9474 = vpack.c.b16 %v9356, %v9355
  %v9475 = vpack.c.b16 %v9358, %v9357
  %v9476 = vpack.c.b16 %v9360, %v9359
  %v9477 = vpack.c.b16 %v9362, %v9361
  %v9478 = vpack.c.b16 %v9364, %v9363
  %v9479 = vpack.c.b16 %v9366, %v9365
  %v9480 = vpack.c.b16 %v9368, %v9367
  %v9481 = vpack.c.b16 %v9370, %v9369
  %v9482 = vpack.c.b16 %v9372, %v9371
  %v9483 = vpack.c.b16 %v9374, %v9373
  %v9484 = vpack.c.b16 %v9376, %v9375
  %v9485 = vpack.c.b16 %v9378, %v9377
  %v9486 = vpack.c.b16 %v9380, %v9379
  %v9487 = vpack.c.b16 %v9382, %v9381
  %v9488 = vpack.c.b16 %v9384, %v9383
  %v9489 = vpack.c.b16 %v9386, %v9385
  %v9490 = vpack.c.b16 %v9388, %v9387
  %v9491 = vpack.c.b16 %v9390, %v9389
  %v9492 = vpack.c.b16 %v9392, %v9391
  %v9493 = vpack.c.b16 %v9394, %v9393
  %v9494 = vpack.c.b16 %v9396, %v9395
  %v9495 = vpack.c.b16 %v9398, %v9397
  %v9496 = vpack.c.b16 %v9400, %v9399
  %v9497 = vpack.c.b16 %v9402, %v9401
  %v9498 = vpack.c.b16 %v9404, %v9403
  %v9499 = vpack.c.b16 %v9406, %v9405
  %v9500 = vpack.c.b16 %v9408, %v9407
  %v9501 = vpack.c.b16 %v9410, %v9409
  %v9502 = vpack.c.b16 %v9412, %v9411
  %v9503 = vpack.c.b16 %v9414, %v9413
  %v9504 = vpack.c.b16 %v9416, %v9415
  %v9505 = vpack.c.b16 %v9418, %v9417
  %v9506 = vpack.c.b16 %v9420, %v9419
  %v9507 = vpack.c.b16 %v9422, %v9421
  %v9508 = vpack.c.b16 %v9424, %v9423
  %v9509 = vpack.c.b16 %v9426, %v9425
  %v9510 = vpack.c.b16 %v9428, %v9427
  %v9511 = vpack.c.b16 %v9430, %v9429
  %v9512 = vpack.c.b16 %v9432, %v9431
  %v9513 = vpack.c.b16 %v9434, %v9433
  %v9514 = vpack.c.b16 %v9436, %v9435
  %v9515 = vpack.c.b16 %v9438, %v9437
  %v9516 = vpack.c.b16 %v9440, %v9439
  %v9517 = vpack.c.b16 %v9442, %v9441
  %v9518 = vpack.c.b16 %v9444, %v9443
  %v9519 = vpack.c.b16 %v9446, %v9445
  %v9520 = vpack.c.b16 %v9448, %v9447
  %v9521 = vpack.c.b16 %v9450, %v9449
  %v9522 = vpack.c.b16 %v9452, %v9451
  %v9523 = vpack.c.b16 %v9454, %v9453
  %v9524 = vpack.c.b16 %v9456, %v9455
  %v9525 = vpack.c.b16 %v9458, %v9457
  %v9526 = vpack.c.b16 %v9460, %v9459
  %v9527 = vpack.c.b16 %v9462, %v9461
  %v9528 = vpack.c.b16 %v9464, %v9463
  %v9529 = vpack.c.b16 %v9466, %v9465
  %v9530 = vpack.c.b16 %v9468, %v9467
  %v9531 = vpack.c.b16 %v9470, %v9469
  %v9532 = vpack.c.b16 %v9472, %v9471
  %v9594 = vsel %vm640, %v9180, 0
  %v9597 = vsel %vm640, %v9188, 0
  %v9600 = vsel %vm640, %v9196, 0
  %v9603 = vsel %vm640, %v9204, 0
  %9605 = vmatprep.subr.bf16.mxu0 0
  %9606 = vmatpush1.bf16.msra.mxu0 %v9473
  %9607 = vmatprep.subr.bf16.mxu0 0
  %9608 = vmatpush1.bf16.msra.mxu0 %v9474
  %9609 = vmatprep.subr.bf16.mxu0 0
  %9610 = vmatpush1.bf16.msra.mxu0 %v9475
  %9611 = vmatprep.subr.bf16.mxu0 0
  %9612 = vmatpush1.bf16.msra.mxu0 %v9476
  %9613 = vmatprep.subr.bf16.mxu0 0
  %9614 = vmatpush1.bf16.msra.mxu0 %v9477
  %9615 = vmatprep.subr.bf16.mxu0 0
  %9616 = vmatpush1.bf16.msra.mxu0 %v9478
  %9617 = vmatprep.subr.bf16.mxu0 0
  %9618 = vmatpush1.bf16.msra.mxu0 %v9479
  %9619 = vmatprep.subr.bf16.mxu0 0
  %9620 = vmatpush1.bf16.msra.mxu0 %v9480
  %9621 = vmatprep.subr.bf16.mxu0 0
  %9622 = vmatpush1.bf16.msra.mxu0 %v9481
  %9623 = vmatprep.subr.bf16.mxu0 0
  %9624 = vmatpush1.bf16.msra.mxu0 %v9482
  %9625 = vmatprep.subr.bf16.mxu0 0
  %9626 = vmatpush1.bf16.msra.mxu0 %v9483
  %9627 = vmatprep.subr.bf16.mxu0 0
  %9628 = vmatpush1.bf16.msra.mxu0 %v9484
  %9629 = vmatprep.subr.bf16.mxu0 0
  %9630 = vmatpush1.bf16.msra.mxu0 %v9485
  %9631 = vmatprep.subr.bf16.mxu0 0
  %9632 = vmatpush1.bf16.msra.mxu0 %v9486
  %9633 = vmatprep.subr.bf16.mxu0 0
  %9634 = vmatpush1.bf16.msra.mxu0 %v9487
  %9635 = vmatprep.subr.bf16.mxu0 0
  %9636 = vmatpush1.bf16.msra.mxu0 %v9488
  %9637 = vmatprep.mubr.bf16.mxu0 %v9174
  %9638 = vmatmul.mubr.bf16.gmra.mrb[0].mxu0 %v9173
  %v9639 = vpop.f32.mrb[0].mxu0
  %v9640 = vadd.f32 %v9087, %v9639
  %v9641 = vpop.f32.mrb[0].mxu0
  %v9642 = vpop.f32.mrb[0].mxu0
  %v9643 = vadd.f32 %v9087, %v9642
  %v9644 = vpop.f32.mrb[0].mxu0
  %9645 = vmatprep.mubr.bf16.mxu0 %v9182
  %9646 = vmatmul.mubr.bf16.gmra.mrb[0].mxu0 %v9181
  %v9647 = vpop.f32.mrb[0].mxu0
  %v9648 = vadd.f32 %v9087, %v9647
  %v9649 = vpop.f32.mrb[0].mxu0
  %v9650 = vpop.f32.mrb[0].mxu0
  %v9651 = vadd.f32 %v9087, %v9650
  %v9652 = vpop.f32.mrb[0].mxu0
  %9653 = vmatprep.mubr.bf16.mxu0 %v9190
  %9654 = vmatmul.mubr.bf16.gmra.mrb[0].mxu0 %v9189
  %v9655 = vpop.f32.mrb[0].mxu0
  %v9656 = vadd.f32 %v9087, %v9655
  %v9657 = vpop.f32.mrb[0].mxu0
  %v9658 = vpop.f32.mrb[0].mxu0
  %v9659 = vadd.f32 %v9087, %v9658
  %v9660 = vpop.f32.mrb[0].mxu0
  %9661 = vmatprep.mubr.bf16.mxu0 %v9198
  %9662 = vmatmul.mubr.bf16.gmra.mrb[0].mxu0 %v9197
  %v9663 = vpop.f32.mrb[0].mxu0
  %v9664 = vadd.f32 %v9087, %v9663
  %v9665 = vpop.f32.mrb[0].mxu0
  %v9666 = vpop.f32.mrb[0].mxu0
  %v9667 = vpop.f32.mrb[0].mxu0
  %9668 = vdwg.mxu0
  %9669 = vmatprep.subr.bf16.mxu0 0
  %9670 = vmatpush1.bf16.msra.mxu0 %v9489
  %9671 = vmatprep.subr.bf16.mxu0 0
  %9672 = vmatpush1.bf16.msra.mxu0 %v9490
  %9673 = vmatprep.subr.bf16.mxu0 0
  %9674 = vmatpush1.bf16.msra.mxu0 %v9491
  %9675 = vmatprep.subr.bf16.mxu0 0
  %9676 = vmatpush1.bf16.msra.mxu0 %v9492
  %9677 = vmatprep.subr.bf16.mxu0 0
  %9678 = vmatpush1.bf16.msra.mxu0 %v9493
  %9679 = vmatprep.subr.bf16.mxu0 0
  %9680 = vmatpush1.bf16.msra.mxu0 %v9494
  %9681 = vmatprep.subr.bf16.mxu0 0
  %9682 = vmatpush1.bf16.msra.mxu0 %v9495
  %9683 = vmatprep.subr.bf16.mxu0 0
  %9684 = vmatpush1.bf16.msra.mxu0 %v9496
  %9685 = vmatprep.subr.bf16.mxu0 0
  %9686 = vmatpush1.bf16.msra.mxu0 %v9497
  %9687 = vmatprep.subr.bf16.mxu0 0
  %9688 = vmatpush1.bf16.msra.mxu0 %v9498
  %9689 = vmatprep.subr.bf16.mxu0 0
  %9690 = vmatpush1.bf16.msra.mxu0 %v9499
  %9691 = vmatprep.subr.bf16.mxu0 0
  %9692 = vmatpush1.bf16.msra.mxu0 %v9500
  %9693 = vmatprep.subr.bf16.mxu0 0
  %9694 = vmatpush1.bf16.msra.mxu0 %v9501
  %9695 = vmatprep.subr.bf16.mxu0 0
  %9696 = vmatpush1.bf16.msra.mxu0 %v9502
  %9697 = vmatprep.subr.bf16.mxu0 0
  %9698 = vmatpush1.bf16.msra.mxu0 %v9503
  %9699 = vmatprep.subr.bf16.mxu0 0
  %9700 = vmatpush1.bf16.msra.mxu0 %v9504
  %9701 = vmatprep.mubr.bf16.mxu0 %v9176
  %9702 = vmatmul.mubr.bf16.gmra.mrb[0].mxu0 %v9175
  %v9703 = vpop.f32.mrb[0].mxu0
  %v9704 = vadd.f32 %v9640, %v9703
  %v9705 = vpop.f32.mrb[0].mxu0
  %v9706 = vpop.f32.mrb[0].mxu0
  %v9707 = vadd.f32 %v9643, %v9706
  %v9708 = vpop.f32.mrb[0].mxu0
  %9709 = vmatprep.mubr.bf16.mxu0 %v9184
  %9710 = vmatmul.mubr.bf16.gmra.mrb[0].mxu0 %v9183
  %v9711 = vpop.f32.mrb[0].mxu0
  %v9712 = vadd.f32 %v9648, %v9711
  %v9713 = vpop.f32.mrb[0].mxu0
  %v9714 = vpop.f32.mrb[0].mxu0
  %v9715 = vadd.f32 %v9651, %v9714
  %v9716 = vpop.f32.mrb[0].mxu0
  %9717 = vmatprep.mubr.bf16.mxu0 %v9192
  %9718 = vmatmul.mubr.bf16.gmra.mrb[0].mxu0 %v9191
  %v9719 = vpop.f32.mrb[0].mxu0
  %v9720 = vadd.f32 %v9656, %v9719
  %v9721 = vpop.f32.mrb[0].mxu0
  %v9722 = vpop.f32.mrb[0].mxu0
  %v9723 = vadd.f32 %v9659, %v9722
  %v9724 = vpop.f32.mrb[0].mxu0
  %9725 = vmatprep.mubr.bf16.mxu0 %v9200
  %9726 = vmatmul.mubr.bf16.gmra.mrb[0].mxu0 %v9199
  %v9727 = vpop.f32.mrb[0].mxu0
  %v9728 = vadd.f32 %v9664, %v9727
  %v9729 = vpop.f32.mrb[0].mxu0
  %v9730 = vpop.f32.mrb[0].mxu0
  %v9731 = vpop.f32.mrb[0].mxu0
  %9732 = vdwg.mxu0
  %9733 = vmatprep.subr.bf16.mxu0 0
  %9734 = vmatpush1.bf16.msra.mxu0 %v9505
  %9735 = vmatprep.subr.bf16.mxu0 0
  %9736 = vmatpush1.bf16.msra.mxu0 %v9506
  %9737 = vmatprep.subr.bf16.mxu0 0
  %9738 = vmatpush1.bf16.msra.mxu0 %v9507
  %9739 = vmatprep.subr.bf16.mxu0 0
  %9740 = vmatpush1.bf16.msra.mxu0 %v9508
  %9741 = vmatprep.subr.bf16.mxu0 0
  %9742 = vmatpush1.bf16.msra.mxu0 %v9509
  %9743 = vmatprep.subr.bf16.mxu0 0
  %9744 = vmatpush1.bf16.msra.mxu0 %v9510
  %9745 = vmatprep.subr.bf16.mxu0 0
  %9746 = vmatpush1.bf16.msra.mxu0 %v9511
  %9747 = vmatprep.subr.bf16.mxu0 0
  %9748 = vmatpush1.bf16.msra.mxu0 %v9512
  %9749 = vmatprep.subr.bf16.mxu0 0
  %9750 = vmatpush1.bf16.msra.mxu0 %v9513
  %9751 = vmatprep.subr.bf16.mxu0 0
  %9752 = vmatpush1.bf16.msra.mxu0 %v9514
  %9753 = vmatprep.subr.bf16.mxu0 0
  %9754 = vmatpush1.bf16.msra.mxu0 %v9515
  %9755 = vmatprep.subr.bf16.mxu0 0
  %9756 = vmatpush1.bf16.msra.mxu0 %v9516
  %9757 = vmatprep.subr.bf16.mxu0 0
  %9758 = vmatpush1.bf16.msra.mxu0 %v9517
  %9759 = vmatprep.subr.bf16.mxu0 0
  %9760 = vmatpush1.bf16.msra.mxu0 %v9518
  %9761 = vmatprep.subr.bf16.mxu0 0
  %9762 = vmatpush1.bf16.msra.mxu0 %v9519
  %9763 = vmatprep.subr.bf16.mxu0 0
  %9764 = vmatpush1.bf16.msra.mxu0 %v9520
  %9765 = vmatprep.mubr.bf16.mxu0 %v9178
  %9766 = vmatmul.mubr.bf16.gmra.mrb[0].mxu0 %v9177
  %v9767 = vpop.f32.mrb[0].mxu0
  %v9768 = vadd.f32 %v9704, %v9767
  %v9769 = vpop.f32.mrb[0].mxu0
  %v9770 = vpop.f32.mrb[0].mxu0
  %v9771 = vadd.f32 %v9707, %v9770
  %v9772 = vpop.f32.mrb[0].mxu0
  %9773 = vmatprep.mubr.bf16.mxu0 %v9186
  %9774 = vmatmul.mubr.bf16.gmra.mrb[0].mxu0 %v9185
  %v9775 = vpop.f32.mrb[0].mxu0
  %v9776 = vadd.f32 %v9712, %v9775
  %v9777 = vpop.f32.mrb[0].mxu0
  %v9778 = vpop.f32.mrb[0].mxu0
  %v9779 = vadd.f32 %v9715, %v9778
  %v9780 = vpop.f32.mrb[0].mxu0
  %9781 = vmatprep.mubr.bf16.mxu0 %v9194
  %9782 = vmatmul.mubr.bf16.gmra.mrb[0].mxu0 %v9193
  %v9783 = vpop.f32.mrb[0].mxu0
  %v9784 = vadd.f32 %v9720, %v9783
  %v9785 = vpop.f32.mrb[0].mxu0
  %v9786 = vpop.f32.mrb[0].mxu0
  %v9787 = vadd.f32 %v9723, %v9786
  %v9788 = vpop.f32.mrb[0].mxu0
  %9789 = vmatprep.mubr.bf16.mxu0 %v9202
  %9790 = vmatmul.mubr.bf16.gmra.mrb[0].mxu0 %v9201
  %v9791 = vpop.f32.mrb[0].mxu0
  %v9792 = vadd.f32 %v9728, %v9791
  %v9793 = vpop.f32.mrb[0].mxu0
  %v9794 = vpop.f32.mrb[0].mxu0
  %v9795 = vpop.f32.mrb[0].mxu0
  %9796 = vdwg.mxu0
  %9797 = vmatprep.subr.bf16.mxu0 0
  %9798 = vmatpush1.bf16.msra.mxu0 %v9521
  %9799 = vmatprep.subr.bf16.mxu0 0
  %9800 = vmatpush1.bf16.msra.mxu0 %v9522
  %9801 = vmatprep.subr.bf16.mxu0 0
  %9802 = vmatpush1.bf16.msra.mxu0 %v9523
  %9803 = vmatprep.subr.bf16.mxu0 0
  %9804 = vmatpush1.bf16.msra.mxu0 %v9524
  %9805 = vmatprep.subr.bf16.mxu0 0
  %9806 = vmatpush1.bf16.msra.mxu0 %v9525
  %9807 = vmatprep.subr.bf16.mxu0 0
  %9808 = vmatpush1.bf16.msra.mxu0 %v9526
  %9809 = vmatprep.subr.bf16.mxu0 0
  %9810 = vmatpush1.bf16.msra.mxu0 %v9527
  %9811 = vmatprep.subr.bf16.mxu0 0
  %9812 = vmatpush1.bf16.msra.mxu0 %v9528
  %9813 = vmatprep.subr.bf16.mxu0 0
  %9814 = vmatpush1.bf16.msra.mxu0 %v9529
  %9815 = vmatprep.subr.bf16.mxu0 0
  %9816 = vmatpush1.bf16.msra.mxu0 %v9530
  %9817 = vmatprep.subr.bf16.mxu0 0
  %9818 = vmatpush1.bf16.msra.mxu0 %v9531
  %9819 = vmatprep.subr.bf16.mxu0 0
  %9820 = vmatpush1.bf16.msra.mxu0 %v9532
  %9821 = vmatprep.subr.bf16.mxu0 0
  %9822 = vmatpush1.bf16.msra.mxu0 0
  %9823 = vmatprep.subr.bf16.mxu0 0
  %9824 = vmatpush1.bf16.msra.mxu0 0
  %9825 = vmatprep.subr.bf16.mxu0 0
  %9826 = vmatpush1.bf16.msra.mxu0 0
  %9827 = vmatprep.subr.bf16.mxu0 0
  %9828 = vmatpush1.bf16.msra.mxu0 0
  %9829 = vmatprep.mubr.bf16.mxu0 %v9594
  %9830 = vmatmul.mubr.bf16.gmra.mrb[0].mxu0 %v9179
  %v9831 = vpop.f32.mrb[0].mxu0
  %v9832 = vadd.f32 %v9768, %v9831
  %v9833 = vpop.f32.mrb[0].mxu0
  %v9834 = vpop.f32.mrb[0].mxu0
  %v9835 = vadd.f32 %v9771, %v9834
  %v9836 = vpop.f32.mrb[0].mxu0
  %9837 = vmatprep.mubr.bf16.mxu0 %v9597
  %9838 = vmatmul.mubr.bf16.gmra.mrb[0].mxu0 %v9187
  %v9839 = vpop.f32.mrb[0].mxu0
  %v9840 = vadd.f32 %v9776, %v9839
  %v9841 = vpop.f32.mrb[0].mxu0
  %v9842 = vpop.f32.mrb[0].mxu0
  %v9843 = vadd.f32 %v9779, %v9842
  %v9844 = vpop.f32.mrb[0].mxu0
  %9845 = vmatprep.mubr.bf16.mxu0 %v9600
  %9846 = vmatmul.mubr.bf16.gmra.mrb[0].mxu0 %v9195
  %v9847 = vpop.f32.mrb[0].mxu0
  %v9848 = vadd.f32 %v9784, %v9847
  %v9849 = vpop.f32.mrb[0].mxu0
  %v9850 = vpop.f32.mrb[0].mxu0
  %v9851 = vadd.f32 %v9787, %v9850
  %v9852 = vpop.f32.mrb[0].mxu0
  %9853 = vmatprep.mubr.bf16.mxu0 %v9603
  %9854 = vmatmul.mubr.bf16.gmra.mrb[0].mxu0 %v9203
  %v9855 = vpop.f32.mrb[0].mxu0
  %v9856 = vadd.f32 %v9792, %v9855
  %v9857 = vpop.f32.mrb[0].mxu0
  %v9858 = vpop.f32.mrb[0].mxu0
  %v9859 = vpop.f32.mrb[0].mxu0
  %9860 = vdwg.mxu0
  %v9861 = vld [vmem:[%s0] sm:$0xff]
  %v9862 = vld [vmem:[%s0 + $0x8] sm:$0xff]
  %v9863 = vld [vmem:[%s0 + $0x10] sm:$0xff]
  %v9864 = vld [vmem:[%s0 + $0x18] sm:$0xf]
  %v9865 = vadd.f32 %v9832, %v9861
  %v9866 = vadd.f32 %v9835, %v9862
  %v9867 = vadd.f32 %v9840, %v9863
  %v9868 = vadd.f32 %v9843, %v9864
  %v9869 = vmax.f32 %v9865, 0.0
  %v9870 = vmax.f32 %v9866, 0.0
  %v9871 = vmax.f32 %v9867, 0.0
  %v9872 = vmax.f32 %v9868, 0.0
  %vm9873 = vcmask 228352
  %9874 = vst.msk [vmem:[%s26] sm:$0xff] %vm9873, %v9869
  %9875 = vst.msk [vmem:[%s26 + $0x8] sm:$0xff] %vm9873, %v9870
  %9876 = vst.msk [vmem:[%s26 + $0x10] sm:$0xff] %vm9873, %v9871
  %9877 = vst.msk [vmem:[%s26 + $0x18] sm:$0xf] %vm153, %v9872
  %v9878 = vsel %vm9873, %v9869, 0.0
  %v9879 = vsel %vm9873, %v9870, 0.0
  %v9880 = vadd.f32 %v9878, %v9879
  %v9881 = vsel %vm9873, %v9871, 0.0
  %v9882 = vadd.f32 %v9880, %v9881
  %v9883 = vsel %vm153, %v9872, 0.0
  %v9884 = vadd.f32 %v9882, %v9883
  %9885 = vadd.xlane.f32.xlu0 %v9884
  %v9886 = vpop.xlane.xlu0 %9885
  %v9887 = vrot.slane %v9886, 4
  %v9888 = vadd.f32 %v9886, %v9887
  %v9889 = vrot.slane %v9888, 2
  %v9890 = vadd.f32 %v9888, %v9889
  %v9891 = vrot.slane %v9890, 1
  %v9892 = vadd.f32 %v9890, %v9891
  %s9893 = vtos %v9892
  %s9894 = smul.f32 %s9893, 0.0012755102
  %v9895 = vld [vmem:[%s21] sm:$0x1]
  %v9896 = vstv %s9894
  %v9897 = vmul.f32 %v9896, %v9895
  %v9898 = vld [vmem:[%s22] sm:$0x1]
  %v9899 = vadd.f32 %v9897, %v9898
  %v9900 = vmax.f32 %v9899, 0.0
  %v9901 = vld [vmem:[%s23] sm:$0x1]
  %v9902 = vmul.f32 %v9900, %v9901
  %vm9903 = vcmask 122880
  %v9904 = vsel %vm9903, %v9902, 0.0
  %9905 = vadd.xlane.f32.xlu0 %v9904
  %v9906 = vpop.xlane.xlu0 %9905
  %v9907 = vld [vmem:[#allocation12] sm:$0x1]
  %v9908 = vadd.f32 %v9906, %v9907
  %v9909 = vsub.f32 0.0, %v9908
  %v9910 = vmul.f32 %v9909, 1.442695
  %v9911 = vpow.pop %v9910
  %v9912 = vadd.f32 %v9911, 1.0
  %v9913 = vrcp.pop %v9912
  %v9914 = vmul.f32 4.0, %v9913
  %vm9915 = vcmask 0
  %9916 = vst.msk [vmem:[%s25] sm:$0x1] %vm9915, %v9914
  %v9917 = vld [vmem:[%s270] sm:$0xff]
  %v9918 = vld [vmem:[%s270 + $0x8] sm:$0xff]
  %v9919 = vld [vmem:[%s270 + $0x10] sm:$0xff]
  %v9920 = vld [vmem:[%s270 + $0x18] sm:$0xf]
  %v9925 = vrot.slane %v9917, 4
  %v9926 = vrot.slane %v9918, 4
  %v9927 = vsel %vm678, %v9925, %v9926
  %v9928 = vrot.slane %v9919, 4
  %v9929 = vsel %vm678, %v9926, %v9928
  %v9930 = vrot.slane %v9920, 4
  %v9931 = vsel %vm678, %v9928, %v9930
  %v9936 = vadd.f32 %v9843, %v9925
  %v9937 = vadd.f32 %v9848, %v9927
  %v9938 = vadd.f32 %v9851, %v9929
  %v9939 = vadd.f32 %v9856, %v9931
  %v9940 = vmax.f32 %v9936, 0.0
  %v9941 = vmax.f32 %v9937, 0.0
  %v9942 = vmax.f32 %v9938, 0.0
  %v9943 = vmax.f32 %v9939, 0.0
  %s9944 = scalar_lea.vmem %s26, 32
  %vm9945 = vcmask 228356
  %9946 = vst.msk [vmem:[%s9944 - $0x4] sm:$0xf0] %vm9945, %v9940
  %9947 = vst.msk [vmem:[%s9944 + $0x4] sm:$0xff] %vm9873, %v9941
  %9948 = vst.msk [vmem:[%s9944 + $0xc] sm:$0xff] %vm9873, %v9942
  %9949 = vst.msk [vmem:[%s9944 + $0x14] sm:$0xff] %vm9873, %v9943
  %v9954 = vrot.slane %v9940, 4
  %v9955 = vrot.slane %v9941, 4
  %v9956 = vsel %vm678, %v9954, %v9955
  %v9957 = vrot.slane %v9942, 4
  %v9958 = vsel %vm678, %v9955, %v9957
  %v9959 = vrot.slane %v9943, 4
  %v9960 = vsel %vm678, %v9957, %v9959
  %v9965 = vsel %vm9873, %v9956, 0.0
  %v9966 = vsel %vm9873, %v9958, 0.0
  %v9967 = vadd.f32 %v9965, %v9966
  %v9968 = vsel %vm9873, %v9960, 0.0
  %v9969 = vadd.f32 %v9967, %v9968
  %v9970 = vsel %vm153, %v9959, 0.0
  %v9971 = vadd.f32 %v9969, %v9970
  %9972 = vadd.xlane.f32.xlu0 %v9971
  %v9973 = vpop.xlane.xlu0 %9972
  %v9974 = vrot.slane %v9973, 4
  %v9975 = vadd.f32 %v9973, %v9974
  %v9976 = vrot.slane %v9975, 2
  %v9977 = vadd.f32 %v9975, %v9976
  %v9978 = vrot.slane %v9977, 1
  %v9979 = vadd.f32 %v9977, %v9978
  %s9980 = vtos %v9979
  %s9981 = smul.f32 %s9980, 0.0012755102
  %v9982 = vld [vmem:[%s21] sm:$0x1]
  %v9983 = vstv %s9981
  %v9984 = vmul.f32 %v9983, %v9982
  %v9985 = vld [vmem:[%s22] sm:$0x1]
  %v9986 = vadd.f32 %v9984, %v9985
  %v9987 = vmax.f32 %v9986, 0.0
  %v9988 = vld [vmem:[%s23] sm:$0x1]
  %v9989 = vmul.f32 %v9987, %v9988
  %v9990 = vsel %vm9903, %v9989, 0.0
  %9991 = vadd.xlane.f32.xlu0 %v9990
  %v9992 = vpop.xlane.xlu0 %9991
  %v9993 = vld [vmem:[#allocation12] sm:$0x1]
  %v9994 = vadd.f32 %v9992, %v9993
  %v9995 = vsub.f32 0.0, %v9994
  %v9996 = vmul.f32 %v9995, 1.442695
  %v9997 = vpow.pop %v9996
  %v9998 = vadd.f32 %v9997, 1.0
  %v9999 = vrcp.pop %v9998
  %v10000 = vmul.f32 4.0, %v9999
  %10001 = vst.msk [vmem:[%s25 + $0x1] sm:$0x1] %vm9915, %v10000
  // Predicated region
  $region106: #{_lambda_.1} parent=0 // pred_check
    _
  $region107: #{_lambda_.1} parent=0 // pred_check_branch
    %10003 = sbr.rel (0) target = $region109
  $region108: #{_lambda_.1} parent=0 // pred_region
    _
  $region109: #{_lambda_.1} parent=0 // pred_fallthru
    _
  // Predicated region
  $region110: #{_lambda_.1} parent=0 // pred_check
    _
  $region111: #{_lambda_.1} parent=0 // pred_check_branch
    %10005 = sbr.rel (0) target = $region113
  $region112: #{_lambda_.1} parent=0 // pred_region
    _
  $region113: #{_lambda_.1} parent=0 // pred_fallthru
    _
  // Predicated region
  $region114: #{_lambda_.1} parent=0 // pred_check
    _
  $region115: #{_lambda_.1} parent=0 // pred_check_branch
    %10007 = sbr.rel (0) target = $region117
  $region116: #{_lambda_.1} parent=0 // pred_region
    _
  $region117: #{_lambda_.1} parent=0 // pred_fallthru
    _
  // Predicated region
  $region118: #{_lambda_.1} parent=0 // pred_check
    _
  $region119: #{_lambda_.1} parent=0 // pred_check_branch
    %10009 = sbr.rel (0) target = $region121
  $region120: #{_lambda_.1} parent=0 // pred_region
    _
  $region121: #{_lambda_.1} parent=0 // pred_fallthru
    _

</llo_original>
